<compile_context>
chip_gen: v6e
topology: v6e:2x2x1
jax: 0.10.0
libtpu: 0.0.40
codegen_flags: <defaults>
</compile_context>

<pallas_src>
import functools

import numpy as np

import jax
import jax.numpy as jnp
from jax import lax
from jax.experimental import pallas as pl
from jax.experimental.pallas import tpu as pltpu


def _round_up(x, m):
    return ((x + m - 1) // m) * m


def _build_tap_masks(K, H, W):
    """(K*K, H*W) float32 validity masks for 'SAME' zero padding, tap order kh*K+kw."""
    pad = K // 2
    rows = np.arange(H * W, dtype=np.int32) // W
    cols = np.arange(H * W, dtype=np.int32) % W
    masks = np.zeros((K * K, H * W), dtype=np.float32)
    t = 0
    for kh in range(K):
        for kw in range(K):
            dh, dw = kh - pad, kw - pad
            valid = ((rows + dh >= 0) & (rows + dh < H) &
                     (cols + dw >= 0) & (cols + dw < W))
            masks[t] = valid.astype(np.float32)
            t += 1
    return jnp.asarray(masks)


def _pad_groups(a, n_groups, nh, nhp, axis):
    """`a` has n_groups*nh entries along `axis`; zero-pad each nh-group to nhp."""
    if nhp == nh:
        return a
    shape = a.shape
    a = a.reshape(shape[:axis] + (n_groups, nh) + shape[axis + 1:])
    pad = [(0, 0)] * a.ndim
    pad[axis + 1] = (0, nhp - nh)
    a = jnp.pad(a, pad)
    return a.reshape(shape[:axis] + (n_groups * nhp,) + shape[axis + 1:])


def _st_lstm_kernel(xin_ref, msk_ref, w1_ref, b1_ref, w2_ref, b2_ref,
                    gam_ref, bet_ref, h_ref, c_ref, m_ref, scr_ref, *,
                    K, H, W, nh, nhp, cim, cin2, off_m, off_c, n_samples,
                    forget_bias, eps):
    """One grid step == `n_samples` batch elements.

    xin_ref : (G, cin1, L)           fused [x | h | m | c | pad] input, L=H*W
    msk_ref : (K*K, L)               per-tap boundary masks (0/1)
    w1_ref  : (14*nhp, K*K*cim)      fused conv_x/conv_h/conv_m im2col weight
    b1_ref  : (14*nhp, 1)            fused conv_x/conv_h/conv_m bias
    w2_ref  : (2*nhp,  K*K*cin2)     fused conv_o/conv_last im2col weight
    b2_ref  : (2*nhp, 1)             fused conv_o/conv_last bias
    gam_ref : (15*nhp, L)            LayerNorm gammas [x | h | m | o]
    bet_ref : (15*nhp, L)            LayerNorm betas  [x | h | m | o]
    h/c/m_ref : (G, nhp, L)          outputs (flattened NCHW, hidden padded)
    scr_ref : (K*K*cim, L)           im2col scratch (bf16 for MXU), reused by both stages
    """
    L = H * W
    pad = K // 2
    KK = K * K

    # Lane shift (jnp.roll convention) per tap, order t = kh*K + kw.
    shifts = [(-((kh - pad) * W + (kw - pad))) % L
              for kh in range(K) for kw in range(K)]
    centre = pad * K + pad                                   # centre tap: no shift/mask

    def im2col(src, crows):
        # src: (crows, L) f32 value; tap t -> scr rows [t*crows, (t+1)*crows).
        for t in range(KK):
            s = shifts[t]
            shifted = pltpu.roll(src, s, axis=1) if s else src
            if t != centre:
                shifted = shifted * msk_ref[t:t + 1, :]
            scr_ref[t * crows:(t + 1) * crows, :] = shifted.astype(scr_ref.dtype)

    def layer_norm(x, gamma, beta, n_real):
        # Fused single-pass stats (sum & sum-of-squares); divisor is the real
        # (unpadded) element count so zero pad rows do not perturb the result.
        inv_n = 1.0 / float(n_real)
        mu = jnp.sum(x, keepdims=True) * inv_n
        ex2 = jnp.sum(x * x, keepdims=True) * inv_n
        var = ex2 - mu * mu
        return (x - mu) * lax.rsqrt(var + eps) * gamma + beta

    # Grid-invariant operands: load once per grid step (shared by all samples).
    w1 = w1_ref[...]
    w2 = w2_ref[...]
    gam = gam_ref[...]
    bet = bet_ref[...]

    for g in range(n_samples):
        xin = xin_ref[g]                                     # (cin1, L) f32

        # ---- stage 1: conv_x + conv_h + conv_m as ONE im2col matmul --------
        im2col(xin[0:cim, :], cim)
        acc1 = jnp.dot(w1, scr_ref[...],
                       preferred_element_type=jnp.float32)   # (14*nhp, L) f32
        acc1 = acc1 + b1_ref[...]                            # conv bias (pre-LN)

        xc = layer_norm(acc1[0:7 * nhp], gam[0:7 * nhp], bet[0:7 * nhp],
                        7 * nh * L)
        hc = layer_norm(acc1[7 * nhp:11 * nhp], gam[7 * nhp:11 * nhp],
                        bet[7 * nhp:11 * nhp], 4 * nh * L)
        mc = layer_norm(acc1[11 * nhp:14 * nhp], gam[11 * nhp:14 * nhp],
                        bet[11 * nhp:14 * nhp], 3 * nh * L)

        i_x, f_x, g_x = xc[0:nhp], xc[nhp:2 * nhp], xc[2 * nhp:3 * nhp]
        i_xp, f_xp = xc[3 * nhp:4 * nhp], xc[4 * nhp:5 * nhp]
        g_xp, o_x = xc[5 * nhp:6 * nhp], xc[6 * nhp:7 * nhp]
        i_h, f_h = hc[0:nhp], hc[nhp:2 * nhp]
        g_h, o_h = hc[2 * nhp:3 * nhp], hc[3 * nhp:4 * nhp]
        i_m, f_m, g_m = mc[0:nhp], mc[nhp:2 * nhp], mc[2 * nhp:3 * nhp]

        o_xh = o_x + o_h            # fold early; o_x/o_h don't stay live past here

        m_t = xin[off_m:off_m + nhp, :]
        c_t = xin[off_c:off_c + nhp, :]

        i_t = jax.nn.sigmoid(i_x + i_h)
        f_t = jax.nn.sigmoid(f_x + f_h + forget_bias)
        g_t = jnp.tanh(g_x + g_h)
        c_new = f_t * c_t + i_t * g_t
        c_ref[g] = c_new.astype(c_ref.dtype)                 # store immediately

        i_tp = jax.nn.sigmoid(i_xp + i_m)
        f_tp = jax.nn.sigmoid(f_xp + f_m + forget_bias)
        g_tp = jnp.tanh(g_xp + g_m)
        m_new = f_tp * m_t + i_tp * g_tp
        m_ref[g] = m_new.astype(m_ref.dtype)                 # store immediately

        # ---- stage 2: conv_o + conv_last(1x1) on mem = [c_new ; m_new] ------
        mem = jnp.concatenate([c_new, m_new], axis=0)        # (cin2, L)
        im2col(mem, cin2)
        acc2 = jnp.dot(w2, scr_ref[0:KK * cin2, :],
                       preferred_element_type=jnp.float32)   # (2*nhp, L)
        acc2 = acc2 + b2_ref[...]

        oo = layer_norm(acc2[0:nhp], gam[14 * nhp:15 * nhp],
                        bet[14 * nhp:15 * nhp], nh * L)      # LN(conv_o(mem))
        o_t = jax.nn.sigmoid(o_xh + oo)
        h_ref[g] = (o_t * jnp.tanh(acc2[nhp:2 * nhp])).astype(h_ref.dtype)


def st_lstm_cell_forward(x_t, h_t, c_t, m_t, params, *, filter_size, stride=1,
                         forget_bias=1.0, eps=1e-5, matmul_dtype=jnp.bfloat16):
    """SpatioTemporalLSTMCell forward. All tensors NCHW float32.

    params (PyTorch layouts):
      w_x (7nh,Cx,K,K) b_x (7nh,) g_x/bt_x (7nh,H,W)   conv_x + LayerNorm
      w_h (4nh,nh,K,K) b_h (4nh,) g_h/bt_h (4nh,H,W)   conv_h + LayerNorm
      w_m (3nh,nh,K,K) b_m (3nh,) g_m/bt_m (3nh,H,W)   conv_m + LayerNorm
      w_o (nh,2nh,K,K) b_o (nh,)  g_o/bt_o (nh,H,W)    conv_o + LayerNorm
      w_last (nh,2nh,1,1) b_last (nh,)                 conv_last (1x1)
    Returns (h_new, c_new, m_new) in NCHW.
    """
    # TODO(synk): stride != 1 (spatial downsampling) is not supported; PredRNN
    # uses stride=1 and the recurrent-state shapes require it.
    assert stride == 1, "only stride=1 is supported"
    B, cx, H, W = x_t.shape
    nh = h_t.shape[1]
    K = filter_size
    pad = K // 2
    KK = K * K
    L = H * W
    dt = x_t.dtype

    nhp = _round_up(nh, 8)              # hidden channels -> full sublane groups
    cim = _round_up(cx + 2 * nhp, 16)   # im2col'ed channels: [x | h | m] only
    cin2 = 2 * nhp                      # stage-2 input channels: [c_new | m_new]
    off_m = cx + nhp                    # m_t rows inside the fused input
    off_c = cx + 2 * nhp                # c_t rows inside the fused input
    used = off_c + nhp                  # real rows of the fused input
    cin1 = max(_round_up(used, 8), cim)
    cout1 = 14 * nhp
    assert off_c + nhp <= cin1 and cim <= cin1   # layout consistency

    # ---- flatten NCHW -> (B, C, H*W): pure reshape, no transpose -----------
    def pad_state(a):
        a = a.reshape(B, nh, L)
        if nhp != nh:
            a = jnp.pad(a, ((0, 0), (0, nhp - nh), (0, 0)))
        return a

    x2 = x_t.reshape(B, cx, L)
    h2, m2, c2 = pad_state(h_t), pad_state(m_t), pad_state(c_t)

    parts = [x2, h2, m2, c2]            # order must match off_m / off_c above
    if cin1 > used:
        parts.append(jnp.zeros((B, cin1 - used, L), dt))
    xin = jnp.concatenate(parts, axis=1)                     # (B, cin1, L)

    # ---- per-gate-group hidden-channel padding of the PyTorch params --------
    # NOTE: in a full PredRNN model these fused weights should be packed once
    # outside the time loop.
    w_x = _pad_groups(params['w_x'], 7, nh, nhp, 0)
    w_h = _pad_groups(_pad_groups(params['w_h'], 4, nh, nhp, 0), 1, nh, nhp, 1)
    w_m = _pad_groups(_pad_groups(params['w_m'], 3, nh, nhp, 0), 1, nh, nhp, 1)
    w_o = _pad_groups(_pad_groups(params['w_o'], 1, nh, nhp, 0), 2, nh, nhp, 1)
    w_l = _pad_groups(_pad_groups(params['w_last'], 1, nh, nhp, 0), 2, nh, nhp, 1)
    b_x = _pad_groups(params['b_x'], 7, nh, nhp, 0)
    b_h = _pad_groups(params['b_h'], 4, nh, nhp, 0)
    b_m = _pad_groups(params['b_m'], 3, nh, nhp, 0)
    b_o = _pad_groups(params['b_o'], 1, nh, nhp, 0)
    b_l = _pad_groups(params['b_last'], 1, nh, nhp, 0)
    # LayerNorm affines: pad rows get gamma=0 / beta=0 so padded channels stay 0.
    g_x = _pad_groups(params['g_x'], 7, nh, nhp, 0)
    g_h = _pad_groups(params['g_h'], 4, nh, nhp, 0)
    g_m = _pad_groups(params['g_m'], 3, nh, nhp, 0)
    g_o = _pad_groups(params['g_o'], 1, nh, nhp, 0)
    bt_x = _pad_groups(params['bt_x'], 7, nh, nhp, 0)
    bt_h = _pad_groups(params['bt_h'], 4, nh, nhp, 0)
    bt_m = _pad_groups(params['bt_m'], 3, nh, nhp, 0)
    bt_o = _pad_groups(params['bt_o'], 1, nh, nhp, 0)

    # ---- stage-1 fused block-diagonal im2col weight: (14*nhp, K*K*cim) ------
    w1t = jnp.zeros((K, K, cout1, cim), jnp.float32)
    w1t = w1t.at[:, :, 0:7 * nhp, 0:cx].set(jnp.transpose(w_x, (2, 3, 0, 1)))
    w1t = w1t.at[:, :, 7 * nhp:11 * nhp, cx:cx + nhp].set(
        jnp.transpose(w_h, (2, 3, 0, 1)))
    w1t = w1t.at[:, :, 11 * nhp:14 * nhp, cx + nhp:cx + 2 * nhp].set(
        jnp.transpose(w_m, (2, 3, 0, 1)))
    w1 = jnp.transpose(w1t, (2, 0, 1, 3)).reshape(cout1, KK * cim)
    w1 = w1.astype(matmul_dtype)
    b1 = jnp.concatenate([b_x, b_h, b_m]).reshape(cout1, 1)

    # ---- stage-2 fused (conv_o + centre-tap conv_last) weight ---------------
    w2t = jnp.zeros((K, K, 2 * nhp, cin2), jnp.float32)
    w2t = w2t.at[:, :, 0:nhp, :].set(jnp.transpose(w_o, (2, 3, 0, 1)))
    w2t = w2t.at[pad, pad, nhp:2 * nhp, :].set(w_l[:, :, 0, 0])
    w2 = jnp.transpose(w2t, (2, 0, 1, 3)).reshape(2 * nhp, KK * cin2)
    w2 = w2.astype(matmul_dtype)
    b2 = jnp.concatenate([b_o, b_l]).reshape(2 * nhp, 1)

    # ---- LayerNorm affine params, flattened + concatenated: (15*nhp, L) -----
    gam = jnp.concatenate([g_x, g_h, g_m, g_o], axis=0).reshape(15 * nhp, L)
    bet = jnp.concatenate([bt_x, bt_h, bt_m, bt_o], axis=0).reshape(15 * nhp, L)

    msk = _build_tap_masks(K, H, W)                           # (K*K, L)

    # ---- samples per grid step: amortize per-step overhead at toy sizes -----
    per_sample_macs = cout1 * KK * cim * L
    G = 1
    if per_sample_macs < (1 << 28):
        for cand in (8, 4, 2):
            if B % cand == 0:
                G = cand
                break
    # NOTE(v7x): with G == 1 the "parallel" batch grid is shared across both
    # TensorCores whenever B >= 2; G > 1 only triggers when per-grid-step
    # overhead dominates the MXU work anyway.

    kernel = functools.partial(
        _st_lstm_kernel, K=K, H=H, W=W, nh=nh, nhp=nhp, cim=cim, cin2=cin2,
        off_m=off_m, off_c=off_c, n_samples=G,
        forget_bias=float(forget_bias), eps=float(eps))

    # ---- VMEM budget: double-buffered operands + scratch + accumulator ------
    mmb = jnp.dtype(matmul_dtype).itemsize
    est = (2 * G * cin1 * L * 4 + 2 * KK * L * 4
           + 2 * (cout1 * KK * cim * mmb + cout1 * 4)
           + 2 * (2 * nhp * KK * cin2 * mmb + 2 * nhp * 4)
           + 2 * 2 * 15 * nhp * L * 4
           + 2 * 3 * G * nhp * L * 4
           + KK * cim * L * mmb
           + 2 * cout1 * L * 4)
    vmem_limit = int(min(max(est * 3 // 2, 32 * 1024 * 1024), 64 * 1024 * 1024))

    out_sds = jax.ShapeDtypeStruct((B, nhp, L), dt)
    h_new, c_new, m_new = pl.pallas_call(
        kernel,
        out_shape=(out_sds, out_sds, out_sds),
        grid_spec=pltpu.PrefetchScalarGridSpec(
            num_scalar_prefetch=0,
            grid=(B // G,),
            in_specs=[
                pl.BlockSpec((G, cin1, L), lambda b: (b, 0, 0)),          # xin
                pl.BlockSpec((KK, L), lambda b: (0, 0)),                  # masks
                pl.BlockSpec((cout1, KK * cim), lambda b: (0, 0)),        # w1
                pl.BlockSpec((cout1, 1), lambda b: (0, 0)),               # b1
                pl.BlockSpec((2 * nhp, KK * cin2), lambda b: (0, 0)),     # w2
                pl.BlockSpec((2 * nhp, 1), lambda b: (0, 0)),             # b2
                pl.BlockSpec((15 * nhp, L), lambda b: (0, 0)),            # gammas
                pl.BlockSpec((15 * nhp, L), lambda b: (0, 0)),            # betas
            ],
            out_specs=[
                pl.BlockSpec((G, nhp, L), lambda b: (b, 0, 0)),
                pl.BlockSpec((G, nhp, L), lambda b: (b, 0, 0)),
                pl.BlockSpec((G, nhp, L), lambda b: (b, 0, 0)),
            ],
            scratch_shapes=[pltpu.VMEM((KK * cim, L), matmul_dtype)],
        ),
        compiler_params=pltpu.CompilerParams(
            dimension_semantics=("parallel",),
            vmem_limit_bytes=vmem_limit),
    )(xin, msk, w1, b1, w2, b2, gam, bet)

    shape4 = (B, nh, H, W)
    return (h_new[:, :nh, :].reshape(shape4),
            c_new[:, :nh, :].reshape(shape4),
            m_new[:, :nh, :].reshape(shape4))


# ---------------------------------------------------------------------------
# Pure-JAX reference (lax.conv) for the correctness check.
# ---------------------------------------------------------------------------
def _reference_forward(x_t, h_t, c_t, m_t, p, *, filter_size,
                       forget_bias=1.0, eps=1e-5):
    K = filter_size
    pad = K // 2

    def conv(x, w, b, padv):
        dn = lax.conv_dimension_numbers(x.shape, w.shape, ('NCHW', 'OIHW', 'NCHW'))
        y = lax.conv_general_dilated(x, w, (1, 1), [(padv, padv), (padv, padv)],
                                     dimension_numbers=dn,
                                     precision=lax.Precision.HIGHEST)
        return y + b[None, :, None, None]

    def ln(x, g, bt):
        mu = jnp.mean(x, axis=(1, 2, 3), keepdims=True)
        var = jnp.mean((x - mu) ** 2, axis=(1, 2, 3), keepdims=True)
        return (x - mu) * lax.rsqrt(var + eps) * g[None] + bt[None]

    xcat = ln(conv(x_t, p['w_x'], p['b_x'], pad), p['g_x'], p['bt_x'])
    hcat = ln(conv(h_t, p['w_h'], p['b_h'], pad), p['g_h'], p['bt_h'])
    mcat = ln(conv(m_t, p['w_m'], p['b_m'], pad), p['g_m'], p['bt_m'])

    i_x, f_x, g_x, i_xp, f_xp, g_xp, o_x = jnp.split(xcat, 7, axis=1)
    i_h, f_h, g_h, o_h = jnp.split(hcat, 4, axis=1)
    i_m, f_m, g_m = jnp.split(mcat, 3, axis=1)

    i_t = jax.nn.sigmoid(i_x + i_h)
    f_t = jax.nn.sigmoid(f_x + f_h + forget_bias)
    g_t = jnp.tanh(g_x + g_h)
    c_new = f_t * c_t + i_t * g_t

    i_tp = jax.nn.sigmoid(i_xp + i_m)
    f_tp = jax.nn.sigmoid(f_xp + f_m + forget_bias)
    g_tp = jnp.tanh(g_xp + g_m)
    m_new = f_tp * m_t + i_tp * g_tp

    mem = jnp.concatenate([c_new, m_new], axis=1)
    oo = ln(conv(mem, p['w_o'], p['b_o'], pad), p['g_o'], p['bt_o'])
    o_t = jax.nn.sigmoid(o_x + o_h + oo)
    last = conv(mem, p['w_last'], p['b_last'], 0)
    h_new = o_t * jnp.tanh(last)
    return h_new, c_new, m_new


if __name__ == "__main__":
    # Small deterministic config: batch=2, in_channel=4, num_hidden=4,
    # spatial=16x16, filter=5, stride=1 (num_hidden < 8 also exercises the
    # padded-gate-slab path).
    B, Cx, NH, HW, K = 2, 4, 4, 16, 5

    key = jax.random.PRNGKey(0)
    ks = list(jax.random.split(key, 16))

    def nrm(k, shape, scale=1.0):
        return scale * jax.random.normal(k, shape, dtype=jnp.float32)

    x_t = nrm(ks[0], (B, Cx, HW, HW))
    h_t = nrm(ks[1], (B, NH, HW, HW))
    c_t = nrm(ks[2], (B, NH, HW, HW))
    m_t = nrm(ks[3], (B, NH, HW, HW))

    def conv_init(k, cout, cin):
        s = 1.0 / (cin * K * K) ** 0.5
        kw, kb = jax.random.split(k)
        return nrm(kw, (cout, cin, K, K), s), nrm(kb, (cout,), s)

    def ln_init(k, c):
        kg, kb = jax.random.split(k)
        return (1.0 + 0.1 * jax.random.normal(kg, (c, HW, HW), jnp.float32),
                0.1 * jax.random.normal(kb, (c, HW, HW), jnp.float32))

    w_x, b_x = conv_init(ks[4], 7 * NH, Cx)
    w_h, b_h = conv_init(ks[5], 4 * NH, NH)
    w_m, b_m = conv_init(ks[6], 3 * NH, NH)
    w_o, b_o = conv_init(ks[7], NH, 2 * NH)
    g_x, bt_x = ln_init(ks[8], 7 * NH)
    g_h, bt_h = ln_init(ks[9], 4 * NH)
    g_m, bt_m = ln_init(ks[10], 3 * NH)
    g_o, bt_o = ln_init(ks[11], NH)
    s_last = 1.0 / (2 * NH) ** 0.5
    w_last = nrm(ks[12], (NH, 2 * NH, 1, 1), s_last)
    b_last = nrm(ks[13], (NH,), s_last)

    params = dict(w_x=w_x, b_x=b_x, g_x=g_x, bt_x=bt_x,
                  w_h=w_h, b_h=b_h, g_h=g_h, bt_h=bt_h,
                  w_m=w_m, b_m=b_m, g_m=g_m, bt_m=bt_m,
                  w_o=w_o, b_o=b_o, g_o=g_o, bt_o=bt_o,
                  w_last=w_last, b_last=b_last)

    ref = _reference_forward(x_t, h_t, c_t, m_t, params, filter_size=K)

    # Primary (performance) path: bf16 MXU operands, f32 accumulate / VPU math.
    got_bf16 = st_lstm_cell_forward(x_t, h_t, c_t, m_t, params,
                                    filter_size=K, stride=1,
                                    matmul_dtype=jnp.bfloat16)
    got_bf16 = jax.block_until_ready(got_bf16)
    assert got_bf16[0].shape == (B, NH, HW, HW)
    for g_arr, r_arr in zip(got_bf16, ref):
        assert g_arr.shape == r_arr.shape
        err = jnp.max(jnp.abs(g_arr - r_arr) / (1.0 + jnp.abs(r_arr)))
        # bf16 matmul operands -> looser tolerance than the exact-f32 check below
        assert err < 1e-1, f"bf16 path error too large: {err}"

    # Exact-math cross-check: identical kernel structure with f32 MXU operands.
    got_f32 = st_lstm_cell_forward(x_t, h_t, c_t, m_t, params,
                                   filter_size=K, stride=1,
                                   matmul_dtype=jnp.float32)
    got_f32 = jax.block_until_ready(got_f32)
    for g_arr, r_arr in zip(got_f32, ref):
        assert jnp.max(jnp.abs(g_arr - r_arr)) < 2e-3

    print("KERNEL_OK")
</pallas_src>

<mosaic_0001>
module attributes {stable_mosaic.version = 11 : i64} {
  func.func @_st_lstm_kernel(%arg0: i32, %arg1: memref<2x32x256xf32, #tpu.memory_space<vmem>>, %arg2: memref<25x256xf32, #tpu.memory_space<vmem>>, %arg3: memref<112x800xbf16, #tpu.memory_space<vmem>>, %arg4: memref<112x1xf32, #tpu.memory_space<vmem>>, %arg5: memref<16x400xbf16, #tpu.memory_space<vmem>>, %arg6: memref<16x1xf32, #tpu.memory_space<vmem>>, %arg7: memref<120x256xf32, #tpu.memory_space<vmem>>, %arg8: memref<120x256xf32, #tpu.memory_space<vmem>>, %arg9: memref<2x8x256xf32, #tpu.memory_space<vmem>>, %arg10: memref<2x8x256xf32, #tpu.memory_space<vmem>>, %arg11: memref<2x8x256xf32, #tpu.memory_space<vmem>>, %arg12: memref<800x256xbf16, #tpu.memory_space<vmem>>) attributes {dimension_semantics = [#tpu.dimension_semantics<parallel>], iteration_bounds = array<i64: 1>, scalar_prefetch = 0 : i64, scratch_operands = 1 : i64, tpu.core_type = #tpu.core_type<tc>, window_params = [{transform_indices = @transform_0, window_bounds = array<i64: 2, 32, 256>}, {pipeline_mode = #tpu.pipeline_mode<synchronous>, transform_indices = @transform_1, window_bounds = array<i64: 25, 256>}, {pipeline_mode = #tpu.pipeline_mode<synchronous>, transform_indices = @transform_2, window_bounds = array<i64: 112, 800>}, {pipeline_mode = #tpu.pipeline_mode<synchronous>, transform_indices = @transform_3, window_bounds = array<i64: 112, 1>}, {pipeline_mode = #tpu.pipeline_mode<synchronous>, transform_indices = @transform_4, window_bounds = array<i64: 16, 400>}, {pipeline_mode = #tpu.pipeline_mode<synchronous>, transform_indices = @transform_5, window_bounds = array<i64: 16, 1>}, {pipeline_mode = #tpu.pipeline_mode<synchronous>, transform_indices = @transform_6, window_bounds = array<i64: 120, 256>}, {pipeline_mode = #tpu.pipeline_mode<synchronous>, transform_indices = @transform_7, window_bounds = array<i64: 120, 256>}, {transform_indices = @transform_8, window_bounds = array<i64: 2, 8, 256>}, {transform_indices = @transform_9, window_bounds = array<i64: 2, 8, 256>}, {transform_indices = @transform_10, window_bounds = array<i64: 2, 8, 256>}]} {
    %c0 = arith.constant 0 : index
    %c0_0 = arith.constant 0 : index
    %0 = vector.load %arg3[%c0, %c0_0] : memref<112x800xbf16, #tpu.memory_space<vmem>>, vector<112x800xbf16>
    %c0_1 = arith.constant 0 : index
    %c0_2 = arith.constant 0 : index
    %1 = vector.load %arg5[%c0_1, %c0_2] : memref<16x400xbf16, #tpu.memory_space<vmem>>, vector<16x400xbf16>
    %c0_3 = arith.constant 0 : index
    %c0_4 = arith.constant 0 : index
    %2 = vector.load %arg7[%c0_3, %c0_4] : memref<120x256xf32, #tpu.memory_space<vmem>>, vector<120x256xf32>
    %c0_5 = arith.constant 0 : index
    %c0_6 = arith.constant 0 : index
    %3 = vector.load %arg8[%c0_5, %c0_6] : memref<120x256xf32, #tpu.memory_space<vmem>>, vector<120x256xf32>
    %c0_7 = arith.constant 0 : index
    %c0_8 = arith.constant 0 : index
    %c0_9 = arith.constant 0 : index
    %4 = vector.load %arg1[%c0_7, %c0_8, %c0_9] : memref<2x32x256xf32, #tpu.memory_space<vmem>>, vector<1x32x256xf32>
    %5 = vector.shape_cast %4 : vector<1x32x256xf32> to vector<32x256xf32>
    %c34_i32 = arith.constant 34 : i32
    %6 = tpu.dynamic_rotate %5 by %c34_i32 dim 1 : vector<32x256xf32>, i32 -> vector<32x256xf32>
    %c0_10 = arith.constant 0 : index
    %c0_11 = arith.constant 0 : index
    %7 = vector.load %arg2[%c0_10, %c0_11] : memref<25x256xf32, #tpu.memory_space<vmem>>, vector<1x256xf32>
    %8 = vector.broadcast %7 : vector<1x256xf32> to vector<32x256xf32>
    %9 = arith.mulf %6, %8 : vector<32x256xf32>
    %10 = arith.truncf %9 : vector<32x256xf32> to vector<32x256xbf16>
    %c0_12 = arith.constant 0 : index
    %c0_13 = arith.constant 0 : index
    %11 = vector.load %arg12[%c0_12, %c0_13] : memref<800x256xbf16, #tpu.memory_space<vmem>>, vector<32x256xbf16>
    tpu.vector_store %arg12[%c0_12, %c0_13], %10 {strides = array<i32>} : memref<800x256xbf16, #tpu.memory_space<vmem>>, vector<32x256xbf16>,
    %c33_i32 = arith.constant 33 : i32
    %12 = tpu.dynamic_rotate %5 by %c33_i32 dim 1 : vector<32x256xf32>, i32 -> vector<32x256xf32>
    %c1 = arith.constant 1 : index
    %c0_14 = arith.constant 0 : index
    %13 = vector.load %arg2[%c1, %c0_14] : memref<25x256xf32, #tpu.memory_space<vmem>>, vector<1x256xf32>
    %14 = vector.broadcast %13 : vector<1x256xf32> to vector<32x256xf32>
    %15 = arith.mulf %12, %14 : vector<32x256xf32>
    %16 = arith.truncf %15 : vector<32x256xf32> to vector<32x256xbf16>
    %c32 = arith.constant 32 : index
    %c0_15 = arith.constant 0 : index
    %17 = vector.load %arg12[%c32, %c0_15] : memref<800x256xbf16, #tpu.memory_space<vmem>>, vector<32x256xbf16>
    tpu.vector_store %arg12[%c32, %c0_15], %16 {strides = array<i32>} : memref<800x256xbf16, #tpu.memory_space<vmem>>, vector<32x256xbf16>,
    %c32_i32 = arith.constant 32 : i32
    %18 = tpu.dynamic_rotate %5 by %c32_i32 dim 1 : vector<32x256xf32>, i32 -> vector<32x256xf32>
    %c2 = arith.constant 2 : index
    %c0_16 = arith.constant 0 : index
    %19 = vector.load %arg2[%c2, %c0_16] : memref<25x256xf32, #tpu.memory_space<vmem>>, vector<1x256xf32>
    %20 = vector.broadcast %19 : vector<1x256xf32> to vector<32x256xf32>
    %21 = arith.mulf %18, %20 : vector<32x256xf32>
    %22 = arith.truncf %21 : vector<32x256xf32> to vector<32x256xbf16>
    %c64 = arith.constant 64 : index
    %c0_17 = arith.constant 0 : index
    %23 = vector.load %arg12[%c64, %c0_17] : memref<800x256xbf16, #tpu.memory_space<vmem>>, vector<32x256xbf16>
    tpu.vector_store %arg12[%c64, %c0_17], %22 {strides = array<i32>} : memref<800x256xbf16, #tpu.memory_space<vmem>>, vector<32x256xbf16>,
    %c31_i32 = arith.constant 31 : i32
    %24 = tpu.dynamic_rotate %5 by %c31_i32 dim 1 : vector<32x256xf32>, i32 -> vector<32x256xf32>
    %c3 = arith.constant 3 : index
    %c0_18 = arith.constant 0 : index
    %25 = vector.load %arg2[%c3, %c0_18] : memref<25x256xf32, #tpu.memory_space<vmem>>, vector<1x256xf32>
    %26 = vector.broadcast %25 : vector<1x256xf32> to vector<32x256xf32>
    %27 = arith.mulf %24, %26 : vector<32x256xf32>
    %28 = arith.truncf %27 : vector<32x256xf32> to vector<32x256xbf16>
    %c96 = arith.constant 96 : index
    %c0_19 = arith.constant 0 : index
    %29 = vector.load %arg12[%c96, %c0_19] : memref<800x256xbf16, #tpu.memory_space<vmem>>, vector<32x256xbf16>
    tpu.vector_store %arg12[%c96, %c0_19], %28 {strides = array<i32>} : memref<800x256xbf16, #tpu.memory_space<vmem>>, vector<32x256xbf16>,
    %c30_i32 = arith.constant 30 : i32
    %30 = tpu.dynamic_rotate %5 by %c30_i32 dim 1 : vector<32x256xf32>, i32 -> vector<32x256xf32>
    %c4 = arith.constant 4 : index
    %c0_20 = arith.constant 0 : index
    %31 = vector.load %arg2[%c4, %c0_20] : memref<25x256xf32, #tpu.memory_space<vmem>>, vector<1x256xf32>
    %32 = vector.broadcast %31 : vector<1x256xf32> to vector<32x256xf32>
    %33 = arith.mulf %30, %32 : vector<32x256xf32>
    %34 = arith.truncf %33 : vector<32x256xf32> to vector<32x256xbf16>
    %c128 = arith.constant 128 : index
    %c0_21 = arith.constant 0 : index
    %35 = vector.load %arg12[%c128, %c0_21] : memref<800x256xbf16, #tpu.memory_space<vmem>>, vector<32x256xbf16>
    tpu.vector_store %arg12[%c128, %c0_21], %34 {strides = array<i32>} : memref<800x256xbf16, #tpu.memory_space<vmem>>, vector<32x256xbf16>,
    %c18_i32 = arith.constant 18 : i32
    %36 = tpu.dynamic_rotate %5 by %c18_i32 dim 1 : vector<32x256xf32>, i32 -> vector<32x256xf32>
    %c5 = arith.constant 5 : index
    %c0_22 = arith.constant 0 : index
    %37 = vector.load %arg2[%c5, %c0_22] : memref<25x256xf32, #tpu.memory_space<vmem>>, vector<1x256xf32>
    %38 = vector.broadcast %37 : vector<1x256xf32> to vector<32x256xf32>
    %39 = arith.mulf %36, %38 : vector<32x256xf32>
    %40 = arith.truncf %39 : vector<32x256xf32> to vector<32x256xbf16>
    %c160 = arith.constant 160 : index
    %c0_23 = arith.constant 0 : index
    %41 = vector.load %arg12[%c160, %c0_23] : memref<800x256xbf16, #tpu.memory_space<vmem>>, vector<32x256xbf16>
    tpu.vector_store %arg12[%c160, %c0_23], %40 {strides = array<i32>} : memref<800x256xbf16, #tpu.memory_space<vmem>>, vector<32x256xbf16>,
    %c17_i32 = arith.constant 17 : i32
    %42 = tpu.dynamic_rotate %5 by %c17_i32 dim 1 : vector<32x256xf32>, i32 -> vector<32x256xf32>
    %c6 = arith.constant 6 : index
    %c0_24 = arith.constant 0 : index
    %43 = vector.load %arg2[%c6, %c0_24] : memref<25x256xf32, #tpu.memory_space<vmem>>, vector<1x256xf32>
    %44 = vector.broadcast %43 : vector<1x256xf32> to vector<32x256xf32>
    %45 = arith.mulf %42, %44 : vector<32x256xf32>
    %46 = arith.truncf %45 : vector<32x256xf32> to vector<32x256xbf16>
    %c192 = arith.constant 192 : index
    %c0_25 = arith.constant 0 : index
    %47 = vector.load %arg12[%c192, %c0_25] : memref<800x256xbf16, #tpu.memory_space<vmem>>, vector<32x256xbf16>
    tpu.vector_store %arg12[%c192, %c0_25], %46 {strides = array<i32>} : memref<800x256xbf16, #tpu.memory_space<vmem>>, vector<32x256xbf16>,
    %c16_i32 = arith.constant 16 : i32
    %48 = tpu.dynamic_rotate %5 by %c16_i32 dim 1 : vector<32x256xf32>, i32 -> vector<32x256xf32>
    %c7 = arith.constant 7 : index
    %c0_26 = arith.constant 0 : index
    %49 = vector.load %arg2[%c7, %c0_26] : memref<25x256xf32, #tpu.memory_space<vmem>>, vector<1x256xf32>
    %50 = vector.broadcast %49 : vector<1x256xf32> to vector<32x256xf32>
    %51 = arith.mulf %48, %50 : vector<32x256xf32>
    %52 = arith.truncf %51 : vector<32x256xf32> to vector<32x256xbf16>
    %c224 = arith.constant 224 : index
    %c0_27 = arith.constant 0 : index
    %53 = vector.load %arg12[%c224, %c0_27] : memref<800x256xbf16, #tpu.memory_space<vmem>>, vector<32x256xbf16>
    tpu.vector_store %arg12[%c224, %c0_27], %52 {strides = array<i32>} : memref<800x256xbf16, #tpu.memory_space<vmem>>, vector<32x256xbf16>,
    %c15_i32 = arith.constant 15 : i32
    %54 = tpu.dynamic_rotate %5 by %c15_i32 dim 1 : vector<32x256xf32>, i32 -> vector<32x256xf32>
    %c8 = arith.constant 8 : index
    %c0_28 = arith.constant 0 : index
    %55 = vector.load %arg2[%c8, %c0_28] : memref<25x256xf32, #tpu.memory_space<vmem>>, vector<1x256xf32>
    %56 = vector.broadcast %55 : vector<1x256xf32> to vector<32x256xf32>
    %57 = arith.mulf %54, %56 : vector<32x256xf32>
    %58 = arith.truncf %57 : vector<32x256xf32> to vector<32x256xbf16>
    %c256 = arith.constant 256 : index
    %c0_29 = arith.constant 0 : index
    %59 = vector.load %arg12[%c256, %c0_29] : memref<800x256xbf16, #tpu.memory_space<vmem>>, vector<32x256xbf16>
    tpu.vector_store %arg12[%c256, %c0_29], %58 {strides = array<i32>} : memref<800x256xbf16, #tpu.memory_space<vmem>>, vector<32x256xbf16>,
    %c14_i32 = arith.constant 14 : i32
    %60 = tpu.dynamic_rotate %5 by %c14_i32 dim 1 : vector<32x256xf32>, i32 -> vector<32x256xf32>
    %c9 = arith.constant 9 : index
    %c0_30 = arith.constant 0 : index
    %61 = vector.load %arg2[%c9, %c0_30] : memref<25x256xf32, #tpu.memory_space<vmem>>, vector<1x256xf32>
    %62 = vector.broadcast %61 : vector<1x256xf32> to vector<32x256xf32>
    %63 = arith.mulf %60, %62 : vector<32x256xf32>
    %64 = arith.truncf %63 : vector<32x256xf32> to vector<32x256xbf16>
    %c288 = arith.constant 288 : index
    %c0_31 = arith.constant 0 : index
    %65 = vector.load %arg12[%c288, %c0_31] : memref<800x256xbf16, #tpu.memory_space<vmem>>, vector<32x256xbf16>
    tpu.vector_store %arg12[%c288, %c0_31], %64 {strides = array<i32>} : memref<800x256xbf16, #tpu.memory_space<vmem>>, vector<32x256xbf16>,
    %c2_i32 = arith.constant 2 : i32
    %66 = tpu.dynamic_rotate %5 by %c2_i32 dim 1 : vector<32x256xf32>, i32 -> vector<32x256xf32>
    %c10 = arith.constant 10 : index
    %c0_32 = arith.constant 0 : index
    %67 = vector.load %arg2[%c10, %c0_32] : memref<25x256xf32, #tpu.memory_space<vmem>>, vector<1x256xf32>
    %68 = vector.broadcast %67 : vector<1x256xf32> to vector<32x256xf32>
    %69 = arith.mulf %66, %68 : vector<32x256xf32>
    %70 = arith.truncf %69 : vector<32x256xf32> to vector<32x256xbf16>
    %c320 = arith.constant 320 : index
    %c0_33 = arith.constant 0 : index
    %71 = vector.load %arg12[%c320, %c0_33] : memref<800x256xbf16, #tpu.memory_space<vmem>>, vector<32x256xbf16>
    tpu.vector_store %arg12[%c320, %c0_33], %70 {strides = array<i32>} : memref<800x256xbf16, #tpu.memory_space<vmem>>, vector<32x256xbf16>,
    %c1_i32 = arith.constant 1 : i32
    %72 = tpu.dynamic_rotate %5 by %c1_i32 dim 1 : vector<32x256xf32>, i32 -> vector<32x256xf32>
    %c11 = arith.constant 11 : index
    %c0_34 = arith.constant 0 : index
    %73 = vector.load %arg2[%c11, %c0_34] : memref<25x256xf32, #tpu.memory_space<vmem>>, vector<1x256xf32>
    %74 = vector.broadcast %73 : vector<1x256xf32> to vector<32x256xf32>
    %75 = arith.mulf %72, %74 : vector<32x256xf32>
    %76 = arith.truncf %75 : vector<32x256xf32> to vector<32x256xbf16>
    %c352 = arith.constant 352 : index
    %c0_35 = arith.constant 0 : index
    %77 = vector.load %arg12[%c352, %c0_35] : memref<800x256xbf16, #tpu.memory_space<vmem>>, vector<32x256xbf16>
    tpu.vector_store %arg12[%c352, %c0_35], %76 {strides = array<i32>} : memref<800x256xbf16, #tpu.memory_space<vmem>>, vector<32x256xbf16>,
    %78 = arith.truncf %5 : vector<32x256xf32> to vector<32x256xbf16>
    %c384 = arith.constant 384 : index
    %c0_36 = arith.constant 0 : index
    %79 = vector.load %arg12[%c384, %c0_36] : memref<800x256xbf16, #tpu.memory_space<vmem>>, vector<32x256xbf16>
    tpu.vector_store %arg12[%c384, %c0_36], %78 {strides = array<i32>} : memref<800x256xbf16, #tpu.memory_space<vmem>>, vector<32x256xbf16>,
    %c255_i32 = arith.constant 255 : i32
    %80 = tpu.dynamic_rotate %5 by %c255_i32 dim 1 : vector<32x256xf32>, i32 -> vector<32x256xf32>
    %c13 = arith.constant 13 : index
    %c0_37 = arith.constant 0 : index
    %81 = vector.load %arg2[%c13, %c0_37] : memref<25x256xf32, #tpu.memory_space<vmem>>, vector<1x256xf32>
    %82 = vector.broadcast %81 : vector<1x256xf32> to vector<32x256xf32>
    %83 = arith.mulf %80, %82 : vector<32x256xf32>
    %84 = arith.truncf %83 : vector<32x256xf32> to vector<32x256xbf16>
    %c416 = arith.constant 416 : index
    %c0_38 = arith.constant 0 : index
    %85 = vector.load %arg12[%c416, %c0_38] : memref<800x256xbf16, #tpu.memory_space<vmem>>, vector<32x256xbf16>
    tpu.vector_store %arg12[%c416, %c0_38], %84 {strides = array<i32>} : memref<800x256xbf16, #tpu.memory_space<vmem>>, vector<32x256xbf16>,
    %c254_i32 = arith.constant 254 : i32
    %86 = tpu.dynamic_rotate %5 by %c254_i32 dim 1 : vector<32x256xf32>, i32 -> vector<32x256xf32>
    %c14 = arith.constant 14 : index
    %c0_39 = arith.constant 0 : index
    %87 = vector.load %arg2[%c14, %c0_39] : memref<25x256xf32, #tpu.memory_space<vmem>>, vector<1x256xf32>
    %88 = vector.broadcast %87 : vector<1x256xf32> to vector<32x256xf32>
    %89 = arith.mulf %86, %88 : vector<32x256xf32>
    %90 = arith.truncf %89 : vector<32x256xf32> to vector<32x256xbf16>
    %c448 = arith.constant 448 : index
    %c0_40 = arith.constant 0 : index
    %91 = vector.load %arg12[%c448, %c0_40] : memref<800x256xbf16, #tpu.memory_space<vmem>>, vector<32x256xbf16>
    tpu.vector_store %arg12[%c448, %c0_40], %90 {strides = array<i32>} : memref<800x256xbf16, #tpu.memory_space<vmem>>, vector<32x256xbf16>,
    %c242_i32 = arith.constant 242 : i32
    %92 = tpu.dynamic_rotate %5 by %c242_i32 dim 1 : vector<32x256xf32>, i32 -> vector<32x256xf32>
    %c15 = arith.constant 15 : index
    %c0_41 = arith.constant 0 : index
    %93 = vector.load %arg2[%c15, %c0_41] : memref<25x256xf32, #tpu.memory_space<vmem>>, vector<1x256xf32>
    %94 = vector.broadcast %93 : vector<1x256xf32> to vector<32x256xf32>
    %95 = arith.mulf %92, %94 : vector<32x256xf32>
    %96 = arith.truncf %95 : vector<32x256xf32> to vector<32x256xbf16>
    %c480 = arith.constant 480 : index
    %c0_42 = arith.constant 0 : index
    %97 = vector.load %arg12[%c480, %c0_42] : memref<800x256xbf16, #tpu.memory_space<vmem>>, vector<32x256xbf16>
    tpu.vector_store %arg12[%c480, %c0_42], %96 {strides = array<i32>} : memref<800x256xbf16, #tpu.memory_space<vmem>>, vector<32x256xbf16>,
    %c241_i32 = arith.constant 241 : i32
    %98 = tpu.dynamic_rotate %5 by %c241_i32 dim 1 : vector<32x256xf32>, i32 -> vector<32x256xf32>
    %c16 = arith.constant 16 : index
    %c0_43 = arith.constant 0 : index
    %99 = vector.load %arg2[%c16, %c0_43] : memref<25x256xf32, #tpu.memory_space<vmem>>, vector<1x256xf32>
    %100 = vector.broadcast %99 : vector<1x256xf32> to vector<32x256xf32>
    %101 = arith.mulf %98, %100 : vector<32x256xf32>
    %102 = arith.truncf %101 : vector<32x256xf32> to vector<32x256xbf16>
    %c512 = arith.constant 512 : index
    %c0_44 = arith.constant 0 : index
    %103 = vector.load %arg12[%c512, %c0_44] : memref<800x256xbf16, #tpu.memory_space<vmem>>, vector<32x256xbf16>
    tpu.vector_store %arg12[%c512, %c0_44], %102 {strides = array<i32>} : memref<800x256xbf16, #tpu.memory_space<vmem>>, vector<32x256xbf16>,
    %c240_i32 = arith.constant 240 : i32
    %104 = tpu.dynamic_rotate %5 by %c240_i32 dim 1 : vector<32x256xf32>, i32 -> vector<32x256xf32>
    %c17 = arith.constant 17 : index
    %c0_45 = arith.constant 0 : index
    %105 = vector.load %arg2[%c17, %c0_45] : memref<25x256xf32, #tpu.memory_space<vmem>>, vector<1x256xf32>
    %106 = vector.broadcast %105 : vector<1x256xf32> to vector<32x256xf32>
    %107 = arith.mulf %104, %106 : vector<32x256xf32>
    %108 = arith.truncf %107 : vector<32x256xf32> to vector<32x256xbf16>
    %c544 = arith.constant 544 : index
    %c0_46 = arith.constant 0 : index
    %109 = vector.load %arg12[%c544, %c0_46] : memref<800x256xbf16, #tpu.memory_space<vmem>>, vector<32x256xbf16>
    tpu.vector_store %arg12[%c544, %c0_46], %108 {strides = array<i32>} : memref<800x256xbf16, #tpu.memory_space<vmem>>, vector<32x256xbf16>,
    %c239_i32 = arith.constant 239 : i32
    %110 = tpu.dynamic_rotate %5 by %c239_i32 dim 1 : vector<32x256xf32>, i32 -> vector<32x256xf32>
    %c18 = arith.constant 18 : index
    %c0_47 = arith.constant 0 : index
    %111 = vector.load %arg2[%c18, %c0_47] : memref<25x256xf32, #tpu.memory_space<vmem>>, vector<1x256xf32>
    %112 = vector.broadcast %111 : vector<1x256xf32> to vector<32x256xf32>
    %113 = arith.mulf %110, %112 : vector<32x256xf32>
    %114 = arith.truncf %113 : vector<32x256xf32> to vector<32x256xbf16>
    %c576 = arith.constant 576 : index
    %c0_48 = arith.constant 0 : index
    %115 = vector.load %arg12[%c576, %c0_48] : memref<800x256xbf16, #tpu.memory_space<vmem>>, vector<32x256xbf16>
    tpu.vector_store %arg12[%c576, %c0_48], %114 {strides = array<i32>} : memref<800x256xbf16, #tpu.memory_space<vmem>>, vector<32x256xbf16>,
    %c238_i32 = arith.constant 238 : i32
    %116 = tpu.dynamic_rotate %5 by %c238_i32 dim 1 : vector<32x256xf32>, i32 -> vector<32x256xf32>
    %c19 = arith.constant 19 : index
    %c0_49 = arith.constant 0 : index
    %117 = vector.load %arg2[%c19, %c0_49] : memref<25x256xf32, #tpu.memory_space<vmem>>, vector<1x256xf32>
    %118 = vector.broadcast %117 : vector<1x256xf32> to vector<32x256xf32>
    %119 = arith.mulf %116, %118 : vector<32x256xf32>
    %120 = arith.truncf %119 : vector<32x256xf32> to vector<32x256xbf16>
    %c608 = arith.constant 608 : index
    %c0_50 = arith.constant 0 : index
    %121 = vector.load %arg12[%c608, %c0_50] : memref<800x256xbf16, #tpu.memory_space<vmem>>, vector<32x256xbf16>
    tpu.vector_store %arg12[%c608, %c0_50], %120 {strides = array<i32>} : memref<800x256xbf16, #tpu.memory_space<vmem>>, vector<32x256xbf16>,
    %c226_i32 = arith.constant 226 : i32
    %122 = tpu.dynamic_rotate %5 by %c226_i32 dim 1 : vector<32x256xf32>, i32 -> vector<32x256xf32>
    %c20 = arith.constant 20 : index
    %c0_51 = arith.constant 0 : index
    %123 = vector.load %arg2[%c20, %c0_51] : memref<25x256xf32, #tpu.memory_space<vmem>>, vector<1x256xf32>
    %124 = vector.broadcast %123 : vector<1x256xf32> to vector<32x256xf32>
    %125 = arith.mulf %122, %124 : vector<32x256xf32>
    %126 = arith.truncf %125 : vector<32x256xf32> to vector<32x256xbf16>
    %c640 = arith.constant 640 : index
    %c0_52 = arith.constant 0 : index
    %127 = vector.load %arg12[%c640, %c0_52] : memref<800x256xbf16, #tpu.memory_space<vmem>>, vector<32x256xbf16>
    tpu.vector_store %arg12[%c640, %c0_52], %126 {strides = array<i32>} : memref<800x256xbf16, #tpu.memory_space<vmem>>, vector<32x256xbf16>,
    %c225_i32 = arith.constant 225 : i32
    %128 = tpu.dynamic_rotate %5 by %c225_i32 dim 1 : vector<32x256xf32>, i32 -> vector<32x256xf32>
    %c21 = arith.constant 21 : index
    %c0_53 = arith.constant 0 : index
    %129 = vector.load %arg2[%c21, %c0_53] : memref<25x256xf32, #tpu.memory_space<vmem>>, vector<1x256xf32>
    %130 = vector.broadcast %129 : vector<1x256xf32> to vector<32x256xf32>
    %131 = arith.mulf %128, %130 : vector<32x256xf32>
    %132 = arith.truncf %131 : vector<32x256xf32> to vector<32x256xbf16>
    %c672 = arith.constant 672 : index
    %c0_54 = arith.constant 0 : index
    %133 = vector.load %arg12[%c672, %c0_54] : memref<800x256xbf16, #tpu.memory_space<vmem>>, vector<32x256xbf16>
    tpu.vector_store %arg12[%c672, %c0_54], %132 {strides = array<i32>} : memref<800x256xbf16, #tpu.memory_space<vmem>>, vector<32x256xbf16>,
    %c224_i32 = arith.constant 224 : i32
    %134 = tpu.dynamic_rotate %5 by %c224_i32 dim 1 : vector<32x256xf32>, i32 -> vector<32x256xf32>
    %c22 = arith.constant 22 : index
    %c0_55 = arith.constant 0 : index
    %135 = vector.load %arg2[%c22, %c0_55] : memref<25x256xf32, #tpu.memory_space<vmem>>, vector<1x256xf32>
    %136 = vector.broadcast %135 : vector<1x256xf32> to vector<32x256xf32>
    %137 = arith.mulf %134, %136 : vector<32x256xf32>
    %138 = arith.truncf %137 : vector<32x256xf32> to vector<32x256xbf16>
    %c704 = arith.constant 704 : index
    %c0_56 = arith.constant 0 : index
    %139 = vector.load %arg12[%c704, %c0_56] : memref<800x256xbf16, #tpu.memory_space<vmem>>, vector<32x256xbf16>
    tpu.vector_store %arg12[%c704, %c0_56], %138 {strides = array<i32>} : memref<800x256xbf16, #tpu.memory_space<vmem>>, vector<32x256xbf16>,
    %c223_i32 = arith.constant 223 : i32
    %140 = tpu.dynamic_rotate %5 by %c223_i32 dim 1 : vector<32x256xf32>, i32 -> vector<32x256xf32>
    %c23 = arith.constant 23 : index
    %c0_57 = arith.constant 0 : index
    %141 = vector.load %arg2[%c23, %c0_57] : memref<25x256xf32, #tpu.memory_space<vmem>>, vector<1x256xf32>
    %142 = vector.broadcast %141 : vector<1x256xf32> to vector<32x256xf32>
    %143 = arith.mulf %140, %142 : vector<32x256xf32>
    %144 = arith.truncf %143 : vector<32x256xf32> to vector<32x256xbf16>
    %c736 = arith.constant 736 : index
    %c0_58 = arith.constant 0 : index
    %145 = vector.load %arg12[%c736, %c0_58] : memref<800x256xbf16, #tpu.memory_space<vmem>>, vector<32x256xbf16>
    tpu.vector_store %arg12[%c736, %c0_58], %144 {strides = array<i32>} : memref<800x256xbf16, #tpu.memory_space<vmem>>, vector<32x256xbf16>,
    %c222_i32 = arith.constant 222 : i32
    %146 = tpu.dynamic_rotate %5 by %c222_i32 dim 1 : vector<32x256xf32>, i32 -> vector<32x256xf32>
    %c24 = arith.constant 24 : index
    %c0_59 = arith.constant 0 : index
    %147 = vector.load %arg2[%c24, %c0_59] : memref<25x256xf32, #tpu.memory_space<vmem>>, vector<1x256xf32>
    %148 = vector.broadcast %147 : vector<1x256xf32> to vector<32x256xf32>
    %149 = arith.mulf %146, %148 : vector<32x256xf32>
    %150 = arith.truncf %149 : vector<32x256xf32> to vector<32x256xbf16>
    %c768 = arith.constant 768 : index
    %c0_60 = arith.constant 0 : index
    %151 = vector.load %arg12[%c768, %c0_60] : memref<800x256xbf16, #tpu.memory_space<vmem>>, vector<32x256xbf16>
    tpu.vector_store %arg12[%c768, %c0_60], %150 {strides = array<i32>} : memref<800x256xbf16, #tpu.memory_space<vmem>>, vector<32x256xbf16>,
    %c0_61 = arith.constant 0 : index
    %c0_62 = arith.constant 0 : index
    %152 = vector.load %arg12[%c0_61, %c0_62] : memref<800x256xbf16, #tpu.memory_space<vmem>>, vector<800x256xbf16>
    %cst = arith.constant dense<0.000000e+00> : vector<112x256xf32>
    %153 = tpu.matmul %0, %152, %cst {dimension_numbers = #tpu.dot_dimension_numbers<[1], [0], [0], [1], [0, 0, 1, 1], [], []>} : vector<112x800xbf16>, vector<800x256xbf16>, vector<112x256xf32> -> vector<112x256xf32>
    %c0_63 = arith.constant 0 : index
    %c0_64 = arith.constant 0 : index
    %154 = vector.load %arg4[%c0_63, %c0_64] : memref<112x1xf32, #tpu.memory_space<vmem>>, vector<112x1xf32>
    %155 = vector.broadcast %154 : vector<112x1xf32> to vector<112x256xf32>
    %156 = arith.addf %153, %155 : vector<112x256xf32>
    %157 = vector.extract_strided_slice %156 {offsets = [0, 0], sizes = [56, 256], strides = [1, 1]} : vector<112x256xf32> to vector<56x256xf32>
    %158 = vector.extract_strided_slice %2 {offsets = [0, 0], sizes = [56, 256], strides = [1, 1]} : vector<120x256xf32> to vector<56x256xf32>
    %159 = vector.extract_strided_slice %3 {offsets = [0, 0], sizes = [56, 256], strides = [1, 1]} : vector<120x256xf32> to vector<56x256xf32>
    %160 = vector.shape_cast %157 : vector<56x256xf32> to vector<1x56x256xf32>
    %cst_65 = arith.constant dense<0.000000e+00> : vector<1xf32>
    %161 = vector.multi_reduction <add>, %160, %cst_65 [1, 2] : vector<1x56x256xf32> to vector<1xf32>
    %162 = vector.shape_cast %161 : vector<1xf32> to vector<1x1x1xf32>
    %163 = vector.extract %162[0, 0, 0] : f32 from vector<1x1x1xf32>
    %164 = vector.broadcast %163 : f32 to vector<1x1xf32>
    %cst_66 = arith.constant 1.39508935E-4 : f32
    %165 = vector.broadcast %cst_66 : f32 to vector<1x1xf32>
    %166 = arith.mulf %164, %165 : vector<1x1xf32>
    %167 = arith.mulf %157, %157 : vector<56x256xf32>
    %168 = vector.shape_cast %167 : vector<56x256xf32> to vector<1x56x256xf32>
    %cst_67 = arith.constant dense<0.000000e+00> : vector<1xf32>
    %169 = vector.multi_reduction <add>, %168, %cst_67 [1, 2] : vector<1x56x256xf32> to vector<1xf32>
    %170 = vector.shape_cast %169 : vector<1xf32> to vector<1x1x1xf32>
    %171 = vector.extract %170[0, 0, 0] : f32 from vector<1x1x1xf32>
    %172 = vector.broadcast %171 : f32 to vector<1x1xf32>
    %cst_68 = arith.constant 1.39508935E-4 : f32
    %173 = vector.broadcast %cst_68 : f32 to vector<1x1xf32>
    %174 = arith.mulf %172, %173 : vector<1x1xf32>
    %175 = arith.mulf %166, %166 : vector<1x1xf32>
    %176 = arith.subf %174, %175 : vector<1x1xf32>
    %177 = vector.broadcast %166 : vector<1x1xf32> to vector<56x256xf32>
    %178 = arith.subf %157, %177 : vector<56x256xf32>
    %cst_69 = arith.constant 9.99999974E-6 : f32
    %179 = vector.broadcast %cst_69 : f32 to vector<1x1xf32>
    %180 = arith.addf %176, %179 : vector<1x1xf32>
    %181 = math.rsqrt %180 : vector<1x1xf32>
    %182 = vector.broadcast %181 : vector<1x1xf32> to vector<56x256xf32>
    %183 = arith.mulf %178, %182 : vector<56x256xf32>
    %184 = arith.mulf %183, %158 : vector<56x256xf32>
    %185 = arith.addf %184, %159 : vector<56x256xf32>
    %186 = vector.extract_strided_slice %156 {offsets = [56, 0], sizes = [32, 256], strides = [1, 1]} : vector<112x256xf32> to vector<32x256xf32>
    %187 = vector.extract_strided_slice %2 {offsets = [56, 0], sizes = [32, 256], strides = [1, 1]} : vector<120x256xf32> to vector<32x256xf32>
    %188 = vector.extract_strided_slice %3 {offsets = [56, 0], sizes = [32, 256], strides = [1, 1]} : vector<120x256xf32> to vector<32x256xf32>
    %189 = vector.shape_cast %186 : vector<32x256xf32> to vector<1x32x256xf32>
    %cst_70 = arith.constant dense<0.000000e+00> : vector<1xf32>
    %190 = vector.multi_reduction <add>, %189, %cst_70 [1, 2] : vector<1x32x256xf32> to vector<1xf32>
    %191 = vector.shape_cast %190 : vector<1xf32> to vector<1x1x1xf32>
    %192 = vector.extract %191[0, 0, 0] : f32 from vector<1x1x1xf32>
    %193 = vector.broadcast %192 : f32 to vector<1x1xf32>
    %cst_71 = arith.constant 2.44140625E-4 : f32
    %194 = vector.broadcast %cst_71 : f32 to vector<1x1xf32>
    %195 = arith.mulf %193, %194 : vector<1x1xf32>
    %196 = arith.mulf %186, %186 : vector<32x256xf32>
    %197 = vector.shape_cast %196 : vector<32x256xf32> to vector<1x32x256xf32>
    %cst_72 = arith.constant dense<0.000000e+00> : vector<1xf32>
    %198 = vector.multi_reduction <add>, %197, %cst_72 [1, 2] : vector<1x32x256xf32> to vector<1xf32>
    %199 = vector.shape_cast %198 : vector<1xf32> to vector<1x1x1xf32>
    %200 = vector.extract %199[0, 0, 0] : f32 from vector<1x1x1xf32>
    %201 = vector.broadcast %200 : f32 to vector<1x1xf32>
    %cst_73 = arith.constant 2.44140625E-4 : f32
    %202 = vector.broadcast %cst_73 : f32 to vector<1x1xf32>
    %203 = arith.mulf %201, %202 : vector<1x1xf32>
    %204 = arith.mulf %195, %195 : vector<1x1xf32>
    %205 = arith.subf %203, %204 : vector<1x1xf32>
    %206 = vector.broadcast %195 : vector<1x1xf32> to vector<32x256xf32>
    %207 = arith.subf %186, %206 : vector<32x256xf32>
    %cst_74 = arith.constant 9.99999974E-6 : f32
    %208 = vector.broadcast %cst_74 : f32 to vector<1x1xf32>
    %209 = arith.addf %205, %208 : vector<1x1xf32>
    %210 = math.rsqrt %209 : vector<1x1xf32>
    %211 = vector.broadcast %210 : vector<1x1xf32> to vector<32x256xf32>
    %212 = arith.mulf %207, %211 : vector<32x256xf32>
    %213 = arith.mulf %212, %187 : vector<32x256xf32>
    %214 = arith.addf %213, %188 : vector<32x256xf32>
    %215 = vector.extract_strided_slice %156 {offsets = [88, 0], sizes = [24, 256], strides = [1, 1]} : vector<112x256xf32> to vector<24x256xf32>
    %216 = vector.extract_strided_slice %2 {offsets = [88, 0], sizes = [24, 256], strides = [1, 1]} : vector<120x256xf32> to vector<24x256xf32>
    %217 = vector.extract_strided_slice %3 {offsets = [88, 0], sizes = [24, 256], strides = [1, 1]} : vector<120x256xf32> to vector<24x256xf32>
    %218 = vector.shape_cast %215 : vector<24x256xf32> to vector<1x24x256xf32>
    %cst_75 = arith.constant dense<0.000000e+00> : vector<1xf32>
    %219 = vector.multi_reduction <add>, %218, %cst_75 [1, 2] : vector<1x24x256xf32> to vector<1xf32>
    %220 = vector.shape_cast %219 : vector<1xf32> to vector<1x1x1xf32>
    %221 = vector.extract %220[0, 0, 0] : f32 from vector<1x1x1xf32>
    %222 = vector.broadcast %221 : f32 to vector<1x1xf32>
    %cst_76 = arith.constant 3.25520843E-4 : f32
    %223 = vector.broadcast %cst_76 : f32 to vector<1x1xf32>
    %224 = arith.mulf %222, %223 : vector<1x1xf32>
    %225 = arith.mulf %215, %215 : vector<24x256xf32>
    %226 = vector.shape_cast %225 : vector<24x256xf32> to vector<1x24x256xf32>
    %cst_77 = arith.constant dense<0.000000e+00> : vector<1xf32>
    %227 = vector.multi_reduction <add>, %226, %cst_77 [1, 2] : vector<1x24x256xf32> to vector<1xf32>
    %228 = vector.shape_cast %227 : vector<1xf32> to vector<1x1x1xf32>
    %229 = vector.extract %228[0, 0, 0] : f32 from vector<1x1x1xf32>
    %230 = vector.broadcast %229 : f32 to vector<1x1xf32>
    %cst_78 = arith.constant 3.25520843E-4 : f32
    %231 = vector.broadcast %cst_78 : f32 to vector<1x1xf32>
    %232 = arith.mulf %230, %231 : vector<1x1xf32>
    %233 = arith.mulf %224, %224 : vector<1x1xf32>
    %234 = arith.subf %232, %233 : vector<1x1xf32>
    %235 = vector.broadcast %224 : vector<1x1xf32> to vector<24x256xf32>
    %236 = arith.subf %215, %235 : vector<24x256xf32>
    %cst_79 = arith.constant 9.99999974E-6 : f32
    %237 = vector.broadcast %cst_79 : f32 to vector<1x1xf32>
    %238 = arith.addf %234, %237 : vector<1x1xf32>
    %239 = math.rsqrt %238 : vector<1x1xf32>
    %240 = vector.broadcast %239 : vector<1x1xf32> to vector<24x256xf32>
    %241 = arith.mulf %236, %240 : vector<24x256xf32>
    %242 = arith.mulf %241, %216 : vector<24x256xf32>
    %243 = arith.addf %242, %217 : vector<24x256xf32>
    %244 = vector.extract_strided_slice %185 {offsets = [0, 0], sizes = [8, 256], strides = [1, 1]} : vector<56x256xf32> to vector<8x256xf32>
    %245 = vector.extract_strided_slice %185 {offsets = [8, 0], sizes = [8, 256], strides = [1, 1]} : vector<56x256xf32> to vector<8x256xf32>
    %246 = vector.extract_strided_slice %185 {offsets = [16, 0], sizes = [8, 256], strides = [1, 1]} : vector<56x256xf32> to vector<8x256xf32>
    %247 = vector.extract_strided_slice %185 {offsets = [24, 0], sizes = [8, 256], strides = [1, 1]} : vector<56x256xf32> to vector<8x256xf32>
    %248 = vector.extract_strided_slice %185 {offsets = [32, 0], sizes = [8, 256], strides = [1, 1]} : vector<56x256xf32> to vector<8x256xf32>
    %249 = vector.extract_strided_slice %185 {offsets = [40, 0], sizes = [8, 256], strides = [1, 1]} : vector<56x256xf32> to vector<8x256xf32>
    %250 = vector.extract_strided_slice %185 {offsets = [48, 0], sizes = [8, 256], strides = [1, 1]} : vector<56x256xf32> to vector<8x256xf32>
    %251 = vector.extract_strided_slice %214 {offsets = [0, 0], sizes = [8, 256], strides = [1, 1]} : vector<32x256xf32> to vector<8x256xf32>
    %252 = vector.extract_strided_slice %214 {offsets = [8, 0], sizes = [8, 256], strides = [1, 1]} : vector<32x256xf32> to vector<8x256xf32>
    %253 = vector.extract_strided_slice %214 {offsets = [16, 0], sizes = [8, 256], strides = [1, 1]} : vector<32x256xf32> to vector<8x256xf32>
    %254 = vector.extract_strided_slice %214 {offsets = [24, 0], sizes = [8, 256], strides = [1, 1]} : vector<32x256xf32> to vector<8x256xf32>
    %255 = vector.extract_strided_slice %243 {offsets = [0, 0], sizes = [8, 256], strides = [1, 1]} : vector<24x256xf32> to vector<8x256xf32>
    %256 = vector.extract_strided_slice %243 {offsets = [8, 0], sizes = [8, 256], strides = [1, 1]} : vector<24x256xf32> to vector<8x256xf32>
    %257 = vector.extract_strided_slice %243 {offsets = [16, 0], sizes = [8, 256], strides = [1, 1]} : vector<24x256xf32> to vector<8x256xf32>
    %258 = arith.addf %250, %254 : vector<8x256xf32>
    %259 = vector.extract_strided_slice %5 {offsets = [12, 0], sizes = [8, 256], strides = [1, 1]} : vector<32x256xf32> to vector<8x256xf32>
    %260 = vector.extract_strided_slice %5 {offsets = [20, 0], sizes = [8, 256], strides = [1, 1]} : vector<32x256xf32> to vector<8x256xf32>
    %261 = arith.addf %244, %251 : vector<8x256xf32>
    %262 = arith.negf %261 : vector<8x256xf32>
    %263 = math.exp %262 : vector<8x256xf32>
    %cst_80 = arith.constant 1.000000e+00 : f32
    %264 = vector.broadcast %cst_80 : f32 to vector<8x256xf32>
    %265 = arith.addf %264, %263 : vector<8x256xf32>
    %266 = arith.divf %264, %265 : vector<8x256xf32>
    %267 = arith.addf %245, %252 : vector<8x256xf32>
    %cst_81 = arith.constant 1.000000e+00 : f32
    %268 = vector.broadcast %cst_81 : f32 to vector<8x256xf32>
    %269 = arith.addf %267, %268 : vector<8x256xf32>
    %270 = arith.negf %269 : vector<8x256xf32>
    %271 = math.exp %270 : vector<8x256xf32>
    %cst_82 = arith.constant 1.000000e+00 : f32
    %272 = vector.broadcast %cst_82 : f32 to vector<8x256xf32>
    %273 = arith.addf %272, %271 : vector<8x256xf32>
    %274 = arith.divf %272, %273 : vector<8x256xf32>
    %275 = arith.addf %246, %253 : vector<8x256xf32>
    %276 = math.tanh %275 : vector<8x256xf32>
    %277 = arith.mulf %274, %260 : vector<8x256xf32>
    %278 = arith.mulf %266, %276 : vector<8x256xf32>
    %279 = arith.addf %277, %278 : vector<8x256xf32>
    %c0_83 = arith.constant 0 : index
    %c0_84 = arith.constant 0 : index
    %c0_85 = arith.constant 0 : index
    %280 = vector.load %arg10[%c0_83, %c0_84, %c0_85] : memref<2x8x256xf32, #tpu.memory_space<vmem>>, vector<1x8x256xf32>
    %281 = vector.shape_cast %280 : vector<1x8x256xf32> to vector<8x256xf32>
    %282 = vector.shape_cast %279 : vector<8x256xf32> to vector<1x8x256xf32>
    tpu.vector_store %arg10[%c0_83, %c0_84, %c0_85], %282 {strides = array<i32>} : memref<2x8x256xf32, #tpu.memory_space<vmem>>, vector<1x8x256xf32>,
    %283 = arith.addf %247, %255 : vector<8x256xf32>
    %284 = arith.negf %283 : vector<8x256xf32>
    %285 = math.exp %284 : vector<8x256xf32>
    %cst_86 = arith.constant 1.000000e+00 : f32
    %286 = vector.broadcast %cst_86 : f32 to vector<8x256xf32>
    %287 = arith.addf %286, %285 : vector<8x256xf32>
    %288 = arith.divf %286, %287 : vector<8x256xf32>
    %289 = arith.addf %248, %256 : vector<8x256xf32>
    %cst_87 = arith.constant 1.000000e+00 : f32
    %290 = vector.broadcast %cst_87 : f32 to vector<8x256xf32>
    %291 = arith.addf %289, %290 : vector<8x256xf32>
    %292 = arith.negf %291 : vector<8x256xf32>
    %293 = math.exp %292 : vector<8x256xf32>
    %cst_88 = arith.constant 1.000000e+00 : f32
    %294 = vector.broadcast %cst_88 : f32 to vector<8x256xf32>
    %295 = arith.addf %294, %293 : vector<8x256xf32>
    %296 = arith.divf %294, %295 : vector<8x256xf32>
    %297 = arith.addf %249, %257 : vector<8x256xf32>
    %298 = math.tanh %297 : vector<8x256xf32>
    %299 = arith.mulf %296, %259 : vector<8x256xf32>
    %300 = arith.mulf %288, %298 : vector<8x256xf32>
    %301 = arith.addf %299, %300 : vector<8x256xf32>
    %c0_89 = arith.constant 0 : index
    %c0_90 = arith.constant 0 : index
    %c0_91 = arith.constant 0 : index
    %302 = vector.load %arg11[%c0_89, %c0_90, %c0_91] : memref<2x8x256xf32, #tpu.memory_space<vmem>>, vector<1x8x256xf32>
    %303 = vector.shape_cast %302 : vector<1x8x256xf32> to vector<8x256xf32>
    %304 = vector.shape_cast %301 : vector<8x256xf32> to vector<1x8x256xf32>
    tpu.vector_store %arg11[%c0_89, %c0_90, %c0_91], %304 {strides = array<i32>} : memref<2x8x256xf32, #tpu.memory_space<vmem>>, vector<1x8x256xf32>,
    %305 = tpu.concatenate %279, %301 in 0 : vector<8x256xf32>, vector<8x256xf32> -> vector<16x256xf32>
    %c34_i32_92 = arith.constant 34 : i32
    %306 = tpu.dynamic_rotate %305 by %c34_i32_92 dim 1 : vector<16x256xf32>, i32 -> vector<16x256xf32>
    %c0_93 = arith.constant 0 : index
    %c0_94 = arith.constant 0 : index
    %307 = vector.load %arg2[%c0_93, %c0_94] : memref<25x256xf32, #tpu.memory_space<vmem>>, vector<1x256xf32>
    %308 = vector.broadcast %307 : vector<1x256xf32> to vector<16x256xf32>
    %309 = arith.mulf %306, %308 : vector<16x256xf32>
    %310 = arith.truncf %309 : vector<16x256xf32> to vector<16x256xbf16>
    %c0_95 = arith.constant 0 : index
    %c0_96 = arith.constant 0 : index
    %311 = vector.load %arg12[%c0_95, %c0_96] : memref<800x256xbf16, #tpu.memory_space<vmem>>, vector<16x256xbf16>
    tpu.vector_store %arg12[%c0_95, %c0_96], %310 {strides = array<i32>} : memref<800x256xbf16, #tpu.memory_space<vmem>>, vector<16x256xbf16>,
    %c33_i32_97 = arith.constant 33 : i32
    %312 = tpu.dynamic_rotate %305 by %c33_i32_97 dim 1 : vector<16x256xf32>, i32 -> vector<16x256xf32>
    %c1_98 = arith.constant 1 : index
    %c0_99 = arith.constant 0 : index
    %313 = vector.load %arg2[%c1_98, %c0_99] : memref<25x256xf32, #tpu.memory_space<vmem>>, vector<1x256xf32>
    %314 = vector.broadcast %313 : vector<1x256xf32> to vector<16x256xf32>
    %315 = arith.mulf %312, %314 : vector<16x256xf32>
    %316 = arith.truncf %315 : vector<16x256xf32> to vector<16x256xbf16>
    %c16_100 = arith.constant 16 : index
    %c0_101 = arith.constant 0 : index
    %317 = vector.load %arg12[%c16_100, %c0_101] : memref<800x256xbf16, #tpu.memory_space<vmem>>, vector<16x256xbf16>
    tpu.vector_store %arg12[%c16_100, %c0_101], %316 {strides = array<i32>} : memref<800x256xbf16, #tpu.memory_space<vmem>>, vector<16x256xbf16>,
    %c32_i32_102 = arith.constant 32 : i32
    %318 = tpu.dynamic_rotate %305 by %c32_i32_102 dim 1 : vector<16x256xf32>, i32 -> vector<16x256xf32>
    %c2_103 = arith.constant 2 : index
    %c0_104 = arith.constant 0 : index
    %319 = vector.load %arg2[%c2_103, %c0_104] : memref<25x256xf32, #tpu.memory_space<vmem>>, vector<1x256xf32>
    %320 = vector.broadcast %319 : vector<1x256xf32> to vector<16x256xf32>
    %321 = arith.mulf %318, %320 : vector<16x256xf32>
    %322 = arith.truncf %321 : vector<16x256xf32> to vector<16x256xbf16>
    %c32_105 = arith.constant 32 : index
    %c0_106 = arith.constant 0 : index
    %323 = vector.load %arg12[%c32_105, %c0_106] : memref<800x256xbf16, #tpu.memory_space<vmem>>, vector<16x256xbf16>
    tpu.vector_store %arg12[%c32_105, %c0_106], %322 {strides = array<i32>} : memref<800x256xbf16, #tpu.memory_space<vmem>>, vector<16x256xbf16>,
    %c31_i32_107 = arith.constant 31 : i32
    %324 = tpu.dynamic_rotate %305 by %c31_i32_107 dim 1 : vector<16x256xf32>, i32 -> vector<16x256xf32>
    %c3_108 = arith.constant 3 : index
    %c0_109 = arith.constant 0 : index
    %325 = vector.load %arg2[%c3_108, %c0_109] : memref<25x256xf32, #tpu.memory_space<vmem>>, vector<1x256xf32>
    %326 = vector.broadcast %325 : vector<1x256xf32> to vector<16x256xf32>
    %327 = arith.mulf %324, %326 : vector<16x256xf32>
    %328 = arith.truncf %327 : vector<16x256xf32> to vector<16x256xbf16>
    %c48 = arith.constant 48 : index
    %c0_110 = arith.constant 0 : index
    %329 = vector.load %arg12[%c48, %c0_110] : memref<800x256xbf16, #tpu.memory_space<vmem>>, vector<16x256xbf16>
    tpu.vector_store %arg12[%c48, %c0_110], %328 {strides = array<i32>} : memref<800x256xbf16, #tpu.memory_space<vmem>>, vector<16x256xbf16>,
    %c30_i32_111 = arith.constant 30 : i32
    %330 = tpu.dynamic_rotate %305 by %c30_i32_111 dim 1 : vector<16x256xf32>, i32 -> vector<16x256xf32>
    %c4_112 = arith.constant 4 : index
    %c0_113 = arith.constant 0 : index
    %331 = vector.load %arg2[%c4_112, %c0_113] : memref<25x256xf32, #tpu.memory_space<vmem>>, vector<1x256xf32>
    %332 = vector.broadcast %331 : vector<1x256xf32> to vector<16x256xf32>
    %333 = arith.mulf %330, %332 : vector<16x256xf32>
    %334 = arith.truncf %333 : vector<16x256xf32> to vector<16x256xbf16>
    %c64_114 = arith.constant 64 : index
    %c0_115 = arith.constant 0 : index
    %335 = vector.load %arg12[%c64_114, %c0_115] : memref<800x256xbf16, #tpu.memory_space<vmem>>, vector<16x256xbf16>
    tpu.vector_store %arg12[%c64_114, %c0_115], %334 {strides = array<i32>} : memref<800x256xbf16, #tpu.memory_space<vmem>>, vector<16x256xbf16>,
    %c18_i32_116 = arith.constant 18 : i32
    %336 = tpu.dynamic_rotate %305 by %c18_i32_116 dim 1 : vector<16x256xf32>, i32 -> vector<16x256xf32>
    %c5_117 = arith.constant 5 : index
    %c0_118 = arith.constant 0 : index
    %337 = vector.load %arg2[%c5_117, %c0_118] : memref<25x256xf32, #tpu.memory_space<vmem>>, vector<1x256xf32>
    %338 = vector.broadcast %337 : vector<1x256xf32> to vector<16x256xf32>
    %339 = arith.mulf %336, %338 : vector<16x256xf32>
    %340 = arith.truncf %339 : vector<16x256xf32> to vector<16x256xbf16>
    %c80 = arith.constant 80 : index
    %c0_119 = arith.constant 0 : index
    %341 = vector.load %arg12[%c80, %c0_119] : memref<800x256xbf16, #tpu.memory_space<vmem>>, vector<16x256xbf16>
    tpu.vector_store %arg12[%c80, %c0_119], %340 {strides = array<i32>} : memref<800x256xbf16, #tpu.memory_space<vmem>>, vector<16x256xbf16>,
    %c17_i32_120 = arith.constant 17 : i32
    %342 = tpu.dynamic_rotate %305 by %c17_i32_120 dim 1 : vector<16x256xf32>, i32 -> vector<16x256xf32>
    %c6_121 = arith.constant 6 : index
    %c0_122 = arith.constant 0 : index
    %343 = vector.load %arg2[%c6_121, %c0_122] : memref<25x256xf32, #tpu.memory_space<vmem>>, vector<1x256xf32>
    %344 = vector.broadcast %343 : vector<1x256xf32> to vector<16x256xf32>
    %345 = arith.mulf %342, %344 : vector<16x256xf32>
    %346 = arith.truncf %345 : vector<16x256xf32> to vector<16x256xbf16>
    %c96_123 = arith.constant 96 : index
    %c0_124 = arith.constant 0 : index
    %347 = vector.load %arg12[%c96_123, %c0_124] : memref<800x256xbf16, #tpu.memory_space<vmem>>, vector<16x256xbf16>
    tpu.vector_store %arg12[%c96_123, %c0_124], %346 {strides = array<i32>} : memref<800x256xbf16, #tpu.memory_space<vmem>>, vector<16x256xbf16>,
    %c16_i32_125 = arith.constant 16 : i32
    %348 = tpu.dynamic_rotate %305 by %c16_i32_125 dim 1 : vector<16x256xf32>, i32 -> vector<16x256xf32>
    %c7_126 = arith.constant 7 : index
    %c0_127 = arith.constant 0 : index
    %349 = vector.load %arg2[%c7_126, %c0_127] : memref<25x256xf32, #tpu.memory_space<vmem>>, vector<1x256xf32>
    %350 = vector.broadcast %349 : vector<1x256xf32> to vector<16x256xf32>
    %351 = arith.mulf %348, %350 : vector<16x256xf32>
    %352 = arith.truncf %351 : vector<16x256xf32> to vector<16x256xbf16>
    %c112 = arith.constant 112 : index
    %c0_128 = arith.constant 0 : index
    %353 = vector.load %arg12[%c112, %c0_128] : memref<800x256xbf16, #tpu.memory_space<vmem>>, vector<16x256xbf16>
    tpu.vector_store %arg12[%c112, %c0_128], %352 {strides = array<i32>} : memref<800x256xbf16, #tpu.memory_space<vmem>>, vector<16x256xbf16>,
    %c15_i32_129 = arith.constant 15 : i32
    %354 = tpu.dynamic_rotate %305 by %c15_i32_129 dim 1 : vector<16x256xf32>, i32 -> vector<16x256xf32>
    %c8_130 = arith.constant 8 : index
    %c0_131 = arith.constant 0 : index
    %355 = vector.load %arg2[%c8_130, %c0_131] : memref<25x256xf32, #tpu.memory_space<vmem>>, vector<1x256xf32>
    %356 = vector.broadcast %355 : vector<1x256xf32> to vector<16x256xf32>
    %357 = arith.mulf %354, %356 : vector<16x256xf32>
    %358 = arith.truncf %357 : vector<16x256xf32> to vector<16x256xbf16>
    %c128_132 = arith.constant 128 : index
    %c0_133 = arith.constant 0 : index
    %359 = vector.load %arg12[%c128_132, %c0_133] : memref<800x256xbf16, #tpu.memory_space<vmem>>, vector<16x256xbf16>
    tpu.vector_store %arg12[%c128_132, %c0_133], %358 {strides = array<i32>} : memref<800x256xbf16, #tpu.memory_space<vmem>>, vector<16x256xbf16>,
    %c14_i32_134 = arith.constant 14 : i32
    %360 = tpu.dynamic_rotate %305 by %c14_i32_134 dim 1 : vector<16x256xf32>, i32 -> vector<16x256xf32>
    %c9_135 = arith.constant 9 : index
    %c0_136 = arith.constant 0 : index
    %361 = vector.load %arg2[%c9_135, %c0_136] : memref<25x256xf32, #tpu.memory_space<vmem>>, vector<1x256xf32>
    %362 = vector.broadcast %361 : vector<1x256xf32> to vector<16x256xf32>
    %363 = arith.mulf %360, %362 : vector<16x256xf32>
    %364 = arith.truncf %363 : vector<16x256xf32> to vector<16x256xbf16>
    %c144 = arith.constant 144 : index
    %c0_137 = arith.constant 0 : index
    %365 = vector.load %arg12[%c144, %c0_137] : memref<800x256xbf16, #tpu.memory_space<vmem>>, vector<16x256xbf16>
    tpu.vector_store %arg12[%c144, %c0_137], %364 {strides = array<i32>} : memref<800x256xbf16, #tpu.memory_space<vmem>>, vector<16x256xbf16>,
    %c2_i32_138 = arith.constant 2 : i32
    %366 = tpu.dynamic_rotate %305 by %c2_i32_138 dim 1 : vector<16x256xf32>, i32 -> vector<16x256xf32>
    %c10_139 = arith.constant 10 : index
    %c0_140 = arith.constant 0 : index
    %367 = vector.load %arg2[%c10_139, %c0_140] : memref<25x256xf32, #tpu.memory_space<vmem>>, vector<1x256xf32>
    %368 = vector.broadcast %367 : vector<1x256xf32> to vector<16x256xf32>
    %369 = arith.mulf %366, %368 : vector<16x256xf32>
    %370 = arith.truncf %369 : vector<16x256xf32> to vector<16x256xbf16>
    %c160_141 = arith.constant 160 : index
    %c0_142 = arith.constant 0 : index
    %371 = vector.load %arg12[%c160_141, %c0_142] : memref<800x256xbf16, #tpu.memory_space<vmem>>, vector<16x256xbf16>
    tpu.vector_store %arg12[%c160_141, %c0_142], %370 {strides = array<i32>} : memref<800x256xbf16, #tpu.memory_space<vmem>>, vector<16x256xbf16>,
    %c1_i32_143 = arith.constant 1 : i32
    %372 = tpu.dynamic_rotate %305 by %c1_i32_143 dim 1 : vector<16x256xf32>, i32 -> vector<16x256xf32>
    %c11_144 = arith.constant 11 : index
    %c0_145 = arith.constant 0 : index
    %373 = vector.load %arg2[%c11_144, %c0_145] : memref<25x256xf32, #tpu.memory_space<vmem>>, vector<1x256xf32>
    %374 = vector.broadcast %373 : vector<1x256xf32> to vector<16x256xf32>
    %375 = arith.mulf %372, %374 : vector<16x256xf32>
    %376 = arith.truncf %375 : vector<16x256xf32> to vector<16x256xbf16>
    %c176 = arith.constant 176 : index
    %c0_146 = arith.constant 0 : index
    %377 = vector.load %arg12[%c176, %c0_146] : memref<800x256xbf16, #tpu.memory_space<vmem>>, vector<16x256xbf16>
    tpu.vector_store %arg12[%c176, %c0_146], %376 {strides = array<i32>} : memref<800x256xbf16, #tpu.memory_space<vmem>>, vector<16x256xbf16>,
    %378 = arith.truncf %305 : vector<16x256xf32> to vector<16x256xbf16>
    %c192_147 = arith.constant 192 : index
    %c0_148 = arith.constant 0 : index
    %379 = vector.load %arg12[%c192_147, %c0_148] : memref<800x256xbf16, #tpu.memory_space<vmem>>, vector<16x256xbf16>
    tpu.vector_store %arg12[%c192_147, %c0_148], %378 {strides = array<i32>} : memref<800x256xbf16, #tpu.memory_space<vmem>>, vector<16x256xbf16>,
    %c255_i32_149 = arith.constant 255 : i32
    %380 = tpu.dynamic_rotate %305 by %c255_i32_149 dim 1 : vector<16x256xf32>, i32 -> vector<16x256xf32>
    %c13_150 = arith.constant 13 : index
    %c0_151 = arith.constant 0 : index
    %381 = vector.load %arg2[%c13_150, %c0_151] : memref<25x256xf32, #tpu.memory_space<vmem>>, vector<1x256xf32>
    %382 = vector.broadcast %381 : vector<1x256xf32> to vector<16x256xf32>
    %383 = arith.mulf %380, %382 : vector<16x256xf32>
    %384 = arith.truncf %383 : vector<16x256xf32> to vector<16x256xbf16>
    %c208 = arith.constant 208 : index
    %c0_152 = arith.constant 0 : index
    %385 = vector.load %arg12[%c208, %c0_152] : memref<800x256xbf16, #tpu.memory_space<vmem>>, vector<16x256xbf16>
    tpu.vector_store %arg12[%c208, %c0_152], %384 {strides = array<i32>} : memref<800x256xbf16, #tpu.memory_space<vmem>>, vector<16x256xbf16>,
    %c254_i32_153 = arith.constant 254 : i32
    %386 = tpu.dynamic_rotate %305 by %c254_i32_153 dim 1 : vector<16x256xf32>, i32 -> vector<16x256xf32>
    %c14_154 = arith.constant 14 : index
    %c0_155 = arith.constant 0 : index
    %387 = vector.load %arg2[%c14_154, %c0_155] : memref<25x256xf32, #tpu.memory_space<vmem>>, vector<1x256xf32>
    %388 = vector.broadcast %387 : vector<1x256xf32> to vector<16x256xf32>
    %389 = arith.mulf %386, %388 : vector<16x256xf32>
    %390 = arith.truncf %389 : vector<16x256xf32> to vector<16x256xbf16>
    %c224_156 = arith.constant 224 : index
    %c0_157 = arith.constant 0 : index
    %391 = vector.load %arg12[%c224_156, %c0_157] : memref<800x256xbf16, #tpu.memory_space<vmem>>, vector<16x256xbf16>
    tpu.vector_store %arg12[%c224_156, %c0_157], %390 {strides = array<i32>} : memref<800x256xbf16, #tpu.memory_space<vmem>>, vector<16x256xbf16>,
    %c242_i32_158 = arith.constant 242 : i32
    %392 = tpu.dynamic_rotate %305 by %c242_i32_158 dim 1 : vector<16x256xf32>, i32 -> vector<16x256xf32>
    %c15_159 = arith.constant 15 : index
    %c0_160 = arith.constant 0 : index
    %393 = vector.load %arg2[%c15_159, %c0_160] : memref<25x256xf32, #tpu.memory_space<vmem>>, vector<1x256xf32>
    %394 = vector.broadcast %393 : vector<1x256xf32> to vector<16x256xf32>
    %395 = arith.mulf %392, %394 : vector<16x256xf32>
    %396 = arith.truncf %395 : vector<16x256xf32> to vector<16x256xbf16>
    %c240 = arith.constant 240 : index
    %c0_161 = arith.constant 0 : index
    %397 = vector.load %arg12[%c240, %c0_161] : memref<800x256xbf16, #tpu.memory_space<vmem>>, vector<16x256xbf16>
    tpu.vector_store %arg12[%c240, %c0_161], %396 {strides = array<i32>} : memref<800x256xbf16, #tpu.memory_space<vmem>>, vector<16x256xbf16>,
    %c241_i32_162 = arith.constant 241 : i32
    %398 = tpu.dynamic_rotate %305 by %c241_i32_162 dim 1 : vector<16x256xf32>, i32 -> vector<16x256xf32>
    %c16_163 = arith.constant 16 : index
    %c0_164 = arith.constant 0 : index
    %399 = vector.load %arg2[%c16_163, %c0_164] : memref<25x256xf32, #tpu.memory_space<vmem>>, vector<1x256xf32>
    %400 = vector.broadcast %399 : vector<1x256xf32> to vector<16x256xf32>
    %401 = arith.mulf %398, %400 : vector<16x256xf32>
    %402 = arith.truncf %401 : vector<16x256xf32> to vector<16x256xbf16>
    %c256_165 = arith.constant 256 : index
    %c0_166 = arith.constant 0 : index
    %403 = vector.load %arg12[%c256_165, %c0_166] : memref<800x256xbf16, #tpu.memory_space<vmem>>, vector<16x256xbf16>
    tpu.vector_store %arg12[%c256_165, %c0_166], %402 {strides = array<i32>} : memref<800x256xbf16, #tpu.memory_space<vmem>>, vector<16x256xbf16>,
    %c240_i32_167 = arith.constant 240 : i32
    %404 = tpu.dynamic_rotate %305 by %c240_i32_167 dim 1 : vector<16x256xf32>, i32 -> vector<16x256xf32>
    %c17_168 = arith.constant 17 : index
    %c0_169 = arith.constant 0 : index
    %405 = vector.load %arg2[%c17_168, %c0_169] : memref<25x256xf32, #tpu.memory_space<vmem>>, vector<1x256xf32>
    %406 = vector.broadcast %405 : vector<1x256xf32> to vector<16x256xf32>
    %407 = arith.mulf %404, %406 : vector<16x256xf32>
    %408 = arith.truncf %407 : vector<16x256xf32> to vector<16x256xbf16>
    %c272 = arith.constant 272 : index
    %c0_170 = arith.constant 0 : index
    %409 = vector.load %arg12[%c272, %c0_170] : memref<800x256xbf16, #tpu.memory_space<vmem>>, vector<16x256xbf16>
    tpu.vector_store %arg12[%c272, %c0_170], %408 {strides = array<i32>} : memref<800x256xbf16, #tpu.memory_space<vmem>>, vector<16x256xbf16>,
    %c239_i32_171 = arith.constant 239 : i32
    %410 = tpu.dynamic_rotate %305 by %c239_i32_171 dim 1 : vector<16x256xf32>, i32 -> vector<16x256xf32>
    %c18_172 = arith.constant 18 : index
    %c0_173 = arith.constant 0 : index
    %411 = vector.load %arg2[%c18_172, %c0_173] : memref<25x256xf32, #tpu.memory_space<vmem>>, vector<1x256xf32>
    %412 = vector.broadcast %411 : vector<1x256xf32> to vector<16x256xf32>
    %413 = arith.mulf %410, %412 : vector<16x256xf32>
    %414 = arith.truncf %413 : vector<16x256xf32> to vector<16x256xbf16>
    %c288_174 = arith.constant 288 : index
    %c0_175 = arith.constant 0 : index
    %415 = vector.load %arg12[%c288_174, %c0_175] : memref<800x256xbf16, #tpu.memory_space<vmem>>, vector<16x256xbf16>
    tpu.vector_store %arg12[%c288_174, %c0_175], %414 {strides = array<i32>} : memref<800x256xbf16, #tpu.memory_space<vmem>>, vector<16x256xbf16>,
    %c238_i32_176 = arith.constant 238 : i32
    %416 = tpu.dynamic_rotate %305 by %c238_i32_176 dim 1 : vector<16x256xf32>, i32 -> vector<16x256xf32>
    %c19_177 = arith.constant 19 : index
    %c0_178 = arith.constant 0 : index
    %417 = vector.load %arg2[%c19_177, %c0_178] : memref<25x256xf32, #tpu.memory_space<vmem>>, vector<1x256xf32>
    %418 = vector.broadcast %417 : vector<1x256xf32> to vector<16x256xf32>
    %419 = arith.mulf %416, %418 : vector<16x256xf32>
    %420 = arith.truncf %419 : vector<16x256xf32> to vector<16x256xbf16>
    %c304 = arith.constant 304 : index
    %c0_179 = arith.constant 0 : index
    %421 = vector.load %arg12[%c304, %c0_179] : memref<800x256xbf16, #tpu.memory_space<vmem>>, vector<16x256xbf16>
    tpu.vector_store %arg12[%c304, %c0_179], %420 {strides = array<i32>} : memref<800x256xbf16, #tpu.memory_space<vmem>>, vector<16x256xbf16>,
    %c226_i32_180 = arith.constant 226 : i32
    %422 = tpu.dynamic_rotate %305 by %c226_i32_180 dim 1 : vector<16x256xf32>, i32 -> vector<16x256xf32>
    %c20_181 = arith.constant 20 : index
    %c0_182 = arith.constant 0 : index
    %423 = vector.load %arg2[%c20_181, %c0_182] : memref<25x256xf32, #tpu.memory_space<vmem>>, vector<1x256xf32>
    %424 = vector.broadcast %423 : vector<1x256xf32> to vector<16x256xf32>
    %425 = arith.mulf %422, %424 : vector<16x256xf32>
    %426 = arith.truncf %425 : vector<16x256xf32> to vector<16x256xbf16>
    %c320_183 = arith.constant 320 : index
    %c0_184 = arith.constant 0 : index
    %427 = vector.load %arg12[%c320_183, %c0_184] : memref<800x256xbf16, #tpu.memory_space<vmem>>, vector<16x256xbf16>
    tpu.vector_store %arg12[%c320_183, %c0_184], %426 {strides = array<i32>} : memref<800x256xbf16, #tpu.memory_space<vmem>>, vector<16x256xbf16>,
    %c225_i32_185 = arith.constant 225 : i32
    %428 = tpu.dynamic_rotate %305 by %c225_i32_185 dim 1 : vector<16x256xf32>, i32 -> vector<16x256xf32>
    %c21_186 = arith.constant 21 : index
    %c0_187 = arith.constant 0 : index
    %429 = vector.load %arg2[%c21_186, %c0_187] : memref<25x256xf32, #tpu.memory_space<vmem>>, vector<1x256xf32>
    %430 = vector.broadcast %429 : vector<1x256xf32> to vector<16x256xf32>
    %431 = arith.mulf %428, %430 : vector<16x256xf32>
    %432 = arith.truncf %431 : vector<16x256xf32> to vector<16x256xbf16>
    %c336 = arith.constant 336 : index
    %c0_188 = arith.constant 0 : index
    %433 = vector.load %arg12[%c336, %c0_188] : memref<800x256xbf16, #tpu.memory_space<vmem>>, vector<16x256xbf16>
    tpu.vector_store %arg12[%c336, %c0_188], %432 {strides = array<i32>} : memref<800x256xbf16, #tpu.memory_space<vmem>>, vector<16x256xbf16>,
    %c224_i32_189 = arith.constant 224 : i32
    %434 = tpu.dynamic_rotate %305 by %c224_i32_189 dim 1 : vector<16x256xf32>, i32 -> vector<16x256xf32>
    %c22_190 = arith.constant 22 : index
    %c0_191 = arith.constant 0 : index
    %435 = vector.load %arg2[%c22_190, %c0_191] : memref<25x256xf32, #tpu.memory_space<vmem>>, vector<1x256xf32>
    %436 = vector.broadcast %435 : vector<1x256xf32> to vector<16x256xf32>
    %437 = arith.mulf %434, %436 : vector<16x256xf32>
    %438 = arith.truncf %437 : vector<16x256xf32> to vector<16x256xbf16>
    %c352_192 = arith.constant 352 : index
    %c0_193 = arith.constant 0 : index
    %439 = vector.load %arg12[%c352_192, %c0_193] : memref<800x256xbf16, #tpu.memory_space<vmem>>, vector<16x256xbf16>
    tpu.vector_store %arg12[%c352_192, %c0_193], %438 {strides = array<i32>} : memref<800x256xbf16, #tpu.memory_space<vmem>>, vector<16x256xbf16>,
    %c223_i32_194 = arith.constant 223 : i32
    %440 = tpu.dynamic_rotate %305 by %c223_i32_194 dim 1 : vector<16x256xf32>, i32 -> vector<16x256xf32>
    %c23_195 = arith.constant 23 : index
    %c0_196 = arith.constant 0 : index
    %441 = vector.load %arg2[%c23_195, %c0_196] : memref<25x256xf32, #tpu.memory_space<vmem>>, vector<1x256xf32>
    %442 = vector.broadcast %441 : vector<1x256xf32> to vector<16x256xf32>
    %443 = arith.mulf %440, %442 : vector<16x256xf32>
    %444 = arith.truncf %443 : vector<16x256xf32> to vector<16x256xbf16>
    %c368 = arith.constant 368 : index
    %c0_197 = arith.constant 0 : index
    %445 = vector.load %arg12[%c368, %c0_197] : memref<800x256xbf16, #tpu.memory_space<vmem>>, vector<16x256xbf16>
    tpu.vector_store %arg12[%c368, %c0_197], %444 {strides = array<i32>} : memref<800x256xbf16, #tpu.memory_space<vmem>>, vector<16x256xbf16>,
    %c222_i32_198 = arith.constant 222 : i32
    %446 = tpu.dynamic_rotate %305 by %c222_i32_198 dim 1 : vector<16x256xf32>, i32 -> vector<16x256xf32>
    %c24_199 = arith.constant 24 : index
    %c0_200 = arith.constant 0 : index
    %447 = vector.load %arg2[%c24_199, %c0_200] : memref<25x256xf32, #tpu.memory_space<vmem>>, vector<1x256xf32>
    %448 = vector.broadcast %447 : vector<1x256xf32> to vector<16x256xf32>
    %449 = arith.mulf %446, %448 : vector<16x256xf32>
    %450 = arith.truncf %449 : vector<16x256xf32> to vector<16x256xbf16>
    %c384_201 = arith.constant 384 : index
    %c0_202 = arith.constant 0 : index
    %451 = vector.load %arg12[%c384_201, %c0_202] : memref<800x256xbf16, #tpu.memory_space<vmem>>, vector<16x256xbf16>
    tpu.vector_store %arg12[%c384_201, %c0_202], %450 {strides = array<i32>} : memref<800x256xbf16, #tpu.memory_space<vmem>>, vector<16x256xbf16>,
    %c0_203 = arith.constant 0 : index
    %c0_204 = arith.constant 0 : index
    %452 = vector.load %arg12[%c0_203, %c0_204] : memref<800x256xbf16, #tpu.memory_space<vmem>>, vector<400x256xbf16>
    %cst_205 = arith.constant dense<0.000000e+00> : vector<16x256xf32>
    %453 = tpu.matmul %1, %452, %cst_205 {dimension_numbers = #tpu.dot_dimension_numbers<[1], [0], [0], [1], [0, 0, 1, 1], [], []>} : vector<16x400xbf16>, vector<400x256xbf16>, vector<16x256xf32> -> vector<16x256xf32>
    %c0_206 = arith.constant 0 : index
    %c0_207 = arith.constant 0 : index
    %454 = vector.load %arg6[%c0_206, %c0_207] : memref<16x1xf32, #tpu.memory_space<vmem>>, vector<16x1xf32>
    %455 = vector.broadcast %454 : vector<16x1xf32> to vector<16x256xf32>
    %456 = arith.addf %453, %455 : vector<16x256xf32>
    %457 = vector.extract_strided_slice %456 {offsets = [0, 0], sizes = [8, 256], strides = [1, 1]} : vector<16x256xf32> to vector<8x256xf32>
    %458 = vector.extract_strided_slice %2 {offsets = [112, 0], sizes = [8, 256], strides = [1, 1]} : vector<120x256xf32> to vector<8x256xf32>
    %459 = vector.extract_strided_slice %3 {offsets = [112, 0], sizes = [8, 256], strides = [1, 1]} : vector<120x256xf32> to vector<8x256xf32>
    %460 = vector.shape_cast %457 : vector<8x256xf32> to vector<1x8x256xf32>
    %cst_208 = arith.constant dense<0.000000e+00> : vector<1xf32>
    %461 = vector.multi_reduction <add>, %460, %cst_208 [1, 2] : vector<1x8x256xf32> to vector<1xf32>
    %462 = vector.shape_cast %461 : vector<1xf32> to vector<1x1x1xf32>
    %463 = vector.extract %462[0, 0, 0] : f32 from vector<1x1x1xf32>
    %464 = vector.broadcast %463 : f32 to vector<1x1xf32>
    %cst_209 = arith.constant 9.765625E-4 : f32
    %465 = vector.broadcast %cst_209 : f32 to vector<1x1xf32>
    %466 = arith.mulf %464, %465 : vector<1x1xf32>
    %467 = arith.mulf %457, %457 : vector<8x256xf32>
    %468 = vector.shape_cast %467 : vector<8x256xf32> to vector<1x8x256xf32>
    %cst_210 = arith.constant dense<0.000000e+00> : vector<1xf32>
    %469 = vector.multi_reduction <add>, %468, %cst_210 [1, 2] : vector<1x8x256xf32> to vector<1xf32>
    %470 = vector.shape_cast %469 : vector<1xf32> to vector<1x1x1xf32>
    %471 = vector.extract %470[0, 0, 0] : f32 from vector<1x1x1xf32>
    %472 = vector.broadcast %471 : f32 to vector<1x1xf32>
    %cst_211 = arith.constant 9.765625E-4 : f32
    %473 = vector.broadcast %cst_211 : f32 to vector<1x1xf32>
    %474 = arith.mulf %472, %473 : vector<1x1xf32>
    %475 = arith.mulf %466, %466 : vector<1x1xf32>
    %476 = arith.subf %474, %475 : vector<1x1xf32>
    %477 = vector.broadcast %466 : vector<1x1xf32> to vector<8x256xf32>
    %478 = arith.subf %457, %477 : vector<8x256xf32>
    %cst_212 = arith.constant 9.99999974E-6 : f32
    %479 = vector.broadcast %cst_212 : f32 to vector<1x1xf32>
    %480 = arith.addf %476, %479 : vector<1x1xf32>
    %481 = math.rsqrt %480 : vector<1x1xf32>
    %482 = vector.broadcast %481 : vector<1x1xf32> to vector<8x256xf32>
    %483 = arith.mulf %478, %482 : vector<8x256xf32>
    %484 = arith.mulf %483, %458 : vector<8x256xf32>
    %485 = arith.addf %484, %459 : vector<8x256xf32>
    %486 = arith.addf %258, %485 : vector<8x256xf32>
    %487 = arith.negf %486 : vector<8x256xf32>
    %488 = math.exp %487 : vector<8x256xf32>
    %cst_213 = arith.constant 1.000000e+00 : f32
    %489 = vector.broadcast %cst_213 : f32 to vector<8x256xf32>
    %490 = arith.addf %489, %488 : vector<8x256xf32>
    %491 = arith.divf %489, %490 : vector<8x256xf32>
    %492 = vector.extract_strided_slice %456 {offsets = [8, 0], sizes = [8, 256], strides = [1, 1]} : vector<16x256xf32> to vector<8x256xf32>
    %493 = math.tanh %492 : vector<8x256xf32>
    %494 = arith.mulf %491, %493 : vector<8x256xf32>
    %c0_214 = arith.constant 0 : index
    %c0_215 = arith.constant 0 : index
    %c0_216 = arith.constant 0 : index
    %495 = vector.load %arg9[%c0_214, %c0_215, %c0_216] : memref<2x8x256xf32, #tpu.memory_space<vmem>>, vector<1x8x256xf32>
    %496 = vector.shape_cast %495 : vector<1x8x256xf32> to vector<8x256xf32>
    %497 = vector.shape_cast %494 : vector<8x256xf32> to vector<1x8x256xf32>
    tpu.vector_store %arg9[%c0_214, %c0_215, %c0_216], %497 {strides = array<i32>} : memref<2x8x256xf32, #tpu.memory_space<vmem>>, vector<1x8x256xf32>,
    %c1_217 = arith.constant 1 : index
    %c0_218 = arith.constant 0 : index
    %c0_219 = arith.constant 0 : index
    %498 = vector.load %arg1[%c1_217, %c0_218, %c0_219] : memref<2x32x256xf32, #tpu.memory_space<vmem>>, vector<1x32x256xf32>
    %499 = vector.shape_cast %498 : vector<1x32x256xf32> to vector<32x256xf32>
    %c34_i32_220 = arith.constant 34 : i32
    %500 = tpu.dynamic_rotate %499 by %c34_i32_220 dim 1 : vector<32x256xf32>, i32 -> vector<32x256xf32>
    %c0_221 = arith.constant 0 : index
    %c0_222 = arith.constant 0 : index
    %501 = vector.load %arg2[%c0_221, %c0_222] : memref<25x256xf32, #tpu.memory_space<vmem>>, vector<1x256xf32>
    %502 = vector.broadcast %501 : vector<1x256xf32> to vector<32x256xf32>
    %503 = arith.mulf %500, %502 : vector<32x256xf32>
    %504 = arith.truncf %503 : vector<32x256xf32> to vector<32x256xbf16>
    %c0_223 = arith.constant 0 : index
    %c0_224 = arith.constant 0 : index
    %505 = vector.load %arg12[%c0_223, %c0_224] : memref<800x256xbf16, #tpu.memory_space<vmem>>, vector<32x256xbf16>
    tpu.vector_store %arg12[%c0_223, %c0_224], %504 {strides = array<i32>} : memref<800x256xbf16, #tpu.memory_space<vmem>>, vector<32x256xbf16>,
    %c33_i32_225 = arith.constant 33 : i32
    %506 = tpu.dynamic_rotate %499 by %c33_i32_225 dim 1 : vector<32x256xf32>, i32 -> vector<32x256xf32>
    %c1_226 = arith.constant 1 : index
    %c0_227 = arith.constant 0 : index
    %507 = vector.load %arg2[%c1_226, %c0_227] : memref<25x256xf32, #tpu.memory_space<vmem>>, vector<1x256xf32>
    %508 = vector.broadcast %507 : vector<1x256xf32> to vector<32x256xf32>
    %509 = arith.mulf %506, %508 : vector<32x256xf32>
    %510 = arith.truncf %509 : vector<32x256xf32> to vector<32x256xbf16>
    %c32_228 = arith.constant 32 : index
    %c0_229 = arith.constant 0 : index
    %511 = vector.load %arg12[%c32_228, %c0_229] : memref<800x256xbf16, #tpu.memory_space<vmem>>, vector<32x256xbf16>
    tpu.vector_store %arg12[%c32_228, %c0_229], %510 {strides = array<i32>} : memref<800x256xbf16, #tpu.memory_space<vmem>>, vector<32x256xbf16>,
    %c32_i32_230 = arith.constant 32 : i32
    %512 = tpu.dynamic_rotate %499 by %c32_i32_230 dim 1 : vector<32x256xf32>, i32 -> vector<32x256xf32>
    %c2_231 = arith.constant 2 : index
    %c0_232 = arith.constant 0 : index
    %513 = vector.load %arg2[%c2_231, %c0_232] : memref<25x256xf32, #tpu.memory_space<vmem>>, vector<1x256xf32>
    %514 = vector.broadcast %513 : vector<1x256xf32> to vector<32x256xf32>
    %515 = arith.mulf %512, %514 : vector<32x256xf32>
    %516 = arith.truncf %515 : vector<32x256xf32> to vector<32x256xbf16>
    %c64_233 = arith.constant 64 : index
    %c0_234 = arith.constant 0 : index
    %517 = vector.load %arg12[%c64_233, %c0_234] : memref<800x256xbf16, #tpu.memory_space<vmem>>, vector<32x256xbf16>
    tpu.vector_store %arg12[%c64_233, %c0_234], %516 {strides = array<i32>} : memref<800x256xbf16, #tpu.memory_space<vmem>>, vector<32x256xbf16>,
    %c31_i32_235 = arith.constant 31 : i32
    %518 = tpu.dynamic_rotate %499 by %c31_i32_235 dim 1 : vector<32x256xf32>, i32 -> vector<32x256xf32>
    %c3_236 = arith.constant 3 : index
    %c0_237 = arith.constant 0 : index
    %519 = vector.load %arg2[%c3_236, %c0_237] : memref<25x256xf32, #tpu.memory_space<vmem>>, vector<1x256xf32>
    %520 = vector.broadcast %519 : vector<1x256xf32> to vector<32x256xf32>
    %521 = arith.mulf %518, %520 : vector<32x256xf32>
    %522 = arith.truncf %521 : vector<32x256xf32> to vector<32x256xbf16>
    %c96_238 = arith.constant 96 : index
    %c0_239 = arith.constant 0 : index
    %523 = vector.load %arg12[%c96_238, %c0_239] : memref<800x256xbf16, #tpu.memory_space<vmem>>, vector<32x256xbf16>
    tpu.vector_store %arg12[%c96_238, %c0_239], %522 {strides = array<i32>} : memref<800x256xbf16, #tpu.memory_space<vmem>>, vector<32x256xbf16>,
    %c30_i32_240 = arith.constant 30 : i32
    %524 = tpu.dynamic_rotate %499 by %c30_i32_240 dim 1 : vector<32x256xf32>, i32 -> vector<32x256xf32>
    %c4_241 = arith.constant 4 : index
    %c0_242 = arith.constant 0 : index
    %525 = vector.load %arg2[%c4_241, %c0_242] : memref<25x256xf32, #tpu.memory_space<vmem>>, vector<1x256xf32>
    %526 = vector.broadcast %525 : vector<1x256xf32> to vector<32x256xf32>
    %527 = arith.mulf %524, %526 : vector<32x256xf32>
    %528 = arith.truncf %527 : vector<32x256xf32> to vector<32x256xbf16>
    %c128_243 = arith.constant 128 : index
    %c0_244 = arith.constant 0 : index
    %529 = vector.load %arg12[%c128_243, %c0_244] : memref<800x256xbf16, #tpu.memory_space<vmem>>, vector<32x256xbf16>
    tpu.vector_store %arg12[%c128_243, %c0_244], %528 {strides = array<i32>} : memref<800x256xbf16, #tpu.memory_space<vmem>>, vector<32x256xbf16>,
    %c18_i32_245 = arith.constant 18 : i32
    %530 = tpu.dynamic_rotate %499 by %c18_i32_245 dim 1 : vector<32x256xf32>, i32 -> vector<32x256xf32>
    %c5_246 = arith.constant 5 : index
    %c0_247 = arith.constant 0 : index
    %531 = vector.load %arg2[%c5_246, %c0_247] : memref<25x256xf32, #tpu.memory_space<vmem>>, vector<1x256xf32>
    %532 = vector.broadcast %531 : vector<1x256xf32> to vector<32x256xf32>
    %533 = arith.mulf %530, %532 : vector<32x256xf32>
    %534 = arith.truncf %533 : vector<32x256xf32> to vector<32x256xbf16>
    %c160_248 = arith.constant 160 : index
    %c0_249 = arith.constant 0 : index
    %535 = vector.load %arg12[%c160_248, %c0_249] : memref<800x256xbf16, #tpu.memory_space<vmem>>, vector<32x256xbf16>
    tpu.vector_store %arg12[%c160_248, %c0_249], %534 {strides = array<i32>} : memref<800x256xbf16, #tpu.memory_space<vmem>>, vector<32x256xbf16>,
    %c17_i32_250 = arith.constant 17 : i32
    %536 = tpu.dynamic_rotate %499 by %c17_i32_250 dim 1 : vector<32x256xf32>, i32 -> vector<32x256xf32>
    %c6_251 = arith.constant 6 : index
    %c0_252 = arith.constant 0 : index
    %537 = vector.load %arg2[%c6_251, %c0_252] : memref<25x256xf32, #tpu.memory_space<vmem>>, vector<1x256xf32>
    %538 = vector.broadcast %537 : vector<1x256xf32> to vector<32x256xf32>
    %539 = arith.mulf %536, %538 : vector<32x256xf32>
    %540 = arith.truncf %539 : vector<32x256xf32> to vector<32x256xbf16>
    %c192_253 = arith.constant 192 : index
    %c0_254 = arith.constant 0 : index
    %541 = vector.load %arg12[%c192_253, %c0_254] : memref<800x256xbf16, #tpu.memory_space<vmem>>, vector<32x256xbf16>
    tpu.vector_store %arg12[%c192_253, %c0_254], %540 {strides = array<i32>} : memref<800x256xbf16, #tpu.memory_space<vmem>>, vector<32x256xbf16>,
    %c16_i32_255 = arith.constant 16 : i32
    %542 = tpu.dynamic_rotate %499 by %c16_i32_255 dim 1 : vector<32x256xf32>, i32 -> vector<32x256xf32>
    %c7_256 = arith.constant 7 : index
    %c0_257 = arith.constant 0 : index
    %543 = vector.load %arg2[%c7_256, %c0_257] : memref<25x256xf32, #tpu.memory_space<vmem>>, vector<1x256xf32>
    %544 = vector.broadcast %543 : vector<1x256xf32> to vector<32x256xf32>
    %545 = arith.mulf %542, %544 : vector<32x256xf32>
    %546 = arith.truncf %545 : vector<32x256xf32> to vector<32x256xbf16>
    %c224_258 = arith.constant 224 : index
    %c0_259 = arith.constant 0 : index
    %547 = vector.load %arg12[%c224_258, %c0_259] : memref<800x256xbf16, #tpu.memory_space<vmem>>, vector<32x256xbf16>
    tpu.vector_store %arg12[%c224_258, %c0_259], %546 {strides = array<i32>} : memref<800x256xbf16, #tpu.memory_space<vmem>>, vector<32x256xbf16>,
    %c15_i32_260 = arith.constant 15 : i32
    %548 = tpu.dynamic_rotate %499 by %c15_i32_260 dim 1 : vector<32x256xf32>, i32 -> vector<32x256xf32>
    %c8_261 = arith.constant 8 : index
    %c0_262 = arith.constant 0 : index
    %549 = vector.load %arg2[%c8_261, %c0_262] : memref<25x256xf32, #tpu.memory_space<vmem>>, vector<1x256xf32>
    %550 = vector.broadcast %549 : vector<1x256xf32> to vector<32x256xf32>
    %551 = arith.mulf %548, %550 : vector<32x256xf32>
    %552 = arith.truncf %551 : vector<32x256xf32> to vector<32x256xbf16>
    %c256_263 = arith.constant 256 : index
    %c0_264 = arith.constant 0 : index
    %553 = vector.load %arg12[%c256_263, %c0_264] : memref<800x256xbf16, #tpu.memory_space<vmem>>, vector<32x256xbf16>
    tpu.vector_store %arg12[%c256_263, %c0_264], %552 {strides = array<i32>} : memref<800x256xbf16, #tpu.memory_space<vmem>>, vector<32x256xbf16>,
    %c14_i32_265 = arith.constant 14 : i32
    %554 = tpu.dynamic_rotate %499 by %c14_i32_265 dim 1 : vector<32x256xf32>, i32 -> vector<32x256xf32>
    %c9_266 = arith.constant 9 : index
    %c0_267 = arith.constant 0 : index
    %555 = vector.load %arg2[%c9_266, %c0_267] : memref<25x256xf32, #tpu.memory_space<vmem>>, vector<1x256xf32>
    %556 = vector.broadcast %555 : vector<1x256xf32> to vector<32x256xf32>
    %557 = arith.mulf %554, %556 : vector<32x256xf32>
    %558 = arith.truncf %557 : vector<32x256xf32> to vector<32x256xbf16>
    %c288_268 = arith.constant 288 : index
    %c0_269 = arith.constant 0 : index
    %559 = vector.load %arg12[%c288_268, %c0_269] : memref<800x256xbf16, #tpu.memory_space<vmem>>, vector<32x256xbf16>
    tpu.vector_store %arg12[%c288_268, %c0_269], %558 {strides = array<i32>} : memref<800x256xbf16, #tpu.memory_space<vmem>>, vector<32x256xbf16>,
    %c2_i32_270 = arith.constant 2 : i32
    %560 = tpu.dynamic_rotate %499 by %c2_i32_270 dim 1 : vector<32x256xf32>, i32 -> vector<32x256xf32>
    %c10_271 = arith.constant 10 : index
    %c0_272 = arith.constant 0 : index
    %561 = vector.load %arg2[%c10_271, %c0_272] : memref<25x256xf32, #tpu.memory_space<vmem>>, vector<1x256xf32>
    %562 = vector.broadcast %561 : vector<1x256xf32> to vector<32x256xf32>
    %563 = arith.mulf %560, %562 : vector<32x256xf32>
    %564 = arith.truncf %563 : vector<32x256xf32> to vector<32x256xbf16>
    %c320_273 = arith.constant 320 : index
    %c0_274 = arith.constant 0 : index
    %565 = vector.load %arg12[%c320_273, %c0_274] : memref<800x256xbf16, #tpu.memory_space<vmem>>, vector<32x256xbf16>
    tpu.vector_store %arg12[%c320_273, %c0_274], %564 {strides = array<i32>} : memref<800x256xbf16, #tpu.memory_space<vmem>>, vector<32x256xbf16>,
    %c1_i32_275 = arith.constant 1 : i32
    %566 = tpu.dynamic_rotate %499 by %c1_i32_275 dim 1 : vector<32x256xf32>, i32 -> vector<32x256xf32>
    %c11_276 = arith.constant 11 : index
    %c0_277 = arith.constant 0 : index
    %567 = vector.load %arg2[%c11_276, %c0_277] : memref<25x256xf32, #tpu.memory_space<vmem>>, vector<1x256xf32>
    %568 = vector.broadcast %567 : vector<1x256xf32> to vector<32x256xf32>
    %569 = arith.mulf %566, %568 : vector<32x256xf32>
    %570 = arith.truncf %569 : vector<32x256xf32> to vector<32x256xbf16>
    %c352_278 = arith.constant 352 : index
    %c0_279 = arith.constant 0 : index
    %571 = vector.load %arg12[%c352_278, %c0_279] : memref<800x256xbf16, #tpu.memory_space<vmem>>, vector<32x256xbf16>
    tpu.vector_store %arg12[%c352_278, %c0_279], %570 {strides = array<i32>} : memref<800x256xbf16, #tpu.memory_space<vmem>>, vector<32x256xbf16>,
    %572 = arith.truncf %499 : vector<32x256xf32> to vector<32x256xbf16>
    %c384_280 = arith.constant 384 : index
    %c0_281 = arith.constant 0 : index
    %573 = vector.load %arg12[%c384_280, %c0_281] : memref<800x256xbf16, #tpu.memory_space<vmem>>, vector<32x256xbf16>
    tpu.vector_store %arg12[%c384_280, %c0_281], %572 {strides = array<i32>} : memref<800x256xbf16, #tpu.memory_space<vmem>>, vector<32x256xbf16>,
    %c255_i32_282 = arith.constant 255 : i32
    %574 = tpu.dynamic_rotate %499 by %c255_i32_282 dim 1 : vector<32x256xf32>, i32 -> vector<32x256xf32>
    %c13_283 = arith.constant 13 : index
    %c0_284 = arith.constant 0 : index
    %575 = vector.load %arg2[%c13_283, %c0_284] : memref<25x256xf32, #tpu.memory_space<vmem>>, vector<1x256xf32>
    %576 = vector.broadcast %575 : vector<1x256xf32> to vector<32x256xf32>
    %577 = arith.mulf %574, %576 : vector<32x256xf32>
    %578 = arith.truncf %577 : vector<32x256xf32> to vector<32x256xbf16>
    %c416_285 = arith.constant 416 : index
    %c0_286 = arith.constant 0 : index
    %579 = vector.load %arg12[%c416_285, %c0_286] : memref<800x256xbf16, #tpu.memory_space<vmem>>, vector<32x256xbf16>
    tpu.vector_store %arg12[%c416_285, %c0_286], %578 {strides = array<i32>} : memref<800x256xbf16, #tpu.memory_space<vmem>>, vector<32x256xbf16>,
    %c254_i32_287 = arith.constant 254 : i32
    %580 = tpu.dynamic_rotate %499 by %c254_i32_287 dim 1 : vector<32x256xf32>, i32 -> vector<32x256xf32>
    %c14_288 = arith.constant 14 : index
    %c0_289 = arith.constant 0 : index
    %581 = vector.load %arg2[%c14_288, %c0_289] : memref<25x256xf32, #tpu.memory_space<vmem>>, vector<1x256xf32>
    %582 = vector.broadcast %581 : vector<1x256xf32> to vector<32x256xf32>
    %583 = arith.mulf %580, %582 : vector<32x256xf32>
    %584 = arith.truncf %583 : vector<32x256xf32> to vector<32x256xbf16>
    %c448_290 = arith.constant 448 : index
    %c0_291 = arith.constant 0 : index
    %585 = vector.load %arg12[%c448_290, %c0_291] : memref<800x256xbf16, #tpu.memory_space<vmem>>, vector<32x256xbf16>
    tpu.vector_store %arg12[%c448_290, %c0_291], %584 {strides = array<i32>} : memref<800x256xbf16, #tpu.memory_space<vmem>>, vector<32x256xbf16>,
    %c242_i32_292 = arith.constant 242 : i32
    %586 = tpu.dynamic_rotate %499 by %c242_i32_292 dim 1 : vector<32x256xf32>, i32 -> vector<32x256xf32>
    %c15_293 = arith.constant 15 : index
    %c0_294 = arith.constant 0 : index
    %587 = vector.load %arg2[%c15_293, %c0_294] : memref<25x256xf32, #tpu.memory_space<vmem>>, vector<1x256xf32>
    %588 = vector.broadcast %587 : vector<1x256xf32> to vector<32x256xf32>
    %589 = arith.mulf %586, %588 : vector<32x256xf32>
    %590 = arith.truncf %589 : vector<32x256xf32> to vector<32x256xbf16>
    %c480_295 = arith.constant 480 : index
    %c0_296 = arith.constant 0 : index
    %591 = vector.load %arg12[%c480_295, %c0_296] : memref<800x256xbf16, #tpu.memory_space<vmem>>, vector<32x256xbf16>
    tpu.vector_store %arg12[%c480_295, %c0_296], %590 {strides = array<i32>} : memref<800x256xbf16, #tpu.memory_space<vmem>>, vector<32x256xbf16>,
    %c241_i32_297 = arith.constant 241 : i32
    %592 = tpu.dynamic_rotate %499 by %c241_i32_297 dim 1 : vector<32x256xf32>, i32 -> vector<32x256xf32>
    %c16_298 = arith.constant 16 : index
    %c0_299 = arith.constant 0 : index
    %593 = vector.load %arg2[%c16_298, %c0_299] : memref<25x256xf32, #tpu.memory_space<vmem>>, vector<1x256xf32>
    %594 = vector.broadcast %593 : vector<1x256xf32> to vector<32x256xf32>
    %595 = arith.mulf %592, %594 : vector<32x256xf32>
    %596 = arith.truncf %595 : vector<32x256xf32> to vector<32x256xbf16>
    %c512_300 = arith.constant 512 : index
    %c0_301 = arith.constant 0 : index
    %597 = vector.load %arg12[%c512_300, %c0_301] : memref<800x256xbf16, #tpu.memory_space<vmem>>, vector<32x256xbf16>
    tpu.vector_store %arg12[%c512_300, %c0_301], %596 {strides = array<i32>} : memref<800x256xbf16, #tpu.memory_space<vmem>>, vector<32x256xbf16>,
    %c240_i32_302 = arith.constant 240 : i32
    %598 = tpu.dynamic_rotate %499 by %c240_i32_302 dim 1 : vector<32x256xf32>, i32 -> vector<32x256xf32>
    %c17_303 = arith.constant 17 : index
    %c0_304 = arith.constant 0 : index
    %599 = vector.load %arg2[%c17_303, %c0_304] : memref<25x256xf32, #tpu.memory_space<vmem>>, vector<1x256xf32>
    %600 = vector.broadcast %599 : vector<1x256xf32> to vector<32x256xf32>
    %601 = arith.mulf %598, %600 : vector<32x256xf32>
    %602 = arith.truncf %601 : vector<32x256xf32> to vector<32x256xbf16>
    %c544_305 = arith.constant 544 : index
    %c0_306 = arith.constant 0 : index
    %603 = vector.load %arg12[%c544_305, %c0_306] : memref<800x256xbf16, #tpu.memory_space<vmem>>, vector<32x256xbf16>
    tpu.vector_store %arg12[%c544_305, %c0_306], %602 {strides = array<i32>} : memref<800x256xbf16, #tpu.memory_space<vmem>>, vector<32x256xbf16>,
    %c239_i32_307 = arith.constant 239 : i32
    %604 = tpu.dynamic_rotate %499 by %c239_i32_307 dim 1 : vector<32x256xf32>, i32 -> vector<32x256xf32>
    %c18_308 = arith.constant 18 : index
    %c0_309 = arith.constant 0 : index
    %605 = vector.load %arg2[%c18_308, %c0_309] : memref<25x256xf32, #tpu.memory_space<vmem>>, vector<1x256xf32>
    %606 = vector.broadcast %605 : vector<1x256xf32> to vector<32x256xf32>
    %607 = arith.mulf %604, %606 : vector<32x256xf32>
    %608 = arith.truncf %607 : vector<32x256xf32> to vector<32x256xbf16>
    %c576_310 = arith.constant 576 : index
    %c0_311 = arith.constant 0 : index
    %609 = vector.load %arg12[%c576_310, %c0_311] : memref<800x256xbf16, #tpu.memory_space<vmem>>, vector<32x256xbf16>
    tpu.vector_store %arg12[%c576_310, %c0_311], %608 {strides = array<i32>} : memref<800x256xbf16, #tpu.memory_space<vmem>>, vector<32x256xbf16>,
    %c238_i32_312 = arith.constant 238 : i32
    %610 = tpu.dynamic_rotate %499 by %c238_i32_312 dim 1 : vector<32x256xf32>, i32 -> vector<32x256xf32>
    %c19_313 = arith.constant 19 : index
    %c0_314 = arith.constant 0 : index
    %611 = vector.load %arg2[%c19_313, %c0_314] : memref<25x256xf32, #tpu.memory_space<vmem>>, vector<1x256xf32>
    %612 = vector.broadcast %611 : vector<1x256xf32> to vector<32x256xf32>
    %613 = arith.mulf %610, %612 : vector<32x256xf32>
    %614 = arith.truncf %613 : vector<32x256xf32> to vector<32x256xbf16>
    %c608_315 = arith.constant 608 : index
    %c0_316 = arith.constant 0 : index
    %615 = vector.load %arg12[%c608_315, %c0_316] : memref<800x256xbf16, #tpu.memory_space<vmem>>, vector<32x256xbf16>
    tpu.vector_store %arg12[%c608_315, %c0_316], %614 {strides = array<i32>} : memref<800x256xbf16, #tpu.memory_space<vmem>>, vector<32x256xbf16>,
    %c226_i32_317 = arith.constant 226 : i32
    %616 = tpu.dynamic_rotate %499 by %c226_i32_317 dim 1 : vector<32x256xf32>, i32 -> vector<32x256xf32>
    %c20_318 = arith.constant 20 : index
    %c0_319 = arith.constant 0 : index
    %617 = vector.load %arg2[%c20_318, %c0_319] : memref<25x256xf32, #tpu.memory_space<vmem>>, vector<1x256xf32>
    %618 = vector.broadcast %617 : vector<1x256xf32> to vector<32x256xf32>
    %619 = arith.mulf %616, %618 : vector<32x256xf32>
    %620 = arith.truncf %619 : vector<32x256xf32> to vector<32x256xbf16>
    %c640_320 = arith.constant 640 : index
    %c0_321 = arith.constant 0 : index
    %621 = vector.load %arg12[%c640_320, %c0_321] : memref<800x256xbf16, #tpu.memory_space<vmem>>, vector<32x256xbf16>
    tpu.vector_store %arg12[%c640_320, %c0_321], %620 {strides = array<i32>} : memref<800x256xbf16, #tpu.memory_space<vmem>>, vector<32x256xbf16>,
    %c225_i32_322 = arith.constant 225 : i32
    %622 = tpu.dynamic_rotate %499 by %c225_i32_322 dim 1 : vector<32x256xf32>, i32 -> vector<32x256xf32>
    %c21_323 = arith.constant 21 : index
    %c0_324 = arith.constant 0 : index
    %623 = vector.load %arg2[%c21_323, %c0_324] : memref<25x256xf32, #tpu.memory_space<vmem>>, vector<1x256xf32>
    %624 = vector.broadcast %623 : vector<1x256xf32> to vector<32x256xf32>
    %625 = arith.mulf %622, %624 : vector<32x256xf32>
    %626 = arith.truncf %625 : vector<32x256xf32> to vector<32x256xbf16>
    %c672_325 = arith.constant 672 : index
    %c0_326 = arith.constant 0 : index
    %627 = vector.load %arg12[%c672_325, %c0_326] : memref<800x256xbf16, #tpu.memory_space<vmem>>, vector<32x256xbf16>
    tpu.vector_store %arg12[%c672_325, %c0_326], %626 {strides = array<i32>} : memref<800x256xbf16, #tpu.memory_space<vmem>>, vector<32x256xbf16>,
    %c224_i32_327 = arith.constant 224 : i32
    %628 = tpu.dynamic_rotate %499 by %c224_i32_327 dim 1 : vector<32x256xf32>, i32 -> vector<32x256xf32>
    %c22_328 = arith.constant 22 : index
    %c0_329 = arith.constant 0 : index
    %629 = vector.load %arg2[%c22_328, %c0_329] : memref<25x256xf32, #tpu.memory_space<vmem>>, vector<1x256xf32>
    %630 = vector.broadcast %629 : vector<1x256xf32> to vector<32x256xf32>
    %631 = arith.mulf %628, %630 : vector<32x256xf32>
    %632 = arith.truncf %631 : vector<32x256xf32> to vector<32x256xbf16>
    %c704_330 = arith.constant 704 : index
    %c0_331 = arith.constant 0 : index
    %633 = vector.load %arg12[%c704_330, %c0_331] : memref<800x256xbf16, #tpu.memory_space<vmem>>, vector<32x256xbf16>
    tpu.vector_store %arg12[%c704_330, %c0_331], %632 {strides = array<i32>} : memref<800x256xbf16, #tpu.memory_space<vmem>>, vector<32x256xbf16>,
    %c223_i32_332 = arith.constant 223 : i32
    %634 = tpu.dynamic_rotate %499 by %c223_i32_332 dim 1 : vector<32x256xf32>, i32 -> vector<32x256xf32>
    %c23_333 = arith.constant 23 : index
    %c0_334 = arith.constant 0 : index
    %635 = vector.load %arg2[%c23_333, %c0_334] : memref<25x256xf32, #tpu.memory_space<vmem>>, vector<1x256xf32>
    %636 = vector.broadcast %635 : vector<1x256xf32> to vector<32x256xf32>
    %637 = arith.mulf %634, %636 : vector<32x256xf32>
    %638 = arith.truncf %637 : vector<32x256xf32> to vector<32x256xbf16>
    %c736_335 = arith.constant 736 : index
    %c0_336 = arith.constant 0 : index
    %639 = vector.load %arg12[%c736_335, %c0_336] : memref<800x256xbf16, #tpu.memory_space<vmem>>, vector<32x256xbf16>
    tpu.vector_store %arg12[%c736_335, %c0_336], %638 {strides = array<i32>} : memref<800x256xbf16, #tpu.memory_space<vmem>>, vector<32x256xbf16>,
    %c222_i32_337 = arith.constant 222 : i32
    %640 = tpu.dynamic_rotate %499 by %c222_i32_337 dim 1 : vector<32x256xf32>, i32 -> vector<32x256xf32>
    %c24_338 = arith.constant 24 : index
    %c0_339 = arith.constant 0 : index
    %641 = vector.load %arg2[%c24_338, %c0_339] : memref<25x256xf32, #tpu.memory_space<vmem>>, vector<1x256xf32>
    %642 = vector.broadcast %641 : vector<1x256xf32> to vector<32x256xf32>
    %643 = arith.mulf %640, %642 : vector<32x256xf32>
    %644 = arith.truncf %643 : vector<32x256xf32> to vector<32x256xbf16>
    %c768_340 = arith.constant 768 : index
    %c0_341 = arith.constant 0 : index
    %645 = vector.load %arg12[%c768_340, %c0_341] : memref<800x256xbf16, #tpu.memory_space<vmem>>, vector<32x256xbf16>
    tpu.vector_store %arg12[%c768_340, %c0_341], %644 {strides = array<i32>} : memref<800x256xbf16, #tpu.memory_space<vmem>>, vector<32x256xbf16>,
    %c0_342 = arith.constant 0 : index
    %c0_343 = arith.constant 0 : index
    %646 = vector.load %arg12[%c0_342, %c0_343] : memref<800x256xbf16, #tpu.memory_space<vmem>>, vector<800x256xbf16>
    %cst_344 = arith.constant dense<0.000000e+00> : vector<112x256xf32>
    %647 = tpu.matmul %0, %646, %cst_344 {dimension_numbers = #tpu.dot_dimension_numbers<[1], [0], [0], [1], [0, 0, 1, 1], [], []>} : vector<112x800xbf16>, vector<800x256xbf16>, vector<112x256xf32> -> vector<112x256xf32>
    %c0_345 = arith.constant 0 : index
    %c0_346 = arith.constant 0 : index
    %648 = vector.load %arg4[%c0_345, %c0_346] : memref<112x1xf32, #tpu.memory_space<vmem>>, vector<112x1xf32>
    %649 = vector.broadcast %648 : vector<112x1xf32> to vector<112x256xf32>
    %650 = arith.addf %647, %649 : vector<112x256xf32>
    %651 = vector.extract_strided_slice %650 {offsets = [0, 0], sizes = [56, 256], strides = [1, 1]} : vector<112x256xf32> to vector<56x256xf32>
    %652 = vector.extract_strided_slice %2 {offsets = [0, 0], sizes = [56, 256], strides = [1, 1]} : vector<120x256xf32> to vector<56x256xf32>
    %653 = vector.extract_strided_slice %3 {offsets = [0, 0], sizes = [56, 256], strides = [1, 1]} : vector<120x256xf32> to vector<56x256xf32>
    %654 = vector.shape_cast %651 : vector<56x256xf32> to vector<1x56x256xf32>
    %cst_347 = arith.constant dense<0.000000e+00> : vector<1xf32>
    %655 = vector.multi_reduction <add>, %654, %cst_347 [1, 2] : vector<1x56x256xf32> to vector<1xf32>
    %656 = vector.shape_cast %655 : vector<1xf32> to vector<1x1x1xf32>
    %657 = vector.extract %656[0, 0, 0] : f32 from vector<1x1x1xf32>
    %658 = vector.broadcast %657 : f32 to vector<1x1xf32>
    %cst_348 = arith.constant 1.39508935E-4 : f32
    %659 = vector.broadcast %cst_348 : f32 to vector<1x1xf32>
    %660 = arith.mulf %658, %659 : vector<1x1xf32>
    %661 = arith.mulf %651, %651 : vector<56x256xf32>
    %662 = vector.shape_cast %661 : vector<56x256xf32> to vector<1x56x256xf32>
    %cst_349 = arith.constant dense<0.000000e+00> : vector<1xf32>
    %663 = vector.multi_reduction <add>, %662, %cst_349 [1, 2] : vector<1x56x256xf32> to vector<1xf32>
    %664 = vector.shape_cast %663 : vector<1xf32> to vector<1x1x1xf32>
    %665 = vector.extract %664[0, 0, 0] : f32 from vector<1x1x1xf32>
    %666 = vector.broadcast %665 : f32 to vector<1x1xf32>
    %cst_350 = arith.constant 1.39508935E-4 : f32
    %667 = vector.broadcast %cst_350 : f32 to vector<1x1xf32>
    %668 = arith.mulf %666, %667 : vector<1x1xf32>
    %669 = arith.mulf %660, %660 : vector<1x1xf32>
    %670 = arith.subf %668, %669 : vector<1x1xf32>
    %671 = vector.broadcast %660 : vector<1x1xf32> to vector<56x256xf32>
    %672 = arith.subf %651, %671 : vector<56x256xf32>
    %cst_351 = arith.constant 9.99999974E-6 : f32
    %673 = vector.broadcast %cst_351 : f32 to vector<1x1xf32>
    %674 = arith.addf %670, %673 : vector<1x1xf32>
    %675 = math.rsqrt %674 : vector<1x1xf32>
    %676 = vector.broadcast %675 : vector<1x1xf32> to vector<56x256xf32>
    %677 = arith.mulf %672, %676 : vector<56x256xf32>
    %678 = arith.mulf %677, %652 : vector<56x256xf32>
    %679 = arith.addf %678, %653 : vector<56x256xf32>
    %680 = vector.extract_strided_slice %650 {offsets = [56, 0], sizes = [32, 256], strides = [1, 1]} : vector<112x256xf32> to vector<32x256xf32>
    %681 = vector.extract_strided_slice %2 {offsets = [56, 0], sizes = [32, 256], strides = [1, 1]} : vector<120x256xf32> to vector<32x256xf32>
    %682 = vector.extract_strided_slice %3 {offsets = [56, 0], sizes = [32, 256], strides = [1, 1]} : vector<120x256xf32> to vector<32x256xf32>
    %683 = vector.shape_cast %680 : vector<32x256xf32> to vector<1x32x256xf32>
    %cst_352 = arith.constant dense<0.000000e+00> : vector<1xf32>
    %684 = vector.multi_reduction <add>, %683, %cst_352 [1, 2] : vector<1x32x256xf32> to vector<1xf32>
    %685 = vector.shape_cast %684 : vector<1xf32> to vector<1x1x1xf32>
    %686 = vector.extract %685[0, 0, 0] : f32 from vector<1x1x1xf32>
    %687 = vector.broadcast %686 : f32 to vector<1x1xf32>
    %cst_353 = arith.constant 2.44140625E-4 : f32
    %688 = vector.broadcast %cst_353 : f32 to vector<1x1xf32>
    %689 = arith.mulf %687, %688 : vector<1x1xf32>
    %690 = arith.mulf %680, %680 : vector<32x256xf32>
    %691 = vector.shape_cast %690 : vector<32x256xf32> to vector<1x32x256xf32>
    %cst_354 = arith.constant dense<0.000000e+00> : vector<1xf32>
    %692 = vector.multi_reduction <add>, %691, %cst_354 [1, 2] : vector<1x32x256xf32> to vector<1xf32>
    %693 = vector.shape_cast %692 : vector<1xf32> to vector<1x1x1xf32>
    %694 = vector.extract %693[0, 0, 0] : f32 from vector<1x1x1xf32>
    %695 = vector.broadcast %694 : f32 to vector<1x1xf32>
    %cst_355 = arith.constant 2.44140625E-4 : f32
    %696 = vector.broadcast %cst_355 : f32 to vector<1x1xf32>
    %697 = arith.mulf %695, %696 : vector<1x1xf32>
    %698 = arith.mulf %689, %689 : vector<1x1xf32>
    %699 = arith.subf %697, %698 : vector<1x1xf32>
    %700 = vector.broadcast %689 : vector<1x1xf32> to vector<32x256xf32>
    %701 = arith.subf %680, %700 : vector<32x256xf32>
    %cst_356 = arith.constant 9.99999974E-6 : f32
    %702 = vector.broadcast %cst_356 : f32 to vector<1x1xf32>
    %703 = arith.addf %699, %702 : vector<1x1xf32>
    %704 = math.rsqrt %703 : vector<1x1xf32>
    %705 = vector.broadcast %704 : vector<1x1xf32> to vector<32x256xf32>
    %706 = arith.mulf %701, %705 : vector<32x256xf32>
    %707 = arith.mulf %706, %681 : vector<32x256xf32>
    %708 = arith.addf %707, %682 : vector<32x256xf32>
    %709 = vector.extract_strided_slice %650 {offsets = [88, 0], sizes = [24, 256], strides = [1, 1]} : vector<112x256xf32> to vector<24x256xf32>
    %710 = vector.extract_strided_slice %2 {offsets = [88, 0], sizes = [24, 256], strides = [1, 1]} : vector<120x256xf32> to vector<24x256xf32>
    %711 = vector.extract_strided_slice %3 {offsets = [88, 0], sizes = [24, 256], strides = [1, 1]} : vector<120x256xf32> to vector<24x256xf32>
    %712 = vector.shape_cast %709 : vector<24x256xf32> to vector<1x24x256xf32>
    %cst_357 = arith.constant dense<0.000000e+00> : vector<1xf32>
    %713 = vector.multi_reduction <add>, %712, %cst_357 [1, 2] : vector<1x24x256xf32> to vector<1xf32>
    %714 = vector.shape_cast %713 : vector<1xf32> to vector<1x1x1xf32>
    %715 = vector.extract %714[0, 0, 0] : f32 from vector<1x1x1xf32>
    %716 = vector.broadcast %715 : f32 to vector<1x1xf32>
    %cst_358 = arith.constant 3.25520843E-4 : f32
    %717 = vector.broadcast %cst_358 : f32 to vector<1x1xf32>
    %718 = arith.mulf %716, %717 : vector<1x1xf32>
    %719 = arith.mulf %709, %709 : vector<24x256xf32>
    %720 = vector.shape_cast %719 : vector<24x256xf32> to vector<1x24x256xf32>
    %cst_359 = arith.constant dense<0.000000e+00> : vector<1xf32>
    %721 = vector.multi_reduction <add>, %720, %cst_359 [1, 2] : vector<1x24x256xf32> to vector<1xf32>
    %722 = vector.shape_cast %721 : vector<1xf32> to vector<1x1x1xf32>
    %723 = vector.extract %722[0, 0, 0] : f32 from vector<1x1x1xf32>
    %724 = vector.broadcast %723 : f32 to vector<1x1xf32>
    %cst_360 = arith.constant 3.25520843E-4 : f32
    %725 = vector.broadcast %cst_360 : f32 to vector<1x1xf32>
    %726 = arith.mulf %724, %725 : vector<1x1xf32>
    %727 = arith.mulf %718, %718 : vector<1x1xf32>
    %728 = arith.subf %726, %727 : vector<1x1xf32>
    %729 = vector.broadcast %718 : vector<1x1xf32> to vector<24x256xf32>
    %730 = arith.subf %709, %729 : vector<24x256xf32>
    %cst_361 = arith.constant 9.99999974E-6 : f32
    %731 = vector.broadcast %cst_361 : f32 to vector<1x1xf32>
    %732 = arith.addf %728, %731 : vector<1x1xf32>
    %733 = math.rsqrt %732 : vector<1x1xf32>
    %734 = vector.broadcast %733 : vector<1x1xf32> to vector<24x256xf32>
    %735 = arith.mulf %730, %734 : vector<24x256xf32>
    %736 = arith.mulf %735, %710 : vector<24x256xf32>
    %737 = arith.addf %736, %711 : vector<24x256xf32>
    %738 = vector.extract_strided_slice %679 {offsets = [0, 0], sizes = [8, 256], strides = [1, 1]} : vector<56x256xf32> to vector<8x256xf32>
    %739 = vector.extract_strided_slice %679 {offsets = [8, 0], sizes = [8, 256], strides = [1, 1]} : vector<56x256xf32> to vector<8x256xf32>
    %740 = vector.extract_strided_slice %679 {offsets = [16, 0], sizes = [8, 256], strides = [1, 1]} : vector<56x256xf32> to vector<8x256xf32>
    %741 = vector.extract_strided_slice %679 {offsets = [24, 0], sizes = [8, 256], strides = [1, 1]} : vector<56x256xf32> to vector<8x256xf32>
    %742 = vector.extract_strided_slice %679 {offsets = [32, 0], sizes = [8, 256], strides = [1, 1]} : vector<56x256xf32> to vector<8x256xf32>
    %743 = vector.extract_strided_slice %679 {offsets = [40, 0], sizes = [8, 256], strides = [1, 1]} : vector<56x256xf32> to vector<8x256xf32>
    %744 = vector.extract_strided_slice %679 {offsets = [48, 0], sizes = [8, 256], strides = [1, 1]} : vector<56x256xf32> to vector<8x256xf32>
    %745 = vector.extract_strided_slice %708 {offsets = [0, 0], sizes = [8, 256], strides = [1, 1]} : vector<32x256xf32> to vector<8x256xf32>
    %746 = vector.extract_strided_slice %708 {offsets = [8, 0], sizes = [8, 256], strides = [1, 1]} : vector<32x256xf32> to vector<8x256xf32>
    %747 = vector.extract_strided_slice %708 {offsets = [16, 0], sizes = [8, 256], strides = [1, 1]} : vector<32x256xf32> to vector<8x256xf32>
    %748 = vector.extract_strided_slice %708 {offsets = [24, 0], sizes = [8, 256], strides = [1, 1]} : vector<32x256xf32> to vector<8x256xf32>
    %749 = vector.extract_strided_slice %737 {offsets = [0, 0], sizes = [8, 256], strides = [1, 1]} : vector<24x256xf32> to vector<8x256xf32>
    %750 = vector.extract_strided_slice %737 {offsets = [8, 0], sizes = [8, 256], strides = [1, 1]} : vector<24x256xf32> to vector<8x256xf32>
    %751 = vector.extract_strided_slice %737 {offsets = [16, 0], sizes = [8, 256], strides = [1, 1]} : vector<24x256xf32> to vector<8x256xf32>
    %752 = arith.addf %744, %748 : vector<8x256xf32>
    %753 = vector.extract_strided_slice %499 {offsets = [12, 0], sizes = [8, 256], strides = [1, 1]} : vector<32x256xf32> to vector<8x256xf32>
    %754 = vector.extract_strided_slice %499 {offsets = [20, 0], sizes = [8, 256], strides = [1, 1]} : vector<32x256xf32> to vector<8x256xf32>
    %755 = arith.addf %738, %745 : vector<8x256xf32>
    %756 = arith.negf %755 : vector<8x256xf32>
    %757 = math.exp %756 : vector<8x256xf32>
    %cst_362 = arith.constant 1.000000e+00 : f32
    %758 = vector.broadcast %cst_362 : f32 to vector<8x256xf32>
    %759 = arith.addf %758, %757 : vector<8x256xf32>
    %760 = arith.divf %758, %759 : vector<8x256xf32>
    %761 = arith.addf %739, %746 : vector<8x256xf32>
    %cst_363 = arith.constant 1.000000e+00 : f32
    %762 = vector.broadcast %cst_363 : f32 to vector<8x256xf32>
    %763 = arith.addf %761, %762 : vector<8x256xf32>
    %764 = arith.negf %763 : vector<8x256xf32>
    %765 = math.exp %764 : vector<8x256xf32>
    %cst_364 = arith.constant 1.000000e+00 : f32
    %766 = vector.broadcast %cst_364 : f32 to vector<8x256xf32>
    %767 = arith.addf %766, %765 : vector<8x256xf32>
    %768 = arith.divf %766, %767 : vector<8x256xf32>
    %769 = arith.addf %740, %747 : vector<8x256xf32>
    %770 = math.tanh %769 : vector<8x256xf32>
    %771 = arith.mulf %768, %754 : vector<8x256xf32>
    %772 = arith.mulf %760, %770 : vector<8x256xf32>
    %773 = arith.addf %771, %772 : vector<8x256xf32>
    %c1_365 = arith.constant 1 : index
    %c0_366 = arith.constant 0 : index
    %c0_367 = arith.constant 0 : index
    %774 = vector.load %arg10[%c1_365, %c0_366, %c0_367] : memref<2x8x256xf32, #tpu.memory_space<vmem>>, vector<1x8x256xf32>
    %775 = vector.shape_cast %774 : vector<1x8x256xf32> to vector<8x256xf32>
    %776 = vector.shape_cast %773 : vector<8x256xf32> to vector<1x8x256xf32>
    tpu.vector_store %arg10[%c1_365, %c0_366, %c0_367], %776 {strides = array<i32>} : memref<2x8x256xf32, #tpu.memory_space<vmem>>, vector<1x8x256xf32>,
    %777 = arith.addf %741, %749 : vector<8x256xf32>
    %778 = arith.negf %777 : vector<8x256xf32>
    %779 = math.exp %778 : vector<8x256xf32>
    %cst_368 = arith.constant 1.000000e+00 : f32
    %780 = vector.broadcast %cst_368 : f32 to vector<8x256xf32>
    %781 = arith.addf %780, %779 : vector<8x256xf32>
    %782 = arith.divf %780, %781 : vector<8x256xf32>
    %783 = arith.addf %742, %750 : vector<8x256xf32>
    %cst_369 = arith.constant 1.000000e+00 : f32
    %784 = vector.broadcast %cst_369 : f32 to vector<8x256xf32>
    %785 = arith.addf %783, %784 : vector<8x256xf32>
    %786 = arith.negf %785 : vector<8x256xf32>
    %787 = math.exp %786 : vector<8x256xf32>
    %cst_370 = arith.constant 1.000000e+00 : f32
    %788 = vector.broadcast %cst_370 : f32 to vector<8x256xf32>
    %789 = arith.addf %788, %787 : vector<8x256xf32>
    %790 = arith.divf %788, %789 : vector<8x256xf32>
    %791 = arith.addf %743, %751 : vector<8x256xf32>
    %792 = math.tanh %791 : vector<8x256xf32>
    %793 = arith.mulf %790, %753 : vector<8x256xf32>
    %794 = arith.mulf %782, %792 : vector<8x256xf32>
    %795 = arith.addf %793, %794 : vector<8x256xf32>
    %c1_371 = arith.constant 1 : index
    %c0_372 = arith.constant 0 : index
    %c0_373 = arith.constant 0 : index
    %796 = vector.load %arg11[%c1_371, %c0_372, %c0_373] : memref<2x8x256xf32, #tpu.memory_space<vmem>>, vector<1x8x256xf32>
    %797 = vector.shape_cast %796 : vector<1x8x256xf32> to vector<8x256xf32>
    %798 = vector.shape_cast %795 : vector<8x256xf32> to vector<1x8x256xf32>
    tpu.vector_store %arg11[%c1_371, %c0_372, %c0_373], %798 {strides = array<i32>} : memref<2x8x256xf32, #tpu.memory_space<vmem>>, vector<1x8x256xf32>,
    %799 = tpu.concatenate %773, %795 in 0 : vector<8x256xf32>, vector<8x256xf32> -> vector<16x256xf32>
    %c34_i32_374 = arith.constant 34 : i32
    %800 = tpu.dynamic_rotate %799 by %c34_i32_374 dim 1 : vector<16x256xf32>, i32 -> vector<16x256xf32>
    %c0_375 = arith.constant 0 : index
    %c0_376 = arith.constant 0 : index
    %801 = vector.load %arg2[%c0_375, %c0_376] : memref<25x256xf32, #tpu.memory_space<vmem>>, vector<1x256xf32>
    %802 = vector.broadcast %801 : vector<1x256xf32> to vector<16x256xf32>
    %803 = arith.mulf %800, %802 : vector<16x256xf32>
    %804 = arith.truncf %803 : vector<16x256xf32> to vector<16x256xbf16>
    %c0_377 = arith.constant 0 : index
    %c0_378 = arith.constant 0 : index
    %805 = vector.load %arg12[%c0_377, %c0_378] : memref<800x256xbf16, #tpu.memory_space<vmem>>, vector<16x256xbf16>
    tpu.vector_store %arg12[%c0_377, %c0_378], %804 {strides = array<i32>} : memref<800x256xbf16, #tpu.memory_space<vmem>>, vector<16x256xbf16>,
    %c33_i32_379 = arith.constant 33 : i32
    %806 = tpu.dynamic_rotate %799 by %c33_i32_379 dim 1 : vector<16x256xf32>, i32 -> vector<16x256xf32>
    %c1_380 = arith.constant 1 : index
    %c0_381 = arith.constant 0 : index
    %807 = vector.load %arg2[%c1_380, %c0_381] : memref<25x256xf32, #tpu.memory_space<vmem>>, vector<1x256xf32>
    %808 = vector.broadcast %807 : vector<1x256xf32> to vector<16x256xf32>
    %809 = arith.mulf %806, %808 : vector<16x256xf32>
    %810 = arith.truncf %809 : vector<16x256xf32> to vector<16x256xbf16>
    %c16_382 = arith.constant 16 : index
    %c0_383 = arith.constant 0 : index
    %811 = vector.load %arg12[%c16_382, %c0_383] : memref<800x256xbf16, #tpu.memory_space<vmem>>, vector<16x256xbf16>
    tpu.vector_store %arg12[%c16_382, %c0_383], %810 {strides = array<i32>} : memref<800x256xbf16, #tpu.memory_space<vmem>>, vector<16x256xbf16>,
    %c32_i32_384 = arith.constant 32 : i32
    %812 = tpu.dynamic_rotate %799 by %c32_i32_384 dim 1 : vector<16x256xf32>, i32 -> vector<16x256xf32>
    %c2_385 = arith.constant 2 : index
    %c0_386 = arith.constant 0 : index
    %813 = vector.load %arg2[%c2_385, %c0_386] : memref<25x256xf32, #tpu.memory_space<vmem>>, vector<1x256xf32>
    %814 = vector.broadcast %813 : vector<1x256xf32> to vector<16x256xf32>
    %815 = arith.mulf %812, %814 : vector<16x256xf32>
    %816 = arith.truncf %815 : vector<16x256xf32> to vector<16x256xbf16>
    %c32_387 = arith.constant 32 : index
    %c0_388 = arith.constant 0 : index
    %817 = vector.load %arg12[%c32_387, %c0_388] : memref<800x256xbf16, #tpu.memory_space<vmem>>, vector<16x256xbf16>
    tpu.vector_store %arg12[%c32_387, %c0_388], %816 {strides = array<i32>} : memref<800x256xbf16, #tpu.memory_space<vmem>>, vector<16x256xbf16>,
    %c31_i32_389 = arith.constant 31 : i32
    %818 = tpu.dynamic_rotate %799 by %c31_i32_389 dim 1 : vector<16x256xf32>, i32 -> vector<16x256xf32>
    %c3_390 = arith.constant 3 : index
    %c0_391 = arith.constant 0 : index
    %819 = vector.load %arg2[%c3_390, %c0_391] : memref<25x256xf32, #tpu.memory_space<vmem>>, vector<1x256xf32>
    %820 = vector.broadcast %819 : vector<1x256xf32> to vector<16x256xf32>
    %821 = arith.mulf %818, %820 : vector<16x256xf32>
    %822 = arith.truncf %821 : vector<16x256xf32> to vector<16x256xbf16>
    %c48_392 = arith.constant 48 : index
    %c0_393 = arith.constant 0 : index
    %823 = vector.load %arg12[%c48_392, %c0_393] : memref<800x256xbf16, #tpu.memory_space<vmem>>, vector<16x256xbf16>
    tpu.vector_store %arg12[%c48_392, %c0_393], %822 {strides = array<i32>} : memref<800x256xbf16, #tpu.memory_space<vmem>>, vector<16x256xbf16>,
    %c30_i32_394 = arith.constant 30 : i32
    %824 = tpu.dynamic_rotate %799 by %c30_i32_394 dim 1 : vector<16x256xf32>, i32 -> vector<16x256xf32>
    %c4_395 = arith.constant 4 : index
    %c0_396 = arith.constant 0 : index
    %825 = vector.load %arg2[%c4_395, %c0_396] : memref<25x256xf32, #tpu.memory_space<vmem>>, vector<1x256xf32>
    %826 = vector.broadcast %825 : vector<1x256xf32> to vector<16x256xf32>
    %827 = arith.mulf %824, %826 : vector<16x256xf32>
    %828 = arith.truncf %827 : vector<16x256xf32> to vector<16x256xbf16>
    %c64_397 = arith.constant 64 : index
    %c0_398 = arith.constant 0 : index
    %829 = vector.load %arg12[%c64_397, %c0_398] : memref<800x256xbf16, #tpu.memory_space<vmem>>, vector<16x256xbf16>
    tpu.vector_store %arg12[%c64_397, %c0_398], %828 {strides = array<i32>} : memref<800x256xbf16, #tpu.memory_space<vmem>>, vector<16x256xbf16>,
    %c18_i32_399 = arith.constant 18 : i32
    %830 = tpu.dynamic_rotate %799 by %c18_i32_399 dim 1 : vector<16x256xf32>, i32 -> vector<16x256xf32>
    %c5_400 = arith.constant 5 : index
    %c0_401 = arith.constant 0 : index
    %831 = vector.load %arg2[%c5_400, %c0_401] : memref<25x256xf32, #tpu.memory_space<vmem>>, vector<1x256xf32>
    %832 = vector.broadcast %831 : vector<1x256xf32> to vector<16x256xf32>
    %833 = arith.mulf %830, %832 : vector<16x256xf32>
    %834 = arith.truncf %833 : vector<16x256xf32> to vector<16x256xbf16>
    %c80_402 = arith.constant 80 : index
    %c0_403 = arith.constant 0 : index
    %835 = vector.load %arg12[%c80_402, %c0_403] : memref<800x256xbf16, #tpu.memory_space<vmem>>, vector<16x256xbf16>
    tpu.vector_store %arg12[%c80_402, %c0_403], %834 {strides = array<i32>} : memref<800x256xbf16, #tpu.memory_space<vmem>>, vector<16x256xbf16>,
    %c17_i32_404 = arith.constant 17 : i32
    %836 = tpu.dynamic_rotate %799 by %c17_i32_404 dim 1 : vector<16x256xf32>, i32 -> vector<16x256xf32>
    %c6_405 = arith.constant 6 : index
    %c0_406 = arith.constant 0 : index
    %837 = vector.load %arg2[%c6_405, %c0_406] : memref<25x256xf32, #tpu.memory_space<vmem>>, vector<1x256xf32>
    %838 = vector.broadcast %837 : vector<1x256xf32> to vector<16x256xf32>
    %839 = arith.mulf %836, %838 : vector<16x256xf32>
    %840 = arith.truncf %839 : vector<16x256xf32> to vector<16x256xbf16>
    %c96_407 = arith.constant 96 : index
    %c0_408 = arith.constant 0 : index
    %841 = vector.load %arg12[%c96_407, %c0_408] : memref<800x256xbf16, #tpu.memory_space<vmem>>, vector<16x256xbf16>
    tpu.vector_store %arg12[%c96_407, %c0_408], %840 {strides = array<i32>} : memref<800x256xbf16, #tpu.memory_space<vmem>>, vector<16x256xbf16>,
    %c16_i32_409 = arith.constant 16 : i32
    %842 = tpu.dynamic_rotate %799 by %c16_i32_409 dim 1 : vector<16x256xf32>, i32 -> vector<16x256xf32>
    %c7_410 = arith.constant 7 : index
    %c0_411 = arith.constant 0 : index
    %843 = vector.load %arg2[%c7_410, %c0_411] : memref<25x256xf32, #tpu.memory_space<vmem>>, vector<1x256xf32>
    %844 = vector.broadcast %843 : vector<1x256xf32> to vector<16x256xf32>
    %845 = arith.mulf %842, %844 : vector<16x256xf32>
    %846 = arith.truncf %845 : vector<16x256xf32> to vector<16x256xbf16>
    %c112_412 = arith.constant 112 : index
    %c0_413 = arith.constant 0 : index
    %847 = vector.load %arg12[%c112_412, %c0_413] : memref<800x256xbf16, #tpu.memory_space<vmem>>, vector<16x256xbf16>
    tpu.vector_store %arg12[%c112_412, %c0_413], %846 {strides = array<i32>} : memref<800x256xbf16, #tpu.memory_space<vmem>>, vector<16x256xbf16>,
    %c15_i32_414 = arith.constant 15 : i32
    %848 = tpu.dynamic_rotate %799 by %c15_i32_414 dim 1 : vector<16x256xf32>, i32 -> vector<16x256xf32>
    %c8_415 = arith.constant 8 : index
    %c0_416 = arith.constant 0 : index
    %849 = vector.load %arg2[%c8_415, %c0_416] : memref<25x256xf32, #tpu.memory_space<vmem>>, vector<1x256xf32>
    %850 = vector.broadcast %849 : vector<1x256xf32> to vector<16x256xf32>
    %851 = arith.mulf %848, %850 : vector<16x256xf32>
    %852 = arith.truncf %851 : vector<16x256xf32> to vector<16x256xbf16>
    %c128_417 = arith.constant 128 : index
    %c0_418 = arith.constant 0 : index
    %853 = vector.load %arg12[%c128_417, %c0_418] : memref<800x256xbf16, #tpu.memory_space<vmem>>, vector<16x256xbf16>
    tpu.vector_store %arg12[%c128_417, %c0_418], %852 {strides = array<i32>} : memref<800x256xbf16, #tpu.memory_space<vmem>>, vector<16x256xbf16>,
    %c14_i32_419 = arith.constant 14 : i32
    %854 = tpu.dynamic_rotate %799 by %c14_i32_419 dim 1 : vector<16x256xf32>, i32 -> vector<16x256xf32>
    %c9_420 = arith.constant 9 : index
    %c0_421 = arith.constant 0 : index
    %855 = vector.load %arg2[%c9_420, %c0_421] : memref<25x256xf32, #tpu.memory_space<vmem>>, vector<1x256xf32>
    %856 = vector.broadcast %855 : vector<1x256xf32> to vector<16x256xf32>
    %857 = arith.mulf %854, %856 : vector<16x256xf32>
    %858 = arith.truncf %857 : vector<16x256xf32> to vector<16x256xbf16>
    %c144_422 = arith.constant 144 : index
    %c0_423 = arith.constant 0 : index
    %859 = vector.load %arg12[%c144_422, %c0_423] : memref<800x256xbf16, #tpu.memory_space<vmem>>, vector<16x256xbf16>
    tpu.vector_store %arg12[%c144_422, %c0_423], %858 {strides = array<i32>} : memref<800x256xbf16, #tpu.memory_space<vmem>>, vector<16x256xbf16>,
    %c2_i32_424 = arith.constant 2 : i32
    %860 = tpu.dynamic_rotate %799 by %c2_i32_424 dim 1 : vector<16x256xf32>, i32 -> vector<16x256xf32>
    %c10_425 = arith.constant 10 : index
    %c0_426 = arith.constant 0 : index
    %861 = vector.load %arg2[%c10_425, %c0_426] : memref<25x256xf32, #tpu.memory_space<vmem>>, vector<1x256xf32>
    %862 = vector.broadcast %861 : vector<1x256xf32> to vector<16x256xf32>
    %863 = arith.mulf %860, %862 : vector<16x256xf32>
    %864 = arith.truncf %863 : vector<16x256xf32> to vector<16x256xbf16>
    %c160_427 = arith.constant 160 : index
    %c0_428 = arith.constant 0 : index
    %865 = vector.load %arg12[%c160_427, %c0_428] : memref<800x256xbf16, #tpu.memory_space<vmem>>, vector<16x256xbf16>
    tpu.vector_store %arg12[%c160_427, %c0_428], %864 {strides = array<i32>} : memref<800x256xbf16, #tpu.memory_space<vmem>>, vector<16x256xbf16>,
    %c1_i32_429 = arith.constant 1 : i32
    %866 = tpu.dynamic_rotate %799 by %c1_i32_429 dim 1 : vector<16x256xf32>, i32 -> vector<16x256xf32>
    %c11_430 = arith.constant 11 : index
    %c0_431 = arith.constant 0 : index
    %867 = vector.load %arg2[%c11_430, %c0_431] : memref<25x256xf32, #tpu.memory_space<vmem>>, vector<1x256xf32>
    %868 = vector.broadcast %867 : vector<1x256xf32> to vector<16x256xf32>
    %869 = arith.mulf %866, %868 : vector<16x256xf32>
    %870 = arith.truncf %869 : vector<16x256xf32> to vector<16x256xbf16>
    %c176_432 = arith.constant 176 : index
    %c0_433 = arith.constant 0 : index
    %871 = vector.load %arg12[%c176_432, %c0_433] : memref<800x256xbf16, #tpu.memory_space<vmem>>, vector<16x256xbf16>
    tpu.vector_store %arg12[%c176_432, %c0_433], %870 {strides = array<i32>} : memref<800x256xbf16, #tpu.memory_space<vmem>>, vector<16x256xbf16>,
    %872 = arith.truncf %799 : vector<16x256xf32> to vector<16x256xbf16>
    %c192_434 = arith.constant 192 : index
    %c0_435 = arith.constant 0 : index
    %873 = vector.load %arg12[%c192_434, %c0_435] : memref<800x256xbf16, #tpu.memory_space<vmem>>, vector<16x256xbf16>
    tpu.vector_store %arg12[%c192_434, %c0_435], %872 {strides = array<i32>} : memref<800x256xbf16, #tpu.memory_space<vmem>>, vector<16x256xbf16>,
    %c255_i32_436 = arith.constant 255 : i32
    %874 = tpu.dynamic_rotate %799 by %c255_i32_436 dim 1 : vector<16x256xf32>, i32 -> vector<16x256xf32>
    %c13_437 = arith.constant 13 : index
    %c0_438 = arith.constant 0 : index
    %875 = vector.load %arg2[%c13_437, %c0_438] : memref<25x256xf32, #tpu.memory_space<vmem>>, vector<1x256xf32>
    %876 = vector.broadcast %875 : vector<1x256xf32> to vector<16x256xf32>
    %877 = arith.mulf %874, %876 : vector<16x256xf32>
    %878 = arith.truncf %877 : vector<16x256xf32> to vector<16x256xbf16>
    %c208_439 = arith.constant 208 : index
    %c0_440 = arith.constant 0 : index
    %879 = vector.load %arg12[%c208_439, %c0_440] : memref<800x256xbf16, #tpu.memory_space<vmem>>, vector<16x256xbf16>
    tpu.vector_store %arg12[%c208_439, %c0_440], %878 {strides = array<i32>} : memref<800x256xbf16, #tpu.memory_space<vmem>>, vector<16x256xbf16>,
    %c254_i32_441 = arith.constant 254 : i32
    %880 = tpu.dynamic_rotate %799 by %c254_i32_441 dim 1 : vector<16x256xf32>, i32 -> vector<16x256xf32>
    %c14_442 = arith.constant 14 : index
    %c0_443 = arith.constant 0 : index
    %881 = vector.load %arg2[%c14_442, %c0_443] : memref<25x256xf32, #tpu.memory_space<vmem>>, vector<1x256xf32>
    %882 = vector.broadcast %881 : vector<1x256xf32> to vector<16x256xf32>
    %883 = arith.mulf %880, %882 : vector<16x256xf32>
    %884 = arith.truncf %883 : vector<16x256xf32> to vector<16x256xbf16>
    %c224_444 = arith.constant 224 : index
    %c0_445 = arith.constant 0 : index
    %885 = vector.load %arg12[%c224_444, %c0_445] : memref<800x256xbf16, #tpu.memory_space<vmem>>, vector<16x256xbf16>
    tpu.vector_store %arg12[%c224_444, %c0_445], %884 {strides = array<i32>} : memref<800x256xbf16, #tpu.memory_space<vmem>>, vector<16x256xbf16>,
    %c242_i32_446 = arith.constant 242 : i32
    %886 = tpu.dynamic_rotate %799 by %c242_i32_446 dim 1 : vector<16x256xf32>, i32 -> vector<16x256xf32>
    %c15_447 = arith.constant 15 : index
    %c0_448 = arith.constant 0 : index
    %887 = vector.load %arg2[%c15_447, %c0_448] : memref<25x256xf32, #tpu.memory_space<vmem>>, vector<1x256xf32>
    %888 = vector.broadcast %887 : vector<1x256xf32> to vector<16x256xf32>
    %889 = arith.mulf %886, %888 : vector<16x256xf32>
    %890 = arith.truncf %889 : vector<16x256xf32> to vector<16x256xbf16>
    %c240_449 = arith.constant 240 : index
    %c0_450 = arith.constant 0 : index
    %891 = vector.load %arg12[%c240_449, %c0_450] : memref<800x256xbf16, #tpu.memory_space<vmem>>, vector<16x256xbf16>
    tpu.vector_store %arg12[%c240_449, %c0_450], %890 {strides = array<i32>} : memref<800x256xbf16, #tpu.memory_space<vmem>>, vector<16x256xbf16>,
    %c241_i32_451 = arith.constant 241 : i32
    %892 = tpu.dynamic_rotate %799 by %c241_i32_451 dim 1 : vector<16x256xf32>, i32 -> vector<16x256xf32>
    %c16_452 = arith.constant 16 : index
    %c0_453 = arith.constant 0 : index
    %893 = vector.load %arg2[%c16_452, %c0_453] : memref<25x256xf32, #tpu.memory_space<vmem>>, vector<1x256xf32>
    %894 = vector.broadcast %893 : vector<1x256xf32> to vector<16x256xf32>
    %895 = arith.mulf %892, %894 : vector<16x256xf32>
    %896 = arith.truncf %895 : vector<16x256xf32> to vector<16x256xbf16>
    %c256_454 = arith.constant 256 : index
    %c0_455 = arith.constant 0 : index
    %897 = vector.load %arg12[%c256_454, %c0_455] : memref<800x256xbf16, #tpu.memory_space<vmem>>, vector<16x256xbf16>
    tpu.vector_store %arg12[%c256_454, %c0_455], %896 {strides = array<i32>} : memref<800x256xbf16, #tpu.memory_space<vmem>>, vector<16x256xbf16>,
    %c240_i32_456 = arith.constant 240 : i32
    %898 = tpu.dynamic_rotate %799 by %c240_i32_456 dim 1 : vector<16x256xf32>, i32 -> vector<16x256xf32>
    %c17_457 = arith.constant 17 : index
    %c0_458 = arith.constant 0 : index
    %899 = vector.load %arg2[%c17_457, %c0_458] : memref<25x256xf32, #tpu.memory_space<vmem>>, vector<1x256xf32>
    %900 = vector.broadcast %899 : vector<1x256xf32> to vector<16x256xf32>
    %901 = arith.mulf %898, %900 : vector<16x256xf32>
    %902 = arith.truncf %901 : vector<16x256xf32> to vector<16x256xbf16>
    %c272_459 = arith.constant 272 : index
    %c0_460 = arith.constant 0 : index
    %903 = vector.load %arg12[%c272_459, %c0_460] : memref<800x256xbf16, #tpu.memory_space<vmem>>, vector<16x256xbf16>
    tpu.vector_store %arg12[%c272_459, %c0_460], %902 {strides = array<i32>} : memref<800x256xbf16, #tpu.memory_space<vmem>>, vector<16x256xbf16>,
    %c239_i32_461 = arith.constant 239 : i32
    %904 = tpu.dynamic_rotate %799 by %c239_i32_461 dim 1 : vector<16x256xf32>, i32 -> vector<16x256xf32>
    %c18_462 = arith.constant 18 : index
    %c0_463 = arith.constant 0 : index
    %905 = vector.load %arg2[%c18_462, %c0_463] : memref<25x256xf32, #tpu.memory_space<vmem>>, vector<1x256xf32>
    %906 = vector.broadcast %905 : vector<1x256xf32> to vector<16x256xf32>
    %907 = arith.mulf %904, %906 : vector<16x256xf32>
    %908 = arith.truncf %907 : vector<16x256xf32> to vector<16x256xbf16>
    %c288_464 = arith.constant 288 : index
    %c0_465 = arith.constant 0 : index
    %909 = vector.load %arg12[%c288_464, %c0_465] : memref<800x256xbf16, #tpu.memory_space<vmem>>, vector<16x256xbf16>
    tpu.vector_store %arg12[%c288_464, %c0_465], %908 {strides = array<i32>} : memref<800x256xbf16, #tpu.memory_space<vmem>>, vector<16x256xbf16>,
    %c238_i32_466 = arith.constant 238 : i32
    %910 = tpu.dynamic_rotate %799 by %c238_i32_466 dim 1 : vector<16x256xf32>, i32 -> vector<16x256xf32>
    %c19_467 = arith.constant 19 : index
    %c0_468 = arith.constant 0 : index
    %911 = vector.load %arg2[%c19_467, %c0_468] : memref<25x256xf32, #tpu.memory_space<vmem>>, vector<1x256xf32>
    %912 = vector.broadcast %911 : vector<1x256xf32> to vector<16x256xf32>
    %913 = arith.mulf %910, %912 : vector<16x256xf32>
    %914 = arith.truncf %913 : vector<16x256xf32> to vector<16x256xbf16>
    %c304_469 = arith.constant 304 : index
    %c0_470 = arith.constant 0 : index
    %915 = vector.load %arg12[%c304_469, %c0_470] : memref<800x256xbf16, #tpu.memory_space<vmem>>, vector<16x256xbf16>
    tpu.vector_store %arg12[%c304_469, %c0_470], %914 {strides = array<i32>} : memref<800x256xbf16, #tpu.memory_space<vmem>>, vector<16x256xbf16>,
    %c226_i32_471 = arith.constant 226 : i32
    %916 = tpu.dynamic_rotate %799 by %c226_i32_471 dim 1 : vector<16x256xf32>, i32 -> vector<16x256xf32>
    %c20_472 = arith.constant 20 : index
    %c0_473 = arith.constant 0 : index
    %917 = vector.load %arg2[%c20_472, %c0_473] : memref<25x256xf32, #tpu.memory_space<vmem>>, vector<1x256xf32>
    %918 = vector.broadcast %917 : vector<1x256xf32> to vector<16x256xf32>
    %919 = arith.mulf %916, %918 : vector<16x256xf32>
    %920 = arith.truncf %919 : vector<16x256xf32> to vector<16x256xbf16>
    %c320_474 = arith.constant 320 : index
    %c0_475 = arith.constant 0 : index
    %921 = vector.load %arg12[%c320_474, %c0_475] : memref<800x256xbf16, #tpu.memory_space<vmem>>, vector<16x256xbf16>
    tpu.vector_store %arg12[%c320_474, %c0_475], %920 {strides = array<i32>} : memref<800x256xbf16, #tpu.memory_space<vmem>>, vector<16x256xbf16>,
    %c225_i32_476 = arith.constant 225 : i32
    %922 = tpu.dynamic_rotate %799 by %c225_i32_476 dim 1 : vector<16x256xf32>, i32 -> vector<16x256xf32>
    %c21_477 = arith.constant 21 : index
    %c0_478 = arith.constant 0 : index
    %923 = vector.load %arg2[%c21_477, %c0_478] : memref<25x256xf32, #tpu.memory_space<vmem>>, vector<1x256xf32>
    %924 = vector.broadcast %923 : vector<1x256xf32> to vector<16x256xf32>
    %925 = arith.mulf %922, %924 : vector<16x256xf32>
    %926 = arith.truncf %925 : vector<16x256xf32> to vector<16x256xbf16>
    %c336_479 = arith.constant 336 : index
    %c0_480 = arith.constant 0 : index
    %927 = vector.load %arg12[%c336_479, %c0_480] : memref<800x256xbf16, #tpu.memory_space<vmem>>, vector<16x256xbf16>
    tpu.vector_store %arg12[%c336_479, %c0_480], %926 {strides = array<i32>} : memref<800x256xbf16, #tpu.memory_space<vmem>>, vector<16x256xbf16>,
    %c224_i32_481 = arith.constant 224 : i32
    %928 = tpu.dynamic_rotate %799 by %c224_i32_481 dim 1 : vector<16x256xf32>, i32 -> vector<16x256xf32>
    %c22_482 = arith.constant 22 : index
    %c0_483 = arith.constant 0 : index
    %929 = vector.load %arg2[%c22_482, %c0_483] : memref<25x256xf32, #tpu.memory_space<vmem>>, vector<1x256xf32>
    %930 = vector.broadcast %929 : vector<1x256xf32> to vector<16x256xf32>
    %931 = arith.mulf %928, %930 : vector<16x256xf32>
    %932 = arith.truncf %931 : vector<16x256xf32> to vector<16x256xbf16>
    %c352_484 = arith.constant 352 : index
    %c0_485 = arith.constant 0 : index
    %933 = vector.load %arg12[%c352_484, %c0_485] : memref<800x256xbf16, #tpu.memory_space<vmem>>, vector<16x256xbf16>
    tpu.vector_store %arg12[%c352_484, %c0_485], %932 {strides = array<i32>} : memref<800x256xbf16, #tpu.memory_space<vmem>>, vector<16x256xbf16>,
    %c223_i32_486 = arith.constant 223 : i32
    %934 = tpu.dynamic_rotate %799 by %c223_i32_486 dim 1 : vector<16x256xf32>, i32 -> vector<16x256xf32>
    %c23_487 = arith.constant 23 : index
    %c0_488 = arith.constant 0 : index
    %935 = vector.load %arg2[%c23_487, %c0_488] : memref<25x256xf32, #tpu.memory_space<vmem>>, vector<1x256xf32>
    %936 = vector.broadcast %935 : vector<1x256xf32> to vector<16x256xf32>
    %937 = arith.mulf %934, %936 : vector<16x256xf32>
    %938 = arith.truncf %937 : vector<16x256xf32> to vector<16x256xbf16>
    %c368_489 = arith.constant 368 : index
    %c0_490 = arith.constant 0 : index
    %939 = vector.load %arg12[%c368_489, %c0_490] : memref<800x256xbf16, #tpu.memory_space<vmem>>, vector<16x256xbf16>
    tpu.vector_store %arg12[%c368_489, %c0_490], %938 {strides = array<i32>} : memref<800x256xbf16, #tpu.memory_space<vmem>>, vector<16x256xbf16>,
    %c222_i32_491 = arith.constant 222 : i32
    %940 = tpu.dynamic_rotate %799 by %c222_i32_491 dim 1 : vector<16x256xf32>, i32 -> vector<16x256xf32>
    %c24_492 = arith.constant 24 : index
    %c0_493 = arith.constant 0 : index
    %941 = vector.load %arg2[%c24_492, %c0_493] : memref<25x256xf32, #tpu.memory_space<vmem>>, vector<1x256xf32>
    %942 = vector.broadcast %941 : vector<1x256xf32> to vector<16x256xf32>
    %943 = arith.mulf %940, %942 : vector<16x256xf32>
    %944 = arith.truncf %943 : vector<16x256xf32> to vector<16x256xbf16>
    %c384_494 = arith.constant 384 : index
    %c0_495 = arith.constant 0 : index
    %945 = vector.load %arg12[%c384_494, %c0_495] : memref<800x256xbf16, #tpu.memory_space<vmem>>, vector<16x256xbf16>
    tpu.vector_store %arg12[%c384_494, %c0_495], %944 {strides = array<i32>} : memref<800x256xbf16, #tpu.memory_space<vmem>>, vector<16x256xbf16>,
    %c0_496 = arith.constant 0 : index
    %c0_497 = arith.constant 0 : index
    %946 = vector.load %arg12[%c0_496, %c0_497] : memref<800x256xbf16, #tpu.memory_space<vmem>>, vector<400x256xbf16>
    %cst_498 = arith.constant dense<0.000000e+00> : vector<16x256xf32>
    %947 = tpu.matmul %1, %946, %cst_498 {dimension_numbers = #tpu.dot_dimension_numbers<[1], [0], [0], [1], [0, 0, 1, 1], [], []>} : vector<16x400xbf16>, vector<400x256xbf16>, vector<16x256xf32> -> vector<16x256xf32>
    %c0_499 = arith.constant 0 : index
    %c0_500 = arith.constant 0 : index
    %948 = vector.load %arg6[%c0_499, %c0_500] : memref<16x1xf32, #tpu.memory_space<vmem>>, vector<16x1xf32>
    %949 = vector.broadcast %948 : vector<16x1xf32> to vector<16x256xf32>
    %950 = arith.addf %947, %949 : vector<16x256xf32>
    %951 = vector.extract_strided_slice %950 {offsets = [0, 0], sizes = [8, 256], strides = [1, 1]} : vector<16x256xf32> to vector<8x256xf32>
    %952 = vector.extract_strided_slice %2 {offsets = [112, 0], sizes = [8, 256], strides = [1, 1]} : vector<120x256xf32> to vector<8x256xf32>
    %953 = vector.extract_strided_slice %3 {offsets = [112, 0], sizes = [8, 256], strides = [1, 1]} : vector<120x256xf32> to vector<8x256xf32>
    %954 = vector.shape_cast %951 : vector<8x256xf32> to vector<1x8x256xf32>
    %cst_501 = arith.constant dense<0.000000e+00> : vector<1xf32>
    %955 = vector.multi_reduction <add>, %954, %cst_501 [1, 2] : vector<1x8x256xf32> to vector<1xf32>
    %956 = vector.shape_cast %955 : vector<1xf32> to vector<1x1x1xf32>
    %957 = vector.extract %956[0, 0, 0] : f32 from vector<1x1x1xf32>
    %958 = vector.broadcast %957 : f32 to vector<1x1xf32>
    %cst_502 = arith.constant 9.765625E-4 : f32
    %959 = vector.broadcast %cst_502 : f32 to vector<1x1xf32>
    %960 = arith.mulf %958, %959 : vector<1x1xf32>
    %961 = arith.mulf %951, %951 : vector<8x256xf32>
    %962 = vector.shape_cast %961 : vector<8x256xf32> to vector<1x8x256xf32>
    %cst_503 = arith.constant dense<0.000000e+00> : vector<1xf32>
    %963 = vector.multi_reduction <add>, %962, %cst_503 [1, 2] : vector<1x8x256xf32> to vector<1xf32>
    %964 = vector.shape_cast %963 : vector<1xf32> to vector<1x1x1xf32>
    %965 = vector.extract %964[0, 0, 0] : f32 from vector<1x1x1xf32>
    %966 = vector.broadcast %965 : f32 to vector<1x1xf32>
    %cst_504 = arith.constant 9.765625E-4 : f32
    %967 = vector.broadcast %cst_504 : f32 to vector<1x1xf32>
    %968 = arith.mulf %966, %967 : vector<1x1xf32>
    %969 = arith.mulf %960, %960 : vector<1x1xf32>
    %970 = arith.subf %968, %969 : vector<1x1xf32>
    %971 = vector.broadcast %960 : vector<1x1xf32> to vector<8x256xf32>
    %972 = arith.subf %951, %971 : vector<8x256xf32>
    %cst_505 = arith.constant 9.99999974E-6 : f32
    %973 = vector.broadcast %cst_505 : f32 to vector<1x1xf32>
    %974 = arith.addf %970, %973 : vector<1x1xf32>
    %975 = math.rsqrt %974 : vector<1x1xf32>
    %976 = vector.broadcast %975 : vector<1x1xf32> to vector<8x256xf32>
    %977 = arith.mulf %972, %976 : vector<8x256xf32>
    %978 = arith.mulf %977, %952 : vector<8x256xf32>
    %979 = arith.addf %978, %953 : vector<8x256xf32>
    %980 = arith.addf %752, %979 : vector<8x256xf32>
    %981 = arith.negf %980 : vector<8x256xf32>
    %982 = math.exp %981 : vector<8x256xf32>
    %cst_506 = arith.constant 1.000000e+00 : f32
    %983 = vector.broadcast %cst_506 : f32 to vector<8x256xf32>
    %984 = arith.addf %983, %982 : vector<8x256xf32>
    %985 = arith.divf %983, %984 : vector<8x256xf32>
    %986 = vector.extract_strided_slice %950 {offsets = [8, 0], sizes = [8, 256], strides = [1, 1]} : vector<16x256xf32> to vector<8x256xf32>
    %987 = math.tanh %986 : vector<8x256xf32>
    %988 = arith.mulf %985, %987 : vector<8x256xf32>
    %c1_507 = arith.constant 1 : index
    %c0_508 = arith.constant 0 : index
    %c0_509 = arith.constant 0 : index
    %989 = vector.load %arg9[%c1_507, %c0_508, %c0_509] : memref<2x8x256xf32, #tpu.memory_space<vmem>>, vector<1x8x256xf32>
    %990 = vector.shape_cast %989 : vector<1x8x256xf32> to vector<8x256xf32>
    %991 = vector.shape_cast %988 : vector<8x256xf32> to vector<1x8x256xf32>
    tpu.vector_store %arg9[%c1_507, %c0_508, %c0_509], %991 {strides = array<i32>} : memref<2x8x256xf32, #tpu.memory_space<vmem>>, vector<1x8x256xf32>,
    return
  }
  func.func @transform_0(%arg0: i32) -> (i32, i32, i32) {
    %c0_i32 = arith.constant 0 : i32
    %c0_i32_0 = arith.constant 0 : i32
    %c0_i32_1 = arith.constant 0 : i32
    return %arg0, %c0_i32, %c0_i32_0 : i32, i32, i32
  }
  func.func @transform_1(%arg0: i32) -> (i32, i32) {
    %c0_i32 = arith.constant 0 : i32
    %c0_i32_0 = arith.constant 0 : i32
    %c0_i32_1 = arith.constant 0 : i32
    return %c0_i32, %c0_i32_0 : i32, i32
  }
  func.func @transform_2(%arg0: i32) -> (i32, i32) {
    %c0_i32 = arith.constant 0 : i32
    %c0_i32_0 = arith.constant 0 : i32
    %c0_i32_1 = arith.constant 0 : i32
    return %c0_i32, %c0_i32_0 : i32, i32
  }
  func.func @transform_3(%arg0: i32) -> (i32, i32) {
    %c0_i32 = arith.constant 0 : i32
    %c0_i32_0 = arith.constant 0 : i32
    %c0_i32_1 = arith.constant 0 : i32
    return %c0_i32, %c0_i32_0 : i32, i32
  }
  func.func @transform_4(%arg0: i32) -> (i32, i32) {
    %c0_i32 = arith.constant 0 : i32
    %c0_i32_0 = arith.constant 0 : i32
    %c0_i32_1 = arith.constant 0 : i32
    return %c0_i32, %c0_i32_0 : i32, i32
  }
  func.func @transform_5(%arg0: i32) -> (i32, i32) {
    %c0_i32 = arith.constant 0 : i32
    %c0_i32_0 = arith.constant 0 : i32
    %c0_i32_1 = arith.constant 0 : i32
    return %c0_i32, %c0_i32_0 : i32, i32
  }
  func.func @transform_6(%arg0: i32) -> (i32, i32) {
    %c0_i32 = arith.constant 0 : i32
    %c0_i32_0 = arith.constant 0 : i32
    %c0_i32_1 = arith.constant 0 : i32
    return %c0_i32, %c0_i32_0 : i32, i32
  }
  func.func @transform_7(%arg0: i32) -> (i32, i32) {
    %c0_i32 = arith.constant 0 : i32
    %c0_i32_0 = arith.constant 0 : i32
    %c0_i32_1 = arith.constant 0 : i32
    return %c0_i32, %c0_i32_0 : i32, i32
  }
  func.func @transform_8(%arg0: i32) -> (i32, i32, i32) {
    %c0_i32 = arith.constant 0 : i32
    %c0_i32_0 = arith.constant 0 : i32
    %c0_i32_1 = arith.constant 0 : i32
    return %arg0, %c0_i32, %c0_i32_0 : i32, i32, i32
  }
  func.func @transform_9(%arg0: i32) -> (i32, i32, i32) {
    %c0_i32 = arith.constant 0 : i32
    %c0_i32_0 = arith.constant 0 : i32
    %c0_i32_1 = arith.constant 0 : i32
    return %arg0, %c0_i32, %c0_i32_0 : i32, i32, i32
  }
  func.func @transform_10(%arg0: i32) -> (i32, i32, i32) {
    %c0_i32 = arith.constant 0 : i32
    %c0_i32_0 = arith.constant 0 : i32
    %c0_i32_1 = arith.constant 0 : i32
    return %arg0, %c0_i32, %c0_i32_0 : i32, i32, i32
  }
}

</mosaic_0001>

<llo_original>
// kernel: tpu_custom_call.1
$region0: #{tpu_custom_call.1}
  #allocation0 [shape = 'u32[]', space=smem, size = 0x4, offset = 0x4, fixed_abs, tag = 'smem constant byte address 0x4 - core index']
  #allocation1 [shape = 'u32[144,128]{1,0:T(1,128)}', space=vmem, size = 0x12000, scoped, tag = 'internal scratch']
  #allocation2 [shape = 'bf16[800,256]{1,0:T(8,128)(2,1)}', space=vmem, size = 0x64000, scoped, tag = 'scratch operand']
  %s0 = inlined_call_operand.vmem [shape: f32[2,32,256], index: 0, kind: input, shape index: {}]
  %s1 = inlined_call_operand.hbm [shape: f32[25,256], index: 1, kind: input, shape index: {}]
  %s2 = inlined_call_operand.hbm [shape: bf16[112,800], index: 2, kind: input, shape index: {}]
  %s3 = inlined_call_operand.vmem [shape: f32[112,1], index: 3, kind: input, shape index: {}]
  %s4 = inlined_call_operand.hbm [shape: bf16[16,400], index: 4, kind: input, shape index: {}]
  %s5 = inlined_call_operand.vmem [shape: f32[16,1], index: 5, kind: input, shape index: {}]
  %s6 = inlined_call_operand.hbm [shape: f32[120,256], index: 6, kind: input, shape index: {}]
  %s7 = inlined_call_operand.hbm [shape: f32[120,256], index: 7, kind: input, shape index: {}]
  %s8 = inlined_call_operand.hbm [shape: f32[2,8,256], index: 8, kind: output, shape index: {0}]
  %s9 = inlined_call_operand.hbm [shape: f32[2,8,256], index: 9, kind: output, shape index: {1}]
  %s10 = inlined_call_operand.hbm [shape: f32[2,8,256], index: 10, kind: output, shape index: {2}]
  %11 = xla_tuple %s8, %s9, %s10
  %s12 = sld [smem:[#allocation0]]
  $region78: #{tpu_custom_call.1} parent=0
    _
  %s14 = ssub.s32 1, %s12
  %s15 = scalar_select 0, %s14, %s12
  $region1: #{tpu_custom_call.1} parent=0
    #allocation3 [shape = 'u8[32768]{0}', space=vmem, size = 0x8000, scoped, tag = 'input window, operand 1, single buffered']
    #allocation4 [shape = 's32[1]{0}', space=sflag, size = 0x4, scoped, tag = 'scoped memory for tpu_custom_call.1']
    #allocation5 [shape = 's32[1]{0}', space=sflag, size = 0x4, scoped, tag = 'scoped memory for tpu_custom_call.1']
    #allocation6 [shape = 'u8[200704]{0}', space=vmem, size = 0x31000, scoped, tag = 'input window, operand 2, single buffered']
    #allocation7 [shape = 's32[1]{0}', space=sflag, size = 0x4, scoped, tag = 'scoped memory for tpu_custom_call.1']
    #allocation8 [shape = 'u8[16384]{0}', space=vmem, size = 0x4000, scoped, tag = 'input window, operand 4, single buffered']
    #allocation9 [shape = 'u8[122880]{0}', space=vmem, size = 0x1e000, scoped, tag = 'input window, operand 6, single buffered']
    #allocation10 [shape = 's32[1]{0}', space=sflag, size = 0x4, scoped, tag = 'scoped memory for tpu_custom_call.1']
    #allocation11 [shape = 'u8[122880]{0}', space=vmem, size = 0x1e000, scoped, tag = 'input window, operand 7, single buffered']
    #allocation12 [shape = 'u8[16384]{0}', space=vmem, size = 0x4000, scoped, tag = 'output window, operand 0, single buffered']
    #allocation13 [shape = 'u8[16384]{0}', space=vmem, size = 0x4000, scoped, tag = 'output window, operand 1, single buffered']
    #allocation14 [shape = 's32[1]{0}', space=sflag, size = 0x4, scoped, tag = 'scoped memory for tpu_custom_call.1']
    #allocation15 [shape = 'u8[16384]{0}', space=vmem, size = 0x4000, scoped, tag = 'output window, operand 2, single buffered']
    %16 = vsyncpa [#allocation4], 0
    %17 = vsyncpa [#allocation7], 0
    %18 = vsyncpa [#allocation10], 0
    %19 = vsyncpa [#allocation5], 0
    %20 = vsyncpa [#allocation14], 0
    // Predicated region
    $region2: #{tpu_custom_call.1} parent=1 // pred_check
      _
    $region3: #{tpu_custom_call.1} parent=1 // pred_check_branch
      %22 = sbr.rel (0) target = $region5
    $region4: #{tpu_custom_call.1} parent=1 // pred_region
      _
    $region5: #{tpu_custom_call.1} parent=1 // pred_fallthru
      _
    // Predicated region
    $region6: #{tpu_custom_call.1} parent=1 // pred_check
      _
    $region7: #{tpu_custom_call.1} parent=1 // pred_check_branch
      %24 = sbr.rel (0) target = $region9
    $region8: #{tpu_custom_call.1} parent=1 // pred_region
      %s26 = ssub.s32 1024, 1024
      %27 = vsyncadd [#allocation4], %s26
      %s28 = sshll.u32 [#allocation3], 4
      %s29 = int_to_ptr.vmem [resolvable:$true] %s28
      %34 = dma.hbm_to_vmem [thread:$0]  %s1, 1024, %s29, [#allocation4], 256, 256, 16
    $region9: #{tpu_custom_call.1} parent=1 // pred_fallthru
      _
    // Predicated region
    $region10: #{tpu_custom_call.1} parent=1 // pred_check
      _
    $region11: #{tpu_custom_call.1} parent=1 // pred_check_branch
      %36 = sbr.rel (0) target = $region13
    $region12: #{tpu_custom_call.1} parent=1 // pred_region
      %s38 = ssub.s32 6272, 6272
      %39 = vsyncadd [#allocation7], %s38
      %s40 = sshll.u32 [#allocation6], 4
      %s41 = int_to_ptr.vmem [resolvable:$true] %s40
      %46 = dma.hbm_to_vmem [thread:$0]  %s2, 6272, %s41, [#allocation7], 448, 448, 28
    $region13: #{tpu_custom_call.1} parent=1 // pred_fallthru
      _
    // Predicated region
    $region14: #{tpu_custom_call.1} parent=1 // pred_check
      _
    $region15: #{tpu_custom_call.1} parent=1 // pred_check_branch
      %48 = sbr.rel (0) target = $region17
    $region16: #{tpu_custom_call.1} parent=1 // pred_region
      _
    $region17: #{tpu_custom_call.1} parent=1 // pred_fallthru
      _
    // Predicated region
    $region18: #{tpu_custom_call.1} parent=1 // pred_check
      _
    $region19: #{tpu_custom_call.1} parent=1 // pred_check_branch
      %50 = sbr.rel (0) target = $region21
    $region20: #{tpu_custom_call.1} parent=1 // pred_region
      %s52 = ssub.s32 512, 512
      %53 = vsyncadd [#allocation7], %s52
      %s54 = sshll.u32 [#allocation8], 4
      %s55 = int_to_ptr.vmem [resolvable:$true] %s54
      %60 = dma.hbm_to_vmem [thread:$0]  %s4, 512, %s55, [#allocation7], 256, 256, 16
    $region21: #{tpu_custom_call.1} parent=1 // pred_fallthru
      _
    // Predicated region
    $region22: #{tpu_custom_call.1} parent=1 // pred_check
      _
    $region23: #{tpu_custom_call.1} parent=1 // pred_check_branch
      %62 = sbr.rel (0) target = $region25
    $region24: #{tpu_custom_call.1} parent=1 // pred_region
      _
    $region25: #{tpu_custom_call.1} parent=1 // pred_fallthru
      _
    // Predicated region
    $region26: #{tpu_custom_call.1} parent=1 // pred_check
      _
    $region27: #{tpu_custom_call.1} parent=1 // pred_check_branch
      %64 = sbr.rel (0) target = $region29
    $region28: #{tpu_custom_call.1} parent=1 // pred_region
      %s66 = ssub.s32 3840, 3840
      %67 = vsyncadd [#allocation10], %s66
      %s68 = sshll.u32 [#allocation9], 4
      %s69 = int_to_ptr.vmem [resolvable:$true] %s68
      %74 = dma.hbm_to_vmem [thread:$0]  %s6, 3840, %s69, [#allocation10], 256, 256, 16
    $region29: #{tpu_custom_call.1} parent=1 // pred_fallthru
      _
    // Predicated region
    $region30: #{tpu_custom_call.1} parent=1 // pred_check
      _
    $region31: #{tpu_custom_call.1} parent=1 // pred_check_branch
      %76 = sbr.rel (0) target = $region33
    $region32: #{tpu_custom_call.1} parent=1 // pred_region
      %s78 = ssub.s32 3840, 3840
      %79 = vsyncadd [#allocation10], %s78
      %s80 = sshll.u32 [#allocation11], 4
      %s81 = int_to_ptr.vmem [resolvable:$true] %s80
      %86 = dma.hbm_to_vmem [thread:$0]  %s7, 3840, %s81, [#allocation10], 256, 256, 16
    $region33: #{tpu_custom_call.1} parent=1 // pred_fallthru
      _
    // Predicated region
    $region34: #{tpu_custom_call.1} parent=1 // pred_check
      _
    $region35: #{tpu_custom_call.1} parent=1 // pred_check_branch
      %88 = sbr.rel (0) target = $region37
    $region36: #{tpu_custom_call.1} parent=1 // pred_region
      %89 = dma.done [#allocation4], 1024
    $region37: #{tpu_custom_call.1} parent=1 // pred_fallthru
      _
    // Predicated region
    $region38: #{tpu_custom_call.1} parent=1 // pred_check
      _
    $region39: #{tpu_custom_call.1} parent=1 // pred_check_branch
      %91 = sbr.rel (0) target = $region41
    $region40: #{tpu_custom_call.1} parent=1 // pred_region
      %92 = dma.done [#allocation7], 6272
    $region41: #{tpu_custom_call.1} parent=1 // pred_fallthru
      _
    // Predicated region
    $region42: #{tpu_custom_call.1} parent=1 // pred_check
      _
    $region43: #{tpu_custom_call.1} parent=1 // pred_check_branch
      %94 = sbr.rel (0) target = $region45
    $region44: #{tpu_custom_call.1} parent=1 // pred_region
      %95 = dma.done [#allocation7], 512
    $region45: #{tpu_custom_call.1} parent=1 // pred_fallthru
      _
    // Predicated region
    $region46: #{tpu_custom_call.1} parent=1 // pred_check
      _
    $region47: #{tpu_custom_call.1} parent=1 // pred_check_branch
      %97 = sbr.rel (0) target = $region49
    $region48: #{tpu_custom_call.1} parent=1 // pred_region
      %98 = dma.done [#allocation10], 3840
    $region49: #{tpu_custom_call.1} parent=1 // pred_fallthru
      _
    // Predicated region
    $region50: #{tpu_custom_call.1} parent=1 // pred_check
      _
    $region51: #{tpu_custom_call.1} parent=1 // pred_check_branch
      %100 = sbr.rel (0) target = $region53
    $region52: #{tpu_custom_call.1} parent=1 // pred_region
      %101 = dma.done [#allocation10], 3840
    $region53: #{tpu_custom_call.1} parent=1 // pred_fallthru
      _
    %v103 = vld [vmem:[#allocation6] sm:$0xff]
    %v104 = vld [vmem:[#allocation6 + $0x8] sm:$0xff]
    %v105 = vld [vmem:[#allocation6 + $0x10] sm:$0xff]
    %v106 = vld [vmem:[#allocation6 + $0x18] sm:$0xf]
    %v107 = vld [vmem:[#allocation6 + $0x1c] sm:$0xff]
    %v108 = vld [vmem:[#allocation6 + $0x24] sm:$0xff]
    %v109 = vld [vmem:[#allocation6 + $0x2c] sm:$0xff]
    %v110 = vld [vmem:[#allocation6 + $0x34] sm:$0xf]
    %v111 = vld [vmem:[#allocation6 + $0x38] sm:$0xff]
    %v112 = vld [vmem:[#allocation6 + $0x40] sm:$0xff]
    %v113 = vld [vmem:[#allocation6 + $0x48] sm:$0xff]
    %v114 = vld [vmem:[#allocation6 + $0x50] sm:$0xf]
    %v115 = vld [vmem:[#allocation6 + $0x54] sm:$0xff]
    %v116 = vld [vmem:[#allocation6 + $0x5c] sm:$0xff]
    %v117 = vld [vmem:[#allocation6 + $0x64] sm:$0xff]
    %v118 = vld [vmem:[#allocation6 + $0x6c] sm:$0xf]
    %v119 = vld [vmem:[#allocation6 + $0x70] sm:$0xff]
    %v120 = vld [vmem:[#allocation6 + $0x78] sm:$0xff]
    %v121 = vld [vmem:[#allocation6 + $0x80] sm:$0xff]
    %v122 = vld [vmem:[#allocation6 + $0x88] sm:$0xf]
    %v123 = vld [vmem:[#allocation6 + $0x8c] sm:$0xff]
    %v124 = vld [vmem:[#allocation6 + $0x94] sm:$0xff]
    %v125 = vld [vmem:[#allocation6 + $0x9c] sm:$0xff]
    %v126 = vld [vmem:[#allocation6 + $0xa4] sm:$0xf]
    %v127 = vld [vmem:[#allocation6 + $0xa8] sm:$0xff]
    %v128 = vld [vmem:[#allocation6 + $0xb0] sm:$0xff]
    %v129 = vld [vmem:[#allocation6 + $0xb8] sm:$0xff]
    %v130 = vld [vmem:[#allocation6 + $0xc0] sm:$0xf]
    %v131 = vld [vmem:[#allocation6 + $0xc4] sm:$0xff]
    %v132 = vld [vmem:[#allocation6 + $0xcc] sm:$0xff]
    %v133 = vld [vmem:[#allocation6 + $0xd4] sm:$0xff]
    %v134 = vld [vmem:[#allocation6 + $0xdc] sm:$0xf]
    %v135 = vld [vmem:[#allocation6 + $0xe0] sm:$0xff]
    %v136 = vld [vmem:[#allocation6 + $0xe8] sm:$0xff]
    %v137 = vld [vmem:[#allocation6 + $0xf0] sm:$0xff]
    %v138 = vld [vmem:[#allocation6 + $0xf8] sm:$0xf]
    %v139 = vld [vmem:[#allocation6 + $0xfc] sm:$0xff]
    %v140 = vld [vmem:[#allocation6 + $0x104] sm:$0xff]
    %v141 = vld [vmem:[#allocation6 + $0x10c] sm:$0xff]
    %v142 = vld [vmem:[#allocation6 + $0x114] sm:$0xf]
    %v143 = vld [vmem:[#allocation6 + $0x118] sm:$0xff]
    %v144 = vld [vmem:[#allocation6 + $0x120] sm:$0xff]
    %v145 = vld [vmem:[#allocation6 + $0x128] sm:$0xff]
    %v146 = vld [vmem:[#allocation6 + $0x130] sm:$0xf]
    %v147 = vld [vmem:[#allocation6 + $0x134] sm:$0xff]
    %v148 = vld [vmem:[#allocation6 + $0x13c] sm:$0xff]
    %v149 = vld [vmem:[#allocation6 + $0x144] sm:$0xff]
    %v150 = vld [vmem:[#allocation6 + $0x14c] sm:$0xf]
    %v151 = vld [vmem:[#allocation6 + $0x150] sm:$0xff]
    %v152 = vld [vmem:[#allocation6 + $0x158] sm:$0xff]
    %v153 = vld [vmem:[#allocation6 + $0x160] sm:$0xff]
    %v154 = vld [vmem:[#allocation6 + $0x168] sm:$0xf]
    %v155 = vld [vmem:[#allocation6 + $0x16c] sm:$0xff]
    %v156 = vld [vmem:[#allocation6 + $0x174] sm:$0xff]
    %v157 = vld [vmem:[#allocation6 + $0x17c] sm:$0xff]
    %v158 = vld [vmem:[#allocation6 + $0x184] sm:$0xf]
    %v159 = vld [vmem:[#allocation8] sm:$0xff]
    %v160 = vld [vmem:[#allocation8 + $0x8] sm:$0xff]
    %v161 = vld [vmem:[#allocation8 + $0x10] sm:$0xff]
    %v162 = vld [vmem:[#allocation8 + $0x18] sm:$0xff]
    %v163 = vld [vmem:[#allocation9] sm:$0xff]
    %v164 = vld [vmem:[#allocation9 + $0x8] sm:$0xff]
    %v165 = vld [vmem:[#allocation9 + $0x10] sm:$0xff]
    %v166 = vld [vmem:[#allocation9 + $0x18] sm:$0xff]
    %v167 = vld [vmem:[#allocation9 + $0x20] sm:$0xff]
    %v168 = vld [vmem:[#allocation9 + $0x28] sm:$0xff]
    %v169 = vld [vmem:[#allocation9 + $0x30] sm:$0xff]
    %v170 = vld [vmem:[#allocation9 + $0x38] sm:$0xff]
    %v171 = vld [vmem:[#allocation9 + $0x40] sm:$0xff]
    %v172 = vld [vmem:[#allocation9 + $0x48] sm:$0xff]
    %v173 = vld [vmem:[#allocation9 + $0x50] sm:$0xff]
    %v174 = vld [vmem:[#allocation9 + $0x58] sm:$0xff]
    %v175 = vld [vmem:[#allocation9 + $0x60] sm:$0xff]
    %v176 = vld [vmem:[#allocation9 + $0x68] sm:$0xff]
    %v177 = vld [vmem:[#allocation9 + $0x70] sm:$0xff]
    %v178 = vld [vmem:[#allocation9 + $0x78] sm:$0xff]
    %v179 = vld [vmem:[#allocation9 + $0x80] sm:$0xff]
    %v180 = vld [vmem:[#allocation9 + $0x88] sm:$0xff]
    %v181 = vld [vmem:[#allocation9 + $0x90] sm:$0xff]
    %v182 = vld [vmem:[#allocation9 + $0x98] sm:$0xff]
    %v183 = vld [vmem:[#allocation9 + $0xa0] sm:$0xff]
    %v184 = vld [vmem:[#allocation9 + $0xa8] sm:$0xff]
    %v185 = vld [vmem:[#allocation9 + $0xb0] sm:$0xff]
    %v186 = vld [vmem:[#allocation9 + $0xb8] sm:$0xff]
    %v187 = vld [vmem:[#allocation9 + $0xc0] sm:$0xff]
    %v188 = vld [vmem:[#allocation9 + $0xc8] sm:$0xff]
    %v189 = vld [vmem:[#allocation9 + $0xd0] sm:$0xff]
    %v190 = vld [vmem:[#allocation9 + $0xd8] sm:$0xff]
    %v191 = vld [vmem:[#allocation9 + $0xe0] sm:$0xff]
    %v192 = vld [vmem:[#allocation9 + $0xe8] sm:$0xff]
    %v193 = vld [vmem:[#allocation11] sm:$0xff]
    %v194 = vld [vmem:[#allocation11 + $0x8] sm:$0xff]
    %v195 = vld [vmem:[#allocation11 + $0x10] sm:$0xff]
    %v196 = vld [vmem:[#allocation11 + $0x18] sm:$0xff]
    %v197 = vld [vmem:[#allocation11 + $0x20] sm:$0xff]
    %v198 = vld [vmem:[#allocation11 + $0x28] sm:$0xff]
    %v199 = vld [vmem:[#allocation11 + $0x30] sm:$0xff]
    %v200 = vld [vmem:[#allocation11 + $0x38] sm:$0xff]
    %v201 = vld [vmem:[#allocation11 + $0x40] sm:$0xff]
    %v202 = vld [vmem:[#allocation11 + $0x48] sm:$0xff]
    %v203 = vld [vmem:[#allocation11 + $0x50] sm:$0xff]
    %v204 = vld [vmem:[#allocation11 + $0x58] sm:$0xff]
    %v205 = vld [vmem:[#allocation11 + $0x60] sm:$0xff]
    %v206 = vld [vmem:[#allocation11 + $0x68] sm:$0xff]
    %v207 = vld [vmem:[#allocation11 + $0x70] sm:$0xff]
    %v208 = vld [vmem:[#allocation11 + $0x78] sm:$0xff]
    %v209 = vld [vmem:[#allocation11 + $0x80] sm:$0xff]
    %v210 = vld [vmem:[#allocation11 + $0x88] sm:$0xff]
    %v211 = vld [vmem:[#allocation11 + $0x90] sm:$0xff]
    %v212 = vld [vmem:[#allocation11 + $0x98] sm:$0xff]
    %v213 = vld [vmem:[#allocation11 + $0xa0] sm:$0xff]
    %v214 = vld [vmem:[#allocation11 + $0xa8] sm:$0xff]
    %v215 = vld [vmem:[#allocation11 + $0xb0] sm:$0xff]
    %v216 = vld [vmem:[#allocation11 + $0xb8] sm:$0xff]
    %v217 = vld [vmem:[#allocation11 + $0xc0] sm:$0xff]
    %v218 = vld [vmem:[#allocation11 + $0xc8] sm:$0xff]
    %v219 = vld [vmem:[#allocation11 + $0xd0] sm:$0xff]
    %v220 = vld [vmem:[#allocation11 + $0xd8] sm:$0xff]
    %v221 = vld [vmem:[#allocation11 + $0xe0] sm:$0xff]
    %v222 = vld [vmem:[#allocation11 + $0xe8] sm:$0xff]
    %v223 = vld [vmem:[%s0] sm:$0xff]
    %v224 = vld [vmem:[%s0 + $0x8] sm:$0xff]
    %v225 = vld [vmem:[%s0 + $0x10] sm:$0xff]
    %v226 = vld [vmem:[%s0 + $0x18] sm:$0xff]
    %v227 = vld [vmem:[%s0 + $0x20] sm:$0xff]
    %v228 = vld [vmem:[%s0 + $0x28] sm:$0xff]
    %v229 = vld [vmem:[%s0 + $0x30] sm:$0xff]
    %v230 = vld [vmem:[%s0 + $0x38] sm:$0xff]
    %231 = vrot.lane.b32.xlu0 %v223, 34
    %v232 = vpop.permute.xlu0 %231
    %233 = vrot.lane.b32.xlu0 %v225, 34
    %v234 = vpop.permute.xlu0 %233
    %235 = vrot.lane.b32.xlu0 %v227, 34
    %v236 = vpop.permute.xlu0 %235
    %237 = vrot.lane.b32.xlu0 %v229, 34
    %v238 = vpop.permute.xlu0 %237
    %239 = vrot.lane.b32.xlu0 %v224, 34
    %v240 = vpop.permute.xlu0 %239
    %241 = vrot.lane.b32.xlu0 %v226, 34
    %v242 = vpop.permute.xlu0 %241
    %243 = vrot.lane.b32.xlu0 %v228, 34
    %v244 = vpop.permute.xlu0 %243
    %245 = vrot.lane.b32.xlu0 %v230, 34
    %v246 = vpop.permute.xlu0 %245
    %v247 = vlaneseq
    %v248 = vand.u32 %v247, 127
    %vm249 = vcmp.lt.s32.totalorder %v248, 34
    %v250 = vsel %vm249, %v232, %v240
    %v251 = vsel %vm249, %v234, %v242
    %v252 = vsel %vm249, %v236, %v244
    %v253 = vsel %vm249, %v238, %v246
    %v254 = vsel %vm249, %v240, %v232
    %v255 = vsel %vm249, %v242, %v234
    %v256 = vsel %vm249, %v244, %v236
    %v257 = vsel %vm249, %v246, %v238
    %v258 = vld [vmem:[#allocation3] ss:$8 sm:$0x3]
    %v260 = vlaneseq
    %v261 = vshrl.u32 %v260, 7
    %v262 = vsub.s32 0, %v261
    %v263 = vrot.slane %v258, %v262
    %v264 = vlaneseq
    %v265 = vshrl.u32 %v264, 7
    %v266 = vsub.s32 1, %v265
    %v267 = vrot.slane %v258, %v266
    %v270 = vmul.f32 %v254, %v263
    %v271 = vmul.f32 %v250, %v267
    %v272 = vmul.f32 %v255, %v263
    %v273 = vmul.f32 %v251, %v267
    %v274 = vmul.f32 %v256, %v263
    %v275 = vmul.f32 %v252, %v267
    %v276 = vmul.f32 %v257, %v263
    %v277 = vmul.f32 %v253, %v267
    %v278 = vpack.c.bf16 %v272, %v270
    %v279 = vpack.c.bf16 %v273, %v271
    %v280 = vpack.c.bf16 %v276, %v274
    %v281 = vpack.c.bf16 %v277, %v275
    %v286 = vunpack.c.l.b16 %v278
    %v287 = vunpack.c.l.b16 %v279
    %v288 = vunpack.c.h.b16 %v278
    %v289 = vunpack.c.h.b16 %v279
    %v290 = vunpack.c.l.b16 %v280
    %v291 = vunpack.c.l.b16 %v281
    %v292 = vunpack.c.h.b16 %v280
    %v293 = vunpack.c.h.b16 %v281
    %v294 = vpack.c.b16 %v287, %v286
    %v295 = vpack.c.b16 %v289, %v288
    %v296 = vpack.c.b16 %v291, %v290
    %v297 = vpack.c.b16 %v293, %v292
    %302 = vst [vmem:[#allocation2] sm:$0xff] %v294
    %303 = vst [vmem:[#allocation2 + $0x8] sm:$0xff] %v295
    %304 = vst [vmem:[#allocation2 + $0x10] sm:$0xff] %v296
    %305 = vst [vmem:[#allocation2 + $0x18] sm:$0xff] %v297
    %306 = vrot.lane.b32.xlu0 %v223, 33
    %v307 = vpop.permute.xlu0 %306
    %308 = vrot.lane.b32.xlu0 %v225, 33
    %v309 = vpop.permute.xlu0 %308
    %310 = vrot.lane.b32.xlu0 %v227, 33
    %v311 = vpop.permute.xlu0 %310
    %312 = vrot.lane.b32.xlu0 %v229, 33
    %v313 = vpop.permute.xlu0 %312
    %314 = vrot.lane.b32.xlu0 %v224, 33
    %v315 = vpop.permute.xlu0 %314
    %316 = vrot.lane.b32.xlu0 %v226, 33
    %v317 = vpop.permute.xlu0 %316
    %318 = vrot.lane.b32.xlu0 %v228, 33
    %v319 = vpop.permute.xlu0 %318
    %320 = vrot.lane.b32.xlu0 %v230, 33
    %v321 = vpop.permute.xlu0 %320
    %vm322 = vcmp.lt.s32.totalorder %v248, 33
    %v323 = vsel %vm322, %v307, %v315
    %v324 = vsel %vm322, %v309, %v317
    %v325 = vsel %vm322, %v311, %v319
    %v326 = vsel %vm322, %v313, %v321
    %v327 = vsel %vm322, %v315, %v307
    %v328 = vsel %vm322, %v317, %v309
    %v329 = vsel %vm322, %v319, %v311
    %v330 = vsel %vm322, %v321, %v313
    %s331 = scalar_lea.vmem [#allocation3], 1
    %v332 = vld [vmem:[%s331] ss:$8 sm:$0x3]
    %v334 = vlaneseq
    %v335 = vshrl.u32 %v334, 7
    %v336 = vsub.s32 0, %v335
    %v337 = vrot.slane %v332, %v336
    %v338 = vlaneseq
    %v339 = vshrl.u32 %v338, 7
    %v340 = vsub.s32 1, %v339
    %v341 = vrot.slane %v332, %v340
    %v344 = vmul.f32 %v327, %v337
    %v345 = vmul.f32 %v323, %v341
    %v346 = vmul.f32 %v328, %v337
    %v347 = vmul.f32 %v324, %v341
    %v348 = vmul.f32 %v329, %v337
    %v349 = vmul.f32 %v325, %v341
    %v350 = vmul.f32 %v330, %v337
    %v351 = vmul.f32 %v326, %v341
    %v352 = vpack.c.bf16 %v346, %v344
    %v353 = vpack.c.bf16 %v347, %v345
    %v354 = vpack.c.bf16 %v350, %v348
    %v355 = vpack.c.bf16 %v351, %v349
    %v360 = vunpack.c.l.b16 %v352
    %v361 = vunpack.c.l.b16 %v353
    %v362 = vunpack.c.h.b16 %v352
    %v363 = vunpack.c.h.b16 %v353
    %v364 = vunpack.c.l.b16 %v354
    %v365 = vunpack.c.l.b16 %v355
    %v366 = vunpack.c.h.b16 %v354
    %v367 = vunpack.c.h.b16 %v355
    %v368 = vpack.c.b16 %v361, %v360
    %v369 = vpack.c.b16 %v363, %v362
    %v370 = vpack.c.b16 %v365, %v364
    %v371 = vpack.c.b16 %v367, %v366
    %376 = vst [vmem:[#allocation2 + $0x20] sm:$0xff] %v368
    %377 = vst [vmem:[#allocation2 + $0x28] sm:$0xff] %v369
    %378 = vst [vmem:[#allocation2 + $0x30] sm:$0xff] %v370
    %379 = vst [vmem:[#allocation2 + $0x38] sm:$0xff] %v371
    %380 = vrot.lane.b32.xlu0 %v223, 32
    %v381 = vpop.permute.xlu0 %380
    %382 = vrot.lane.b32.xlu0 %v225, 32
    %v383 = vpop.permute.xlu0 %382
    %384 = vrot.lane.b32.xlu0 %v227, 32
    %v385 = vpop.permute.xlu0 %384
    %386 = vrot.lane.b32.xlu0 %v229, 32
    %v387 = vpop.permute.xlu0 %386
    %388 = vrot.lane.b32.xlu0 %v224, 32
    %v389 = vpop.permute.xlu0 %388
    %390 = vrot.lane.b32.xlu0 %v226, 32
    %v391 = vpop.permute.xlu0 %390
    %392 = vrot.lane.b32.xlu0 %v228, 32
    %v393 = vpop.permute.xlu0 %392
    %394 = vrot.lane.b32.xlu0 %v230, 32
    %v395 = vpop.permute.xlu0 %394
    %vm396 = vcmp.lt.s32.totalorder %v248, 32
    %v397 = vsel %vm396, %v381, %v389
    %v398 = vsel %vm396, %v383, %v391
    %v399 = vsel %vm396, %v385, %v393
    %v400 = vsel %vm396, %v387, %v395
    %v401 = vsel %vm396, %v389, %v381
    %v402 = vsel %vm396, %v391, %v383
    %v403 = vsel %vm396, %v393, %v385
    %v404 = vsel %vm396, %v395, %v387
    %s405 = scalar_lea.vmem [#allocation3], 2
    %v406 = vld [vmem:[%s405] ss:$8 sm:$0x3]
    %v408 = vlaneseq
    %v409 = vshrl.u32 %v408, 7
    %v410 = vsub.s32 0, %v409
    %v411 = vrot.slane %v406, %v410
    %v412 = vlaneseq
    %v413 = vshrl.u32 %v412, 7
    %v414 = vsub.s32 1, %v413
    %v415 = vrot.slane %v406, %v414
    %v418 = vmul.f32 %v401, %v411
    %v419 = vmul.f32 %v397, %v415
    %v420 = vmul.f32 %v402, %v411
    %v421 = vmul.f32 %v398, %v415
    %v422 = vmul.f32 %v403, %v411
    %v423 = vmul.f32 %v399, %v415
    %v424 = vmul.f32 %v404, %v411
    %v425 = vmul.f32 %v400, %v415
    %v426 = vpack.c.bf16 %v420, %v418
    %v427 = vpack.c.bf16 %v421, %v419
    %v428 = vpack.c.bf16 %v424, %v422
    %v429 = vpack.c.bf16 %v425, %v423
    %v434 = vunpack.c.l.b16 %v426
    %v435 = vunpack.c.l.b16 %v427
    %v436 = vunpack.c.h.b16 %v426
    %v437 = vunpack.c.h.b16 %v427
    %v438 = vunpack.c.l.b16 %v428
    %v439 = vunpack.c.l.b16 %v429
    %v440 = vunpack.c.h.b16 %v428
    %v441 = vunpack.c.h.b16 %v429
    %v442 = vpack.c.b16 %v435, %v434
    %v443 = vpack.c.b16 %v437, %v436
    %v444 = vpack.c.b16 %v439, %v438
    %v445 = vpack.c.b16 %v441, %v440
    %450 = vst [vmem:[#allocation2 + $0x40] sm:$0xff] %v442
    %451 = vst [vmem:[#allocation2 + $0x48] sm:$0xff] %v443
    %452 = vst [vmem:[#allocation2 + $0x50] sm:$0xff] %v444
    %453 = vst [vmem:[#allocation2 + $0x58] sm:$0xff] %v445
    %454 = vrot.lane.b32.xlu0 %v223, 31
    %v455 = vpop.permute.xlu0 %454
    %456 = vrot.lane.b32.xlu0 %v225, 31
    %v457 = vpop.permute.xlu0 %456
    %458 = vrot.lane.b32.xlu0 %v227, 31
    %v459 = vpop.permute.xlu0 %458
    %460 = vrot.lane.b32.xlu0 %v229, 31
    %v461 = vpop.permute.xlu0 %460
    %462 = vrot.lane.b32.xlu0 %v224, 31
    %v463 = vpop.permute.xlu0 %462
    %464 = vrot.lane.b32.xlu0 %v226, 31
    %v465 = vpop.permute.xlu0 %464
    %466 = vrot.lane.b32.xlu0 %v228, 31
    %v467 = vpop.permute.xlu0 %466
    %468 = vrot.lane.b32.xlu0 %v230, 31
    %v469 = vpop.permute.xlu0 %468
    %vm470 = vcmp.lt.s32.totalorder %v248, 31
    %v471 = vsel %vm470, %v455, %v463
    %v472 = vsel %vm470, %v457, %v465
    %v473 = vsel %vm470, %v459, %v467
    %v474 = vsel %vm470, %v461, %v469
    %v475 = vsel %vm470, %v463, %v455
    %v476 = vsel %vm470, %v465, %v457
    %v477 = vsel %vm470, %v467, %v459
    %v478 = vsel %vm470, %v469, %v461
    %s479 = scalar_lea.vmem [#allocation3], 3
    %v480 = vld [vmem:[%s479] ss:$8 sm:$0x3]
    %v482 = vlaneseq
    %v483 = vshrl.u32 %v482, 7
    %v484 = vsub.s32 0, %v483
    %v485 = vrot.slane %v480, %v484
    %v486 = vlaneseq
    %v487 = vshrl.u32 %v486, 7
    %v488 = vsub.s32 1, %v487
    %v489 = vrot.slane %v480, %v488
    %v492 = vmul.f32 %v475, %v485
    %v493 = vmul.f32 %v471, %v489
    %v494 = vmul.f32 %v476, %v485
    %v495 = vmul.f32 %v472, %v489
    %v496 = vmul.f32 %v477, %v485
    %v497 = vmul.f32 %v473, %v489
    %v498 = vmul.f32 %v478, %v485
    %v499 = vmul.f32 %v474, %v489
    %v500 = vpack.c.bf16 %v494, %v492
    %v501 = vpack.c.bf16 %v495, %v493
    %v502 = vpack.c.bf16 %v498, %v496
    %v503 = vpack.c.bf16 %v499, %v497
    %v508 = vunpack.c.l.b16 %v500
    %v509 = vunpack.c.l.b16 %v501
    %v510 = vunpack.c.h.b16 %v500
    %v511 = vunpack.c.h.b16 %v501
    %v512 = vunpack.c.l.b16 %v502
    %v513 = vunpack.c.l.b16 %v503
    %v514 = vunpack.c.h.b16 %v502
    %v515 = vunpack.c.h.b16 %v503
    %v516 = vpack.c.b16 %v509, %v508
    %v517 = vpack.c.b16 %v511, %v510
    %v518 = vpack.c.b16 %v513, %v512
    %v519 = vpack.c.b16 %v515, %v514
    %524 = vst [vmem:[#allocation2 + $0x60] sm:$0xff] %v516
    %525 = vst [vmem:[#allocation2 + $0x68] sm:$0xff] %v517
    %526 = vst [vmem:[#allocation2 + $0x70] sm:$0xff] %v518
    %527 = vst [vmem:[#allocation2 + $0x78] sm:$0xff] %v519
    %528 = vrot.lane.b32.xlu0 %v223, 30
    %v529 = vpop.permute.xlu0 %528
    %530 = vrot.lane.b32.xlu0 %v225, 30
    %v531 = vpop.permute.xlu0 %530
    %532 = vrot.lane.b32.xlu0 %v227, 30
    %v533 = vpop.permute.xlu0 %532
    %534 = vrot.lane.b32.xlu0 %v229, 30
    %v535 = vpop.permute.xlu0 %534
    %536 = vrot.lane.b32.xlu0 %v224, 30
    %v537 = vpop.permute.xlu0 %536
    %538 = vrot.lane.b32.xlu0 %v226, 30
    %v539 = vpop.permute.xlu0 %538
    %540 = vrot.lane.b32.xlu0 %v228, 30
    %v541 = vpop.permute.xlu0 %540
    %542 = vrot.lane.b32.xlu0 %v230, 30
    %v543 = vpop.permute.xlu0 %542
    %vm544 = vcmp.lt.s32.totalorder %v248, 30
    %v545 = vsel %vm544, %v529, %v537
    %v546 = vsel %vm544, %v531, %v539
    %v547 = vsel %vm544, %v533, %v541
    %v548 = vsel %vm544, %v535, %v543
    %v549 = vsel %vm544, %v537, %v529
    %v550 = vsel %vm544, %v539, %v531
    %v551 = vsel %vm544, %v541, %v533
    %v552 = vsel %vm544, %v543, %v535
    %s553 = scalar_lea.vmem [#allocation3], 4
    %v554 = vld [vmem:[%s553] ss:$8 sm:$0x3]
    %v556 = vlaneseq
    %v557 = vshrl.u32 %v556, 7
    %v558 = vsub.s32 0, %v557
    %v559 = vrot.slane %v554, %v558
    %v560 = vlaneseq
    %v561 = vshrl.u32 %v560, 7
    %v562 = vsub.s32 1, %v561
    %v563 = vrot.slane %v554, %v562
    %v566 = vmul.f32 %v549, %v559
    %v567 = vmul.f32 %v545, %v563
    %v568 = vmul.f32 %v550, %v559
    %v569 = vmul.f32 %v546, %v563
    %v570 = vmul.f32 %v551, %v559
    %v571 = vmul.f32 %v547, %v563
    %v572 = vmul.f32 %v552, %v559
    %v573 = vmul.f32 %v548, %v563
    %v574 = vpack.c.bf16 %v568, %v566
    %v575 = vpack.c.bf16 %v569, %v567
    %v576 = vpack.c.bf16 %v572, %v570
    %v577 = vpack.c.bf16 %v573, %v571
    %v582 = vunpack.c.l.b16 %v574
    %v583 = vunpack.c.l.b16 %v575
    %v584 = vunpack.c.h.b16 %v574
    %v585 = vunpack.c.h.b16 %v575
    %v586 = vunpack.c.l.b16 %v576
    %v587 = vunpack.c.l.b16 %v577
    %v588 = vunpack.c.h.b16 %v576
    %v589 = vunpack.c.h.b16 %v577
    %v590 = vpack.c.b16 %v583, %v582
    %v591 = vpack.c.b16 %v585, %v584
    %v592 = vpack.c.b16 %v587, %v586
    %v593 = vpack.c.b16 %v589, %v588
    %598 = vst [vmem:[#allocation2 + $0x80] sm:$0xff] %v590
    %599 = vst [vmem:[#allocation2 + $0x88] sm:$0xff] %v591
    %600 = vst [vmem:[#allocation2 + $0x90] sm:$0xff] %v592
    %601 = vst [vmem:[#allocation2 + $0x98] sm:$0xff] %v593
    %602 = vrot.lane.b32.xlu0 %v223, 18
    %v603 = vpop.permute.xlu0 %602
    %604 = vrot.lane.b32.xlu0 %v225, 18
    %v605 = vpop.permute.xlu0 %604
    %606 = vrot.lane.b32.xlu0 %v227, 18
    %v607 = vpop.permute.xlu0 %606
    %608 = vrot.lane.b32.xlu0 %v229, 18
    %v609 = vpop.permute.xlu0 %608
    %610 = vrot.lane.b32.xlu0 %v224, 18
    %v611 = vpop.permute.xlu0 %610
    %612 = vrot.lane.b32.xlu0 %v226, 18
    %v613 = vpop.permute.xlu0 %612
    %614 = vrot.lane.b32.xlu0 %v228, 18
    %v615 = vpop.permute.xlu0 %614
    %616 = vrot.lane.b32.xlu0 %v230, 18
    %v617 = vpop.permute.xlu0 %616
    %vm618 = vcmp.lt.s32.totalorder %v248, 18
    %v619 = vsel %vm618, %v603, %v611
    %v620 = vsel %vm618, %v605, %v613
    %v621 = vsel %vm618, %v607, %v615
    %v622 = vsel %vm618, %v609, %v617
    %v623 = vsel %vm618, %v611, %v603
    %v624 = vsel %vm618, %v613, %v605
    %v625 = vsel %vm618, %v615, %v607
    %v626 = vsel %vm618, %v617, %v609
    %s627 = scalar_lea.vmem [#allocation3], 5
    %v628 = vld [vmem:[%s627] ss:$8 sm:$0x3]
    %v630 = vlaneseq
    %v631 = vshrl.u32 %v630, 7
    %v632 = vsub.s32 0, %v631
    %v633 = vrot.slane %v628, %v632
    %v634 = vlaneseq
    %v635 = vshrl.u32 %v634, 7
    %v636 = vsub.s32 1, %v635
    %v637 = vrot.slane %v628, %v636
    %v640 = vmul.f32 %v623, %v633
    %v641 = vmul.f32 %v619, %v637
    %v642 = vmul.f32 %v624, %v633
    %v643 = vmul.f32 %v620, %v637
    %v644 = vmul.f32 %v625, %v633
    %v645 = vmul.f32 %v621, %v637
    %v646 = vmul.f32 %v626, %v633
    %v647 = vmul.f32 %v622, %v637
    %v648 = vpack.c.bf16 %v642, %v640
    %v649 = vpack.c.bf16 %v643, %v641
    %v650 = vpack.c.bf16 %v646, %v644
    %v651 = vpack.c.bf16 %v647, %v645
    %v656 = vunpack.c.l.b16 %v648
    %v657 = vunpack.c.l.b16 %v649
    %v658 = vunpack.c.h.b16 %v648
    %v659 = vunpack.c.h.b16 %v649
    %v660 = vunpack.c.l.b16 %v650
    %v661 = vunpack.c.l.b16 %v651
    %v662 = vunpack.c.h.b16 %v650
    %v663 = vunpack.c.h.b16 %v651
    %v664 = vpack.c.b16 %v657, %v656
    %v665 = vpack.c.b16 %v659, %v658
    %v666 = vpack.c.b16 %v661, %v660
    %v667 = vpack.c.b16 %v663, %v662
    %672 = vst [vmem:[#allocation2 + $0xa0] sm:$0xff] %v664
    %673 = vst [vmem:[#allocation2 + $0xa8] sm:$0xff] %v665
    %674 = vst [vmem:[#allocation2 + $0xb0] sm:$0xff] %v666
    %675 = vst [vmem:[#allocation2 + $0xb8] sm:$0xff] %v667
    %676 = vrot.lane.b32.xlu0 %v223, 17
    %v677 = vpop.permute.xlu0 %676
    %678 = vrot.lane.b32.xlu0 %v225, 17
    %v679 = vpop.permute.xlu0 %678
    %680 = vrot.lane.b32.xlu0 %v227, 17
    %v681 = vpop.permute.xlu0 %680
    %682 = vrot.lane.b32.xlu0 %v229, 17
    %v683 = vpop.permute.xlu0 %682
    %684 = vrot.lane.b32.xlu0 %v224, 17
    %v685 = vpop.permute.xlu0 %684
    %686 = vrot.lane.b32.xlu0 %v226, 17
    %v687 = vpop.permute.xlu0 %686
    %688 = vrot.lane.b32.xlu0 %v228, 17
    %v689 = vpop.permute.xlu0 %688
    %690 = vrot.lane.b32.xlu0 %v230, 17
    %v691 = vpop.permute.xlu0 %690
    %vm692 = vcmp.lt.s32.totalorder %v248, 17
    %v693 = vsel %vm692, %v677, %v685
    %v694 = vsel %vm692, %v679, %v687
    %v695 = vsel %vm692, %v681, %v689
    %v696 = vsel %vm692, %v683, %v691
    %v697 = vsel %vm692, %v685, %v677
    %v698 = vsel %vm692, %v687, %v679
    %v699 = vsel %vm692, %v689, %v681
    %v700 = vsel %vm692, %v691, %v683
    %s701 = scalar_lea.vmem [#allocation3], 6
    %v702 = vld [vmem:[%s701] ss:$8 sm:$0x3]
    %v704 = vlaneseq
    %v705 = vshrl.u32 %v704, 7
    %v706 = vsub.s32 0, %v705
    %v707 = vrot.slane %v702, %v706
    %v708 = vlaneseq
    %v709 = vshrl.u32 %v708, 7
    %v710 = vsub.s32 1, %v709
    %v711 = vrot.slane %v702, %v710
    %v714 = vmul.f32 %v697, %v707
    %v715 = vmul.f32 %v693, %v711
    %v716 = vmul.f32 %v698, %v707
    %v717 = vmul.f32 %v694, %v711
    %v718 = vmul.f32 %v699, %v707
    %v719 = vmul.f32 %v695, %v711
    %v720 = vmul.f32 %v700, %v707
    %v721 = vmul.f32 %v696, %v711
    %v722 = vpack.c.bf16 %v716, %v714
    %v723 = vpack.c.bf16 %v717, %v715
    %v724 = vpack.c.bf16 %v720, %v718
    %v725 = vpack.c.bf16 %v721, %v719
    %v730 = vunpack.c.l.b16 %v722
    %v731 = vunpack.c.l.b16 %v723
    %v732 = vunpack.c.h.b16 %v722
    %v733 = vunpack.c.h.b16 %v723
    %v734 = vunpack.c.l.b16 %v724
    %v735 = vunpack.c.l.b16 %v725
    %v736 = vunpack.c.h.b16 %v724
    %v737 = vunpack.c.h.b16 %v725
    %v738 = vpack.c.b16 %v731, %v730
    %v739 = vpack.c.b16 %v733, %v732
    %v740 = vpack.c.b16 %v735, %v734
    %v741 = vpack.c.b16 %v737, %v736
    %746 = vst [vmem:[#allocation2 + $0xc0] sm:$0xff] %v738
    %747 = vst [vmem:[#allocation2 + $0xc8] sm:$0xff] %v739
    %748 = vst [vmem:[#allocation2 + $0xd0] sm:$0xff] %v740
    %749 = vst [vmem:[#allocation2 + $0xd8] sm:$0xff] %v741
    %750 = vrot.lane.b32.xlu0 %v223, 16
    %v751 = vpop.permute.xlu0 %750
    %752 = vrot.lane.b32.xlu0 %v225, 16
    %v753 = vpop.permute.xlu0 %752
    %754 = vrot.lane.b32.xlu0 %v227, 16
    %v755 = vpop.permute.xlu0 %754
    %756 = vrot.lane.b32.xlu0 %v229, 16
    %v757 = vpop.permute.xlu0 %756
    %758 = vrot.lane.b32.xlu0 %v224, 16
    %v759 = vpop.permute.xlu0 %758
    %760 = vrot.lane.b32.xlu0 %v226, 16
    %v761 = vpop.permute.xlu0 %760
    %762 = vrot.lane.b32.xlu0 %v228, 16
    %v763 = vpop.permute.xlu0 %762
    %764 = vrot.lane.b32.xlu0 %v230, 16
    %v765 = vpop.permute.xlu0 %764
    %vm766 = vcmp.lt.s32.totalorder %v248, 16
    %v767 = vsel %vm766, %v751, %v759
    %v768 = vsel %vm766, %v753, %v761
    %v769 = vsel %vm766, %v755, %v763
    %v770 = vsel %vm766, %v757, %v765
    %v771 = vsel %vm766, %v759, %v751
    %v772 = vsel %vm766, %v761, %v753
    %v773 = vsel %vm766, %v763, %v755
    %v774 = vsel %vm766, %v765, %v757
    %s775 = scalar_lea.vmem [#allocation3], 7
    %v776 = vld [vmem:[%s775] ss:$8 sm:$0x3]
    %v778 = vlaneseq
    %v779 = vshrl.u32 %v778, 7
    %v780 = vsub.s32 0, %v779
    %v781 = vrot.slane %v776, %v780
    %v782 = vlaneseq
    %v783 = vshrl.u32 %v782, 7
    %v784 = vsub.s32 1, %v783
    %v785 = vrot.slane %v776, %v784
    %v788 = vmul.f32 %v771, %v781
    %v789 = vmul.f32 %v767, %v785
    %v790 = vmul.f32 %v772, %v781
    %v791 = vmul.f32 %v768, %v785
    %v792 = vmul.f32 %v773, %v781
    %v793 = vmul.f32 %v769, %v785
    %v794 = vmul.f32 %v774, %v781
    %v795 = vmul.f32 %v770, %v785
    %v796 = vpack.c.bf16 %v790, %v788
    %v797 = vpack.c.bf16 %v791, %v789
    %v798 = vpack.c.bf16 %v794, %v792
    %v799 = vpack.c.bf16 %v795, %v793
    %v804 = vunpack.c.l.b16 %v796
    %v805 = vunpack.c.l.b16 %v797
    %v806 = vunpack.c.h.b16 %v796
    %v807 = vunpack.c.h.b16 %v797
    %v808 = vunpack.c.l.b16 %v798
    %v809 = vunpack.c.l.b16 %v799
    %v810 = vunpack.c.h.b16 %v798
    %v811 = vunpack.c.h.b16 %v799
    %v812 = vpack.c.b16 %v805, %v804
    %v813 = vpack.c.b16 %v807, %v806
    %v814 = vpack.c.b16 %v809, %v808
    %v815 = vpack.c.b16 %v811, %v810
    %820 = vst [vmem:[#allocation2 + $0xe0] sm:$0xff] %v812
    %821 = vst [vmem:[#allocation2 + $0xe8] sm:$0xff] %v813
    %822 = vst [vmem:[#allocation2 + $0xf0] sm:$0xff] %v814
    %823 = vst [vmem:[#allocation2 + $0xf8] sm:$0xff] %v815
    %824 = vrot.lane.b32.xlu0 %v223, 15
    %v825 = vpop.permute.xlu0 %824
    %826 = vrot.lane.b32.xlu0 %v225, 15
    %v827 = vpop.permute.xlu0 %826
    %828 = vrot.lane.b32.xlu0 %v227, 15
    %v829 = vpop.permute.xlu0 %828
    %830 = vrot.lane.b32.xlu0 %v229, 15
    %v831 = vpop.permute.xlu0 %830
    %832 = vrot.lane.b32.xlu0 %v224, 15
    %v833 = vpop.permute.xlu0 %832
    %834 = vrot.lane.b32.xlu0 %v226, 15
    %v835 = vpop.permute.xlu0 %834
    %836 = vrot.lane.b32.xlu0 %v228, 15
    %v837 = vpop.permute.xlu0 %836
    %838 = vrot.lane.b32.xlu0 %v230, 15
    %v839 = vpop.permute.xlu0 %838
    %vm840 = vcmp.lt.s32.totalorder %v248, 15
    %v841 = vsel %vm840, %v825, %v833
    %v842 = vsel %vm840, %v827, %v835
    %v843 = vsel %vm840, %v829, %v837
    %v844 = vsel %vm840, %v831, %v839
    %v845 = vsel %vm840, %v833, %v825
    %v846 = vsel %vm840, %v835, %v827
    %v847 = vsel %vm840, %v837, %v829
    %v848 = vsel %vm840, %v839, %v831
    %s849 = scalar_lea.vmem [#allocation3], 16
    %v850 = vld [vmem:[%s849] ss:$8 sm:$0x3]
    %v852 = vlaneseq
    %v853 = vshrl.u32 %v852, 7
    %v854 = vsub.s32 0, %v853
    %v855 = vrot.slane %v850, %v854
    %v856 = vlaneseq
    %v857 = vshrl.u32 %v856, 7
    %v858 = vsub.s32 1, %v857
    %v859 = vrot.slane %v850, %v858
    %v862 = vmul.f32 %v845, %v855
    %v863 = vmul.f32 %v841, %v859
    %v864 = vmul.f32 %v846, %v855
    %v865 = vmul.f32 %v842, %v859
    %v866 = vmul.f32 %v847, %v855
    %v867 = vmul.f32 %v843, %v859
    %v868 = vmul.f32 %v848, %v855
    %v869 = vmul.f32 %v844, %v859
    %v870 = vpack.c.bf16 %v864, %v862
    %v871 = vpack.c.bf16 %v865, %v863
    %v872 = vpack.c.bf16 %v868, %v866
    %v873 = vpack.c.bf16 %v869, %v867
    %v878 = vunpack.c.l.b16 %v870
    %v879 = vunpack.c.l.b16 %v871
    %v880 = vunpack.c.h.b16 %v870
    %v881 = vunpack.c.h.b16 %v871
    %v882 = vunpack.c.l.b16 %v872
    %v883 = vunpack.c.l.b16 %v873
    %v884 = vunpack.c.h.b16 %v872
    %v885 = vunpack.c.h.b16 %v873
    %v886 = vpack.c.b16 %v879, %v878
    %v887 = vpack.c.b16 %v881, %v880
    %v888 = vpack.c.b16 %v883, %v882
    %v889 = vpack.c.b16 %v885, %v884
    %894 = vst [vmem:[#allocation2 + $0x100] sm:$0xff] %v886
    %895 = vst [vmem:[#allocation2 + $0x108] sm:$0xff] %v887
    %896 = vst [vmem:[#allocation2 + $0x110] sm:$0xff] %v888
    %897 = vst [vmem:[#allocation2 + $0x118] sm:$0xff] %v889
    %898 = vrot.lane.b32.xlu0 %v223, 14
    %v899 = vpop.permute.xlu0 %898
    %900 = vrot.lane.b32.xlu0 %v225, 14
    %v901 = vpop.permute.xlu0 %900
    %902 = vrot.lane.b32.xlu0 %v227, 14
    %v903 = vpop.permute.xlu0 %902
    %904 = vrot.lane.b32.xlu0 %v229, 14
    %v905 = vpop.permute.xlu0 %904
    %906 = vrot.lane.b32.xlu0 %v224, 14
    %v907 = vpop.permute.xlu0 %906
    %908 = vrot.lane.b32.xlu0 %v226, 14
    %v909 = vpop.permute.xlu0 %908
    %910 = vrot.lane.b32.xlu0 %v228, 14
    %v911 = vpop.permute.xlu0 %910
    %912 = vrot.lane.b32.xlu0 %v230, 14
    %v913 = vpop.permute.xlu0 %912
    %vm914 = vcmp.lt.s32.totalorder %v248, 14
    %v915 = vsel %vm914, %v899, %v907
    %v916 = vsel %vm914, %v901, %v909
    %v917 = vsel %vm914, %v903, %v911
    %v918 = vsel %vm914, %v905, %v913
    %v919 = vsel %vm914, %v907, %v899
    %v920 = vsel %vm914, %v909, %v901
    %v921 = vsel %vm914, %v911, %v903
    %v922 = vsel %vm914, %v913, %v905
    %s923 = scalar_lea.vmem [#allocation3], 17
    %v924 = vld [vmem:[%s923] ss:$8 sm:$0x3]
    %v926 = vlaneseq
    %v927 = vshrl.u32 %v926, 7
    %v928 = vsub.s32 0, %v927
    %v929 = vrot.slane %v924, %v928
    %v930 = vlaneseq
    %v931 = vshrl.u32 %v930, 7
    %v932 = vsub.s32 1, %v931
    %v933 = vrot.slane %v924, %v932
    %v936 = vmul.f32 %v919, %v929
    %v937 = vmul.f32 %v915, %v933
    %v938 = vmul.f32 %v920, %v929
    %v939 = vmul.f32 %v916, %v933
    %v940 = vmul.f32 %v921, %v929
    %v941 = vmul.f32 %v917, %v933
    %v942 = vmul.f32 %v922, %v929
    %v943 = vmul.f32 %v918, %v933
    %v944 = vpack.c.bf16 %v938, %v936
    %v945 = vpack.c.bf16 %v939, %v937
    %v946 = vpack.c.bf16 %v942, %v940
    %v947 = vpack.c.bf16 %v943, %v941
    %v952 = vunpack.c.l.b16 %v944
    %v953 = vunpack.c.l.b16 %v945
    %v954 = vunpack.c.h.b16 %v944
    %v955 = vunpack.c.h.b16 %v945
    %v956 = vunpack.c.l.b16 %v946
    %v957 = vunpack.c.l.b16 %v947
    %v958 = vunpack.c.h.b16 %v946
    %v959 = vunpack.c.h.b16 %v947
    %v960 = vpack.c.b16 %v953, %v952
    %v961 = vpack.c.b16 %v955, %v954
    %v962 = vpack.c.b16 %v957, %v956
    %v963 = vpack.c.b16 %v959, %v958
    %968 = vst [vmem:[#allocation2 + $0x120] sm:$0xff] %v960
    %969 = vst [vmem:[#allocation2 + $0x128] sm:$0xff] %v961
    %970 = vst [vmem:[#allocation2 + $0x130] sm:$0xff] %v962
    %971 = vst [vmem:[#allocation2 + $0x138] sm:$0xff] %v963
    %972 = vrot.lane.b32.xlu0 %v223, 2
    %v973 = vpop.permute.xlu0 %972
    %974 = vrot.lane.b32.xlu0 %v225, 2
    %v975 = vpop.permute.xlu0 %974
    %976 = vrot.lane.b32.xlu0 %v227, 2
    %v977 = vpop.permute.xlu0 %976
    %978 = vrot.lane.b32.xlu0 %v229, 2
    %v979 = vpop.permute.xlu0 %978
    %980 = vrot.lane.b32.xlu0 %v224, 2
    %v981 = vpop.permute.xlu0 %980
    %982 = vrot.lane.b32.xlu0 %v226, 2
    %v983 = vpop.permute.xlu0 %982
    %984 = vrot.lane.b32.xlu0 %v228, 2
    %v985 = vpop.permute.xlu0 %984
    %986 = vrot.lane.b32.xlu0 %v230, 2
    %v987 = vpop.permute.xlu0 %986
    %vm988 = vcmp.lt.s32.totalorder %v248, 2
    %v989 = vsel %vm988, %v973, %v981
    %v990 = vsel %vm988, %v975, %v983
    %v991 = vsel %vm988, %v977, %v985
    %v992 = vsel %vm988, %v979, %v987
    %v993 = vsel %vm988, %v981, %v973
    %v994 = vsel %vm988, %v983, %v975
    %v995 = vsel %vm988, %v985, %v977
    %v996 = vsel %vm988, %v987, %v979
    %s997 = scalar_lea.vmem [#allocation3], 18
    %v998 = vld [vmem:[%s997] ss:$8 sm:$0x3]
    %v1000 = vlaneseq
    %v1001 = vshrl.u32 %v1000, 7
    %v1002 = vsub.s32 0, %v1001
    %v1003 = vrot.slane %v998, %v1002
    %v1004 = vlaneseq
    %v1005 = vshrl.u32 %v1004, 7
    %v1006 = vsub.s32 1, %v1005
    %v1007 = vrot.slane %v998, %v1006
    %v1010 = vmul.f32 %v993, %v1003
    %v1011 = vmul.f32 %v989, %v1007
    %v1012 = vmul.f32 %v994, %v1003
    %v1013 = vmul.f32 %v990, %v1007
    %v1014 = vmul.f32 %v995, %v1003
    %v1015 = vmul.f32 %v991, %v1007
    %v1016 = vmul.f32 %v996, %v1003
    %v1017 = vmul.f32 %v992, %v1007
    %v1018 = vpack.c.bf16 %v1012, %v1010
    %v1019 = vpack.c.bf16 %v1013, %v1011
    %v1020 = vpack.c.bf16 %v1016, %v1014
    %v1021 = vpack.c.bf16 %v1017, %v1015
    %v1026 = vunpack.c.l.b16 %v1018
    %v1027 = vunpack.c.l.b16 %v1019
    %v1028 = vunpack.c.h.b16 %v1018
    %v1029 = vunpack.c.h.b16 %v1019
    %v1030 = vunpack.c.l.b16 %v1020
    %v1031 = vunpack.c.l.b16 %v1021
    %v1032 = vunpack.c.h.b16 %v1020
    %v1033 = vunpack.c.h.b16 %v1021
    %v1034 = vpack.c.b16 %v1027, %v1026
    %v1035 = vpack.c.b16 %v1029, %v1028
    %v1036 = vpack.c.b16 %v1031, %v1030
    %v1037 = vpack.c.b16 %v1033, %v1032
    %1042 = vst [vmem:[#allocation2 + $0x140] sm:$0xff] %v1034
    %1043 = vst [vmem:[#allocation2 + $0x148] sm:$0xff] %v1035
    %1044 = vst [vmem:[#allocation2 + $0x150] sm:$0xff] %v1036
    %1045 = vst [vmem:[#allocation2 + $0x158] sm:$0xff] %v1037
    %1046 = vrot.lane.b32.xlu0 %v223, 1
    %v1047 = vpop.permute.xlu0 %1046
    %1048 = vrot.lane.b32.xlu0 %v225, 1
    %v1049 = vpop.permute.xlu0 %1048
    %1050 = vrot.lane.b32.xlu0 %v227, 1
    %v1051 = vpop.permute.xlu0 %1050
    %1052 = vrot.lane.b32.xlu0 %v229, 1
    %v1053 = vpop.permute.xlu0 %1052
    %1054 = vrot.lane.b32.xlu0 %v224, 1
    %v1055 = vpop.permute.xlu0 %1054
    %1056 = vrot.lane.b32.xlu0 %v226, 1
    %v1057 = vpop.permute.xlu0 %1056
    %1058 = vrot.lane.b32.xlu0 %v228, 1
    %v1059 = vpop.permute.xlu0 %1058
    %1060 = vrot.lane.b32.xlu0 %v230, 1
    %v1061 = vpop.permute.xlu0 %1060
    %vm1062 = vcmp.lt.s32.totalorder %v248, 1
    %v1063 = vsel %vm1062, %v1047, %v1055
    %v1064 = vsel %vm1062, %v1049, %v1057
    %v1065 = vsel %vm1062, %v1051, %v1059
    %v1066 = vsel %vm1062, %v1053, %v1061
    %v1067 = vsel %vm1062, %v1055, %v1047
    %v1068 = vsel %vm1062, %v1057, %v1049
    %v1069 = vsel %vm1062, %v1059, %v1051
    %v1070 = vsel %vm1062, %v1061, %v1053
    %s1071 = scalar_lea.vmem [#allocation3], 19
    %v1072 = vld [vmem:[%s1071] ss:$8 sm:$0x3]
    %v1074 = vlaneseq
    %v1075 = vshrl.u32 %v1074, 7
    %v1076 = vsub.s32 0, %v1075
    %v1077 = vrot.slane %v1072, %v1076
    %v1078 = vlaneseq
    %v1079 = vshrl.u32 %v1078, 7
    %v1080 = vsub.s32 1, %v1079
    %v1081 = vrot.slane %v1072, %v1080
    %v1084 = vmul.f32 %v1067, %v1077
    %v1085 = vmul.f32 %v1063, %v1081
    %v1086 = vmul.f32 %v1068, %v1077
    %v1087 = vmul.f32 %v1064, %v1081
    %v1088 = vmul.f32 %v1069, %v1077
    %v1089 = vmul.f32 %v1065, %v1081
    %v1090 = vmul.f32 %v1070, %v1077
    %v1091 = vmul.f32 %v1066, %v1081
    %v1092 = vpack.c.bf16 %v1086, %v1084
    %v1093 = vpack.c.bf16 %v1087, %v1085
    %v1094 = vpack.c.bf16 %v1090, %v1088
    %v1095 = vpack.c.bf16 %v1091, %v1089
    %v1100 = vunpack.c.l.b16 %v1092
    %v1101 = vunpack.c.l.b16 %v1093
    %v1102 = vunpack.c.h.b16 %v1092
    %v1103 = vunpack.c.h.b16 %v1093
    %v1104 = vunpack.c.l.b16 %v1094
    %v1105 = vunpack.c.l.b16 %v1095
    %v1106 = vunpack.c.h.b16 %v1094
    %v1107 = vunpack.c.h.b16 %v1095
    %v1108 = vpack.c.b16 %v1101, %v1100
    %v1109 = vpack.c.b16 %v1103, %v1102
    %v1110 = vpack.c.b16 %v1105, %v1104
    %v1111 = vpack.c.b16 %v1107, %v1106
    %1116 = vst [vmem:[#allocation2 + $0x160] sm:$0xff] %v1108
    %1117 = vst [vmem:[#allocation2 + $0x168] sm:$0xff] %v1109
    %1118 = vst [vmem:[#allocation2 + $0x170] sm:$0xff] %v1110
    %1119 = vst [vmem:[#allocation2 + $0x178] sm:$0xff] %v1111
    %v1120 = vpack.c.bf16 %v225, %v223
    %v1121 = vpack.c.bf16 %v226, %v224
    %v1122 = vpack.c.bf16 %v229, %v227
    %v1123 = vpack.c.bf16 %v230, %v228
    %v1128 = vunpack.c.l.b16 %v1120
    %v1129 = vunpack.c.l.b16 %v1121
    %v1130 = vunpack.c.h.b16 %v1120
    %v1131 = vunpack.c.h.b16 %v1121
    %v1132 = vunpack.c.l.b16 %v1122
    %v1133 = vunpack.c.l.b16 %v1123
    %v1134 = vunpack.c.h.b16 %v1122
    %v1135 = vunpack.c.h.b16 %v1123
    %v1136 = vpack.c.b16 %v1129, %v1128
    %v1137 = vpack.c.b16 %v1131, %v1130
    %v1138 = vpack.c.b16 %v1133, %v1132
    %v1139 = vpack.c.b16 %v1135, %v1134
    %1144 = vst [vmem:[#allocation2 + $0x180] sm:$0xff] %v1136
    %1145 = vst [vmem:[#allocation2 + $0x188] sm:$0xff] %v1137
    %1146 = vst [vmem:[#allocation2 + $0x190] sm:$0xff] %v1138
    %1147 = vst [vmem:[#allocation2 + $0x198] sm:$0xff] %v1139
    %1148 = vrot.lane.b32.xlu0 %v223, 127
    %v1149 = vpop.permute.xlu0 %1148
    %1150 = vrot.lane.b32.xlu0 %v225, 127
    %v1151 = vpop.permute.xlu0 %1150
    %1152 = vrot.lane.b32.xlu0 %v227, 127
    %v1153 = vpop.permute.xlu0 %1152
    %1154 = vrot.lane.b32.xlu0 %v229, 127
    %v1155 = vpop.permute.xlu0 %1154
    %1156 = vrot.lane.b32.xlu0 %v224, 127
    %v1157 = vpop.permute.xlu0 %1156
    %1158 = vrot.lane.b32.xlu0 %v226, 127
    %v1159 = vpop.permute.xlu0 %1158
    %1160 = vrot.lane.b32.xlu0 %v228, 127
    %v1161 = vpop.permute.xlu0 %1160
    %1162 = vrot.lane.b32.xlu0 %v230, 127
    %v1163 = vpop.permute.xlu0 %1162
    %vm1164 = vcmp.lt.s32.totalorder %v248, 127
    %v1165 = vsel %vm1164, %v1149, %v1157
    %v1166 = vsel %vm1164, %v1151, %v1159
    %v1167 = vsel %vm1164, %v1153, %v1161
    %v1168 = vsel %vm1164, %v1155, %v1163
    %v1169 = vsel %vm1164, %v1157, %v1149
    %v1170 = vsel %vm1164, %v1159, %v1151
    %v1171 = vsel %vm1164, %v1161, %v1153
    %v1172 = vsel %vm1164, %v1163, %v1155
    %s1173 = scalar_lea.vmem [#allocation3], 21
    %v1174 = vld [vmem:[%s1173] ss:$8 sm:$0x3]
    %v1176 = vlaneseq
    %v1177 = vshrl.u32 %v1176, 7
    %v1178 = vsub.s32 0, %v1177
    %v1179 = vrot.slane %v1174, %v1178
    %v1180 = vlaneseq
    %v1181 = vshrl.u32 %v1180, 7
    %v1182 = vsub.s32 1, %v1181
    %v1183 = vrot.slane %v1174, %v1182
    %v1186 = vmul.f32 %v1165, %v1179
    %v1187 = vmul.f32 %v1169, %v1183
    %v1188 = vmul.f32 %v1166, %v1179
    %v1189 = vmul.f32 %v1170, %v1183
    %v1190 = vmul.f32 %v1167, %v1179
    %v1191 = vmul.f32 %v1171, %v1183
    %v1192 = vmul.f32 %v1168, %v1179
    %v1193 = vmul.f32 %v1172, %v1183
    %v1194 = vpack.c.bf16 %v1188, %v1186
    %v1195 = vpack.c.bf16 %v1189, %v1187
    %v1196 = vpack.c.bf16 %v1192, %v1190
    %v1197 = vpack.c.bf16 %v1193, %v1191
    %v1202 = vunpack.c.l.b16 %v1194
    %v1203 = vunpack.c.l.b16 %v1195
    %v1204 = vunpack.c.h.b16 %v1194
    %v1205 = vunpack.c.h.b16 %v1195
    %v1206 = vunpack.c.l.b16 %v1196
    %v1207 = vunpack.c.l.b16 %v1197
    %v1208 = vunpack.c.h.b16 %v1196
    %v1209 = vunpack.c.h.b16 %v1197
    %v1210 = vpack.c.b16 %v1203, %v1202
    %v1211 = vpack.c.b16 %v1205, %v1204
    %v1212 = vpack.c.b16 %v1207, %v1206
    %v1213 = vpack.c.b16 %v1209, %v1208
    %1218 = vst [vmem:[#allocation2 + $0x1a0] sm:$0xff] %v1210
    %1219 = vst [vmem:[#allocation2 + $0x1a8] sm:$0xff] %v1211
    %1220 = vst [vmem:[#allocation2 + $0x1b0] sm:$0xff] %v1212
    %1221 = vst [vmem:[#allocation2 + $0x1b8] sm:$0xff] %v1213
    %1222 = vrot.lane.b32.xlu0 %v223, 126
    %v1223 = vpop.permute.xlu0 %1222
    %1224 = vrot.lane.b32.xlu0 %v225, 126
    %v1225 = vpop.permute.xlu0 %1224
    %1226 = vrot.lane.b32.xlu0 %v227, 126
    %v1227 = vpop.permute.xlu0 %1226
    %1228 = vrot.lane.b32.xlu0 %v229, 126
    %v1229 = vpop.permute.xlu0 %1228
    %1230 = vrot.lane.b32.xlu0 %v224, 126
    %v1231 = vpop.permute.xlu0 %1230
    %1232 = vrot.lane.b32.xlu0 %v226, 126
    %v1233 = vpop.permute.xlu0 %1232
    %1234 = vrot.lane.b32.xlu0 %v228, 126
    %v1235 = vpop.permute.xlu0 %1234
    %1236 = vrot.lane.b32.xlu0 %v230, 126
    %v1237 = vpop.permute.xlu0 %1236
    %vm1238 = vcmp.lt.s32.totalorder %v248, 126
    %v1239 = vsel %vm1238, %v1223, %v1231
    %v1240 = vsel %vm1238, %v1225, %v1233
    %v1241 = vsel %vm1238, %v1227, %v1235
    %v1242 = vsel %vm1238, %v1229, %v1237
    %v1243 = vsel %vm1238, %v1231, %v1223
    %v1244 = vsel %vm1238, %v1233, %v1225
    %v1245 = vsel %vm1238, %v1235, %v1227
    %v1246 = vsel %vm1238, %v1237, %v1229
    %s1247 = scalar_lea.vmem [#allocation3], 22
    %v1248 = vld [vmem:[%s1247] ss:$8 sm:$0x3]
    %v1250 = vlaneseq
    %v1251 = vshrl.u32 %v1250, 7
    %v1252 = vsub.s32 0, %v1251
    %v1253 = vrot.slane %v1248, %v1252
    %v1254 = vlaneseq
    %v1255 = vshrl.u32 %v1254, 7
    %v1256 = vsub.s32 1, %v1255
    %v1257 = vrot.slane %v1248, %v1256
    %v1260 = vmul.f32 %v1239, %v1253
    %v1261 = vmul.f32 %v1243, %v1257
    %v1262 = vmul.f32 %v1240, %v1253
    %v1263 = vmul.f32 %v1244, %v1257
    %v1264 = vmul.f32 %v1241, %v1253
    %v1265 = vmul.f32 %v1245, %v1257
    %v1266 = vmul.f32 %v1242, %v1253
    %v1267 = vmul.f32 %v1246, %v1257
    %v1268 = vpack.c.bf16 %v1262, %v1260
    %v1269 = vpack.c.bf16 %v1263, %v1261
    %v1270 = vpack.c.bf16 %v1266, %v1264
    %v1271 = vpack.c.bf16 %v1267, %v1265
    %v1276 = vunpack.c.l.b16 %v1268
    %v1277 = vunpack.c.l.b16 %v1269
    %v1278 = vunpack.c.h.b16 %v1268
    %v1279 = vunpack.c.h.b16 %v1269
    %v1280 = vunpack.c.l.b16 %v1270
    %v1281 = vunpack.c.l.b16 %v1271
    %v1282 = vunpack.c.h.b16 %v1270
    %v1283 = vunpack.c.h.b16 %v1271
    %v1284 = vpack.c.b16 %v1277, %v1276
    %v1285 = vpack.c.b16 %v1279, %v1278
    %v1286 = vpack.c.b16 %v1281, %v1280
    %v1287 = vpack.c.b16 %v1283, %v1282
    %1292 = vst [vmem:[#allocation2 + $0x1c0] sm:$0xff] %v1284
    %1293 = vst [vmem:[#allocation2 + $0x1c8] sm:$0xff] %v1285
    %1294 = vst [vmem:[#allocation2 + $0x1d0] sm:$0xff] %v1286
    %1295 = vst [vmem:[#allocation2 + $0x1d8] sm:$0xff] %v1287
    %1296 = vrot.lane.b32.xlu0 %v223, 114
    %v1297 = vpop.permute.xlu0 %1296
    %1298 = vrot.lane.b32.xlu0 %v225, 114
    %v1299 = vpop.permute.xlu0 %1298
    %1300 = vrot.lane.b32.xlu0 %v227, 114
    %v1301 = vpop.permute.xlu0 %1300
    %1302 = vrot.lane.b32.xlu0 %v229, 114
    %v1303 = vpop.permute.xlu0 %1302
    %1304 = vrot.lane.b32.xlu0 %v224, 114
    %v1305 = vpop.permute.xlu0 %1304
    %1306 = vrot.lane.b32.xlu0 %v226, 114
    %v1307 = vpop.permute.xlu0 %1306
    %1308 = vrot.lane.b32.xlu0 %v228, 114
    %v1309 = vpop.permute.xlu0 %1308
    %1310 = vrot.lane.b32.xlu0 %v230, 114
    %v1311 = vpop.permute.xlu0 %1310
    %vm1312 = vcmp.lt.s32.totalorder %v248, 114
    %v1313 = vsel %vm1312, %v1297, %v1305
    %v1314 = vsel %vm1312, %v1299, %v1307
    %v1315 = vsel %vm1312, %v1301, %v1309
    %v1316 = vsel %vm1312, %v1303, %v1311
    %v1317 = vsel %vm1312, %v1305, %v1297
    %v1318 = vsel %vm1312, %v1307, %v1299
    %v1319 = vsel %vm1312, %v1309, %v1301
    %v1320 = vsel %vm1312, %v1311, %v1303
    %s1321 = scalar_lea.vmem [#allocation3], 23
    %v1322 = vld [vmem:[%s1321] ss:$8 sm:$0x3]
    %v1324 = vlaneseq
    %v1325 = vshrl.u32 %v1324, 7
    %v1326 = vsub.s32 0, %v1325
    %v1327 = vrot.slane %v1322, %v1326
    %v1328 = vlaneseq
    %v1329 = vshrl.u32 %v1328, 7
    %v1330 = vsub.s32 1, %v1329
    %v1331 = vrot.slane %v1322, %v1330
    %v1334 = vmul.f32 %v1313, %v1327
    %v1335 = vmul.f32 %v1317, %v1331
    %v1336 = vmul.f32 %v1314, %v1327
    %v1337 = vmul.f32 %v1318, %v1331
    %v1338 = vmul.f32 %v1315, %v1327
    %v1339 = vmul.f32 %v1319, %v1331
    %v1340 = vmul.f32 %v1316, %v1327
    %v1341 = vmul.f32 %v1320, %v1331
    %v1342 = vpack.c.bf16 %v1336, %v1334
    %v1343 = vpack.c.bf16 %v1337, %v1335
    %v1344 = vpack.c.bf16 %v1340, %v1338
    %v1345 = vpack.c.bf16 %v1341, %v1339
    %v1350 = vunpack.c.l.b16 %v1342
    %v1351 = vunpack.c.l.b16 %v1343
    %v1352 = vunpack.c.h.b16 %v1342
    %v1353 = vunpack.c.h.b16 %v1343
    %v1354 = vunpack.c.l.b16 %v1344
    %v1355 = vunpack.c.l.b16 %v1345
    %v1356 = vunpack.c.h.b16 %v1344
    %v1357 = vunpack.c.h.b16 %v1345
    %v1358 = vpack.c.b16 %v1351, %v1350
    %v1359 = vpack.c.b16 %v1353, %v1352
    %v1360 = vpack.c.b16 %v1355, %v1354
    %v1361 = vpack.c.b16 %v1357, %v1356
    %1366 = vst [vmem:[#allocation2 + $0x1e0] sm:$0xff] %v1358
    %1367 = vst [vmem:[#allocation2 + $0x1e8] sm:$0xff] %v1359
    %1368 = vst [vmem:[#allocation2 + $0x1f0] sm:$0xff] %v1360
    %1369 = vst [vmem:[#allocation2 + $0x1f8] sm:$0xff] %v1361
    %1370 = vrot.lane.b32.xlu0 %v223, 113
    %v1371 = vpop.permute.xlu0 %1370
    %1372 = vrot.lane.b32.xlu0 %v225, 113
    %v1373 = vpop.permute.xlu0 %1372
    %1374 = vrot.lane.b32.xlu0 %v227, 113
    %v1375 = vpop.permute.xlu0 %1374
    %1376 = vrot.lane.b32.xlu0 %v229, 113
    %v1377 = vpop.permute.xlu0 %1376
    %1378 = vrot.lane.b32.xlu0 %v224, 113
    %v1379 = vpop.permute.xlu0 %1378
    %1380 = vrot.lane.b32.xlu0 %v226, 113
    %v1381 = vpop.permute.xlu0 %1380
    %1382 = vrot.lane.b32.xlu0 %v228, 113
    %v1383 = vpop.permute.xlu0 %1382
    %1384 = vrot.lane.b32.xlu0 %v230, 113
    %v1385 = vpop.permute.xlu0 %1384
    %vm1386 = vcmp.lt.s32.totalorder %v248, 113
    %v1387 = vsel %vm1386, %v1371, %v1379
    %v1388 = vsel %vm1386, %v1373, %v1381
    %v1389 = vsel %vm1386, %v1375, %v1383
    %v1390 = vsel %vm1386, %v1377, %v1385
    %v1391 = vsel %vm1386, %v1379, %v1371
    %v1392 = vsel %vm1386, %v1381, %v1373
    %v1393 = vsel %vm1386, %v1383, %v1375
    %v1394 = vsel %vm1386, %v1385, %v1377
    %s1395 = scalar_lea.vmem [#allocation3], 32
    %v1396 = vld [vmem:[%s1395] ss:$8 sm:$0x3]
    %v1398 = vlaneseq
    %v1399 = vshrl.u32 %v1398, 7
    %v1400 = vsub.s32 0, %v1399
    %v1401 = vrot.slane %v1396, %v1400
    %v1402 = vlaneseq
    %v1403 = vshrl.u32 %v1402, 7
    %v1404 = vsub.s32 1, %v1403
    %v1405 = vrot.slane %v1396, %v1404
    %v1408 = vmul.f32 %v1387, %v1401
    %v1409 = vmul.f32 %v1391, %v1405
    %v1410 = vmul.f32 %v1388, %v1401
    %v1411 = vmul.f32 %v1392, %v1405
    %v1412 = vmul.f32 %v1389, %v1401
    %v1413 = vmul.f32 %v1393, %v1405
    %v1414 = vmul.f32 %v1390, %v1401
    %v1415 = vmul.f32 %v1394, %v1405
    %v1416 = vpack.c.bf16 %v1410, %v1408
    %v1417 = vpack.c.bf16 %v1411, %v1409
    %v1418 = vpack.c.bf16 %v1414, %v1412
    %v1419 = vpack.c.bf16 %v1415, %v1413
    %v1424 = vunpack.c.l.b16 %v1416
    %v1425 = vunpack.c.l.b16 %v1417
    %v1426 = vunpack.c.h.b16 %v1416
    %v1427 = vunpack.c.h.b16 %v1417
    %v1428 = vunpack.c.l.b16 %v1418
    %v1429 = vunpack.c.l.b16 %v1419
    %v1430 = vunpack.c.h.b16 %v1418
    %v1431 = vunpack.c.h.b16 %v1419
    %v1432 = vpack.c.b16 %v1425, %v1424
    %v1433 = vpack.c.b16 %v1427, %v1426
    %v1434 = vpack.c.b16 %v1429, %v1428
    %v1435 = vpack.c.b16 %v1431, %v1430
    %1440 = vst [vmem:[#allocation2 + $0x200] sm:$0xff] %v1432
    %1441 = vst [vmem:[#allocation2 + $0x208] sm:$0xff] %v1433
    %1442 = vst [vmem:[#allocation2 + $0x210] sm:$0xff] %v1434
    %1443 = vst [vmem:[#allocation2 + $0x218] sm:$0xff] %v1435
    %1444 = vrot.lane.b32.xlu0 %v223, 112
    %v1445 = vpop.permute.xlu0 %1444
    %1446 = vrot.lane.b32.xlu0 %v225, 112
    %v1447 = vpop.permute.xlu0 %1446
    %1448 = vrot.lane.b32.xlu0 %v227, 112
    %v1449 = vpop.permute.xlu0 %1448
    %1450 = vrot.lane.b32.xlu0 %v229, 112
    %v1451 = vpop.permute.xlu0 %1450
    %1452 = vrot.lane.b32.xlu0 %v224, 112
    %v1453 = vpop.permute.xlu0 %1452
    %1454 = vrot.lane.b32.xlu0 %v226, 112
    %v1455 = vpop.permute.xlu0 %1454
    %1456 = vrot.lane.b32.xlu0 %v228, 112
    %v1457 = vpop.permute.xlu0 %1456
    %1458 = vrot.lane.b32.xlu0 %v230, 112
    %v1459 = vpop.permute.xlu0 %1458
    %vm1460 = vcmp.lt.s32.totalorder %v248, 112
    %v1461 = vsel %vm1460, %v1445, %v1453
    %v1462 = vsel %vm1460, %v1447, %v1455
    %v1463 = vsel %vm1460, %v1449, %v1457
    %v1464 = vsel %vm1460, %v1451, %v1459
    %v1465 = vsel %vm1460, %v1453, %v1445
    %v1466 = vsel %vm1460, %v1455, %v1447
    %v1467 = vsel %vm1460, %v1457, %v1449
    %v1468 = vsel %vm1460, %v1459, %v1451
    %s1469 = scalar_lea.vmem [#allocation3], 33
    %v1470 = vld [vmem:[%s1469] ss:$8 sm:$0x3]
    %v1472 = vlaneseq
    %v1473 = vshrl.u32 %v1472, 7
    %v1474 = vsub.s32 0, %v1473
    %v1475 = vrot.slane %v1470, %v1474
    %v1476 = vlaneseq
    %v1477 = vshrl.u32 %v1476, 7
    %v1478 = vsub.s32 1, %v1477
    %v1479 = vrot.slane %v1470, %v1478
    %v1482 = vmul.f32 %v1461, %v1475
    %v1483 = vmul.f32 %v1465, %v1479
    %v1484 = vmul.f32 %v1462, %v1475
    %v1485 = vmul.f32 %v1466, %v1479
    %v1486 = vmul.f32 %v1463, %v1475
    %v1487 = vmul.f32 %v1467, %v1479
    %v1488 = vmul.f32 %v1464, %v1475
    %v1489 = vmul.f32 %v1468, %v1479
    %v1490 = vpack.c.bf16 %v1484, %v1482
    %v1491 = vpack.c.bf16 %v1485, %v1483
    %v1492 = vpack.c.bf16 %v1488, %v1486
    %v1493 = vpack.c.bf16 %v1489, %v1487
    %v1498 = vunpack.c.l.b16 %v1490
    %v1499 = vunpack.c.l.b16 %v1491
    %v1500 = vunpack.c.h.b16 %v1490
    %v1501 = vunpack.c.h.b16 %v1491
    %v1502 = vunpack.c.l.b16 %v1492
    %v1503 = vunpack.c.l.b16 %v1493
    %v1504 = vunpack.c.h.b16 %v1492
    %v1505 = vunpack.c.h.b16 %v1493
    %v1506 = vpack.c.b16 %v1499, %v1498
    %v1507 = vpack.c.b16 %v1501, %v1500
    %v1508 = vpack.c.b16 %v1503, %v1502
    %v1509 = vpack.c.b16 %v1505, %v1504
    %1514 = vst [vmem:[#allocation2 + $0x220] sm:$0xff] %v1506
    %1515 = vst [vmem:[#allocation2 + $0x228] sm:$0xff] %v1507
    %1516 = vst [vmem:[#allocation2 + $0x230] sm:$0xff] %v1508
    %1517 = vst [vmem:[#allocation2 + $0x238] sm:$0xff] %v1509
    %1518 = vrot.lane.b32.xlu0 %v223, 111
    %v1519 = vpop.permute.xlu0 %1518
    %1520 = vrot.lane.b32.xlu0 %v225, 111
    %v1521 = vpop.permute.xlu0 %1520
    %1522 = vrot.lane.b32.xlu0 %v227, 111
    %v1523 = vpop.permute.xlu0 %1522
    %1524 = vrot.lane.b32.xlu0 %v229, 111
    %v1525 = vpop.permute.xlu0 %1524
    %1526 = vrot.lane.b32.xlu0 %v224, 111
    %v1527 = vpop.permute.xlu0 %1526
    %1528 = vrot.lane.b32.xlu0 %v226, 111
    %v1529 = vpop.permute.xlu0 %1528
    %1530 = vrot.lane.b32.xlu0 %v228, 111
    %v1531 = vpop.permute.xlu0 %1530
    %1532 = vrot.lane.b32.xlu0 %v230, 111
    %v1533 = vpop.permute.xlu0 %1532
    %vm1534 = vcmp.lt.s32.totalorder %v248, 111
    %v1535 = vsel %vm1534, %v1519, %v1527
    %v1536 = vsel %vm1534, %v1521, %v1529
    %v1537 = vsel %vm1534, %v1523, %v1531
    %v1538 = vsel %vm1534, %v1525, %v1533
    %v1539 = vsel %vm1534, %v1527, %v1519
    %v1540 = vsel %vm1534, %v1529, %v1521
    %v1541 = vsel %vm1534, %v1531, %v1523
    %v1542 = vsel %vm1534, %v1533, %v1525
    %s1543 = scalar_lea.vmem [#allocation3], 34
    %v1544 = vld [vmem:[%s1543] ss:$8 sm:$0x3]
    %v1546 = vlaneseq
    %v1547 = vshrl.u32 %v1546, 7
    %v1548 = vsub.s32 0, %v1547
    %v1549 = vrot.slane %v1544, %v1548
    %v1550 = vlaneseq
    %v1551 = vshrl.u32 %v1550, 7
    %v1552 = vsub.s32 1, %v1551
    %v1553 = vrot.slane %v1544, %v1552
    %v1556 = vmul.f32 %v1535, %v1549
    %v1557 = vmul.f32 %v1539, %v1553
    %v1558 = vmul.f32 %v1536, %v1549
    %v1559 = vmul.f32 %v1540, %v1553
    %v1560 = vmul.f32 %v1537, %v1549
    %v1561 = vmul.f32 %v1541, %v1553
    %v1562 = vmul.f32 %v1538, %v1549
    %v1563 = vmul.f32 %v1542, %v1553
    %v1564 = vpack.c.bf16 %v1558, %v1556
    %v1565 = vpack.c.bf16 %v1559, %v1557
    %v1566 = vpack.c.bf16 %v1562, %v1560
    %v1567 = vpack.c.bf16 %v1563, %v1561
    %v1572 = vunpack.c.l.b16 %v1564
    %v1573 = vunpack.c.l.b16 %v1565
    %v1574 = vunpack.c.h.b16 %v1564
    %v1575 = vunpack.c.h.b16 %v1565
    %v1576 = vunpack.c.l.b16 %v1566
    %v1577 = vunpack.c.l.b16 %v1567
    %v1578 = vunpack.c.h.b16 %v1566
    %v1579 = vunpack.c.h.b16 %v1567
    %v1580 = vpack.c.b16 %v1573, %v1572
    %v1581 = vpack.c.b16 %v1575, %v1574
    %v1582 = vpack.c.b16 %v1577, %v1576
    %v1583 = vpack.c.b16 %v1579, %v1578
    %1588 = vst [vmem:[#allocation2 + $0x240] sm:$0xff] %v1580
    %1589 = vst [vmem:[#allocation2 + $0x248] sm:$0xff] %v1581
    %1590 = vst [vmem:[#allocation2 + $0x250] sm:$0xff] %v1582
    %1591 = vst [vmem:[#allocation2 + $0x258] sm:$0xff] %v1583
    %1592 = vrot.lane.b32.xlu0 %v223, 110
    %v1593 = vpop.permute.xlu0 %1592
    %1594 = vrot.lane.b32.xlu0 %v225, 110
    %v1595 = vpop.permute.xlu0 %1594
    %1596 = vrot.lane.b32.xlu0 %v227, 110
    %v1597 = vpop.permute.xlu0 %1596
    %1598 = vrot.lane.b32.xlu0 %v229, 110
    %v1599 = vpop.permute.xlu0 %1598
    %1600 = vrot.lane.b32.xlu0 %v224, 110
    %v1601 = vpop.permute.xlu0 %1600
    %1602 = vrot.lane.b32.xlu0 %v226, 110
    %v1603 = vpop.permute.xlu0 %1602
    %1604 = vrot.lane.b32.xlu0 %v228, 110
    %v1605 = vpop.permute.xlu0 %1604
    %1606 = vrot.lane.b32.xlu0 %v230, 110
    %v1607 = vpop.permute.xlu0 %1606
    %vm1608 = vcmp.lt.s32.totalorder %v248, 110
    %v1609 = vsel %vm1608, %v1593, %v1601
    %v1610 = vsel %vm1608, %v1595, %v1603
    %v1611 = vsel %vm1608, %v1597, %v1605
    %v1612 = vsel %vm1608, %v1599, %v1607
    %v1613 = vsel %vm1608, %v1601, %v1593
    %v1614 = vsel %vm1608, %v1603, %v1595
    %v1615 = vsel %vm1608, %v1605, %v1597
    %v1616 = vsel %vm1608, %v1607, %v1599
    %s1617 = scalar_lea.vmem [#allocation3], 35
    %v1618 = vld [vmem:[%s1617] ss:$8 sm:$0x3]
    %v1620 = vlaneseq
    %v1621 = vshrl.u32 %v1620, 7
    %v1622 = vsub.s32 0, %v1621
    %v1623 = vrot.slane %v1618, %v1622
    %v1624 = vlaneseq
    %v1625 = vshrl.u32 %v1624, 7
    %v1626 = vsub.s32 1, %v1625
    %v1627 = vrot.slane %v1618, %v1626
    %v1630 = vmul.f32 %v1609, %v1623
    %v1631 = vmul.f32 %v1613, %v1627
    %v1632 = vmul.f32 %v1610, %v1623
    %v1633 = vmul.f32 %v1614, %v1627
    %v1634 = vmul.f32 %v1611, %v1623
    %v1635 = vmul.f32 %v1615, %v1627
    %v1636 = vmul.f32 %v1612, %v1623
    %v1637 = vmul.f32 %v1616, %v1627
    %v1638 = vpack.c.bf16 %v1632, %v1630
    %v1639 = vpack.c.bf16 %v1633, %v1631
    %v1640 = vpack.c.bf16 %v1636, %v1634
    %v1641 = vpack.c.bf16 %v1637, %v1635
    %v1646 = vunpack.c.l.b16 %v1638
    %v1647 = vunpack.c.l.b16 %v1639
    %v1648 = vunpack.c.h.b16 %v1638
    %v1649 = vunpack.c.h.b16 %v1639
    %v1650 = vunpack.c.l.b16 %v1640
    %v1651 = vunpack.c.l.b16 %v1641
    %v1652 = vunpack.c.h.b16 %v1640
    %v1653 = vunpack.c.h.b16 %v1641
    %v1654 = vpack.c.b16 %v1647, %v1646
    %v1655 = vpack.c.b16 %v1649, %v1648
    %v1656 = vpack.c.b16 %v1651, %v1650
    %v1657 = vpack.c.b16 %v1653, %v1652
    %1662 = vst [vmem:[#allocation2 + $0x260] sm:$0xff] %v1654
    %1663 = vst [vmem:[#allocation2 + $0x268] sm:$0xff] %v1655
    %1664 = vst [vmem:[#allocation2 + $0x270] sm:$0xff] %v1656
    %1665 = vst [vmem:[#allocation2 + $0x278] sm:$0xff] %v1657
    %1666 = vrot.lane.b32.xlu0 %v223, 98
    %v1667 = vpop.permute.xlu0 %1666
    %1668 = vrot.lane.b32.xlu0 %v225, 98
    %v1669 = vpop.permute.xlu0 %1668
    %1670 = vrot.lane.b32.xlu0 %v227, 98
    %v1671 = vpop.permute.xlu0 %1670
    %1672 = vrot.lane.b32.xlu0 %v229, 98
    %v1673 = vpop.permute.xlu0 %1672
    %1674 = vrot.lane.b32.xlu0 %v224, 98
    %v1675 = vpop.permute.xlu0 %1674
    %1676 = vrot.lane.b32.xlu0 %v226, 98
    %v1677 = vpop.permute.xlu0 %1676
    %1678 = vrot.lane.b32.xlu0 %v228, 98
    %v1679 = vpop.permute.xlu0 %1678
    %1680 = vrot.lane.b32.xlu0 %v230, 98
    %v1681 = vpop.permute.xlu0 %1680
    %vm1682 = vcmp.lt.s32.totalorder %v248, 98
    %v1683 = vsel %vm1682, %v1667, %v1675
    %v1684 = vsel %vm1682, %v1669, %v1677
    %v1685 = vsel %vm1682, %v1671, %v1679
    %v1686 = vsel %vm1682, %v1673, %v1681
    %v1687 = vsel %vm1682, %v1675, %v1667
    %v1688 = vsel %vm1682, %v1677, %v1669
    %v1689 = vsel %vm1682, %v1679, %v1671
    %v1690 = vsel %vm1682, %v1681, %v1673
    %s1691 = scalar_lea.vmem [#allocation3], 36
    %v1692 = vld [vmem:[%s1691] ss:$8 sm:$0x3]
    %v1694 = vlaneseq
    %v1695 = vshrl.u32 %v1694, 7
    %v1696 = vsub.s32 0, %v1695
    %v1697 = vrot.slane %v1692, %v1696
    %v1698 = vlaneseq
    %v1699 = vshrl.u32 %v1698, 7
    %v1700 = vsub.s32 1, %v1699
    %v1701 = vrot.slane %v1692, %v1700
    %v1704 = vmul.f32 %v1683, %v1697
    %v1705 = vmul.f32 %v1687, %v1701
    %v1706 = vmul.f32 %v1684, %v1697
    %v1707 = vmul.f32 %v1688, %v1701
    %v1708 = vmul.f32 %v1685, %v1697
    %v1709 = vmul.f32 %v1689, %v1701
    %v1710 = vmul.f32 %v1686, %v1697
    %v1711 = vmul.f32 %v1690, %v1701
    %v1712 = vpack.c.bf16 %v1706, %v1704
    %v1713 = vpack.c.bf16 %v1707, %v1705
    %v1714 = vpack.c.bf16 %v1710, %v1708
    %v1715 = vpack.c.bf16 %v1711, %v1709
    %v1720 = vunpack.c.l.b16 %v1712
    %v1721 = vunpack.c.l.b16 %v1713
    %v1722 = vunpack.c.h.b16 %v1712
    %v1723 = vunpack.c.h.b16 %v1713
    %v1724 = vunpack.c.l.b16 %v1714
    %v1725 = vunpack.c.l.b16 %v1715
    %v1726 = vunpack.c.h.b16 %v1714
    %v1727 = vunpack.c.h.b16 %v1715
    %v1728 = vpack.c.b16 %v1721, %v1720
    %v1729 = vpack.c.b16 %v1723, %v1722
    %v1730 = vpack.c.b16 %v1725, %v1724
    %v1731 = vpack.c.b16 %v1727, %v1726
    %1736 = vst [vmem:[#allocation2 + $0x280] sm:$0xff] %v1728
    %1737 = vst [vmem:[#allocation2 + $0x288] sm:$0xff] %v1729
    %1738 = vst [vmem:[#allocation2 + $0x290] sm:$0xff] %v1730
    %1739 = vst [vmem:[#allocation2 + $0x298] sm:$0xff] %v1731
    %1740 = vrot.lane.b32.xlu0 %v223, 97
    %v1741 = vpop.permute.xlu0 %1740
    %1742 = vrot.lane.b32.xlu0 %v225, 97
    %v1743 = vpop.permute.xlu0 %1742
    %1744 = vrot.lane.b32.xlu0 %v227, 97
    %v1745 = vpop.permute.xlu0 %1744
    %1746 = vrot.lane.b32.xlu0 %v229, 97
    %v1747 = vpop.permute.xlu0 %1746
    %1748 = vrot.lane.b32.xlu0 %v224, 97
    %v1749 = vpop.permute.xlu0 %1748
    %1750 = vrot.lane.b32.xlu0 %v226, 97
    %v1751 = vpop.permute.xlu0 %1750
    %1752 = vrot.lane.b32.xlu0 %v228, 97
    %v1753 = vpop.permute.xlu0 %1752
    %1754 = vrot.lane.b32.xlu0 %v230, 97
    %v1755 = vpop.permute.xlu0 %1754
    %vm1756 = vcmp.lt.s32.totalorder %v248, 97
    %v1757 = vsel %vm1756, %v1741, %v1749
    %v1758 = vsel %vm1756, %v1743, %v1751
    %v1759 = vsel %vm1756, %v1745, %v1753
    %v1760 = vsel %vm1756, %v1747, %v1755
    %v1761 = vsel %vm1756, %v1749, %v1741
    %v1762 = vsel %vm1756, %v1751, %v1743
    %v1763 = vsel %vm1756, %v1753, %v1745
    %v1764 = vsel %vm1756, %v1755, %v1747
    %s1765 = scalar_lea.vmem [#allocation3], 37
    %v1766 = vld [vmem:[%s1765] ss:$8 sm:$0x3]
    %v1768 = vlaneseq
    %v1769 = vshrl.u32 %v1768, 7
    %v1770 = vsub.s32 0, %v1769
    %v1771 = vrot.slane %v1766, %v1770
    %v1772 = vlaneseq
    %v1773 = vshrl.u32 %v1772, 7
    %v1774 = vsub.s32 1, %v1773
    %v1775 = vrot.slane %v1766, %v1774
    %v1778 = vmul.f32 %v1757, %v1771
    %v1779 = vmul.f32 %v1761, %v1775
    %v1780 = vmul.f32 %v1758, %v1771
    %v1781 = vmul.f32 %v1762, %v1775
    %v1782 = vmul.f32 %v1759, %v1771
    %v1783 = vmul.f32 %v1763, %v1775
    %v1784 = vmul.f32 %v1760, %v1771
    %v1785 = vmul.f32 %v1764, %v1775
    %v1786 = vpack.c.bf16 %v1780, %v1778
    %v1787 = vpack.c.bf16 %v1781, %v1779
    %v1788 = vpack.c.bf16 %v1784, %v1782
    %v1789 = vpack.c.bf16 %v1785, %v1783
    %v1794 = vunpack.c.l.b16 %v1786
    %v1795 = vunpack.c.l.b16 %v1787
    %v1796 = vunpack.c.h.b16 %v1786
    %v1797 = vunpack.c.h.b16 %v1787
    %v1798 = vunpack.c.l.b16 %v1788
    %v1799 = vunpack.c.l.b16 %v1789
    %v1800 = vunpack.c.h.b16 %v1788
    %v1801 = vunpack.c.h.b16 %v1789
    %v1802 = vpack.c.b16 %v1795, %v1794
    %v1803 = vpack.c.b16 %v1797, %v1796
    %v1804 = vpack.c.b16 %v1799, %v1798
    %v1805 = vpack.c.b16 %v1801, %v1800
    %1810 = vst [vmem:[#allocation2 + $0x2a0] sm:$0xff] %v1802
    %1811 = vst [vmem:[#allocation2 + $0x2a8] sm:$0xff] %v1803
    %1812 = vst [vmem:[#allocation2 + $0x2b0] sm:$0xff] %v1804
    %1813 = vst [vmem:[#allocation2 + $0x2b8] sm:$0xff] %v1805
    %1814 = vrot.lane.b32.xlu0 %v223, 96
    %v1815 = vpop.permute.xlu0 %1814
    %1816 = vrot.lane.b32.xlu0 %v225, 96
    %v1817 = vpop.permute.xlu0 %1816
    %1818 = vrot.lane.b32.xlu0 %v227, 96
    %v1819 = vpop.permute.xlu0 %1818
    %1820 = vrot.lane.b32.xlu0 %v229, 96
    %v1821 = vpop.permute.xlu0 %1820
    %1822 = vrot.lane.b32.xlu0 %v224, 96
    %v1823 = vpop.permute.xlu0 %1822
    %1824 = vrot.lane.b32.xlu0 %v226, 96
    %v1825 = vpop.permute.xlu0 %1824
    %1826 = vrot.lane.b32.xlu0 %v228, 96
    %v1827 = vpop.permute.xlu0 %1826
    %1828 = vrot.lane.b32.xlu0 %v230, 96
    %v1829 = vpop.permute.xlu0 %1828
    %vm1830 = vcmp.lt.s32.totalorder %v248, 96
    %v1831 = vsel %vm1830, %v1815, %v1823
    %v1832 = vsel %vm1830, %v1817, %v1825
    %v1833 = vsel %vm1830, %v1819, %v1827
    %v1834 = vsel %vm1830, %v1821, %v1829
    %v1835 = vsel %vm1830, %v1823, %v1815
    %v1836 = vsel %vm1830, %v1825, %v1817
    %v1837 = vsel %vm1830, %v1827, %v1819
    %v1838 = vsel %vm1830, %v1829, %v1821
    %s1839 = scalar_lea.vmem [#allocation3], 38
    %v1840 = vld [vmem:[%s1839] ss:$8 sm:$0x3]
    %v1842 = vlaneseq
    %v1843 = vshrl.u32 %v1842, 7
    %v1844 = vsub.s32 0, %v1843
    %v1845 = vrot.slane %v1840, %v1844
    %v1846 = vlaneseq
    %v1847 = vshrl.u32 %v1846, 7
    %v1848 = vsub.s32 1, %v1847
    %v1849 = vrot.slane %v1840, %v1848
    %v1852 = vmul.f32 %v1831, %v1845
    %v1853 = vmul.f32 %v1835, %v1849
    %v1854 = vmul.f32 %v1832, %v1845
    %v1855 = vmul.f32 %v1836, %v1849
    %v1856 = vmul.f32 %v1833, %v1845
    %v1857 = vmul.f32 %v1837, %v1849
    %v1858 = vmul.f32 %v1834, %v1845
    %v1859 = vmul.f32 %v1838, %v1849
    %v1860 = vpack.c.bf16 %v1854, %v1852
    %v1861 = vpack.c.bf16 %v1855, %v1853
    %v1862 = vpack.c.bf16 %v1858, %v1856
    %v1863 = vpack.c.bf16 %v1859, %v1857
    %v1868 = vunpack.c.l.b16 %v1860
    %v1869 = vunpack.c.l.b16 %v1861
    %v1870 = vunpack.c.h.b16 %v1860
    %v1871 = vunpack.c.h.b16 %v1861
    %v1872 = vunpack.c.l.b16 %v1862
    %v1873 = vunpack.c.l.b16 %v1863
    %v1874 = vunpack.c.h.b16 %v1862
    %v1875 = vunpack.c.h.b16 %v1863
    %v1876 = vpack.c.b16 %v1869, %v1868
    %v1877 = vpack.c.b16 %v1871, %v1870
    %v1878 = vpack.c.b16 %v1873, %v1872
    %v1879 = vpack.c.b16 %v1875, %v1874
    %1884 = vst [vmem:[#allocation2 + $0x2c0] sm:$0xff] %v1876
    %1885 = vst [vmem:[#allocation2 + $0x2c8] sm:$0xff] %v1877
    %1886 = vst [vmem:[#allocation2 + $0x2d0] sm:$0xff] %v1878
    %1887 = vst [vmem:[#allocation2 + $0x2d8] sm:$0xff] %v1879
    %1888 = vrot.lane.b32.xlu0 %v223, 95
    %v1889 = vpop.permute.xlu0 %1888
    %1890 = vrot.lane.b32.xlu0 %v225, 95
    %v1891 = vpop.permute.xlu0 %1890
    %1892 = vrot.lane.b32.xlu0 %v227, 95
    %v1893 = vpop.permute.xlu0 %1892
    %1894 = vrot.lane.b32.xlu0 %v229, 95
    %v1895 = vpop.permute.xlu0 %1894
    %1896 = vrot.lane.b32.xlu0 %v224, 95
    %v1897 = vpop.permute.xlu0 %1896
    %1898 = vrot.lane.b32.xlu0 %v226, 95
    %v1899 = vpop.permute.xlu0 %1898
    %1900 = vrot.lane.b32.xlu0 %v228, 95
    %v1901 = vpop.permute.xlu0 %1900
    %1902 = vrot.lane.b32.xlu0 %v230, 95
    %v1903 = vpop.permute.xlu0 %1902
    %vm1904 = vcmp.lt.s32.totalorder %v248, 95
    %v1905 = vsel %vm1904, %v1889, %v1897
    %v1906 = vsel %vm1904, %v1891, %v1899
    %v1907 = vsel %vm1904, %v1893, %v1901
    %v1908 = vsel %vm1904, %v1895, %v1903
    %v1909 = vsel %vm1904, %v1897, %v1889
    %v1910 = vsel %vm1904, %v1899, %v1891
    %v1911 = vsel %vm1904, %v1901, %v1893
    %v1912 = vsel %vm1904, %v1903, %v1895
    %s1913 = scalar_lea.vmem [#allocation3], 39
    %v1914 = vld [vmem:[%s1913] ss:$8 sm:$0x3]
    %v1916 = vlaneseq
    %v1917 = vshrl.u32 %v1916, 7
    %v1918 = vsub.s32 0, %v1917
    %v1919 = vrot.slane %v1914, %v1918
    %v1920 = vlaneseq
    %v1921 = vshrl.u32 %v1920, 7
    %v1922 = vsub.s32 1, %v1921
    %v1923 = vrot.slane %v1914, %v1922
    %v1926 = vmul.f32 %v1905, %v1919
    %v1927 = vmul.f32 %v1909, %v1923
    %v1928 = vmul.f32 %v1906, %v1919
    %v1929 = vmul.f32 %v1910, %v1923
    %v1930 = vmul.f32 %v1907, %v1919
    %v1931 = vmul.f32 %v1911, %v1923
    %v1932 = vmul.f32 %v1908, %v1919
    %v1933 = vmul.f32 %v1912, %v1923
    %v1934 = vpack.c.bf16 %v1928, %v1926
    %v1935 = vpack.c.bf16 %v1929, %v1927
    %v1936 = vpack.c.bf16 %v1932, %v1930
    %v1937 = vpack.c.bf16 %v1933, %v1931
    %v1942 = vunpack.c.l.b16 %v1934
    %v1943 = vunpack.c.l.b16 %v1935
    %v1944 = vunpack.c.h.b16 %v1934
    %v1945 = vunpack.c.h.b16 %v1935
    %v1946 = vunpack.c.l.b16 %v1936
    %v1947 = vunpack.c.l.b16 %v1937
    %v1948 = vunpack.c.h.b16 %v1936
    %v1949 = vunpack.c.h.b16 %v1937
    %v1950 = vpack.c.b16 %v1943, %v1942
    %v1951 = vpack.c.b16 %v1945, %v1944
    %v1952 = vpack.c.b16 %v1947, %v1946
    %v1953 = vpack.c.b16 %v1949, %v1948
    %1958 = vst [vmem:[#allocation2 + $0x2e0] sm:$0xff] %v1950
    %1959 = vst [vmem:[#allocation2 + $0x2e8] sm:$0xff] %v1951
    %1960 = vst [vmem:[#allocation2 + $0x2f0] sm:$0xff] %v1952
    %1961 = vst [vmem:[#allocation2 + $0x2f8] sm:$0xff] %v1953
    %1962 = vrot.lane.b32.xlu0 %v223, 94
    %v1963 = vpop.permute.xlu0 %1962
    %1964 = vrot.lane.b32.xlu0 %v225, 94
    %v1965 = vpop.permute.xlu0 %1964
    %1966 = vrot.lane.b32.xlu0 %v227, 94
    %v1967 = vpop.permute.xlu0 %1966
    %1968 = vrot.lane.b32.xlu0 %v229, 94
    %v1969 = vpop.permute.xlu0 %1968
    %1970 = vrot.lane.b32.xlu0 %v224, 94
    %v1971 = vpop.permute.xlu0 %1970
    %1972 = vrot.lane.b32.xlu0 %v226, 94
    %v1973 = vpop.permute.xlu0 %1972
    %1974 = vrot.lane.b32.xlu0 %v228, 94
    %v1975 = vpop.permute.xlu0 %1974
    %1976 = vrot.lane.b32.xlu0 %v230, 94
    %v1977 = vpop.permute.xlu0 %1976
    %vm1978 = vcmp.lt.s32.totalorder %v248, 94
    %v1979 = vsel %vm1978, %v1963, %v1971
    %v1980 = vsel %vm1978, %v1965, %v1973
    %v1981 = vsel %vm1978, %v1967, %v1975
    %v1982 = vsel %vm1978, %v1969, %v1977
    %v1983 = vsel %vm1978, %v1971, %v1963
    %v1984 = vsel %vm1978, %v1973, %v1965
    %v1985 = vsel %vm1978, %v1975, %v1967
    %v1986 = vsel %vm1978, %v1977, %v1969
    %s1987 = scalar_lea.vmem [#allocation3], 48
    %v1988 = vld [vmem:[%s1987] ss:$8 sm:$0x3]
    %v1990 = vlaneseq
    %v1991 = vshrl.u32 %v1990, 7
    %v1992 = vsub.s32 0, %v1991
    %v1993 = vrot.slane %v1988, %v1992
    %v1994 = vlaneseq
    %v1995 = vshrl.u32 %v1994, 7
    %v1996 = vsub.s32 1, %v1995
    %v1997 = vrot.slane %v1988, %v1996
    %v2000 = vmul.f32 %v1979, %v1993
    %v2001 = vmul.f32 %v1983, %v1997
    %v2002 = vmul.f32 %v1980, %v1993
    %v2003 = vmul.f32 %v1984, %v1997
    %v2004 = vmul.f32 %v1981, %v1993
    %v2005 = vmul.f32 %v1985, %v1997
    %v2006 = vmul.f32 %v1982, %v1993
    %v2007 = vmul.f32 %v1986, %v1997
    %v2008 = vpack.c.bf16 %v2002, %v2000
    %v2009 = vpack.c.bf16 %v2003, %v2001
    %v2010 = vpack.c.bf16 %v2006, %v2004
    %v2011 = vpack.c.bf16 %v2007, %v2005
    %v2016 = vunpack.c.l.b16 %v2008
    %v2017 = vunpack.c.l.b16 %v2009
    %v2018 = vunpack.c.h.b16 %v2008
    %v2019 = vunpack.c.h.b16 %v2009
    %v2020 = vunpack.c.l.b16 %v2010
    %v2021 = vunpack.c.l.b16 %v2011
    %v2022 = vunpack.c.h.b16 %v2010
    %v2023 = vunpack.c.h.b16 %v2011
    %v2024 = vpack.c.b16 %v2017, %v2016
    %v2025 = vpack.c.b16 %v2019, %v2018
    %v2026 = vpack.c.b16 %v2021, %v2020
    %v2027 = vpack.c.b16 %v2023, %v2022
    %2032 = vst [vmem:[#allocation2 + $0x300] sm:$0xff] %v2024
    %2033 = vst [vmem:[#allocation2 + $0x308] sm:$0xff] %v2025
    %2034 = vst [vmem:[#allocation2 + $0x310] sm:$0xff] %v2026
    %2035 = vst [vmem:[#allocation2 + $0x318] sm:$0xff] %v2027
    %v2036 = vld [vmem:[#allocation2] sm:$0xff]
    %v2037 = vld [vmem:[#allocation2 + $0x8] sm:$0xff]
    %v2038 = vld [vmem:[#allocation2 + $0x10] sm:$0xff]
    %v2039 = vld [vmem:[#allocation2 + $0x18] sm:$0xff]
    %v2040 = vld [vmem:[#allocation2 + $0x20] sm:$0xff]
    %v2041 = vld [vmem:[#allocation2 + $0x28] sm:$0xff]
    %v2042 = vld [vmem:[#allocation2 + $0x30] sm:$0xff]
    %v2043 = vld [vmem:[#allocation2 + $0x38] sm:$0xff]
    %v2044 = vld [vmem:[#allocation2 + $0x40] sm:$0xff]
    %v2045 = vld [vmem:[#allocation2 + $0x48] sm:$0xff]
    %v2046 = vld [vmem:[#allocation2 + $0x50] sm:$0xff]
    %v2047 = vld [vmem:[#allocation2 + $0x58] sm:$0xff]
    %v2048 = vld [vmem:[#allocation2 + $0x60] sm:$0xff]
    %v2049 = vld [vmem:[#allocation2 + $0x68] sm:$0xff]
    %v2050 = vld [vmem:[#allocation2 + $0x70] sm:$0xff]
    %v2051 = vld [vmem:[#allocation2 + $0x78] sm:$0xff]
    %v2052 = vld [vmem:[#allocation2 + $0x80] sm:$0xff]
    %v2053 = vld [vmem:[#allocation2 + $0x88] sm:$0xff]
    %v2054 = vld [vmem:[#allocation2 + $0x90] sm:$0xff]
    %v2055 = vld [vmem:[#allocation2 + $0x98] sm:$0xff]
    %v2056 = vld [vmem:[#allocation2 + $0xa0] sm:$0xff]
    %v2057 = vld [vmem:[#allocation2 + $0xa8] sm:$0xff]
    %v2058 = vld [vmem:[#allocation2 + $0xb0] sm:$0xff]
    %v2059 = vld [vmem:[#allocation2 + $0xb8] sm:$0xff]
    %v2060 = vld [vmem:[#allocation2 + $0xc0] sm:$0xff]
    %v2061 = vld [vmem:[#allocation2 + $0xc8] sm:$0xff]
    %v2062 = vld [vmem:[#allocation2 + $0xd0] sm:$0xff]
    %v2063 = vld [vmem:[#allocation2 + $0xd8] sm:$0xff]
    %v2064 = vld [vmem:[#allocation2 + $0xe0] sm:$0xff]
    %v2065 = vld [vmem:[#allocation2 + $0xe8] sm:$0xff]
    %v2066 = vld [vmem:[#allocation2 + $0xf0] sm:$0xff]
    %v2067 = vld [vmem:[#allocation2 + $0xf8] sm:$0xff]
    %v2068 = vld [vmem:[#allocation2 + $0x100] sm:$0xff]
    %v2069 = vld [vmem:[#allocation2 + $0x108] sm:$0xff]
    %v2070 = vld [vmem:[#allocation2 + $0x110] sm:$0xff]
    %v2071 = vld [vmem:[#allocation2 + $0x118] sm:$0xff]
    %v2072 = vld [vmem:[#allocation2 + $0x120] sm:$0xff]
    %v2073 = vld [vmem:[#allocation2 + $0x128] sm:$0xff]
    %v2074 = vld [vmem:[#allocation2 + $0x130] sm:$0xff]
    %v2075 = vld [vmem:[#allocation2 + $0x138] sm:$0xff]
    %v2076 = vld [vmem:[#allocation2 + $0x140] sm:$0xff]
    %v2077 = vld [vmem:[#allocation2 + $0x148] sm:$0xff]
    %v2078 = vld [vmem:[#allocation2 + $0x150] sm:$0xff]
    %v2079 = vld [vmem:[#allocation2 + $0x158] sm:$0xff]
    %v2080 = vld [vmem:[#allocation2 + $0x160] sm:$0xff]
    %v2081 = vld [vmem:[#allocation2 + $0x168] sm:$0xff]
    %v2082 = vld [vmem:[#allocation2 + $0x170] sm:$0xff]
    %v2083 = vld [vmem:[#allocation2 + $0x178] sm:$0xff]
    %v2084 = vld [vmem:[#allocation2 + $0x180] sm:$0xff]
    %v2085 = vld [vmem:[#allocation2 + $0x188] sm:$0xff]
    %v2086 = vld [vmem:[#allocation2 + $0x190] sm:$0xff]
    %v2087 = vld [vmem:[#allocation2 + $0x198] sm:$0xff]
    %v2088 = vld [vmem:[#allocation2 + $0x1a0] sm:$0xff]
    %v2089 = vld [vmem:[#allocation2 + $0x1a8] sm:$0xff]
    %v2090 = vld [vmem:[#allocation2 + $0x1b0] sm:$0xff]
    %v2091 = vld [vmem:[#allocation2 + $0x1b8] sm:$0xff]
    %v2092 = vld [vmem:[#allocation2 + $0x1c0] sm:$0xff]
    %v2093 = vld [vmem:[#allocation2 + $0x1c8] sm:$0xff]
    %v2094 = vld [vmem:[#allocation2 + $0x1d0] sm:$0xff]
    %v2095 = vld [vmem:[#allocation2 + $0x1d8] sm:$0xff]
    %v2096 = vld [vmem:[#allocation2 + $0x1e0] sm:$0xff]
    %v2097 = vld [vmem:[#allocation2 + $0x1e8] sm:$0xff]
    %v2098 = vld [vmem:[#allocation2 + $0x1f0] sm:$0xff]
    %v2099 = vld [vmem:[#allocation2 + $0x1f8] sm:$0xff]
    %v2100 = vld [vmem:[#allocation2 + $0x200] sm:$0xff]
    %v2101 = vld [vmem:[#allocation2 + $0x208] sm:$0xff]
    %v2102 = vld [vmem:[#allocation2 + $0x210] sm:$0xff]
    %v2103 = vld [vmem:[#allocation2 + $0x218] sm:$0xff]
    %v2104 = vld [vmem:[#allocation2 + $0x220] sm:$0xff]
    %v2105 = vld [vmem:[#allocation2 + $0x228] sm:$0xff]
    %v2106 = vld [vmem:[#allocation2 + $0x230] sm:$0xff]
    %v2107 = vld [vmem:[#allocation2 + $0x238] sm:$0xff]
    %v2108 = vld [vmem:[#allocation2 + $0x240] sm:$0xff]
    %v2109 = vld [vmem:[#allocation2 + $0x248] sm:$0xff]
    %v2110 = vld [vmem:[#allocation2 + $0x250] sm:$0xff]
    %v2111 = vld [vmem:[#allocation2 + $0x258] sm:$0xff]
    %v2112 = vld [vmem:[#allocation2 + $0x260] sm:$0xff]
    %v2113 = vld [vmem:[#allocation2 + $0x268] sm:$0xff]
    %v2114 = vld [vmem:[#allocation2 + $0x270] sm:$0xff]
    %v2115 = vld [vmem:[#allocation2 + $0x278] sm:$0xff]
    %v2116 = vld [vmem:[#allocation2 + $0x280] sm:$0xff]
    %v2117 = vld [vmem:[#allocation2 + $0x288] sm:$0xff]
    %v2118 = vld [vmem:[#allocation2 + $0x290] sm:$0xff]
    %v2119 = vld [vmem:[#allocation2 + $0x298] sm:$0xff]
    %v2120 = vld [vmem:[#allocation2 + $0x2a0] sm:$0xff]
    %v2121 = vld [vmem:[#allocation2 + $0x2a8] sm:$0xff]
    %v2122 = vld [vmem:[#allocation2 + $0x2b0] sm:$0xff]
    %v2123 = vld [vmem:[#allocation2 + $0x2b8] sm:$0xff]
    %v2124 = vld [vmem:[#allocation2 + $0x2c0] sm:$0xff]
    %v2125 = vld [vmem:[#allocation2 + $0x2c8] sm:$0xff]
    %v2126 = vld [vmem:[#allocation2 + $0x2d0] sm:$0xff]
    %v2127 = vld [vmem:[#allocation2 + $0x2d8] sm:$0xff]
    %v2128 = vld [vmem:[#allocation2 + $0x2e0] sm:$0xff]
    %v2129 = vld [vmem:[#allocation2 + $0x2e8] sm:$0xff]
    %v2130 = vld [vmem:[#allocation2 + $0x2f0] sm:$0xff]
    %v2131 = vld [vmem:[#allocation2 + $0x2f8] sm:$0xff]
    %v2132 = vld [vmem:[#allocation2 + $0x300] sm:$0xff]
    %v2133 = vld [vmem:[#allocation2 + $0x308] sm:$0xff]
    %v2134 = vld [vmem:[#allocation2 + $0x310] sm:$0xff]
    %v2135 = vld [vmem:[#allocation2 + $0x318] sm:$0xff]
    %v2136 = vld [vmem:[%s3] sm:$0xff]
    %v2137 = vld [vmem:[%s3 + $0x8] sm:$0xff]
    %v2138 = vld [vmem:[%s3 + $0x10] sm:$0xff]
    %v2139 = vld [vmem:[%s3 + $0x18] sm:$0xff]
    %v2140 = vld [vmem:[%s3 + $0x20] sm:$0xff]
    %v2141 = vld [vmem:[%s3 + $0x28] sm:$0xff]
    %v2142 = vld [vmem:[%s3 + $0x30] sm:$0xff]
    %v2143 = vld [vmem:[%s3 + $0x38] sm:$0xff]
    %v2144 = vld [vmem:[%s3 + $0x40] sm:$0xff]
    %v2145 = vld [vmem:[%s3 + $0x48] sm:$0xff]
    %v2146 = vld [vmem:[%s3 + $0x50] sm:$0xff]
    %v2147 = vld [vmem:[%s3 + $0x58] sm:$0xff]
    %v2148 = vld [vmem:[%s3 + $0x60] sm:$0xff]
    %v2149 = vld [vmem:[%s3 + $0x68] sm:$0xff]
    %2151 = vset.pattern.permute.xlu0 0
    %2152 = vperm.xlu0 %2151, %v2136
    %v2153 = vpop.permute.xlu0 %2152
    %2156 = vset.pattern.permute.xlu0 0
    %2157 = vperm.xlu0 %2156, %v2137
    %v2158 = vpop.permute.xlu0 %2157
    %2161 = vset.pattern.permute.xlu0 0
    %2162 = vperm.xlu0 %2161, %v2138
    %v2163 = vpop.permute.xlu0 %2162
    %2166 = vset.pattern.permute.xlu0 0
    %2167 = vperm.xlu0 %2166, %v2139
    %v2168 = vpop.permute.xlu0 %2167
    %2171 = vset.pattern.permute.xlu0 0
    %2172 = vperm.xlu0 %2171, %v2140
    %v2173 = vpop.permute.xlu0 %2172
    %2176 = vset.pattern.permute.xlu0 0
    %2177 = vperm.xlu0 %2176, %v2141
    %v2178 = vpop.permute.xlu0 %2177
    %2181 = vset.pattern.permute.xlu0 0
    %2182 = vperm.xlu0 %2181, %v2142
    %v2183 = vpop.permute.xlu0 %2182
    %2186 = vset.pattern.permute.xlu0 0
    %2187 = vperm.xlu0 %2186, %v2143
    %v2188 = vpop.permute.xlu0 %2187
    %2191 = vset.pattern.permute.xlu0 0
    %2192 = vperm.xlu0 %2191, %v2144
    %v2193 = vpop.permute.xlu0 %2192
    %2196 = vset.pattern.permute.xlu0 0
    %2197 = vperm.xlu0 %2196, %v2145
    %v2198 = vpop.permute.xlu0 %2197
    %2201 = vset.pattern.permute.xlu0 0
    %2202 = vperm.xlu0 %2201, %v2146
    %v2203 = vpop.permute.xlu0 %2202
    %2206 = vset.pattern.permute.xlu0 0
    %2207 = vperm.xlu0 %2206, %v2147
    %v2208 = vpop.permute.xlu0 %2207
    %2211 = vset.pattern.permute.xlu0 0
    %2212 = vperm.xlu0 %2211, %v2148
    %v2213 = vpop.permute.xlu0 %2212
    %2216 = vset.pattern.permute.xlu0 0
    %2217 = vperm.xlu0 %2216, %v2149
    %v2218 = vpop.permute.xlu0 %2217
    %v2276 = vunpack.c.l.b16 %v103
    %v2277 = vunpack.c.h.b16 %v103
    %v2278 = vunpack.c.l.b16 %v104
    %v2279 = vunpack.c.h.b16 %v104
    %v2280 = vunpack.c.l.b16 %v105
    %v2281 = vunpack.c.h.b16 %v105
    %v2282 = vunpack.c.l.b16 %v106
    %v2283 = vunpack.c.l.b16 %v107
    %v2284 = vunpack.c.h.b16 %v107
    %v2285 = vunpack.c.l.b16 %v108
    %v2286 = vunpack.c.h.b16 %v108
    %v2287 = vunpack.c.l.b16 %v109
    %v2288 = vunpack.c.h.b16 %v109
    %v2289 = vunpack.c.l.b16 %v110
    %v2290 = vunpack.c.l.b16 %v111
    %v2291 = vunpack.c.h.b16 %v111
    %v2292 = vunpack.c.l.b16 %v112
    %v2293 = vunpack.c.h.b16 %v112
    %v2294 = vunpack.c.l.b16 %v113
    %v2295 = vunpack.c.h.b16 %v113
    %v2296 = vunpack.c.l.b16 %v114
    %v2297 = vunpack.c.l.b16 %v115
    %v2298 = vunpack.c.h.b16 %v115
    %v2299 = vunpack.c.l.b16 %v116
    %v2300 = vunpack.c.h.b16 %v116
    %v2301 = vunpack.c.l.b16 %v117
    %v2302 = vunpack.c.h.b16 %v117
    %v2303 = vunpack.c.l.b16 %v118
    %v2304 = vunpack.c.l.b16 %v119
    %v2305 = vunpack.c.h.b16 %v119
    %v2306 = vunpack.c.l.b16 %v120
    %v2307 = vunpack.c.h.b16 %v120
    %v2308 = vunpack.c.l.b16 %v121
    %v2309 = vunpack.c.h.b16 %v121
    %v2310 = vunpack.c.l.b16 %v122
    %v2311 = vunpack.c.l.b16 %v123
    %v2312 = vunpack.c.h.b16 %v123
    %v2313 = vunpack.c.l.b16 %v124
    %v2314 = vunpack.c.h.b16 %v124
    %v2315 = vunpack.c.l.b16 %v125
    %v2316 = vunpack.c.h.b16 %v125
    %v2317 = vunpack.c.l.b16 %v126
    %v2318 = vunpack.c.l.b16 %v127
    %v2319 = vunpack.c.h.b16 %v127
    %v2320 = vunpack.c.l.b16 %v128
    %v2321 = vunpack.c.h.b16 %v128
    %v2322 = vunpack.c.l.b16 %v129
    %v2323 = vunpack.c.h.b16 %v129
    %v2324 = vunpack.c.l.b16 %v130
    %v2325 = vunpack.c.l.b16 %v131
    %v2326 = vunpack.c.h.b16 %v131
    %v2327 = vunpack.c.l.b16 %v132
    %v2328 = vunpack.c.h.b16 %v132
    %v2329 = vunpack.c.l.b16 %v133
    %v2330 = vunpack.c.h.b16 %v133
    %v2331 = vunpack.c.l.b16 %v134
    %v2332 = vunpack.c.l.b16 %v135
    %v2333 = vunpack.c.h.b16 %v135
    %v2334 = vunpack.c.l.b16 %v136
    %v2335 = vunpack.c.h.b16 %v136
    %v2336 = vunpack.c.l.b16 %v137
    %v2337 = vunpack.c.h.b16 %v137
    %v2338 = vunpack.c.l.b16 %v138
    %v2339 = vunpack.c.l.b16 %v139
    %v2340 = vunpack.c.h.b16 %v139
    %v2341 = vunpack.c.l.b16 %v140
    %v2342 = vunpack.c.h.b16 %v140
    %v2343 = vunpack.c.l.b16 %v141
    %v2344 = vunpack.c.h.b16 %v141
    %v2345 = vunpack.c.l.b16 %v142
    %v2346 = vunpack.c.l.b16 %v143
    %v2347 = vunpack.c.h.b16 %v143
    %v2348 = vunpack.c.l.b16 %v144
    %v2349 = vunpack.c.h.b16 %v144
    %v2350 = vunpack.c.l.b16 %v145
    %v2351 = vunpack.c.h.b16 %v145
    %v2352 = vunpack.c.l.b16 %v146
    %v2353 = vunpack.c.l.b16 %v147
    %v2354 = vunpack.c.h.b16 %v147
    %v2355 = vunpack.c.l.b16 %v148
    %v2356 = vunpack.c.h.b16 %v148
    %v2357 = vunpack.c.l.b16 %v149
    %v2358 = vunpack.c.h.b16 %v149
    %v2359 = vunpack.c.l.b16 %v150
    %v2360 = vunpack.c.l.b16 %v151
    %v2361 = vunpack.c.h.b16 %v151
    %v2362 = vunpack.c.l.b16 %v152
    %v2363 = vunpack.c.h.b16 %v152
    %v2364 = vunpack.c.l.b16 %v153
    %v2365 = vunpack.c.h.b16 %v153
    %v2366 = vunpack.c.l.b16 %v154
    %v2367 = vunpack.c.l.b16 %v155
    %v2368 = vunpack.c.h.b16 %v155
    %v2369 = vunpack.c.l.b16 %v156
    %v2370 = vunpack.c.h.b16 %v156
    %v2371 = vunpack.c.l.b16 %v157
    %v2372 = vunpack.c.h.b16 %v157
    %v2373 = vunpack.c.l.b16 %v158
    %v2374 = vpack.c.b16 %v2283, %v2276
    %v2375 = vpack.c.b16 %v2284, %v2277
    %v2376 = vpack.c.b16 %v2285, %v2278
    %v2377 = vpack.c.b16 %v2286, %v2279
    %v2378 = vpack.c.b16 %v2287, %v2280
    %v2379 = vpack.c.b16 %v2288, %v2281
    %v2380 = vpack.c.b16 %v2289, %v2282
    %v2381 = vpack.c.b16 %v2297, %v2290
    %v2382 = vpack.c.b16 %v2298, %v2291
    %v2383 = vpack.c.b16 %v2299, %v2292
    %v2384 = vpack.c.b16 %v2300, %v2293
    %v2385 = vpack.c.b16 %v2301, %v2294
    %v2386 = vpack.c.b16 %v2302, %v2295
    %v2387 = vpack.c.b16 %v2303, %v2296
    %v2388 = vpack.c.b16 %v2311, %v2304
    %v2389 = vpack.c.b16 %v2312, %v2305
    %v2390 = vpack.c.b16 %v2313, %v2306
    %v2391 = vpack.c.b16 %v2314, %v2307
    %v2392 = vpack.c.b16 %v2315, %v2308
    %v2393 = vpack.c.b16 %v2316, %v2309
    %v2394 = vpack.c.b16 %v2317, %v2310
    %v2395 = vpack.c.b16 %v2325, %v2318
    %v2396 = vpack.c.b16 %v2326, %v2319
    %v2397 = vpack.c.b16 %v2327, %v2320
    %v2398 = vpack.c.b16 %v2328, %v2321
    %v2399 = vpack.c.b16 %v2329, %v2322
    %v2400 = vpack.c.b16 %v2330, %v2323
    %v2401 = vpack.c.b16 %v2331, %v2324
    %v2402 = vpack.c.b16 %v2339, %v2332
    %v2403 = vpack.c.b16 %v2340, %v2333
    %v2404 = vpack.c.b16 %v2341, %v2334
    %v2405 = vpack.c.b16 %v2342, %v2335
    %v2406 = vpack.c.b16 %v2343, %v2336
    %v2407 = vpack.c.b16 %v2344, %v2337
    %v2408 = vpack.c.b16 %v2345, %v2338
    %v2409 = vpack.c.b16 %v2353, %v2346
    %v2410 = vpack.c.b16 %v2354, %v2347
    %v2411 = vpack.c.b16 %v2355, %v2348
    %v2412 = vpack.c.b16 %v2356, %v2349
    %v2413 = vpack.c.b16 %v2357, %v2350
    %v2414 = vpack.c.b16 %v2358, %v2351
    %v2415 = vpack.c.b16 %v2359, %v2352
    %v2416 = vpack.c.b16 %v2367, %v2360
    %v2417 = vpack.c.b16 %v2368, %v2361
    %v2418 = vpack.c.b16 %v2369, %v2362
    %v2419 = vpack.c.b16 %v2370, %v2363
    %v2420 = vpack.c.b16 %v2371, %v2364
    %v2421 = vpack.c.b16 %v2372, %v2365
    %v2422 = vpack.c.b16 %v2373, %v2366
    %v2565 = vunpack.c.l.b16 %v2036
    %v2566 = vunpack.c.h.b16 %v2036
    %v2567 = vunpack.c.l.b16 %v2037
    %v2568 = vunpack.c.h.b16 %v2037
    %v2569 = vunpack.c.l.b16 %v2038
    %v2570 = vunpack.c.h.b16 %v2038
    %v2571 = vunpack.c.l.b16 %v2039
    %v2572 = vunpack.c.h.b16 %v2039
    %v2573 = vunpack.c.l.b16 %v2040
    %v2574 = vunpack.c.h.b16 %v2040
    %v2575 = vunpack.c.l.b16 %v2041
    %v2576 = vunpack.c.h.b16 %v2041
    %v2577 = vunpack.c.l.b16 %v2042
    %v2578 = vunpack.c.h.b16 %v2042
    %v2579 = vunpack.c.l.b16 %v2043
    %v2580 = vunpack.c.h.b16 %v2043
    %v2581 = vunpack.c.l.b16 %v2044
    %v2582 = vunpack.c.h.b16 %v2044
    %v2583 = vunpack.c.l.b16 %v2045
    %v2584 = vunpack.c.h.b16 %v2045
    %v2585 = vunpack.c.l.b16 %v2046
    %v2586 = vunpack.c.h.b16 %v2046
    %v2587 = vunpack.c.l.b16 %v2047
    %v2588 = vunpack.c.h.b16 %v2047
    %v2589 = vunpack.c.l.b16 %v2048
    %v2590 = vunpack.c.h.b16 %v2048
    %v2591 = vunpack.c.l.b16 %v2049
    %v2592 = vunpack.c.h.b16 %v2049
    %v2593 = vunpack.c.l.b16 %v2050
    %v2594 = vunpack.c.h.b16 %v2050
    %v2595 = vunpack.c.l.b16 %v2051
    %v2596 = vunpack.c.h.b16 %v2051
    %v2597 = vunpack.c.l.b16 %v2052
    %v2598 = vunpack.c.h.b16 %v2052
    %v2599 = vunpack.c.l.b16 %v2053
    %v2600 = vunpack.c.h.b16 %v2053
    %v2601 = vunpack.c.l.b16 %v2054
    %v2602 = vunpack.c.h.b16 %v2054
    %v2603 = vunpack.c.l.b16 %v2055
    %v2604 = vunpack.c.h.b16 %v2055
    %v2605 = vunpack.c.l.b16 %v2056
    %v2606 = vunpack.c.h.b16 %v2056
    %v2607 = vunpack.c.l.b16 %v2057
    %v2608 = vunpack.c.h.b16 %v2057
    %v2609 = vunpack.c.l.b16 %v2058
    %v2610 = vunpack.c.h.b16 %v2058
    %v2611 = vunpack.c.l.b16 %v2059
    %v2612 = vunpack.c.h.b16 %v2059
    %v2613 = vunpack.c.l.b16 %v2060
    %v2614 = vunpack.c.h.b16 %v2060
    %v2615 = vunpack.c.l.b16 %v2061
    %v2616 = vunpack.c.h.b16 %v2061
    %v2617 = vunpack.c.l.b16 %v2062
    %v2618 = vunpack.c.h.b16 %v2062
    %v2619 = vunpack.c.l.b16 %v2063
    %v2620 = vunpack.c.h.b16 %v2063
    %v2621 = vunpack.c.l.b16 %v2064
    %v2622 = vunpack.c.h.b16 %v2064
    %v2623 = vunpack.c.l.b16 %v2065
    %v2624 = vunpack.c.h.b16 %v2065
    %v2625 = vunpack.c.l.b16 %v2066
    %v2626 = vunpack.c.h.b16 %v2066
    %v2627 = vunpack.c.l.b16 %v2067
    %v2628 = vunpack.c.h.b16 %v2067
    %v2629 = vunpack.c.l.b16 %v2068
    %v2630 = vunpack.c.h.b16 %v2068
    %v2631 = vunpack.c.l.b16 %v2069
    %v2632 = vunpack.c.h.b16 %v2069
    %v2633 = vunpack.c.l.b16 %v2070
    %v2634 = vunpack.c.h.b16 %v2070
    %v2635 = vunpack.c.l.b16 %v2071
    %v2636 = vunpack.c.h.b16 %v2071
    %v2637 = vunpack.c.l.b16 %v2072
    %v2638 = vunpack.c.h.b16 %v2072
    %v2639 = vunpack.c.l.b16 %v2073
    %v2640 = vunpack.c.h.b16 %v2073
    %v2641 = vunpack.c.l.b16 %v2074
    %v2642 = vunpack.c.h.b16 %v2074
    %v2643 = vunpack.c.l.b16 %v2075
    %v2644 = vunpack.c.h.b16 %v2075
    %v2645 = vunpack.c.l.b16 %v2076
    %v2646 = vunpack.c.h.b16 %v2076
    %v2647 = vunpack.c.l.b16 %v2077
    %v2648 = vunpack.c.h.b16 %v2077
    %v2649 = vunpack.c.l.b16 %v2078
    %v2650 = vunpack.c.h.b16 %v2078
    %v2651 = vunpack.c.l.b16 %v2079
    %v2652 = vunpack.c.h.b16 %v2079
    %v2653 = vunpack.c.l.b16 %v2080
    %v2654 = vunpack.c.h.b16 %v2080
    %v2655 = vunpack.c.l.b16 %v2081
    %v2656 = vunpack.c.h.b16 %v2081
    %v2657 = vunpack.c.l.b16 %v2082
    %v2658 = vunpack.c.h.b16 %v2082
    %v2659 = vunpack.c.l.b16 %v2083
    %v2660 = vunpack.c.h.b16 %v2083
    %v2661 = vunpack.c.l.b16 %v2084
    %v2662 = vunpack.c.h.b16 %v2084
    %v2663 = vunpack.c.l.b16 %v2085
    %v2664 = vunpack.c.h.b16 %v2085
    %v2665 = vunpack.c.l.b16 %v2086
    %v2666 = vunpack.c.h.b16 %v2086
    %v2667 = vunpack.c.l.b16 %v2087
    %v2668 = vunpack.c.h.b16 %v2087
    %v2669 = vunpack.c.l.b16 %v2088
    %v2670 = vunpack.c.h.b16 %v2088
    %v2671 = vunpack.c.l.b16 %v2089
    %v2672 = vunpack.c.h.b16 %v2089
    %v2673 = vunpack.c.l.b16 %v2090
    %v2674 = vunpack.c.h.b16 %v2090
    %v2675 = vunpack.c.l.b16 %v2091
    %v2676 = vunpack.c.h.b16 %v2091
    %v2677 = vunpack.c.l.b16 %v2092
    %v2678 = vunpack.c.h.b16 %v2092
    %v2679 = vunpack.c.l.b16 %v2093
    %v2680 = vunpack.c.h.b16 %v2093
    %v2681 = vunpack.c.l.b16 %v2094
    %v2682 = vunpack.c.h.b16 %v2094
    %v2683 = vunpack.c.l.b16 %v2095
    %v2684 = vunpack.c.h.b16 %v2095
    %v2685 = vunpack.c.l.b16 %v2096
    %v2686 = vunpack.c.h.b16 %v2096
    %v2687 = vunpack.c.l.b16 %v2097
    %v2688 = vunpack.c.h.b16 %v2097
    %v2689 = vunpack.c.l.b16 %v2098
    %v2690 = vunpack.c.h.b16 %v2098
    %v2691 = vunpack.c.l.b16 %v2099
    %v2692 = vunpack.c.h.b16 %v2099
    %v2693 = vunpack.c.l.b16 %v2100
    %v2694 = vunpack.c.h.b16 %v2100
    %v2695 = vunpack.c.l.b16 %v2101
    %v2696 = vunpack.c.h.b16 %v2101
    %v2697 = vunpack.c.l.b16 %v2102
    %v2698 = vunpack.c.h.b16 %v2102
    %v2699 = vunpack.c.l.b16 %v2103
    %v2700 = vunpack.c.h.b16 %v2103
    %v2701 = vunpack.c.l.b16 %v2104
    %v2702 = vunpack.c.h.b16 %v2104
    %v2703 = vunpack.c.l.b16 %v2105
    %v2704 = vunpack.c.h.b16 %v2105
    %v2705 = vunpack.c.l.b16 %v2106
    %v2706 = vunpack.c.h.b16 %v2106
    %v2707 = vunpack.c.l.b16 %v2107
    %v2708 = vunpack.c.h.b16 %v2107
    %v2709 = vunpack.c.l.b16 %v2108
    %v2710 = vunpack.c.h.b16 %v2108
    %v2711 = vunpack.c.l.b16 %v2109
    %v2712 = vunpack.c.h.b16 %v2109
    %v2713 = vunpack.c.l.b16 %v2110
    %v2714 = vunpack.c.h.b16 %v2110
    %v2715 = vunpack.c.l.b16 %v2111
    %v2716 = vunpack.c.h.b16 %v2111
    %v2717 = vunpack.c.l.b16 %v2112
    %v2718 = vunpack.c.h.b16 %v2112
    %v2719 = vunpack.c.l.b16 %v2113
    %v2720 = vunpack.c.h.b16 %v2113
    %v2721 = vunpack.c.l.b16 %v2114
    %v2722 = vunpack.c.h.b16 %v2114
    %v2723 = vunpack.c.l.b16 %v2115
    %v2724 = vunpack.c.h.b16 %v2115
    %v2725 = vunpack.c.l.b16 %v2116
    %v2726 = vunpack.c.h.b16 %v2116
    %v2727 = vunpack.c.l.b16 %v2117
    %v2728 = vunpack.c.h.b16 %v2117
    %v2729 = vunpack.c.l.b16 %v2118
    %v2730 = vunpack.c.h.b16 %v2118
    %v2731 = vunpack.c.l.b16 %v2119
    %v2732 = vunpack.c.h.b16 %v2119
    %v2733 = vunpack.c.l.b16 %v2120
    %v2734 = vunpack.c.h.b16 %v2120
    %v2735 = vunpack.c.l.b16 %v2121
    %v2736 = vunpack.c.h.b16 %v2121
    %v2737 = vunpack.c.l.b16 %v2122
    %v2738 = vunpack.c.h.b16 %v2122
    %v2739 = vunpack.c.l.b16 %v2123
    %v2740 = vunpack.c.h.b16 %v2123
    %v2741 = vunpack.c.l.b16 %v2124
    %v2742 = vunpack.c.h.b16 %v2124
    %v2743 = vunpack.c.l.b16 %v2125
    %v2744 = vunpack.c.h.b16 %v2125
    %v2745 = vunpack.c.l.b16 %v2126
    %v2746 = vunpack.c.h.b16 %v2126
    %v2747 = vunpack.c.l.b16 %v2127
    %v2748 = vunpack.c.h.b16 %v2127
    %v2749 = vunpack.c.l.b16 %v2128
    %v2750 = vunpack.c.h.b16 %v2128
    %v2751 = vunpack.c.l.b16 %v2129
    %v2752 = vunpack.c.h.b16 %v2129
    %v2753 = vunpack.c.l.b16 %v2130
    %v2754 = vunpack.c.h.b16 %v2130
    %v2755 = vunpack.c.l.b16 %v2131
    %v2756 = vunpack.c.h.b16 %v2131
    %v2757 = vunpack.c.l.b16 %v2132
    %v2758 = vunpack.c.h.b16 %v2132
    %v2759 = vunpack.c.l.b16 %v2133
    %v2760 = vunpack.c.h.b16 %v2133
    %v2761 = vunpack.c.l.b16 %v2134
    %v2762 = vunpack.c.h.b16 %v2134
    %v2763 = vunpack.c.l.b16 %v2135
    %v2764 = vunpack.c.h.b16 %v2135
    %v2765 = vpack.c.b16 %v2567, %v2565
    %v2766 = vpack.c.b16 %v2568, %v2566
    %v2767 = vpack.c.b16 %v2571, %v2569
    %v2768 = vpack.c.b16 %v2572, %v2570
    %v2769 = vpack.c.b16 %v2575, %v2573
    %v2770 = vpack.c.b16 %v2576, %v2574
    %v2771 = vpack.c.b16 %v2579, %v2577
    %v2772 = vpack.c.b16 %v2580, %v2578
    %v2773 = vpack.c.b16 %v2583, %v2581
    %v2774 = vpack.c.b16 %v2584, %v2582
    %v2775 = vpack.c.b16 %v2587, %v2585
    %v2776 = vpack.c.b16 %v2588, %v2586
    %v2777 = vpack.c.b16 %v2591, %v2589
    %v2778 = vpack.c.b16 %v2592, %v2590
    %v2779 = vpack.c.b16 %v2595, %v2593
    %v2780 = vpack.c.b16 %v2596, %v2594
    %v2781 = vpack.c.b16 %v2599, %v2597
    %v2782 = vpack.c.b16 %v2600, %v2598
    %v2783 = vpack.c.b16 %v2603, %v2601
    %v2784 = vpack.c.b16 %v2604, %v2602
    %v2785 = vpack.c.b16 %v2607, %v2605
    %v2786 = vpack.c.b16 %v2608, %v2606
    %v2787 = vpack.c.b16 %v2611, %v2609
    %v2788 = vpack.c.b16 %v2612, %v2610
    %v2789 = vpack.c.b16 %v2615, %v2613
    %v2790 = vpack.c.b16 %v2616, %v2614
    %v2791 = vpack.c.b16 %v2619, %v2617
    %v2792 = vpack.c.b16 %v2620, %v2618
    %v2793 = vpack.c.b16 %v2623, %v2621
    %v2794 = vpack.c.b16 %v2624, %v2622
    %v2795 = vpack.c.b16 %v2627, %v2625
    %v2796 = vpack.c.b16 %v2628, %v2626
    %v2797 = vpack.c.b16 %v2631, %v2629
    %v2798 = vpack.c.b16 %v2632, %v2630
    %v2799 = vpack.c.b16 %v2635, %v2633
    %v2800 = vpack.c.b16 %v2636, %v2634
    %v2801 = vpack.c.b16 %v2639, %v2637
    %v2802 = vpack.c.b16 %v2640, %v2638
    %v2803 = vpack.c.b16 %v2643, %v2641
    %v2804 = vpack.c.b16 %v2644, %v2642
    %v2805 = vpack.c.b16 %v2647, %v2645
    %v2806 = vpack.c.b16 %v2648, %v2646
    %v2807 = vpack.c.b16 %v2651, %v2649
    %v2808 = vpack.c.b16 %v2652, %v2650
    %v2809 = vpack.c.b16 %v2655, %v2653
    %v2810 = vpack.c.b16 %v2656, %v2654
    %v2811 = vpack.c.b16 %v2659, %v2657
    %v2812 = vpack.c.b16 %v2660, %v2658
    %v2813 = vpack.c.b16 %v2663, %v2661
    %v2814 = vpack.c.b16 %v2664, %v2662
    %v2815 = vpack.c.b16 %v2667, %v2665
    %v2816 = vpack.c.b16 %v2668, %v2666
    %v2817 = vpack.c.b16 %v2671, %v2669
    %v2818 = vpack.c.b16 %v2672, %v2670
    %v2819 = vpack.c.b16 %v2675, %v2673
    %v2820 = vpack.c.b16 %v2676, %v2674
    %v2821 = vpack.c.b16 %v2679, %v2677
    %v2822 = vpack.c.b16 %v2680, %v2678
    %v2823 = vpack.c.b16 %v2683, %v2681
    %v2824 = vpack.c.b16 %v2684, %v2682
    %v2825 = vpack.c.b16 %v2687, %v2685
    %v2826 = vpack.c.b16 %v2688, %v2686
    %v2827 = vpack.c.b16 %v2691, %v2689
    %v2828 = vpack.c.b16 %v2692, %v2690
    %v2829 = vpack.c.b16 %v2695, %v2693
    %v2830 = vpack.c.b16 %v2696, %v2694
    %v2831 = vpack.c.b16 %v2699, %v2697
    %v2832 = vpack.c.b16 %v2700, %v2698
    %v2833 = vpack.c.b16 %v2703, %v2701
    %v2834 = vpack.c.b16 %v2704, %v2702
    %v2835 = vpack.c.b16 %v2707, %v2705
    %v2836 = vpack.c.b16 %v2708, %v2706
    %v2837 = vpack.c.b16 %v2711, %v2709
    %v2838 = vpack.c.b16 %v2712, %v2710
    %v2839 = vpack.c.b16 %v2715, %v2713
    %v2840 = vpack.c.b16 %v2716, %v2714
    %v2841 = vpack.c.b16 %v2719, %v2717
    %v2842 = vpack.c.b16 %v2720, %v2718
    %v2843 = vpack.c.b16 %v2723, %v2721
    %v2844 = vpack.c.b16 %v2724, %v2722
    %v2845 = vpack.c.b16 %v2727, %v2725
    %v2846 = vpack.c.b16 %v2728, %v2726
    %v2847 = vpack.c.b16 %v2731, %v2729
    %v2848 = vpack.c.b16 %v2732, %v2730
    %v2849 = vpack.c.b16 %v2735, %v2733
    %v2850 = vpack.c.b16 %v2736, %v2734
    %v2851 = vpack.c.b16 %v2739, %v2737
    %v2852 = vpack.c.b16 %v2740, %v2738
    %v2853 = vpack.c.b16 %v2743, %v2741
    %v2854 = vpack.c.b16 %v2744, %v2742
    %v2855 = vpack.c.b16 %v2747, %v2745
    %v2856 = vpack.c.b16 %v2748, %v2746
    %v2857 = vpack.c.b16 %v2751, %v2749
    %v2858 = vpack.c.b16 %v2752, %v2750
    %v2859 = vpack.c.b16 %v2755, %v2753
    %v2860 = vpack.c.b16 %v2756, %v2754
    %v2861 = vpack.c.b16 %v2759, %v2757
    %v2862 = vpack.c.b16 %v2760, %v2758
    %v2863 = vpack.c.b16 %v2763, %v2761
    %v2864 = vpack.c.b16 %v2764, %v2762
    %vm2965 = vcmask 261120
    %v2967 = vsel %vm2965, %v2380, 0
    %v2970 = vsel %vm2965, %v2387, 0
    %v2973 = vsel %vm2965, %v2394, 0
    %v2976 = vsel %vm2965, %v2401, 0
    %v2979 = vsel %vm2965, %v2408, 0
    %v2982 = vsel %vm2965, %v2415, 0
    %v2985 = vsel %vm2965, %v2422, 0
    %2987 = vmatprep.subr.bf16.mxu0 %v2780
    %2988 = vmatpush1.bf16.msra.mxu0 %v2779
    %2989 = vmatprep.subr.bf16.mxu0 %v2778
    %2990 = vmatpush1.bf16.msra.mxu0 %v2777
    %2991 = vmatprep.subr.bf16.mxu0 %v2776
    %2992 = vmatpush1.bf16.msra.mxu0 %v2775
    %2993 = vmatprep.subr.bf16.mxu0 %v2774
    %2994 = vmatpush1.bf16.msra.mxu0 %v2773
    %2995 = vmatprep.subr.bf16.mxu0 %v2772
    %2996 = vmatpush1.bf16.msra.mxu0 %v2771
    %2997 = vmatprep.subr.bf16.mxu0 %v2770
    %2998 = vmatpush1.bf16.msra.mxu0 %v2769
    %2999 = vmatprep.subr.bf16.mxu0 %v2768
    %3000 = vmatpush1.bf16.msra.mxu0 %v2767
    %3001 = vmatprep.subr.bf16.mxu0 %v2766
    %3002 = vmatpush1.bf16.msra.mxu0 %v2765
    %3003 = vmatprep.subr.bf16.mxu0 %v2796
    %3004 = vmatpush2.bf16.msra.mxu0 %v2795
    %3005 = vmatprep.subr.bf16.mxu0 %v2794
    %3006 = vmatpush2.bf16.msra.mxu0 %v2793
    %3007 = vmatprep.subr.bf16.mxu0 %v2792
    %3008 = vmatpush2.bf16.msra.mxu0 %v2791
    %3009 = vmatprep.subr.bf16.mxu0 %v2790
    %3010 = vmatpush2.bf16.msra.mxu0 %v2789
    %3011 = vmatprep.subr.bf16.mxu0 %v2788
    %3012 = vmatpush2.bf16.msra.mxu0 %v2787
    %3013 = vmatprep.subr.bf16.mxu0 %v2786
    %3014 = vmatpush2.bf16.msra.mxu0 %v2785
    %3015 = vmatprep.subr.bf16.mxu0 %v2784
    %3016 = vmatpush2.bf16.msra.mxu0 %v2783
    %3017 = vmatprep.subr.bf16.mxu0 %v2782
    %3018 = vmatpush2.bf16.msra.mxu0 %v2781
    %3019 = vmatprep.mubr.bf16.mxu0 %v2375
    %3020 = vmatmul.mubr.bf16.gmra.mxu0 %v2374
    %v3021 = vpop.f32.mrf.mxu0
    %v3022 = vadd.f32 %v2153, %v3021
    %v3023 = vpop.f32.mrf.mxu0
    %v3024 = vadd.f32 %v2153, %v3023
    %v3025 = vpop.f32.mrf.mxu0
    %v3026 = vadd.f32 %v2158, %v3025
    %v3027 = vpop.f32.mrf.mxu0
    %v3028 = vadd.f32 %v2158, %v3027
    %3029 = vmatprep.mubr.bf16.mxu0 %v2382
    %3030 = vmatmul.mubr.bf16.gmra.mxu0 %v2381
    %v3031 = vpop.f32.mrf.mxu0
    %v3032 = vadd.f32 %v2163, %v3031
    %v3033 = vpop.f32.mrf.mxu0
    %v3034 = vadd.f32 %v2163, %v3033
    %v3035 = vpop.f32.mrf.mxu0
    %v3036 = vadd.f32 %v2168, %v3035
    %v3037 = vpop.f32.mrf.mxu0
    %v3038 = vadd.f32 %v2168, %v3037
    %3039 = vmatprep.mubr.bf16.mxu0 %v2389
    %3040 = vmatmul.mubr.bf16.gmra.mxu0 %v2388
    %v3041 = vpop.f32.mrf.mxu0
    %v3042 = vadd.f32 %v2173, %v3041
    %v3043 = vpop.f32.mrf.mxu0
    %v3044 = vadd.f32 %v2173, %v3043
    %v3045 = vpop.f32.mrf.mxu0
    %v3046 = vadd.f32 %v2178, %v3045
    %v3047 = vpop.f32.mrf.mxu0
    %v3048 = vadd.f32 %v2178, %v3047
    %3049 = vmatprep.mubr.bf16.mxu0 %v2396
    %3050 = vmatmul.mubr.bf16.gmra.mxu0 %v2395
    %v3051 = vpop.f32.mrf.mxu0
    %v3052 = vadd.f32 %v2183, %v3051
    %v3053 = vpop.f32.mrf.mxu0
    %v3054 = vadd.f32 %v2183, %v3053
    %v3055 = vpop.f32.mrf.mxu0
    %v3056 = vadd.f32 %v2188, %v3055
    %v3057 = vpop.f32.mrf.mxu0
    %v3058 = vadd.f32 %v2188, %v3057
    %3059 = vmatprep.mubr.bf16.mxu0 %v2403
    %3060 = vmatmul.mubr.bf16.gmra.mxu0 %v2402
    %v3061 = vpop.f32.mrf.mxu0
    %v3062 = vadd.f32 %v2193, %v3061
    %v3063 = vpop.f32.mrf.mxu0
    %v3064 = vadd.f32 %v2193, %v3063
    %v3065 = vpop.f32.mrf.mxu0
    %v3066 = vadd.f32 %v2198, %v3065
    %v3067 = vpop.f32.mrf.mxu0
    %v3068 = vadd.f32 %v2198, %v3067
    %3069 = vmatprep.mubr.bf16.mxu0 %v2410
    %3070 = vmatmul.mubr.bf16.gmra.mxu0 %v2409
    %v3071 = vpop.f32.mrf.mxu0
    %v3072 = vadd.f32 %v2203, %v3071
    %v3073 = vpop.f32.mrf.mxu0
    %v3074 = vadd.f32 %v2203, %v3073
    %v3075 = vpop.f32.mrf.mxu0
    %v3076 = vadd.f32 %v2208, %v3075
    %v3077 = vpop.f32.mrf.mxu0
    %v3078 = vadd.f32 %v2208, %v3077
    %3079 = vmatprep.mubr.bf16.mxu0 %v2417
    %3080 = vmatmul.mubr.bf16.gmra.mxu0 %v2416
    %v3081 = vpop.f32.mrf.mxu0
    %v3082 = vadd.f32 %v2213, %v3081
    %v3083 = vpop.f32.mrf.mxu0
    %v3084 = vadd.f32 %v2213, %v3083
    %v3085 = vpop.f32.mrf.mxu0
    %v3086 = vadd.f32 %v2218, %v3085
    %v3087 = vpop.f32.mrf.mxu0
    %v3088 = vadd.f32 %v2218, %v3087
    %3089 = vdwg.mxu0
    %3090 = vmatprep.subr.bf16.mxu0 %v2812
    %3091 = vmatpush1.bf16.msra.mxu0 %v2811
    %3092 = vmatprep.subr.bf16.mxu0 %v2810
    %3093 = vmatpush1.bf16.msra.mxu0 %v2809
    %3094 = vmatprep.subr.bf16.mxu0 %v2808
    %3095 = vmatpush1.bf16.msra.mxu0 %v2807
    %3096 = vmatprep.subr.bf16.mxu0 %v2806
    %3097 = vmatpush1.bf16.msra.mxu0 %v2805
    %3098 = vmatprep.subr.bf16.mxu0 %v2804
    %3099 = vmatpush1.bf16.msra.mxu0 %v2803
    %3100 = vmatprep.subr.bf16.mxu0 %v2802
    %3101 = vmatpush1.bf16.msra.mxu0 %v2801
    %3102 = vmatprep.subr.bf16.mxu0 %v2800
    %3103 = vmatpush1.bf16.msra.mxu0 %v2799
    %3104 = vmatprep.subr.bf16.mxu0 %v2798
    %3105 = vmatpush1.bf16.msra.mxu0 %v2797
    %3106 = vmatprep.subr.bf16.mxu0 %v2828
    %3107 = vmatpush2.bf16.msra.mxu0 %v2827
    %3108 = vmatprep.subr.bf16.mxu0 %v2826
    %3109 = vmatpush2.bf16.msra.mxu0 %v2825
    %3110 = vmatprep.subr.bf16.mxu0 %v2824
    %3111 = vmatpush2.bf16.msra.mxu0 %v2823
    %3112 = vmatprep.subr.bf16.mxu0 %v2822
    %3113 = vmatpush2.bf16.msra.mxu0 %v2821
    %3114 = vmatprep.subr.bf16.mxu0 %v2820
    %3115 = vmatpush2.bf16.msra.mxu0 %v2819
    %3116 = vmatprep.subr.bf16.mxu0 %v2818
    %3117 = vmatpush2.bf16.msra.mxu0 %v2817
    %3118 = vmatprep.subr.bf16.mxu0 %v2816
    %3119 = vmatpush2.bf16.msra.mxu0 %v2815
    %3120 = vmatprep.subr.bf16.mxu0 %v2814
    %3121 = vmatpush2.bf16.msra.mxu0 %v2813
    %3122 = vmatprep.mubr.bf16.mxu0 %v2377
    %3123 = vmatmul.mubr.bf16.gmra.mxu0 %v2376
    %v3124 = vpop.f32.mrf.mxu0
    %v3125 = vadd.f32 %v3022, %v3124
    %v3126 = vpop.f32.mrf.mxu0
    %v3127 = vadd.f32 %v3024, %v3126
    %v3128 = vpop.f32.mrf.mxu0
    %v3129 = vadd.f32 %v3026, %v3128
    %v3130 = vpop.f32.mrf.mxu0
    %v3131 = vadd.f32 %v3028, %v3130
    %3132 = vmatprep.mubr.bf16.mxu0 %v2384
    %3133 = vmatmul.mubr.bf16.gmra.mxu0 %v2383
    %v3134 = vpop.f32.mrf.mxu0
    %v3135 = vadd.f32 %v3032, %v3134
    %v3136 = vpop.f32.mrf.mxu0
    %v3137 = vadd.f32 %v3034, %v3136
    %v3138 = vpop.f32.mrf.mxu0
    %v3139 = vadd.f32 %v3036, %v3138
    %v3140 = vpop.f32.mrf.mxu0
    %v3141 = vadd.f32 %v3038, %v3140
    %3142 = vmatprep.mubr.bf16.mxu0 %v2391
    %3143 = vmatmul.mubr.bf16.gmra.mxu0 %v2390
    %v3144 = vpop.f32.mrf.mxu0
    %v3145 = vadd.f32 %v3042, %v3144
    %v3146 = vpop.f32.mrf.mxu0
    %v3147 = vadd.f32 %v3044, %v3146
    %v3148 = vpop.f32.mrf.mxu0
    %v3149 = vadd.f32 %v3046, %v3148
    %v3150 = vpop.f32.mrf.mxu0
    %v3151 = vadd.f32 %v3048, %v3150
    %3152 = vmatprep.mubr.bf16.mxu0 %v2398
    %3153 = vmatmul.mubr.bf16.gmra.mxu0 %v2397
    %v3154 = vpop.f32.mrf.mxu0
    %v3155 = vadd.f32 %v3052, %v3154
    %v3156 = vpop.f32.mrf.mxu0
    %v3157 = vadd.f32 %v3054, %v3156
    %v3158 = vpop.f32.mrf.mxu0
    %v3159 = vadd.f32 %v3056, %v3158
    %v3160 = vpop.f32.mrf.mxu0
    %v3161 = vadd.f32 %v3058, %v3160
    %3162 = vmatprep.mubr.bf16.mxu0 %v2405
    %3163 = vmatmul.mubr.bf16.gmra.mxu0 %v2404
    %v3164 = vpop.f32.mrf.mxu0
    %v3165 = vadd.f32 %v3062, %v3164
    %v3166 = vpop.f32.mrf.mxu0
    %v3167 = vadd.f32 %v3064, %v3166
    %v3168 = vpop.f32.mrf.mxu0
    %v3169 = vadd.f32 %v3066, %v3168
    %v3170 = vpop.f32.mrf.mxu0
    %v3171 = vadd.f32 %v3068, %v3170
    %3172 = vmatprep.mubr.bf16.mxu0 %v2412
    %3173 = vmatmul.mubr.bf16.gmra.mxu0 %v2411
    %v3174 = vpop.f32.mrf.mxu0
    %v3175 = vadd.f32 %v3072, %v3174
    %v3176 = vpop.f32.mrf.mxu0
    %v3177 = vadd.f32 %v3074, %v3176
    %v3178 = vpop.f32.mrf.mxu0
    %v3179 = vadd.f32 %v3076, %v3178
    %v3180 = vpop.f32.mrf.mxu0
    %v3181 = vadd.f32 %v3078, %v3180
    %3182 = vmatprep.mubr.bf16.mxu0 %v2419
    %3183 = vmatmul.mubr.bf16.gmra.mxu0 %v2418
    %v3184 = vpop.f32.mrf.mxu0
    %v3185 = vadd.f32 %v3082, %v3184
    %v3186 = vpop.f32.mrf.mxu0
    %v3187 = vadd.f32 %v3084, %v3186
    %v3188 = vpop.f32.mrf.mxu0
    %v3189 = vadd.f32 %v3086, %v3188
    %v3190 = vpop.f32.mrf.mxu0
    %v3191 = vadd.f32 %v3088, %v3190
    %3192 = vdwg.mxu0
    %3193 = vmatprep.subr.bf16.mxu0 %v2844
    %3194 = vmatpush1.bf16.msra.mxu0 %v2843
    %3195 = vmatprep.subr.bf16.mxu0 %v2842
    %3196 = vmatpush1.bf16.msra.mxu0 %v2841
    %3197 = vmatprep.subr.bf16.mxu0 %v2840
    %3198 = vmatpush1.bf16.msra.mxu0 %v2839
    %3199 = vmatprep.subr.bf16.mxu0 %v2838
    %3200 = vmatpush1.bf16.msra.mxu0 %v2837
    %3201 = vmatprep.subr.bf16.mxu0 %v2836
    %3202 = vmatpush1.bf16.msra.mxu0 %v2835
    %3203 = vmatprep.subr.bf16.mxu0 %v2834
    %3204 = vmatpush1.bf16.msra.mxu0 %v2833
    %3205 = vmatprep.subr.bf16.mxu0 %v2832
    %3206 = vmatpush1.bf16.msra.mxu0 %v2831
    %3207 = vmatprep.subr.bf16.mxu0 %v2830
    %3208 = vmatpush1.bf16.msra.mxu0 %v2829
    %3209 = vmatprep.subr.bf16.mxu0 %v2860
    %3210 = vmatpush2.bf16.msra.mxu0 %v2859
    %3211 = vmatprep.subr.bf16.mxu0 %v2858
    %3212 = vmatpush2.bf16.msra.mxu0 %v2857
    %3213 = vmatprep.subr.bf16.mxu0 %v2856
    %3214 = vmatpush2.bf16.msra.mxu0 %v2855
    %3215 = vmatprep.subr.bf16.mxu0 %v2854
    %3216 = vmatpush2.bf16.msra.mxu0 %v2853
    %3217 = vmatprep.subr.bf16.mxu0 %v2852
    %3218 = vmatpush2.bf16.msra.mxu0 %v2851
    %3219 = vmatprep.subr.bf16.mxu0 %v2850
    %3220 = vmatpush2.bf16.msra.mxu0 %v2849
    %3221 = vmatprep.subr.bf16.mxu0 %v2848
    %3222 = vmatpush2.bf16.msra.mxu0 %v2847
    %3223 = vmatprep.subr.bf16.mxu0 %v2846
    %3224 = vmatpush2.bf16.msra.mxu0 %v2845
    %3225 = vmatprep.mubr.bf16.mxu0 %v2379
    %3226 = vmatmul.mubr.bf16.gmra.mxu0 %v2378
    %v3227 = vpop.f32.mrf.mxu0
    %v3228 = vadd.f32 %v3125, %v3227
    %v3229 = vpop.f32.mrf.mxu0
    %v3230 = vadd.f32 %v3127, %v3229
    %v3231 = vpop.f32.mrf.mxu0
    %v3232 = vadd.f32 %v3129, %v3231
    %v3233 = vpop.f32.mrf.mxu0
    %v3234 = vadd.f32 %v3131, %v3233
    %3235 = vmatprep.mubr.bf16.mxu0 %v2386
    %3236 = vmatmul.mubr.bf16.gmra.mxu0 %v2385
    %v3237 = vpop.f32.mrf.mxu0
    %v3238 = vadd.f32 %v3135, %v3237
    %v3239 = vpop.f32.mrf.mxu0
    %v3240 = vadd.f32 %v3137, %v3239
    %v3241 = vpop.f32.mrf.mxu0
    %v3242 = vadd.f32 %v3139, %v3241
    %v3243 = vpop.f32.mrf.mxu0
    %v3244 = vadd.f32 %v3141, %v3243
    %3245 = vmatprep.mubr.bf16.mxu0 %v2393
    %3246 = vmatmul.mubr.bf16.gmra.mxu0 %v2392
    %v3247 = vpop.f32.mrf.mxu0
    %v3248 = vadd.f32 %v3145, %v3247
    %v3249 = vpop.f32.mrf.mxu0
    %v3250 = vadd.f32 %v3147, %v3249
    %v3251 = vpop.f32.mrf.mxu0
    %v3252 = vadd.f32 %v3149, %v3251
    %v3253 = vpop.f32.mrf.mxu0
    %v3254 = vadd.f32 %v3151, %v3253
    %3255 = vmatprep.mubr.bf16.mxu0 %v2400
    %3256 = vmatmul.mubr.bf16.gmra.mxu0 %v2399
    %v3257 = vpop.f32.mrf.mxu0
    %v3258 = vadd.f32 %v3155, %v3257
    %v3259 = vpop.f32.mrf.mxu0
    %v3260 = vadd.f32 %v3157, %v3259
    %v3261 = vpop.f32.mrf.mxu0
    %v3262 = vadd.f32 %v3159, %v3261
    %v3263 = vpop.f32.mrf.mxu0
    %v3264 = vadd.f32 %v3161, %v3263
    %3265 = vmatprep.mubr.bf16.mxu0 %v2407
    %3266 = vmatmul.mubr.bf16.gmra.mxu0 %v2406
    %v3267 = vpop.f32.mrf.mxu0
    %v3268 = vadd.f32 %v3165, %v3267
    %v3269 = vpop.f32.mrf.mxu0
    %v3270 = vadd.f32 %v3167, %v3269
    %v3271 = vpop.f32.mrf.mxu0
    %v3272 = vadd.f32 %v3169, %v3271
    %v3273 = vpop.f32.mrf.mxu0
    %v3274 = vadd.f32 %v3171, %v3273
    %3275 = vmatprep.mubr.bf16.mxu0 %v2414
    %3276 = vmatmul.mubr.bf16.gmra.mxu0 %v2413
    %v3277 = vpop.f32.mrf.mxu0
    %v3278 = vadd.f32 %v3175, %v3277
    %v3279 = vpop.f32.mrf.mxu0
    %v3280 = vadd.f32 %v3177, %v3279
    %v3281 = vpop.f32.mrf.mxu0
    %v3282 = vadd.f32 %v3179, %v3281
    %v3283 = vpop.f32.mrf.mxu0
    %v3284 = vadd.f32 %v3181, %v3283
    %3285 = vmatprep.mubr.bf16.mxu0 %v2421
    %3286 = vmatmul.mubr.bf16.gmra.mxu0 %v2420
    %v3287 = vpop.f32.mrf.mxu0
    %v3288 = vadd.f32 %v3185, %v3287
    %v3289 = vpop.f32.mrf.mxu0
    %v3290 = vadd.f32 %v3187, %v3289
    %v3291 = vpop.f32.mrf.mxu0
    %v3292 = vadd.f32 %v3189, %v3291
    %v3293 = vpop.f32.mrf.mxu0
    %v3294 = vadd.f32 %v3191, %v3293
    %3295 = vdwg.mxu0
    %3296 = vmatprep.subr.bf16.mxu0 0
    %3297 = vmatpush1.bf16.msra.mxu0 0
    %3298 = vmatprep.subr.bf16.mxu0 0
    %3299 = vmatpush1.bf16.msra.mxu0 0
    %3300 = vmatprep.subr.bf16.mxu0 0
    %3301 = vmatpush1.bf16.msra.mxu0 0
    %3302 = vmatprep.subr.bf16.mxu0 0
    %3303 = vmatpush1.bf16.msra.mxu0 0
    %3304 = vmatprep.subr.bf16.mxu0 0
    %3305 = vmatpush1.bf16.msra.mxu0 0
    %3306 = vmatprep.subr.bf16.mxu0 0
    %3307 = vmatpush1.bf16.msra.mxu0 0
    %3308 = vmatprep.subr.bf16.mxu0 %v2864
    %3309 = vmatpush1.bf16.msra.mxu0 %v2863
    %3310 = vmatprep.subr.bf16.mxu0 %v2862
    %3311 = vmatpush1.bf16.msra.mxu0 %v2861
    %3312 = vmatprep.subr.bf16.mxu0 0
    %3313 = vmatpush2.bf16.msra.mxu0 0
    %3314 = vmatprep.subr.bf16.mxu0 0
    %3315 = vmatpush2.bf16.msra.mxu0 0
    %3316 = vmatprep.subr.bf16.mxu0 0
    %3317 = vmatpush2.bf16.msra.mxu0 0
    %3318 = vmatprep.subr.bf16.mxu0 0
    %3319 = vmatpush2.bf16.msra.mxu0 0
    %3320 = vmatprep.subr.bf16.mxu0 0
    %3321 = vmatpush2.bf16.msra.mxu0 0
    %3322 = vmatprep.subr.bf16.mxu0 0
    %3323 = vmatpush2.bf16.msra.mxu0 0
    %3324 = vmatprep.subr.bf16.mxu0 0
    %3325 = vmatpush2.bf16.msra.mxu0 0
    %3326 = vmatprep.subr.bf16.mxu0 0
    %3327 = vmatpush2.bf16.msra.mxu0 0
    %3328 = vmatprep.mubr.bf16.mxu0 0
    %3329 = vmatmul.mubr.bf16.gmra.mxu0 %v2967
    %v3330 = vpop.f32.mrf.mxu0
    %v3331 = vadd.f32 %v3228, %v3330
    %v3332 = vpop.f32.mrf.mxu0
    %v3333 = vadd.f32 %v3230, %v3332
    %v3334 = vpop.f32.mrf.mxu0
    %v3335 = vadd.f32 %v3232, %v3334
    %v3336 = vpop.f32.mrf.mxu0
    %v3337 = vadd.f32 %v3234, %v3336
    %3338 = vmatprep.mubr.bf16.mxu0 0
    %3339 = vmatmul.mubr.bf16.gmra.mxu0 %v2970
    %v3340 = vpop.f32.mrf.mxu0
    %v3341 = vadd.f32 %v3238, %v3340
    %v3342 = vpop.f32.mrf.mxu0
    %v3343 = vadd.f32 %v3240, %v3342
    %v3344 = vpop.f32.mrf.mxu0
    %v3345 = vadd.f32 %v3242, %v3344
    %v3346 = vpop.f32.mrf.mxu0
    %v3347 = vadd.f32 %v3244, %v3346
    %3348 = vmatprep.mubr.bf16.mxu0 0
    %3349 = vmatmul.mubr.bf16.gmra.mxu0 %v2973
    %v3350 = vpop.f32.mrf.mxu0
    %v3351 = vadd.f32 %v3248, %v3350
    %v3352 = vpop.f32.mrf.mxu0
    %v3353 = vadd.f32 %v3250, %v3352
    %v3354 = vpop.f32.mrf.mxu0
    %v3355 = vadd.f32 %v3252, %v3354
    %v3356 = vpop.f32.mrf.mxu0
    %v3357 = vadd.f32 %v3254, %v3356
    %3358 = vmatprep.mubr.bf16.mxu0 0
    %3359 = vmatmul.mubr.bf16.gmra.mxu0 %v2976
    %v3360 = vpop.f32.mrf.mxu0
    %v3361 = vadd.f32 %v3258, %v3360
    %v3362 = vpop.f32.mrf.mxu0
    %v3363 = vadd.f32 %v3260, %v3362
    %v3364 = vpop.f32.mrf.mxu0
    %v3365 = vadd.f32 %v3262, %v3364
    %v3366 = vpop.f32.mrf.mxu0
    %v3367 = vadd.f32 %v3264, %v3366
    %3368 = vmatprep.mubr.bf16.mxu0 0
    %3369 = vmatmul.mubr.bf16.gmra.mxu0 %v2979
    %v3370 = vpop.f32.mrf.mxu0
    %v3371 = vadd.f32 %v3268, %v3370
    %v3372 = vpop.f32.mrf.mxu0
    %v3373 = vadd.f32 %v3270, %v3372
    %v3374 = vpop.f32.mrf.mxu0
    %v3375 = vadd.f32 %v3272, %v3374
    %v3376 = vpop.f32.mrf.mxu0
    %v3377 = vadd.f32 %v3274, %v3376
    %3378 = vmatprep.mubr.bf16.mxu0 0
    %3379 = vmatmul.mubr.bf16.gmra.mxu0 %v2982
    %v3380 = vpop.f32.mrf.mxu0
    %v3381 = vadd.f32 %v3278, %v3380
    %v3382 = vpop.f32.mrf.mxu0
    %v3383 = vadd.f32 %v3280, %v3382
    %v3384 = vpop.f32.mrf.mxu0
    %v3385 = vadd.f32 %v3282, %v3384
    %v3386 = vpop.f32.mrf.mxu0
    %v3387 = vadd.f32 %v3284, %v3386
    %3388 = vmatprep.mubr.bf16.mxu0 0
    %3389 = vmatmul.mubr.bf16.gmra.mxu0 %v2985
    %v3390 = vpop.f32.mrf.mxu0
    %v3391 = vadd.f32 %v3288, %v3390
    %v3392 = vpop.f32.mrf.mxu0
    %v3393 = vadd.f32 %v3290, %v3392
    %v3394 = vpop.f32.mrf.mxu0
    %v3395 = vadd.f32 %v3292, %v3394
    %v3396 = vpop.f32.mrf.mxu0
    %v3397 = vadd.f32 %v3294, %v3396
    %3398 = vdwg.mxu0
    %v3399 = vadd.f32 %v3331, %v3333
    %v3400 = vadd.f32 %v3399, %v3335
    %v3401 = vadd.f32 %v3400, %v3337
    %v3402 = vadd.f32 %v3401, %v3341
    %v3403 = vadd.f32 %v3402, %v3343
    %v3404 = vadd.f32 %v3403, %v3345
    %v3405 = vadd.f32 %v3404, %v3347
    %v3406 = vadd.f32 %v3405, %v3351
    %v3407 = vadd.f32 %v3406, %v3353
    %v3408 = vadd.f32 %v3407, %v3355
    %v3409 = vadd.f32 %v3408, %v3357
    %v3410 = vadd.f32 %v3409, %v3361
    %v3411 = vadd.f32 %v3410, %v3363
    %3412 = vadd.xlane.f32.xlu0 %v3411
    %v3413 = vpop.xlane.xlu0 %3412
    %v3414 = vrot.slane %v3413, 4
    %v3415 = vadd.f32 %v3413, %v3414
    %v3416 = vrot.slane %v3415, 2
    %v3417 = vadd.f32 %v3415, %v3416
    %v3418 = vrot.slane %v3417, 1
    %v3419 = vadd.f32 %v3417, %v3418
    %s3420 = vtos %v3419
    %v3421 = vstv %s3420
    %v3422 = vmul.f32 %v3421, 0.00013950893
    %v3423 = vmul.f32 %v3331, %v3331
    %v3424 = vmul.f32 %v3333, %v3333
    %v3425 = vmul.f32 %v3335, %v3335
    %v3426 = vmul.f32 %v3337, %v3337
    %v3427 = vmul.f32 %v3341, %v3341
    %v3428 = vmul.f32 %v3343, %v3343
    %v3429 = vmul.f32 %v3345, %v3345
    %v3430 = vmul.f32 %v3347, %v3347
    %v3431 = vmul.f32 %v3351, %v3351
    %v3432 = vmul.f32 %v3353, %v3353
    %v3433 = vmul.f32 %v3355, %v3355
    %v3434 = vmul.f32 %v3357, %v3357
    %v3435 = vmul.f32 %v3361, %v3361
    %v3436 = vmul.f32 %v3363, %v3363
    %v3437 = vadd.f32 %v3423, %v3424
    %v3438 = vadd.f32 %v3437, %v3425
    %v3439 = vadd.f32 %v3438, %v3426
    %v3440 = vadd.f32 %v3439, %v3427
    %v3441 = vadd.f32 %v3440, %v3428
    %v3442 = vadd.f32 %v3441, %v3429
    %v3443 = vadd.f32 %v3442, %v3430
    %v3444 = vadd.f32 %v3443, %v3431
    %v3445 = vadd.f32 %v3444, %v3432
    %v3446 = vadd.f32 %v3445, %v3433
    %v3447 = vadd.f32 %v3446, %v3434
    %v3448 = vadd.f32 %v3447, %v3435
    %v3449 = vadd.f32 %v3448, %v3436
    %3450 = vadd.xlane.f32.xlu0 %v3449
    %v3451 = vpop.xlane.xlu0 %3450
    %v3452 = vrot.slane %v3451, 4
    %v3453 = vadd.f32 %v3451, %v3452
    %v3454 = vrot.slane %v3453, 2
    %v3455 = vadd.f32 %v3453, %v3454
    %v3456 = vrot.slane %v3455, 1
    %v3457 = vadd.f32 %v3455, %v3456
    %s3458 = vtos %v3457
    %v3459 = vstv %s3458
    %v3460 = vmul.f32 %v3459, 0.00013950893
    %v3461 = vmul.f32 %v3422, %v3422
    %v3462 = vsub.f32 %v3460, %v3461
    %v3463 = vsub.f32 %v3331, %v3422
    %v3464 = vsub.f32 %v3333, %v3422
    %v3465 = vsub.f32 %v3335, %v3422
    %v3466 = vsub.f32 %v3337, %v3422
    %v3467 = vsub.f32 %v3341, %v3422
    %v3468 = vsub.f32 %v3343, %v3422
    %v3469 = vsub.f32 %v3345, %v3422
    %v3470 = vsub.f32 %v3347, %v3422
    %v3471 = vsub.f32 %v3351, %v3422
    %v3472 = vsub.f32 %v3353, %v3422
    %v3473 = vsub.f32 %v3355, %v3422
    %v3474 = vsub.f32 %v3357, %v3422
    %v3475 = vsub.f32 %v3361, %v3422
    %v3476 = vsub.f32 %v3363, %v3422
    %v3477 = vadd.f32 %v3462, 1e-05
    %v3478 = vrsqrt.pop %v3477
    %v3479 = vmul.f32 %v3463, %v3478
    %v3480 = vmul.f32 %v3464, %v3478
    %v3481 = vmul.f32 %v3465, %v3478
    %v3482 = vmul.f32 %v3466, %v3478
    %v3483 = vmul.f32 %v3467, %v3478
    %v3484 = vmul.f32 %v3468, %v3478
    %v3485 = vmul.f32 %v3469, %v3478
    %v3486 = vmul.f32 %v3470, %v3478
    %v3487 = vmul.f32 %v3471, %v3478
    %v3488 = vmul.f32 %v3472, %v3478
    %v3489 = vmul.f32 %v3473, %v3478
    %v3490 = vmul.f32 %v3474, %v3478
    %v3491 = vmul.f32 %v3475, %v3478
    %v3492 = vmul.f32 %v3476, %v3478
    %v3493 = vmul.f32 %v3479, %v163
    %v3494 = vmul.f32 %v3480, %v164
    %v3495 = vmul.f32 %v3481, %v165
    %v3496 = vmul.f32 %v3482, %v166
    %v3497 = vmul.f32 %v3483, %v167
    %v3498 = vmul.f32 %v3484, %v168
    %v3499 = vmul.f32 %v3485, %v169
    %v3500 = vmul.f32 %v3486, %v170
    %v3501 = vmul.f32 %v3487, %v171
    %v3502 = vmul.f32 %v3488, %v172
    %v3503 = vmul.f32 %v3489, %v173
    %v3504 = vmul.f32 %v3490, %v174
    %v3505 = vmul.f32 %v3491, %v175
    %v3506 = vmul.f32 %v3492, %v176
    %v3507 = vadd.f32 %v3493, %v193
    %v3508 = vadd.f32 %v3494, %v194
    %v3509 = vadd.f32 %v3495, %v195
    %v3510 = vadd.f32 %v3496, %v196
    %v3511 = vadd.f32 %v3497, %v197
    %v3512 = vadd.f32 %v3498, %v198
    %v3513 = vadd.f32 %v3499, %v199
    %v3514 = vadd.f32 %v3500, %v200
    %v3515 = vadd.f32 %v3501, %v201
    %v3516 = vadd.f32 %v3502, %v202
    %v3517 = vadd.f32 %v3503, %v203
    %v3518 = vadd.f32 %v3504, %v204
    %v3519 = vadd.f32 %v3505, %v205
    %v3520 = vadd.f32 %v3506, %v206
    %v3521 = vadd.f32 %v3365, %v3367
    %v3522 = vadd.f32 %v3521, %v3371
    %v3523 = vadd.f32 %v3522, %v3373
    %v3524 = vadd.f32 %v3523, %v3375
    %v3525 = vadd.f32 %v3524, %v3377
    %v3526 = vadd.f32 %v3525, %v3381
    %v3527 = vadd.f32 %v3526, %v3383
    %3528 = vadd.xlane.f32.xlu0 %v3527
    %v3529 = vpop.xlane.xlu0 %3528
    %v3530 = vrot.slane %v3529, 4
    %v3531 = vadd.f32 %v3529, %v3530
    %v3532 = vrot.slane %v3531, 2
    %v3533 = vadd.f32 %v3531, %v3532
    %v3534 = vrot.slane %v3533, 1
    %v3535 = vadd.f32 %v3533, %v3534
    %s3536 = vtos %v3535
    %v3537 = vstv %s3536
    %v3538 = vmul.f32 %v3537, 0.00024414063
    %v3539 = vmul.f32 %v3365, %v3365
    %v3540 = vmul.f32 %v3367, %v3367
    %v3541 = vmul.f32 %v3371, %v3371
    %v3542 = vmul.f32 %v3373, %v3373
    %v3543 = vmul.f32 %v3375, %v3375
    %v3544 = vmul.f32 %v3377, %v3377
    %v3545 = vmul.f32 %v3381, %v3381
    %v3546 = vmul.f32 %v3383, %v3383
    %v3547 = vadd.f32 %v3539, %v3540
    %v3548 = vadd.f32 %v3547, %v3541
    %v3549 = vadd.f32 %v3548, %v3542
    %v3550 = vadd.f32 %v3549, %v3543
    %v3551 = vadd.f32 %v3550, %v3544
    %v3552 = vadd.f32 %v3551, %v3545
    %v3553 = vadd.f32 %v3552, %v3546
    %3554 = vadd.xlane.f32.xlu0 %v3553
    %v3555 = vpop.xlane.xlu0 %3554
    %v3556 = vrot.slane %v3555, 4
    %v3557 = vadd.f32 %v3555, %v3556
    %v3558 = vrot.slane %v3557, 2
    %v3559 = vadd.f32 %v3557, %v3558
    %v3560 = vrot.slane %v3559, 1
    %v3561 = vadd.f32 %v3559, %v3560
    %s3562 = vtos %v3561
    %v3563 = vstv %s3562
    %v3564 = vmul.f32 %v3563, 0.00024414063
    %v3565 = vmul.f32 %v3538, %v3538
    %v3566 = vsub.f32 %v3564, %v3565
    %v3567 = vsub.f32 %v3365, %v3538
    %v3568 = vsub.f32 %v3367, %v3538
    %v3569 = vsub.f32 %v3371, %v3538
    %v3570 = vsub.f32 %v3373, %v3538
    %v3571 = vsub.f32 %v3375, %v3538
    %v3572 = vsub.f32 %v3377, %v3538
    %v3573 = vsub.f32 %v3381, %v3538
    %v3574 = vsub.f32 %v3383, %v3538
    %v3575 = vadd.f32 %v3566, 1e-05
    %v3576 = vrsqrt.pop %v3575
    %v3577 = vmul.f32 %v3567, %v3576
    %v3578 = vmul.f32 %v3568, %v3576
    %v3579 = vmul.f32 %v3569, %v3576
    %v3580 = vmul.f32 %v3570, %v3576
    %v3581 = vmul.f32 %v3571, %v3576
    %v3582 = vmul.f32 %v3572, %v3576
    %v3583 = vmul.f32 %v3573, %v3576
    %v3584 = vmul.f32 %v3574, %v3576
    %v3585 = vmul.f32 %v3577, %v177
    %v3586 = vmul.f32 %v3578, %v178
    %v3587 = vmul.f32 %v3579, %v179
    %v3588 = vmul.f32 %v3580, %v180
    %v3589 = vmul.f32 %v3581, %v181
    %v3590 = vmul.f32 %v3582, %v182
    %v3591 = vmul.f32 %v3583, %v183
    %v3592 = vmul.f32 %v3584, %v184
    %v3593 = vadd.f32 %v3585, %v207
    %v3594 = vadd.f32 %v3586, %v208
    %v3595 = vadd.f32 %v3587, %v209
    %v3596 = vadd.f32 %v3588, %v210
    %v3597 = vadd.f32 %v3589, %v211
    %v3598 = vadd.f32 %v3590, %v212
    %v3599 = vadd.f32 %v3591, %v213
    %v3600 = vadd.f32 %v3592, %v214
    %v3601 = vadd.f32 %v3385, %v3387
    %v3602 = vadd.f32 %v3601, %v3391
    %v3603 = vadd.f32 %v3602, %v3393
    %v3604 = vadd.f32 %v3603, %v3395
    %v3605 = vadd.f32 %v3604, %v3397
    %3606 = vadd.xlane.f32.xlu0 %v3605
    %v3607 = vpop.xlane.xlu0 %3606
    %v3608 = vrot.slane %v3607, 4
    %v3609 = vadd.f32 %v3607, %v3608
    %v3610 = vrot.slane %v3609, 2
    %v3611 = vadd.f32 %v3609, %v3610
    %v3612 = vrot.slane %v3611, 1
    %v3613 = vadd.f32 %v3611, %v3612
    %s3614 = vtos %v3613
    %v3615 = vstv %s3614
    %v3616 = vmul.f32 %v3615, 0.00032552084
    %v3617 = vmul.f32 %v3385, %v3385
    %v3618 = vmul.f32 %v3387, %v3387
    %v3619 = vmul.f32 %v3391, %v3391
    %v3620 = vmul.f32 %v3393, %v3393
    %v3621 = vmul.f32 %v3395, %v3395
    %v3622 = vmul.f32 %v3397, %v3397
    %v3623 = vadd.f32 %v3617, %v3618
    %v3624 = vadd.f32 %v3623, %v3619
    %v3625 = vadd.f32 %v3624, %v3620
    %v3626 = vadd.f32 %v3625, %v3621
    %v3627 = vadd.f32 %v3626, %v3622
    %3628 = vadd.xlane.f32.xlu0 %v3627
    %v3629 = vpop.xlane.xlu0 %3628
    %v3630 = vrot.slane %v3629, 4
    %v3631 = vadd.f32 %v3629, %v3630
    %v3632 = vrot.slane %v3631, 2
    %v3633 = vadd.f32 %v3631, %v3632
    %v3634 = vrot.slane %v3633, 1
    %v3635 = vadd.f32 %v3633, %v3634
    %s3636 = vtos %v3635
    %v3637 = vstv %s3636
    %v3638 = vmul.f32 %v3637, 0.00032552084
    %v3639 = vmul.f32 %v3616, %v3616
    %v3640 = vsub.f32 %v3638, %v3639
    %v3641 = vsub.f32 %v3385, %v3616
    %v3642 = vsub.f32 %v3387, %v3616
    %v3643 = vsub.f32 %v3391, %v3616
    %v3644 = vsub.f32 %v3393, %v3616
    %v3645 = vsub.f32 %v3395, %v3616
    %v3646 = vsub.f32 %v3397, %v3616
    %v3647 = vadd.f32 %v3640, 1e-05
    %v3648 = vrsqrt.pop %v3647
    %v3649 = vmul.f32 %v3641, %v3648
    %v3650 = vmul.f32 %v3642, %v3648
    %v3651 = vmul.f32 %v3643, %v3648
    %v3652 = vmul.f32 %v3644, %v3648
    %v3653 = vmul.f32 %v3645, %v3648
    %v3654 = vmul.f32 %v3646, %v3648
    %v3655 = vmul.f32 %v3649, %v185
    %v3656 = vmul.f32 %v3650, %v186
    %v3657 = vmul.f32 %v3651, %v187
    %v3658 = vmul.f32 %v3652, %v188
    %v3659 = vmul.f32 %v3653, %v189
    %v3660 = vmul.f32 %v3654, %v190
    %v3661 = vadd.f32 %v3655, %v215
    %v3662 = vadd.f32 %v3656, %v216
    %v3663 = vadd.f32 %v3657, %v217
    %v3664 = vadd.f32 %v3658, %v218
    %v3665 = vadd.f32 %v3659, %v219
    %v3666 = vadd.f32 %v3660, %v220
    %v3667 = vadd.f32 %v3519, %v3599
    %v3668 = vadd.f32 %v3520, %v3600
    %v3669 = vadd.f32 %v3507, %v3593
    %v3670 = vadd.f32 %v3508, %v3594
    %v3671 = vxor.u32 %v3669, 2147483648
    %v3672 = vxor.u32 %v3670, 2147483648
    %v3673 = vmul.f32 %v3671, 1.442695
    %v3674 = vpow.pop %v3673
    %v3675 = vmul.f32 %v3672, 1.442695
    %v3676 = vpow.pop %v3675
    %v3677 = vadd.f32 %v3674, 1.0
    %v3678 = vadd.f32 %v3676, 1.0
    %v3679 = vrcp.pop %v3677
    %v3680 = vmul.f32 1.0, %v3679
    %v3681 = vrcp.pop %v3678
    %v3682 = vmul.f32 1.0, %v3681
    %v3683 = vadd.f32 %v3509, %v3595
    %v3684 = vadd.f32 %v3510, %v3596
    %v3685 = vadd.f32 %v3683, 1.0
    %v3686 = vadd.f32 %v3684, 1.0
    %v3687 = vxor.u32 %v3685, 2147483648
    %v3688 = vxor.u32 %v3686, 2147483648
    %v3689 = vmul.f32 %v3687, 1.442695
    %v3690 = vpow.pop %v3689
    %v3691 = vmul.f32 %v3688, 1.442695
    %v3692 = vpow.pop %v3691
    %v3693 = vadd.f32 %v3690, 1.0
    %v3694 = vadd.f32 %v3692, 1.0
    %v3695 = vrcp.pop %v3693
    %v3696 = vmul.f32 1.0, %v3695
    %v3697 = vrcp.pop %v3694
    %v3698 = vmul.f32 1.0, %v3697
    %v3699 = vadd.f32 %v3511, %v3597
    %v3700 = vadd.f32 %v3512, %v3598
    %v3701 = vtanh.pop %v3699
    %v3702 = vtanh.pop %v3700
    %vm3707 = vcmask 1043456
    %v3708 = vrot.slane %v227, 4
    %v3709 = vrot.slane %v229, 4
    %v3710 = vsel %vm3707, %v3708, %v3709
    %v3711 = vrot.slane %v228, 4
    %v3712 = vrot.slane %v230, 4
    %v3713 = vsel %vm3707, %v3711, %v3712
    %v3716 = vmul.f32 %v3696, %v3710
    %v3717 = vmul.f32 %v3698, %v3713
    %v3718 = vmul.f32 %v3680, %v3701
    %v3719 = vmul.f32 %v3682, %v3702
    %v3720 = vadd.f32 %v3716, %v3718
    %v3721 = vadd.f32 %v3717, %v3719
    %3722 = vst [vmem:[#allocation13] sm:$0xff] %v3720
    %3723 = vst [vmem:[#allocation13 + $0x8] sm:$0xff] %v3721
    %v3724 = vadd.f32 %v3513, %v3661
    %v3725 = vadd.f32 %v3514, %v3662
    %v3726 = vxor.u32 %v3724, 2147483648
    %v3727 = vxor.u32 %v3725, 2147483648
    %v3728 = vmul.f32 %v3726, 1.442695
    %v3729 = vpow.pop %v3728
    %v3730 = vmul.f32 %v3727, 1.442695
    %v3731 = vpow.pop %v3730
    %v3732 = vadd.f32 %v3729, 1.0
    %v3733 = vadd.f32 %v3731, 1.0
    %v3734 = vrcp.pop %v3732
    %v3735 = vmul.f32 1.0, %v3734
    %v3736 = vrcp.pop %v3733
    %v3737 = vmul.f32 1.0, %v3736
    %v3738 = vadd.f32 %v3515, %v3663
    %v3739 = vadd.f32 %v3516, %v3664
    %v3740 = vadd.f32 %v3738, 1.0
    %v3741 = vadd.f32 %v3739, 1.0
    %v3742 = vxor.u32 %v3740, 2147483648
    %v3743 = vxor.u32 %v3741, 2147483648
    %v3744 = vmul.f32 %v3742, 1.442695
    %v3745 = vpow.pop %v3744
    %v3746 = vmul.f32 %v3743, 1.442695
    %v3747 = vpow.pop %v3746
    %v3748 = vadd.f32 %v3745, 1.0
    %v3749 = vadd.f32 %v3747, 1.0
    %v3750 = vrcp.pop %v3748
    %v3751 = vmul.f32 1.0, %v3750
    %v3752 = vrcp.pop %v3749
    %v3753 = vmul.f32 1.0, %v3752
    %v3754 = vadd.f32 %v3517, %v3665
    %v3755 = vadd.f32 %v3518, %v3666
    %v3756 = vtanh.pop %v3754
    %v3757 = vtanh.pop %v3755
    %v3760 = vrot.slane %v225, 4
    %v3761 = vsel %vm3707, %v3760, %v3708
    %v3762 = vrot.slane %v226, 4
    %v3763 = vsel %vm3707, %v3762, %v3711
    %v3766 = vmul.f32 %v3751, %v3761
    %v3767 = vmul.f32 %v3753, %v3763
    %v3768 = vmul.f32 %v3735, %v3756
    %v3769 = vmul.f32 %v3737, %v3757
    %v3770 = vadd.f32 %v3766, %v3768
    %v3771 = vadd.f32 %v3767, %v3769
    %3772 = vst [vmem:[#allocation15] sm:$0xff] %v3770
    %3773 = vst [vmem:[#allocation15 + $0x8] sm:$0xff] %v3771
    %3774 = vrot.lane.b32.xlu0 %v3720, 34
    %v3775 = vpop.permute.xlu0 %3774
    %3776 = vrot.lane.b32.xlu0 %v3770, 34
    %v3777 = vpop.permute.xlu0 %3776
    %3778 = vrot.lane.b32.xlu0 %v3721, 34
    %v3779 = vpop.permute.xlu0 %3778
    %3780 = vrot.lane.b32.xlu0 %v3771, 34
    %v3781 = vpop.permute.xlu0 %3780
    %v3782 = vsel %vm249, %v3775, %v3779
    %v3783 = vsel %vm249, %v3777, %v3781
    %v3784 = vsel %vm249, %v3779, %v3775
    %v3785 = vsel %vm249, %v3781, %v3777
    %v3786 = vld [vmem:[#allocation3] ss:$8 sm:$0x3]
    %v3788 = vlaneseq
    %v3789 = vshrl.u32 %v3788, 7
    %v3790 = vsub.s32 0, %v3789
    %v3791 = vrot.slane %v3786, %v3790
    %v3792 = vlaneseq
    %v3793 = vshrl.u32 %v3792, 7
    %v3794 = vsub.s32 1, %v3793
    %v3795 = vrot.slane %v3786, %v3794
    %v3798 = vmul.f32 %v3784, %v3791
    %v3799 = vmul.f32 %v3782, %v3795
    %v3800 = vmul.f32 %v3785, %v3791
    %v3801 = vmul.f32 %v3783, %v3795
    %v3802 = vpack.c.bf16 %v3800, %v3798
    %v3803 = vpack.c.bf16 %v3801, %v3799
    %v3806 = vunpack.c.l.b16 %v3802
    %v3807 = vunpack.c.l.b16 %v3803
    %v3808 = vunpack.c.h.b16 %v3802
    %v3809 = vunpack.c.h.b16 %v3803
    %v3810 = vpack.c.b16 %v3807, %v3806
    %v3811 = vpack.c.b16 %v3809, %v3808
    %3814 = vst [vmem:[#allocation2] sm:$0xff] %v3810
    %3815 = vst [vmem:[#allocation2 + $0x8] sm:$0xff] %v3811
    %3816 = vrot.lane.b32.xlu0 %v3720, 33
    %v3817 = vpop.permute.xlu0 %3816
    %3818 = vrot.lane.b32.xlu0 %v3770, 33
    %v3819 = vpop.permute.xlu0 %3818
    %3820 = vrot.lane.b32.xlu0 %v3721, 33
    %v3821 = vpop.permute.xlu0 %3820
    %3822 = vrot.lane.b32.xlu0 %v3771, 33
    %v3823 = vpop.permute.xlu0 %3822
    %v3824 = vsel %vm322, %v3817, %v3821
    %v3825 = vsel %vm322, %v3819, %v3823
    %v3826 = vsel %vm322, %v3821, %v3817
    %v3827 = vsel %vm322, %v3823, %v3819
    %v3828 = vld [vmem:[%s331] ss:$8 sm:$0x3]
    %v3830 = vlaneseq
    %v3831 = vshrl.u32 %v3830, 7
    %v3832 = vsub.s32 0, %v3831
    %v3833 = vrot.slane %v3828, %v3832
    %v3834 = vlaneseq
    %v3835 = vshrl.u32 %v3834, 7
    %v3836 = vsub.s32 1, %v3835
    %v3837 = vrot.slane %v3828, %v3836
    %v3840 = vmul.f32 %v3826, %v3833
    %v3841 = vmul.f32 %v3824, %v3837
    %v3842 = vmul.f32 %v3827, %v3833
    %v3843 = vmul.f32 %v3825, %v3837
    %v3844 = vpack.c.bf16 %v3842, %v3840
    %v3845 = vpack.c.bf16 %v3843, %v3841
    %v3848 = vunpack.c.l.b16 %v3844
    %v3849 = vunpack.c.l.b16 %v3845
    %v3850 = vunpack.c.h.b16 %v3844
    %v3851 = vunpack.c.h.b16 %v3845
    %v3852 = vpack.c.b16 %v3849, %v3848
    %v3853 = vpack.c.b16 %v3851, %v3850
    %3856 = vst [vmem:[#allocation2 + $0x10] sm:$0xff] %v3852
    %3857 = vst [vmem:[#allocation2 + $0x18] sm:$0xff] %v3853
    %3858 = vrot.lane.b32.xlu0 %v3720, 32
    %v3859 = vpop.permute.xlu0 %3858
    %3860 = vrot.lane.b32.xlu0 %v3770, 32
    %v3861 = vpop.permute.xlu0 %3860
    %3862 = vrot.lane.b32.xlu0 %v3721, 32
    %v3863 = vpop.permute.xlu0 %3862
    %3864 = vrot.lane.b32.xlu0 %v3771, 32
    %v3865 = vpop.permute.xlu0 %3864
    %v3866 = vsel %vm396, %v3859, %v3863
    %v3867 = vsel %vm396, %v3861, %v3865
    %v3868 = vsel %vm396, %v3863, %v3859
    %v3869 = vsel %vm396, %v3865, %v3861
    %v3870 = vld [vmem:[%s405] ss:$8 sm:$0x3]
    %v3872 = vlaneseq
    %v3873 = vshrl.u32 %v3872, 7
    %v3874 = vsub.s32 0, %v3873
    %v3875 = vrot.slane %v3870, %v3874
    %v3876 = vlaneseq
    %v3877 = vshrl.u32 %v3876, 7
    %v3878 = vsub.s32 1, %v3877
    %v3879 = vrot.slane %v3870, %v3878
    %v3882 = vmul.f32 %v3868, %v3875
    %v3883 = vmul.f32 %v3866, %v3879
    %v3884 = vmul.f32 %v3869, %v3875
    %v3885 = vmul.f32 %v3867, %v3879
    %v3886 = vpack.c.bf16 %v3884, %v3882
    %v3887 = vpack.c.bf16 %v3885, %v3883
    %v3890 = vunpack.c.l.b16 %v3886
    %v3891 = vunpack.c.l.b16 %v3887
    %v3892 = vunpack.c.h.b16 %v3886
    %v3893 = vunpack.c.h.b16 %v3887
    %v3894 = vpack.c.b16 %v3891, %v3890
    %v3895 = vpack.c.b16 %v3893, %v3892
    %3898 = vst [vmem:[#allocation2 + $0x20] sm:$0xff] %v3894
    %3899 = vst [vmem:[#allocation2 + $0x28] sm:$0xff] %v3895
    %3900 = vrot.lane.b32.xlu0 %v3720, 31
    %v3901 = vpop.permute.xlu0 %3900
    %3902 = vrot.lane.b32.xlu0 %v3770, 31
    %v3903 = vpop.permute.xlu0 %3902
    %3904 = vrot.lane.b32.xlu0 %v3721, 31
    %v3905 = vpop.permute.xlu0 %3904
    %3906 = vrot.lane.b32.xlu0 %v3771, 31
    %v3907 = vpop.permute.xlu0 %3906
    %v3908 = vsel %vm470, %v3901, %v3905
    %v3909 = vsel %vm470, %v3903, %v3907
    %v3910 = vsel %vm470, %v3905, %v3901
    %v3911 = vsel %vm470, %v3907, %v3903
    %v3912 = vld [vmem:[%s479] ss:$8 sm:$0x3]
    %v3914 = vlaneseq
    %v3915 = vshrl.u32 %v3914, 7
    %v3916 = vsub.s32 0, %v3915
    %v3917 = vrot.slane %v3912, %v3916
    %v3918 = vlaneseq
    %v3919 = vshrl.u32 %v3918, 7
    %v3920 = vsub.s32 1, %v3919
    %v3921 = vrot.slane %v3912, %v3920
    %v3924 = vmul.f32 %v3910, %v3917
    %v3925 = vmul.f32 %v3908, %v3921
    %v3926 = vmul.f32 %v3911, %v3917
    %v3927 = vmul.f32 %v3909, %v3921
    %v3928 = vpack.c.bf16 %v3926, %v3924
    %v3929 = vpack.c.bf16 %v3927, %v3925
    %v3932 = vunpack.c.l.b16 %v3928
    %v3933 = vunpack.c.l.b16 %v3929
    %v3934 = vunpack.c.h.b16 %v3928
    %v3935 = vunpack.c.h.b16 %v3929
    %v3936 = vpack.c.b16 %v3933, %v3932
    %v3937 = vpack.c.b16 %v3935, %v3934
    %3940 = vst [vmem:[#allocation2 + $0x30] sm:$0xff] %v3936
    %3941 = vst [vmem:[#allocation2 + $0x38] sm:$0xff] %v3937
    %3942 = vrot.lane.b32.xlu0 %v3720, 30
    %v3943 = vpop.permute.xlu0 %3942
    %3944 = vrot.lane.b32.xlu0 %v3770, 30
    %v3945 = vpop.permute.xlu0 %3944
    %3946 = vrot.lane.b32.xlu0 %v3721, 30
    %v3947 = vpop.permute.xlu0 %3946
    %3948 = vrot.lane.b32.xlu0 %v3771, 30
    %v3949 = vpop.permute.xlu0 %3948
    %v3950 = vsel %vm544, %v3943, %v3947
    %v3951 = vsel %vm544, %v3945, %v3949
    %v3952 = vsel %vm544, %v3947, %v3943
    %v3953 = vsel %vm544, %v3949, %v3945
    %v3954 = vld [vmem:[%s553] ss:$8 sm:$0x3]
    %v3956 = vlaneseq
    %v3957 = vshrl.u32 %v3956, 7
    %v3958 = vsub.s32 0, %v3957
    %v3959 = vrot.slane %v3954, %v3958
    %v3960 = vlaneseq
    %v3961 = vshrl.u32 %v3960, 7
    %v3962 = vsub.s32 1, %v3961
    %v3963 = vrot.slane %v3954, %v3962
    %v3966 = vmul.f32 %v3952, %v3959
    %v3967 = vmul.f32 %v3950, %v3963
    %v3968 = vmul.f32 %v3953, %v3959
    %v3969 = vmul.f32 %v3951, %v3963
    %v3970 = vpack.c.bf16 %v3968, %v3966
    %v3971 = vpack.c.bf16 %v3969, %v3967
    %v3974 = vunpack.c.l.b16 %v3970
    %v3975 = vunpack.c.l.b16 %v3971
    %v3976 = vunpack.c.h.b16 %v3970
    %v3977 = vunpack.c.h.b16 %v3971
    %v3978 = vpack.c.b16 %v3975, %v3974
    %v3979 = vpack.c.b16 %v3977, %v3976
    %3982 = vst [vmem:[#allocation2 + $0x40] sm:$0xff] %v3978
    %3983 = vst [vmem:[#allocation2 + $0x48] sm:$0xff] %v3979
    %3984 = vrot.lane.b32.xlu0 %v3720, 18
    %v3985 = vpop.permute.xlu0 %3984
    %3986 = vrot.lane.b32.xlu0 %v3770, 18
    %v3987 = vpop.permute.xlu0 %3986
    %3988 = vrot.lane.b32.xlu0 %v3721, 18
    %v3989 = vpop.permute.xlu0 %3988
    %3990 = vrot.lane.b32.xlu0 %v3771, 18
    %v3991 = vpop.permute.xlu0 %3990
    %v3992 = vsel %vm618, %v3985, %v3989
    %v3993 = vsel %vm618, %v3987, %v3991
    %v3994 = vsel %vm618, %v3989, %v3985
    %v3995 = vsel %vm618, %v3991, %v3987
    %v3996 = vld [vmem:[%s627] ss:$8 sm:$0x3]
    %v3998 = vlaneseq
    %v3999 = vshrl.u32 %v3998, 7
    %v4000 = vsub.s32 0, %v3999
    %v4001 = vrot.slane %v3996, %v4000
    %v4002 = vlaneseq
    %v4003 = vshrl.u32 %v4002, 7
    %v4004 = vsub.s32 1, %v4003
    %v4005 = vrot.slane %v3996, %v4004
    %v4008 = vmul.f32 %v3994, %v4001
    %v4009 = vmul.f32 %v3992, %v4005
    %v4010 = vmul.f32 %v3995, %v4001
    %v4011 = vmul.f32 %v3993, %v4005
    %v4012 = vpack.c.bf16 %v4010, %v4008
    %v4013 = vpack.c.bf16 %v4011, %v4009
    %v4016 = vunpack.c.l.b16 %v4012
    %v4017 = vunpack.c.l.b16 %v4013
    %v4018 = vunpack.c.h.b16 %v4012
    %v4019 = vunpack.c.h.b16 %v4013
    %v4020 = vpack.c.b16 %v4017, %v4016
    %v4021 = vpack.c.b16 %v4019, %v4018
    %4024 = vst [vmem:[#allocation2 + $0x50] sm:$0xff] %v4020
    %4025 = vst [vmem:[#allocation2 + $0x58] sm:$0xff] %v4021
    %4026 = vrot.lane.b32.xlu0 %v3720, 17
    %v4027 = vpop.permute.xlu0 %4026
    %4028 = vrot.lane.b32.xlu0 %v3770, 17
    %v4029 = vpop.permute.xlu0 %4028
    %4030 = vrot.lane.b32.xlu0 %v3721, 17
    %v4031 = vpop.permute.xlu0 %4030
    %4032 = vrot.lane.b32.xlu0 %v3771, 17
    %v4033 = vpop.permute.xlu0 %4032
    %v4034 = vsel %vm692, %v4027, %v4031
    %v4035 = vsel %vm692, %v4029, %v4033
    %v4036 = vsel %vm692, %v4031, %v4027
    %v4037 = vsel %vm692, %v4033, %v4029
    %v4038 = vld [vmem:[%s701] ss:$8 sm:$0x3]
    %v4040 = vlaneseq
    %v4041 = vshrl.u32 %v4040, 7
    %v4042 = vsub.s32 0, %v4041
    %v4043 = vrot.slane %v4038, %v4042
    %v4044 = vlaneseq
    %v4045 = vshrl.u32 %v4044, 7
    %v4046 = vsub.s32 1, %v4045
    %v4047 = vrot.slane %v4038, %v4046
    %v4050 = vmul.f32 %v4036, %v4043
    %v4051 = vmul.f32 %v4034, %v4047
    %v4052 = vmul.f32 %v4037, %v4043
    %v4053 = vmul.f32 %v4035, %v4047
    %v4054 = vpack.c.bf16 %v4052, %v4050
    %v4055 = vpack.c.bf16 %v4053, %v4051
    %v4058 = vunpack.c.l.b16 %v4054
    %v4059 = vunpack.c.l.b16 %v4055
    %v4060 = vunpack.c.h.b16 %v4054
    %v4061 = vunpack.c.h.b16 %v4055
    %v4062 = vpack.c.b16 %v4059, %v4058
    %v4063 = vpack.c.b16 %v4061, %v4060
    %4066 = vst [vmem:[#allocation2 + $0x60] sm:$0xff] %v4062
    %4067 = vst [vmem:[#allocation2 + $0x68] sm:$0xff] %v4063
    %4068 = vrot.lane.b32.xlu0 %v3720, 16
    %v4069 = vpop.permute.xlu0 %4068
    %4070 = vrot.lane.b32.xlu0 %v3770, 16
    %v4071 = vpop.permute.xlu0 %4070
    %4072 = vrot.lane.b32.xlu0 %v3721, 16
    %v4073 = vpop.permute.xlu0 %4072
    %4074 = vrot.lane.b32.xlu0 %v3771, 16
    %v4075 = vpop.permute.xlu0 %4074
    %v4076 = vsel %vm766, %v4069, %v4073
    %v4077 = vsel %vm766, %v4071, %v4075
    %v4078 = vsel %vm766, %v4073, %v4069
    %v4079 = vsel %vm766, %v4075, %v4071
    %v4080 = vld [vmem:[%s775] ss:$8 sm:$0x3]
    %v4082 = vlaneseq
    %v4083 = vshrl.u32 %v4082, 7
    %v4084 = vsub.s32 0, %v4083
    %v4085 = vrot.slane %v4080, %v4084
    %v4086 = vlaneseq
    %v4087 = vshrl.u32 %v4086, 7
    %v4088 = vsub.s32 1, %v4087
    %v4089 = vrot.slane %v4080, %v4088
    %v4092 = vmul.f32 %v4078, %v4085
    %v4093 = vmul.f32 %v4076, %v4089
    %v4094 = vmul.f32 %v4079, %v4085
    %v4095 = vmul.f32 %v4077, %v4089
    %v4096 = vpack.c.bf16 %v4094, %v4092
    %v4097 = vpack.c.bf16 %v4095, %v4093
    %v4100 = vunpack.c.l.b16 %v4096
    %v4101 = vunpack.c.l.b16 %v4097
    %v4102 = vunpack.c.h.b16 %v4096
    %v4103 = vunpack.c.h.b16 %v4097
    %v4104 = vpack.c.b16 %v4101, %v4100
    %v4105 = vpack.c.b16 %v4103, %v4102
    %4108 = vst [vmem:[#allocation2 + $0x70] sm:$0xff] %v4104
    %4109 = vst [vmem:[#allocation2 + $0x78] sm:$0xff] %v4105
    %4110 = vrot.lane.b32.xlu0 %v3720, 15
    %v4111 = vpop.permute.xlu0 %4110
    %4112 = vrot.lane.b32.xlu0 %v3770, 15
    %v4113 = vpop.permute.xlu0 %4112
    %4114 = vrot.lane.b32.xlu0 %v3721, 15
    %v4115 = vpop.permute.xlu0 %4114
    %4116 = vrot.lane.b32.xlu0 %v3771, 15
    %v4117 = vpop.permute.xlu0 %4116
    %v4118 = vsel %vm840, %v4111, %v4115
    %v4119 = vsel %vm840, %v4113, %v4117
    %v4120 = vsel %vm840, %v4115, %v4111
    %v4121 = vsel %vm840, %v4117, %v4113
    %v4122 = vld [vmem:[%s849] ss:$8 sm:$0x3]
    %v4124 = vlaneseq
    %v4125 = vshrl.u32 %v4124, 7
    %v4126 = vsub.s32 0, %v4125
    %v4127 = vrot.slane %v4122, %v4126
    %v4128 = vlaneseq
    %v4129 = vshrl.u32 %v4128, 7
    %v4130 = vsub.s32 1, %v4129
    %v4131 = vrot.slane %v4122, %v4130
    %v4134 = vmul.f32 %v4120, %v4127
    %v4135 = vmul.f32 %v4118, %v4131
    %v4136 = vmul.f32 %v4121, %v4127
    %v4137 = vmul.f32 %v4119, %v4131
    %v4138 = vpack.c.bf16 %v4136, %v4134
    %v4139 = vpack.c.bf16 %v4137, %v4135
    %v4142 = vunpack.c.l.b16 %v4138
    %v4143 = vunpack.c.l.b16 %v4139
    %v4144 = vunpack.c.h.b16 %v4138
    %v4145 = vunpack.c.h.b16 %v4139
    %v4146 = vpack.c.b16 %v4143, %v4142
    %v4147 = vpack.c.b16 %v4145, %v4144
    %4150 = vst [vmem:[#allocation2 + $0x80] sm:$0xff] %v4146
    %4151 = vst [vmem:[#allocation2 + $0x88] sm:$0xff] %v4147
    %4152 = vrot.lane.b32.xlu0 %v3720, 14
    %v4153 = vpop.permute.xlu0 %4152
    %4154 = vrot.lane.b32.xlu0 %v3770, 14
    %v4155 = vpop.permute.xlu0 %4154
    %4156 = vrot.lane.b32.xlu0 %v3721, 14
    %v4157 = vpop.permute.xlu0 %4156
    %4158 = vrot.lane.b32.xlu0 %v3771, 14
    %v4159 = vpop.permute.xlu0 %4158
    %v4160 = vsel %vm914, %v4153, %v4157
    %v4161 = vsel %vm914, %v4155, %v4159
    %v4162 = vsel %vm914, %v4157, %v4153
    %v4163 = vsel %vm914, %v4159, %v4155
    %v4164 = vld [vmem:[%s923] ss:$8 sm:$0x3]
    %v4166 = vlaneseq
    %v4167 = vshrl.u32 %v4166, 7
    %v4168 = vsub.s32 0, %v4167
    %v4169 = vrot.slane %v4164, %v4168
    %v4170 = vlaneseq
    %v4171 = vshrl.u32 %v4170, 7
    %v4172 = vsub.s32 1, %v4171
    %v4173 = vrot.slane %v4164, %v4172
    %v4176 = vmul.f32 %v4162, %v4169
    %v4177 = vmul.f32 %v4160, %v4173
    %v4178 = vmul.f32 %v4163, %v4169
    %v4179 = vmul.f32 %v4161, %v4173
    %v4180 = vpack.c.bf16 %v4178, %v4176
    %v4181 = vpack.c.bf16 %v4179, %v4177
    %v4184 = vunpack.c.l.b16 %v4180
    %v4185 = vunpack.c.l.b16 %v4181
    %v4186 = vunpack.c.h.b16 %v4180
    %v4187 = vunpack.c.h.b16 %v4181
    %v4188 = vpack.c.b16 %v4185, %v4184
    %v4189 = vpack.c.b16 %v4187, %v4186
    %4192 = vst [vmem:[#allocation2 + $0x90] sm:$0xff] %v4188
    %4193 = vst [vmem:[#allocation2 + $0x98] sm:$0xff] %v4189
    %4194 = vrot.lane.b32.xlu0 %v3720, 2
    %v4195 = vpop.permute.xlu0 %4194
    %4196 = vrot.lane.b32.xlu0 %v3770, 2
    %v4197 = vpop.permute.xlu0 %4196
    %4198 = vrot.lane.b32.xlu0 %v3721, 2
    %v4199 = vpop.permute.xlu0 %4198
    %4200 = vrot.lane.b32.xlu0 %v3771, 2
    %v4201 = vpop.permute.xlu0 %4200
    %v4202 = vsel %vm988, %v4195, %v4199
    %v4203 = vsel %vm988, %v4197, %v4201
    %v4204 = vsel %vm988, %v4199, %v4195
    %v4205 = vsel %vm988, %v4201, %v4197
    %v4206 = vld [vmem:[%s997] ss:$8 sm:$0x3]
    %v4208 = vlaneseq
    %v4209 = vshrl.u32 %v4208, 7
    %v4210 = vsub.s32 0, %v4209
    %v4211 = vrot.slane %v4206, %v4210
    %v4212 = vlaneseq
    %v4213 = vshrl.u32 %v4212, 7
    %v4214 = vsub.s32 1, %v4213
    %v4215 = vrot.slane %v4206, %v4214
    %v4218 = vmul.f32 %v4204, %v4211
    %v4219 = vmul.f32 %v4202, %v4215
    %v4220 = vmul.f32 %v4205, %v4211
    %v4221 = vmul.f32 %v4203, %v4215
    %v4222 = vpack.c.bf16 %v4220, %v4218
    %v4223 = vpack.c.bf16 %v4221, %v4219
    %v4226 = vunpack.c.l.b16 %v4222
    %v4227 = vunpack.c.l.b16 %v4223
    %v4228 = vunpack.c.h.b16 %v4222
    %v4229 = vunpack.c.h.b16 %v4223
    %v4230 = vpack.c.b16 %v4227, %v4226
    %v4231 = vpack.c.b16 %v4229, %v4228
    %4234 = vst [vmem:[#allocation2 + $0xa0] sm:$0xff] %v4230
    %4235 = vst [vmem:[#allocation2 + $0xa8] sm:$0xff] %v4231
    %4236 = vrot.lane.b32.xlu0 %v3720, 1
    %v4237 = vpop.permute.xlu0 %4236
    %4238 = vrot.lane.b32.xlu0 %v3770, 1
    %v4239 = vpop.permute.xlu0 %4238
    %4240 = vrot.lane.b32.xlu0 %v3721, 1
    %v4241 = vpop.permute.xlu0 %4240
    %4242 = vrot.lane.b32.xlu0 %v3771, 1
    %v4243 = vpop.permute.xlu0 %4242
    %v4244 = vsel %vm1062, %v4237, %v4241
    %v4245 = vsel %vm1062, %v4239, %v4243
    %v4246 = vsel %vm1062, %v4241, %v4237
    %v4247 = vsel %vm1062, %v4243, %v4239
    %v4248 = vld [vmem:[%s1071] ss:$8 sm:$0x3]
    %v4250 = vlaneseq
    %v4251 = vshrl.u32 %v4250, 7
    %v4252 = vsub.s32 0, %v4251
    %v4253 = vrot.slane %v4248, %v4252
    %v4254 = vlaneseq
    %v4255 = vshrl.u32 %v4254, 7
    %v4256 = vsub.s32 1, %v4255
    %v4257 = vrot.slane %v4248, %v4256
    %v4260 = vmul.f32 %v4246, %v4253
    %v4261 = vmul.f32 %v4244, %v4257
    %v4262 = vmul.f32 %v4247, %v4253
    %v4263 = vmul.f32 %v4245, %v4257
    %v4264 = vpack.c.bf16 %v4262, %v4260
    %v4265 = vpack.c.bf16 %v4263, %v4261
    %v4268 = vunpack.c.l.b16 %v4264
    %v4269 = vunpack.c.l.b16 %v4265
    %v4270 = vunpack.c.h.b16 %v4264
    %v4271 = vunpack.c.h.b16 %v4265
    %v4272 = vpack.c.b16 %v4269, %v4268
    %v4273 = vpack.c.b16 %v4271, %v4270
    %4276 = vst [vmem:[#allocation2 + $0xb0] sm:$0xff] %v4272
    %4277 = vst [vmem:[#allocation2 + $0xb8] sm:$0xff] %v4273
    %v4278 = vpack.c.bf16 %v3770, %v3720
    %v4279 = vpack.c.bf16 %v3771, %v3721
    %v4282 = vunpack.c.l.b16 %v4278
    %v4283 = vunpack.c.l.b16 %v4279
    %v4284 = vunpack.c.h.b16 %v4278
    %v4285 = vunpack.c.h.b16 %v4279
    %v4286 = vpack.c.b16 %v4283, %v4282
    %v4287 = vpack.c.b16 %v4285, %v4284
    %4290 = vst [vmem:[#allocation2 + $0xc0] sm:$0xff] %v4286
    %4291 = vst [vmem:[#allocation2 + $0xc8] sm:$0xff] %v4287
    %4292 = vrot.lane.b32.xlu0 %v3720, 127
    %v4293 = vpop.permute.xlu0 %4292
    %4294 = vrot.lane.b32.xlu0 %v3770, 127
    %v4295 = vpop.permute.xlu0 %4294
    %4296 = vrot.lane.b32.xlu0 %v3721, 127
    %v4297 = vpop.permute.xlu0 %4296
    %4298 = vrot.lane.b32.xlu0 %v3771, 127
    %v4299 = vpop.permute.xlu0 %4298
    %v4300 = vsel %vm1164, %v4293, %v4297
    %v4301 = vsel %vm1164, %v4295, %v4299
    %v4302 = vsel %vm1164, %v4297, %v4293
    %v4303 = vsel %vm1164, %v4299, %v4295
    %v4304 = vld [vmem:[%s1173] ss:$8 sm:$0x3]
    %v4306 = vlaneseq
    %v4307 = vshrl.u32 %v4306, 7
    %v4308 = vsub.s32 0, %v4307
    %v4309 = vrot.slane %v4304, %v4308
    %v4310 = vlaneseq
    %v4311 = vshrl.u32 %v4310, 7
    %v4312 = vsub.s32 1, %v4311
    %v4313 = vrot.slane %v4304, %v4312
    %v4316 = vmul.f32 %v4300, %v4309
    %v4317 = vmul.f32 %v4302, %v4313
    %v4318 = vmul.f32 %v4301, %v4309
    %v4319 = vmul.f32 %v4303, %v4313
    %v4320 = vpack.c.bf16 %v4318, %v4316
    %v4321 = vpack.c.bf16 %v4319, %v4317
    %v4324 = vunpack.c.l.b16 %v4320
    %v4325 = vunpack.c.l.b16 %v4321
    %v4326 = vunpack.c.h.b16 %v4320
    %v4327 = vunpack.c.h.b16 %v4321
    %v4328 = vpack.c.b16 %v4325, %v4324
    %v4329 = vpack.c.b16 %v4327, %v4326
    %4332 = vst [vmem:[#allocation2 + $0xd0] sm:$0xff] %v4328
    %4333 = vst [vmem:[#allocation2 + $0xd8] sm:$0xff] %v4329
    %4334 = vrot.lane.b32.xlu0 %v3720, 126
    %v4335 = vpop.permute.xlu0 %4334
    %4336 = vrot.lane.b32.xlu0 %v3770, 126
    %v4337 = vpop.permute.xlu0 %4336
    %4338 = vrot.lane.b32.xlu0 %v3721, 126
    %v4339 = vpop.permute.xlu0 %4338
    %4340 = vrot.lane.b32.xlu0 %v3771, 126
    %v4341 = vpop.permute.xlu0 %4340
    %v4342 = vsel %vm1238, %v4335, %v4339
    %v4343 = vsel %vm1238, %v4337, %v4341
    %v4344 = vsel %vm1238, %v4339, %v4335
    %v4345 = vsel %vm1238, %v4341, %v4337
    %v4346 = vld [vmem:[%s1247] ss:$8 sm:$0x3]
    %v4348 = vlaneseq
    %v4349 = vshrl.u32 %v4348, 7
    %v4350 = vsub.s32 0, %v4349
    %v4351 = vrot.slane %v4346, %v4350
    %v4352 = vlaneseq
    %v4353 = vshrl.u32 %v4352, 7
    %v4354 = vsub.s32 1, %v4353
    %v4355 = vrot.slane %v4346, %v4354
    %v4358 = vmul.f32 %v4342, %v4351
    %v4359 = vmul.f32 %v4344, %v4355
    %v4360 = vmul.f32 %v4343, %v4351
    %v4361 = vmul.f32 %v4345, %v4355
    %v4362 = vpack.c.bf16 %v4360, %v4358
    %v4363 = vpack.c.bf16 %v4361, %v4359
    %v4366 = vunpack.c.l.b16 %v4362
    %v4367 = vunpack.c.l.b16 %v4363
    %v4368 = vunpack.c.h.b16 %v4362
    %v4369 = vunpack.c.h.b16 %v4363
    %v4370 = vpack.c.b16 %v4367, %v4366
    %v4371 = vpack.c.b16 %v4369, %v4368
    %4374 = vst [vmem:[#allocation2 + $0xe0] sm:$0xff] %v4370
    %4375 = vst [vmem:[#allocation2 + $0xe8] sm:$0xff] %v4371
    %4376 = vrot.lane.b32.xlu0 %v3720, 114
    %v4377 = vpop.permute.xlu0 %4376
    %4378 = vrot.lane.b32.xlu0 %v3770, 114
    %v4379 = vpop.permute.xlu0 %4378
    %4380 = vrot.lane.b32.xlu0 %v3721, 114
    %v4381 = vpop.permute.xlu0 %4380
    %4382 = vrot.lane.b32.xlu0 %v3771, 114
    %v4383 = vpop.permute.xlu0 %4382
    %v4384 = vsel %vm1312, %v4377, %v4381
    %v4385 = vsel %vm1312, %v4379, %v4383
    %v4386 = vsel %vm1312, %v4381, %v4377
    %v4387 = vsel %vm1312, %v4383, %v4379
    %v4388 = vld [vmem:[%s1321] ss:$8 sm:$0x3]
    %v4390 = vlaneseq
    %v4391 = vshrl.u32 %v4390, 7
    %v4392 = vsub.s32 0, %v4391
    %v4393 = vrot.slane %v4388, %v4392
    %v4394 = vlaneseq
    %v4395 = vshrl.u32 %v4394, 7
    %v4396 = vsub.s32 1, %v4395
    %v4397 = vrot.slane %v4388, %v4396
    %v4400 = vmul.f32 %v4384, %v4393
    %v4401 = vmul.f32 %v4386, %v4397
    %v4402 = vmul.f32 %v4385, %v4393
    %v4403 = vmul.f32 %v4387, %v4397
    %v4404 = vpack.c.bf16 %v4402, %v4400
    %v4405 = vpack.c.bf16 %v4403, %v4401
    %v4408 = vunpack.c.l.b16 %v4404
    %v4409 = vunpack.c.l.b16 %v4405
    %v4410 = vunpack.c.h.b16 %v4404
    %v4411 = vunpack.c.h.b16 %v4405
    %v4412 = vpack.c.b16 %v4409, %v4408
    %v4413 = vpack.c.b16 %v4411, %v4410
    %4416 = vst [vmem:[#allocation2 + $0xf0] sm:$0xff] %v4412
    %4417 = vst [vmem:[#allocation2 + $0xf8] sm:$0xff] %v4413
    %4418 = vrot.lane.b32.xlu0 %v3720, 113
    %v4419 = vpop.permute.xlu0 %4418
    %4420 = vrot.lane.b32.xlu0 %v3770, 113
    %v4421 = vpop.permute.xlu0 %4420
    %4422 = vrot.lane.b32.xlu0 %v3721, 113
    %v4423 = vpop.permute.xlu0 %4422
    %4424 = vrot.lane.b32.xlu0 %v3771, 113
    %v4425 = vpop.permute.xlu0 %4424
    %v4426 = vsel %vm1386, %v4419, %v4423
    %v4427 = vsel %vm1386, %v4421, %v4425
    %v4428 = vsel %vm1386, %v4423, %v4419
    %v4429 = vsel %vm1386, %v4425, %v4421
    %v4430 = vld [vmem:[%s1395] ss:$8 sm:$0x3]
    %v4432 = vlaneseq
    %v4433 = vshrl.u32 %v4432, 7
    %v4434 = vsub.s32 0, %v4433
    %v4435 = vrot.slane %v4430, %v4434
    %v4436 = vlaneseq
    %v4437 = vshrl.u32 %v4436, 7
    %v4438 = vsub.s32 1, %v4437
    %v4439 = vrot.slane %v4430, %v4438
    %v4442 = vmul.f32 %v4426, %v4435
    %v4443 = vmul.f32 %v4428, %v4439
    %v4444 = vmul.f32 %v4427, %v4435
    %v4445 = vmul.f32 %v4429, %v4439
    %v4446 = vpack.c.bf16 %v4444, %v4442
    %v4447 = vpack.c.bf16 %v4445, %v4443
    %v4450 = vunpack.c.l.b16 %v4446
    %v4451 = vunpack.c.l.b16 %v4447
    %v4452 = vunpack.c.h.b16 %v4446
    %v4453 = vunpack.c.h.b16 %v4447
    %v4454 = vpack.c.b16 %v4451, %v4450
    %v4455 = vpack.c.b16 %v4453, %v4452
    %4458 = vst [vmem:[#allocation2 + $0x100] sm:$0xff] %v4454
    %4459 = vst [vmem:[#allocation2 + $0x108] sm:$0xff] %v4455
    %4460 = vrot.lane.b32.xlu0 %v3720, 112
    %v4461 = vpop.permute.xlu0 %4460
    %4462 = vrot.lane.b32.xlu0 %v3770, 112
    %v4463 = vpop.permute.xlu0 %4462
    %4464 = vrot.lane.b32.xlu0 %v3721, 112
    %v4465 = vpop.permute.xlu0 %4464
    %4466 = vrot.lane.b32.xlu0 %v3771, 112
    %v4467 = vpop.permute.xlu0 %4466
    %v4468 = vsel %vm1460, %v4461, %v4465
    %v4469 = vsel %vm1460, %v4463, %v4467
    %v4470 = vsel %vm1460, %v4465, %v4461
    %v4471 = vsel %vm1460, %v4467, %v4463
    %v4472 = vld [vmem:[%s1469] ss:$8 sm:$0x3]
    %v4474 = vlaneseq
    %v4475 = vshrl.u32 %v4474, 7
    %v4476 = vsub.s32 0, %v4475
    %v4477 = vrot.slane %v4472, %v4476
    %v4478 = vlaneseq
    %v4479 = vshrl.u32 %v4478, 7
    %v4480 = vsub.s32 1, %v4479
    %v4481 = vrot.slane %v4472, %v4480
    %v4484 = vmul.f32 %v4468, %v4477
    %v4485 = vmul.f32 %v4470, %v4481
    %v4486 = vmul.f32 %v4469, %v4477
    %v4487 = vmul.f32 %v4471, %v4481
    %v4488 = vpack.c.bf16 %v4486, %v4484
    %v4489 = vpack.c.bf16 %v4487, %v4485
    %v4492 = vunpack.c.l.b16 %v4488
    %v4493 = vunpack.c.l.b16 %v4489
    %v4494 = vunpack.c.h.b16 %v4488
    %v4495 = vunpack.c.h.b16 %v4489
    %v4496 = vpack.c.b16 %v4493, %v4492
    %v4497 = vpack.c.b16 %v4495, %v4494
    %4500 = vst [vmem:[#allocation2 + $0x110] sm:$0xff] %v4496
    %4501 = vst [vmem:[#allocation2 + $0x118] sm:$0xff] %v4497
    %4502 = vrot.lane.b32.xlu0 %v3720, 111
    %v4503 = vpop.permute.xlu0 %4502
    %4504 = vrot.lane.b32.xlu0 %v3770, 111
    %v4505 = vpop.permute.xlu0 %4504
    %4506 = vrot.lane.b32.xlu0 %v3721, 111
    %v4507 = vpop.permute.xlu0 %4506
    %4508 = vrot.lane.b32.xlu0 %v3771, 111
    %v4509 = vpop.permute.xlu0 %4508
    %v4510 = vsel %vm1534, %v4503, %v4507
    %v4511 = vsel %vm1534, %v4505, %v4509
    %v4512 = vsel %vm1534, %v4507, %v4503
    %v4513 = vsel %vm1534, %v4509, %v4505
    %v4514 = vld [vmem:[%s1543] ss:$8 sm:$0x3]
    %v4516 = vlaneseq
    %v4517 = vshrl.u32 %v4516, 7
    %v4518 = vsub.s32 0, %v4517
    %v4519 = vrot.slane %v4514, %v4518
    %v4520 = vlaneseq
    %v4521 = vshrl.u32 %v4520, 7
    %v4522 = vsub.s32 1, %v4521
    %v4523 = vrot.slane %v4514, %v4522
    %v4526 = vmul.f32 %v4510, %v4519
    %v4527 = vmul.f32 %v4512, %v4523
    %v4528 = vmul.f32 %v4511, %v4519
    %v4529 = vmul.f32 %v4513, %v4523
    %v4530 = vpack.c.bf16 %v4528, %v4526
    %v4531 = vpack.c.bf16 %v4529, %v4527
    %v4534 = vunpack.c.l.b16 %v4530
    %v4535 = vunpack.c.l.b16 %v4531
    %v4536 = vunpack.c.h.b16 %v4530
    %v4537 = vunpack.c.h.b16 %v4531
    %v4538 = vpack.c.b16 %v4535, %v4534
    %v4539 = vpack.c.b16 %v4537, %v4536
    %4542 = vst [vmem:[#allocation2 + $0x120] sm:$0xff] %v4538
    %4543 = vst [vmem:[#allocation2 + $0x128] sm:$0xff] %v4539
    %4544 = vrot.lane.b32.xlu0 %v3720, 110
    %v4545 = vpop.permute.xlu0 %4544
    %4546 = vrot.lane.b32.xlu0 %v3770, 110
    %v4547 = vpop.permute.xlu0 %4546
    %4548 = vrot.lane.b32.xlu0 %v3721, 110
    %v4549 = vpop.permute.xlu0 %4548
    %4550 = vrot.lane.b32.xlu0 %v3771, 110
    %v4551 = vpop.permute.xlu0 %4550
    %v4552 = vsel %vm1608, %v4545, %v4549
    %v4553 = vsel %vm1608, %v4547, %v4551
    %v4554 = vsel %vm1608, %v4549, %v4545
    %v4555 = vsel %vm1608, %v4551, %v4547
    %v4556 = vld [vmem:[%s1617] ss:$8 sm:$0x3]
    %v4558 = vlaneseq
    %v4559 = vshrl.u32 %v4558, 7
    %v4560 = vsub.s32 0, %v4559
    %v4561 = vrot.slane %v4556, %v4560
    %v4562 = vlaneseq
    %v4563 = vshrl.u32 %v4562, 7
    %v4564 = vsub.s32 1, %v4563
    %v4565 = vrot.slane %v4556, %v4564
    %v4568 = vmul.f32 %v4552, %v4561
    %v4569 = vmul.f32 %v4554, %v4565
    %v4570 = vmul.f32 %v4553, %v4561
    %v4571 = vmul.f32 %v4555, %v4565
    %v4572 = vpack.c.bf16 %v4570, %v4568
    %v4573 = vpack.c.bf16 %v4571, %v4569
    %v4576 = vunpack.c.l.b16 %v4572
    %v4577 = vunpack.c.l.b16 %v4573
    %v4578 = vunpack.c.h.b16 %v4572
    %v4579 = vunpack.c.h.b16 %v4573
    %v4580 = vpack.c.b16 %v4577, %v4576
    %v4581 = vpack.c.b16 %v4579, %v4578
    %4584 = vst [vmem:[#allocation2 + $0x130] sm:$0xff] %v4580
    %4585 = vst [vmem:[#allocation2 + $0x138] sm:$0xff] %v4581
    %4586 = vrot.lane.b32.xlu0 %v3720, 98
    %v4587 = vpop.permute.xlu0 %4586
    %4588 = vrot.lane.b32.xlu0 %v3770, 98
    %v4589 = vpop.permute.xlu0 %4588
    %4590 = vrot.lane.b32.xlu0 %v3721, 98
    %v4591 = vpop.permute.xlu0 %4590
    %4592 = vrot.lane.b32.xlu0 %v3771, 98
    %v4593 = vpop.permute.xlu0 %4592
    %v4594 = vsel %vm1682, %v4587, %v4591
    %v4595 = vsel %vm1682, %v4589, %v4593
    %v4596 = vsel %vm1682, %v4591, %v4587
    %v4597 = vsel %vm1682, %v4593, %v4589
    %v4598 = vld [vmem:[%s1691] ss:$8 sm:$0x3]
    %v4600 = vlaneseq
    %v4601 = vshrl.u32 %v4600, 7
    %v4602 = vsub.s32 0, %v4601
    %v4603 = vrot.slane %v4598, %v4602
    %v4604 = vlaneseq
    %v4605 = vshrl.u32 %v4604, 7
    %v4606 = vsub.s32 1, %v4605
    %v4607 = vrot.slane %v4598, %v4606
    %v4610 = vmul.f32 %v4594, %v4603
    %v4611 = vmul.f32 %v4596, %v4607
    %v4612 = vmul.f32 %v4595, %v4603
    %v4613 = vmul.f32 %v4597, %v4607
    %v4614 = vpack.c.bf16 %v4612, %v4610
    %v4615 = vpack.c.bf16 %v4613, %v4611
    %v4618 = vunpack.c.l.b16 %v4614
    %v4619 = vunpack.c.l.b16 %v4615
    %v4620 = vunpack.c.h.b16 %v4614
    %v4621 = vunpack.c.h.b16 %v4615
    %v4622 = vpack.c.b16 %v4619, %v4618
    %v4623 = vpack.c.b16 %v4621, %v4620
    %4626 = vst [vmem:[#allocation2 + $0x140] sm:$0xff] %v4622
    %4627 = vst [vmem:[#allocation2 + $0x148] sm:$0xff] %v4623
    %4628 = vrot.lane.b32.xlu0 %v3720, 97
    %v4629 = vpop.permute.xlu0 %4628
    %4630 = vrot.lane.b32.xlu0 %v3770, 97
    %v4631 = vpop.permute.xlu0 %4630
    %4632 = vrot.lane.b32.xlu0 %v3721, 97
    %v4633 = vpop.permute.xlu0 %4632
    %4634 = vrot.lane.b32.xlu0 %v3771, 97
    %v4635 = vpop.permute.xlu0 %4634
    %v4636 = vsel %vm1756, %v4629, %v4633
    %v4637 = vsel %vm1756, %v4631, %v4635
    %v4638 = vsel %vm1756, %v4633, %v4629
    %v4639 = vsel %vm1756, %v4635, %v4631
    %v4640 = vld [vmem:[%s1765] ss:$8 sm:$0x3]
    %v4642 = vlaneseq
    %v4643 = vshrl.u32 %v4642, 7
    %v4644 = vsub.s32 0, %v4643
    %v4645 = vrot.slane %v4640, %v4644
    %v4646 = vlaneseq
    %v4647 = vshrl.u32 %v4646, 7
    %v4648 = vsub.s32 1, %v4647
    %v4649 = vrot.slane %v4640, %v4648
    %v4652 = vmul.f32 %v4636, %v4645
    %v4653 = vmul.f32 %v4638, %v4649
    %v4654 = vmul.f32 %v4637, %v4645
    %v4655 = vmul.f32 %v4639, %v4649
    %v4656 = vpack.c.bf16 %v4654, %v4652
    %v4657 = vpack.c.bf16 %v4655, %v4653
    %v4660 = vunpack.c.l.b16 %v4656
    %v4661 = vunpack.c.l.b16 %v4657
    %v4662 = vunpack.c.h.b16 %v4656
    %v4663 = vunpack.c.h.b16 %v4657
    %v4664 = vpack.c.b16 %v4661, %v4660
    %v4665 = vpack.c.b16 %v4663, %v4662
    %4668 = vst [vmem:[#allocation2 + $0x150] sm:$0xff] %v4664
    %4669 = vst [vmem:[#allocation2 + $0x158] sm:$0xff] %v4665
    %4670 = vrot.lane.b32.xlu0 %v3720, 96
    %v4671 = vpop.permute.xlu0 %4670
    %4672 = vrot.lane.b32.xlu0 %v3770, 96
    %v4673 = vpop.permute.xlu0 %4672
    %4674 = vrot.lane.b32.xlu0 %v3721, 96
    %v4675 = vpop.permute.xlu0 %4674
    %4676 = vrot.lane.b32.xlu0 %v3771, 96
    %v4677 = vpop.permute.xlu0 %4676
    %v4678 = vsel %vm1830, %v4671, %v4675
    %v4679 = vsel %vm1830, %v4673, %v4677
    %v4680 = vsel %vm1830, %v4675, %v4671
    %v4681 = vsel %vm1830, %v4677, %v4673
    %v4682 = vld [vmem:[%s1839] ss:$8 sm:$0x3]
    %v4684 = vlaneseq
    %v4685 = vshrl.u32 %v4684, 7
    %v4686 = vsub.s32 0, %v4685
    %v4687 = vrot.slane %v4682, %v4686
    %v4688 = vlaneseq
    %v4689 = vshrl.u32 %v4688, 7
    %v4690 = vsub.s32 1, %v4689
    %v4691 = vrot.slane %v4682, %v4690
    %v4694 = vmul.f32 %v4678, %v4687
    %v4695 = vmul.f32 %v4680, %v4691
    %v4696 = vmul.f32 %v4679, %v4687
    %v4697 = vmul.f32 %v4681, %v4691
    %v4698 = vpack.c.bf16 %v4696, %v4694
    %v4699 = vpack.c.bf16 %v4697, %v4695
    %v4702 = vunpack.c.l.b16 %v4698
    %v4703 = vunpack.c.l.b16 %v4699
    %v4704 = vunpack.c.h.b16 %v4698
    %v4705 = vunpack.c.h.b16 %v4699
    %v4706 = vpack.c.b16 %v4703, %v4702
    %v4707 = vpack.c.b16 %v4705, %v4704
    %4710 = vst [vmem:[#allocation2 + $0x160] sm:$0xff] %v4706
    %4711 = vst [vmem:[#allocation2 + $0x168] sm:$0xff] %v4707
    %4712 = vrot.lane.b32.xlu0 %v3720, 95
    %v4713 = vpop.permute.xlu0 %4712
    %4714 = vrot.lane.b32.xlu0 %v3770, 95
    %v4715 = vpop.permute.xlu0 %4714
    %4716 = vrot.lane.b32.xlu0 %v3721, 95
    %v4717 = vpop.permute.xlu0 %4716
    %4718 = vrot.lane.b32.xlu0 %v3771, 95
    %v4719 = vpop.permute.xlu0 %4718
    %v4720 = vsel %vm1904, %v4713, %v4717
    %v4721 = vsel %vm1904, %v4715, %v4719
    %v4722 = vsel %vm1904, %v4717, %v4713
    %v4723 = vsel %vm1904, %v4719, %v4715
    %v4724 = vld [vmem:[%s1913] ss:$8 sm:$0x3]
    %v4726 = vlaneseq
    %v4727 = vshrl.u32 %v4726, 7
    %v4728 = vsub.s32 0, %v4727
    %v4729 = vrot.slane %v4724, %v4728
    %v4730 = vlaneseq
    %v4731 = vshrl.u32 %v4730, 7
    %v4732 = vsub.s32 1, %v4731
    %v4733 = vrot.slane %v4724, %v4732
    %v4736 = vmul.f32 %v4720, %v4729
    %v4737 = vmul.f32 %v4722, %v4733
    %v4738 = vmul.f32 %v4721, %v4729
    %v4739 = vmul.f32 %v4723, %v4733
    %v4740 = vpack.c.bf16 %v4738, %v4736
    %v4741 = vpack.c.bf16 %v4739, %v4737
    %v4744 = vunpack.c.l.b16 %v4740
    %v4745 = vunpack.c.l.b16 %v4741
    %v4746 = vunpack.c.h.b16 %v4740
    %v4747 = vunpack.c.h.b16 %v4741
    %v4748 = vpack.c.b16 %v4745, %v4744
    %v4749 = vpack.c.b16 %v4747, %v4746
    %4752 = vst [vmem:[#allocation2 + $0x170] sm:$0xff] %v4748
    %4753 = vst [vmem:[#allocation2 + $0x178] sm:$0xff] %v4749
    %4754 = vrot.lane.b32.xlu0 %v3720, 94
    %v4755 = vpop.permute.xlu0 %4754
    %4756 = vrot.lane.b32.xlu0 %v3770, 94
    %v4757 = vpop.permute.xlu0 %4756
    %4758 = vrot.lane.b32.xlu0 %v3721, 94
    %v4759 = vpop.permute.xlu0 %4758
    %4760 = vrot.lane.b32.xlu0 %v3771, 94
    %v4761 = vpop.permute.xlu0 %4760
    %v4762 = vsel %vm1978, %v4755, %v4759
    %v4763 = vsel %vm1978, %v4757, %v4761
    %v4764 = vsel %vm1978, %v4759, %v4755
    %v4765 = vsel %vm1978, %v4761, %v4757
    %v4766 = vld [vmem:[%s1987] ss:$8 sm:$0x3]
    %v4768 = vlaneseq
    %v4769 = vshrl.u32 %v4768, 7
    %v4770 = vsub.s32 0, %v4769
    %v4771 = vrot.slane %v4766, %v4770
    %v4772 = vlaneseq
    %v4773 = vshrl.u32 %v4772, 7
    %v4774 = vsub.s32 1, %v4773
    %v4775 = vrot.slane %v4766, %v4774
    %v4778 = vmul.f32 %v4762, %v4771
    %v4779 = vmul.f32 %v4764, %v4775
    %v4780 = vmul.f32 %v4763, %v4771
    %v4781 = vmul.f32 %v4765, %v4775
    %v4782 = vpack.c.bf16 %v4780, %v4778
    %v4783 = vpack.c.bf16 %v4781, %v4779
    %v4786 = vunpack.c.l.b16 %v4782
    %v4787 = vunpack.c.l.b16 %v4783
    %v4788 = vunpack.c.h.b16 %v4782
    %v4789 = vunpack.c.h.b16 %v4783
    %v4790 = vpack.c.b16 %v4787, %v4786
    %v4791 = vpack.c.b16 %v4789, %v4788
    %4794 = vst [vmem:[#allocation2 + $0x180] sm:$0xff] %v4790
    %4795 = vst [vmem:[#allocation2 + $0x188] sm:$0xff] %v4791
    %v4796 = vld [vmem:[#allocation2] sm:$0xff]
    %v4797 = vld [vmem:[#allocation2 + $0x8] sm:$0xff]
    %v4798 = vld [vmem:[#allocation2 + $0x10] sm:$0xff]
    %v4799 = vld [vmem:[#allocation2 + $0x18] sm:$0xff]
    %v4800 = vld [vmem:[#allocation2 + $0x20] sm:$0xff]
    %v4801 = vld [vmem:[#allocation2 + $0x28] sm:$0xff]
    %v4802 = vld [vmem:[#allocation2 + $0x30] sm:$0xff]
    %v4803 = vld [vmem:[#allocation2 + $0x38] sm:$0xff]
    %v4804 = vld [vmem:[#allocation2 + $0x40] sm:$0xff]
    %v4805 = vld [vmem:[#allocation2 + $0x48] sm:$0xff]
    %v4806 = vld [vmem:[#allocation2 + $0x50] sm:$0xff]
    %v4807 = vld [vmem:[#allocation2 + $0x58] sm:$0xff]
    %v4808 = vld [vmem:[#allocation2 + $0x60] sm:$0xff]
    %v4809 = vld [vmem:[#allocation2 + $0x68] sm:$0xff]
    %v4810 = vld [vmem:[#allocation2 + $0x70] sm:$0xff]
    %v4811 = vld [vmem:[#allocation2 + $0x78] sm:$0xff]
    %v4812 = vld [vmem:[#allocation2 + $0x80] sm:$0xff]
    %v4813 = vld [vmem:[#allocation2 + $0x88] sm:$0xff]
    %v4814 = vld [vmem:[#allocation2 + $0x90] sm:$0xff]
    %v4815 = vld [vmem:[#allocation2 + $0x98] sm:$0xff]
    %v4816 = vld [vmem:[#allocation2 + $0xa0] sm:$0xff]
    %v4817 = vld [vmem:[#allocation2 + $0xa8] sm:$0xff]
    %v4818 = vld [vmem:[#allocation2 + $0xb0] sm:$0xff]
    %v4819 = vld [vmem:[#allocation2 + $0xb8] sm:$0xff]
    %v4820 = vld [vmem:[#allocation2 + $0xc0] sm:$0xff]
    %v4821 = vld [vmem:[#allocation2 + $0xc8] sm:$0xff]
    %v4822 = vld [vmem:[#allocation2 + $0xd0] sm:$0xff]
    %v4823 = vld [vmem:[#allocation2 + $0xd8] sm:$0xff]
    %v4824 = vld [vmem:[#allocation2 + $0xe0] sm:$0xff]
    %v4825 = vld [vmem:[#allocation2 + $0xe8] sm:$0xff]
    %v4826 = vld [vmem:[#allocation2 + $0xf0] sm:$0xff]
    %v4827 = vld [vmem:[#allocation2 + $0xf8] sm:$0xff]
    %v4828 = vld [vmem:[#allocation2 + $0x100] sm:$0xff]
    %v4829 = vld [vmem:[#allocation2 + $0x108] sm:$0xff]
    %v4830 = vld [vmem:[#allocation2 + $0x110] sm:$0xff]
    %v4831 = vld [vmem:[#allocation2 + $0x118] sm:$0xff]
    %v4832 = vld [vmem:[#allocation2 + $0x120] sm:$0xff]
    %v4833 = vld [vmem:[#allocation2 + $0x128] sm:$0xff]
    %v4834 = vld [vmem:[#allocation2 + $0x130] sm:$0xff]
    %v4835 = vld [vmem:[#allocation2 + $0x138] sm:$0xff]
    %v4836 = vld [vmem:[#allocation2 + $0x140] sm:$0xff]
    %v4837 = vld [vmem:[#allocation2 + $0x148] sm:$0xff]
    %v4838 = vld [vmem:[#allocation2 + $0x150] sm:$0xff]
    %v4839 = vld [vmem:[#allocation2 + $0x158] sm:$0xff]
    %v4840 = vld [vmem:[#allocation2 + $0x160] sm:$0xff]
    %v4841 = vld [vmem:[#allocation2 + $0x168] sm:$0xff]
    %v4842 = vld [vmem:[#allocation2 + $0x170] sm:$0xff]
    %v4843 = vld [vmem:[#allocation2 + $0x178] sm:$0xff]
    %v4844 = vld [vmem:[#allocation2 + $0x180] sm:$0xff]
    %v4845 = vld [vmem:[#allocation2 + $0x188] sm:$0xff]
    %v4846 = vld [vmem:[%s5] sm:$0xff]
    %v4847 = vld [vmem:[%s5 + $0x8] sm:$0xff]
    %4849 = vset.pattern.permute.xlu0 0
    %4850 = vperm.xlu0 %4849, %v4846
    %v4851 = vpop.permute.xlu0 %4850
    %4854 = vset.pattern.permute.xlu0 0
    %4855 = vperm.xlu0 %4854, %v4847
    %v4856 = vpop.permute.xlu0 %4855
    %v4862 = vunpack.c.l.b16 %v159
    %v4863 = vunpack.c.h.b16 %v159
    %v4864 = vunpack.c.l.b16 %v160
    %v4865 = vunpack.c.h.b16 %v160
    %v4866 = vunpack.c.l.b16 %v161
    %v4867 = vunpack.c.h.b16 %v161
    %v4868 = vunpack.c.l.b16 %v162
    %v4869 = vunpack.c.h.b16 %v162
    %v4870 = vpack.c.b16 %v4866, %v4862
    %v4871 = vpack.c.b16 %v4867, %v4863
    %v4872 = vpack.c.b16 %v4868, %v4864
    %v4873 = vpack.c.b16 %v4869, %v4865
    %v4927 = vunpack.c.l.b16 %v4796
    %v4928 = vunpack.c.h.b16 %v4796
    %v4929 = vunpack.c.l.b16 %v4797
    %v4930 = vunpack.c.h.b16 %v4797
    %v4931 = vunpack.c.l.b16 %v4798
    %v4932 = vunpack.c.h.b16 %v4798
    %v4933 = vunpack.c.l.b16 %v4799
    %v4934 = vunpack.c.h.b16 %v4799
    %v4935 = vunpack.c.l.b16 %v4800
    %v4936 = vunpack.c.h.b16 %v4800
    %v4937 = vunpack.c.l.b16 %v4801
    %v4938 = vunpack.c.h.b16 %v4801
    %v4939 = vunpack.c.l.b16 %v4802
    %v4940 = vunpack.c.h.b16 %v4802
    %v4941 = vunpack.c.l.b16 %v4803
    %v4942 = vunpack.c.h.b16 %v4803
    %v4943 = vunpack.c.l.b16 %v4804
    %v4944 = vunpack.c.h.b16 %v4804
    %v4945 = vunpack.c.l.b16 %v4805
    %v4946 = vunpack.c.h.b16 %v4805
    %v4947 = vunpack.c.l.b16 %v4806
    %v4948 = vunpack.c.h.b16 %v4806
    %v4949 = vunpack.c.l.b16 %v4807
    %v4950 = vunpack.c.h.b16 %v4807
    %v4951 = vunpack.c.l.b16 %v4808
    %v4952 = vunpack.c.h.b16 %v4808
    %v4953 = vunpack.c.l.b16 %v4809
    %v4954 = vunpack.c.h.b16 %v4809
    %v4955 = vunpack.c.l.b16 %v4810
    %v4956 = vunpack.c.h.b16 %v4810
    %v4957 = vunpack.c.l.b16 %v4811
    %v4958 = vunpack.c.h.b16 %v4811
    %v4959 = vunpack.c.l.b16 %v4812
    %v4960 = vunpack.c.h.b16 %v4812
    %v4961 = vunpack.c.l.b16 %v4813
    %v4962 = vunpack.c.h.b16 %v4813
    %v4963 = vunpack.c.l.b16 %v4814
    %v4964 = vunpack.c.h.b16 %v4814
    %v4965 = vunpack.c.l.b16 %v4815
    %v4966 = vunpack.c.h.b16 %v4815
    %v4967 = vunpack.c.l.b16 %v4816
    %v4968 = vunpack.c.h.b16 %v4816
    %v4969 = vunpack.c.l.b16 %v4817
    %v4970 = vunpack.c.h.b16 %v4817
    %v4971 = vunpack.c.l.b16 %v4818
    %v4972 = vunpack.c.h.b16 %v4818
    %v4973 = vunpack.c.l.b16 %v4819
    %v4974 = vunpack.c.h.b16 %v4819
    %v4975 = vunpack.c.l.b16 %v4820
    %v4976 = vunpack.c.h.b16 %v4820
    %v4977 = vunpack.c.l.b16 %v4821
    %v4978 = vunpack.c.h.b16 %v4821
    %v4979 = vunpack.c.l.b16 %v4822
    %v4980 = vunpack.c.h.b16 %v4822
    %v4981 = vunpack.c.l.b16 %v4823
    %v4982 = vunpack.c.h.b16 %v4823
    %v4983 = vunpack.c.l.b16 %v4824
    %v4984 = vunpack.c.h.b16 %v4824
    %v4985 = vunpack.c.l.b16 %v4825
    %v4986 = vunpack.c.h.b16 %v4825
    %v4987 = vunpack.c.l.b16 %v4826
    %v4988 = vunpack.c.h.b16 %v4826
    %v4989 = vunpack.c.l.b16 %v4827
    %v4990 = vunpack.c.h.b16 %v4827
    %v4991 = vunpack.c.l.b16 %v4828
    %v4992 = vunpack.c.h.b16 %v4828
    %v4993 = vunpack.c.l.b16 %v4829
    %v4994 = vunpack.c.h.b16 %v4829
    %v4995 = vunpack.c.l.b16 %v4830
    %v4996 = vunpack.c.h.b16 %v4830
    %v4997 = vunpack.c.l.b16 %v4831
    %v4998 = vunpack.c.h.b16 %v4831
    %v4999 = vunpack.c.l.b16 %v4832
    %v5000 = vunpack.c.h.b16 %v4832
    %v5001 = vunpack.c.l.b16 %v4833
    %v5002 = vunpack.c.h.b16 %v4833
    %v5003 = vunpack.c.l.b16 %v4834
    %v5004 = vunpack.c.h.b16 %v4834
    %v5005 = vunpack.c.l.b16 %v4835
    %v5006 = vunpack.c.h.b16 %v4835
    %v5007 = vunpack.c.l.b16 %v4836
    %v5008 = vunpack.c.h.b16 %v4836
    %v5009 = vunpack.c.l.b16 %v4837
    %v5010 = vunpack.c.h.b16 %v4837
    %v5011 = vunpack.c.l.b16 %v4838
    %v5012 = vunpack.c.h.b16 %v4838
    %v5013 = vunpack.c.l.b16 %v4839
    %v5014 = vunpack.c.h.b16 %v4839
    %v5015 = vunpack.c.l.b16 %v4840
    %v5016 = vunpack.c.h.b16 %v4840
    %v5017 = vunpack.c.l.b16 %v4841
    %v5018 = vunpack.c.h.b16 %v4841
    %v5019 = vunpack.c.l.b16 %v4842
    %v5020 = vunpack.c.h.b16 %v4842
    %v5021 = vunpack.c.l.b16 %v4843
    %v5022 = vunpack.c.h.b16 %v4843
    %v5023 = vunpack.c.l.b16 %v4844
    %v5024 = vunpack.c.h.b16 %v4844
    %v5025 = vunpack.c.l.b16 %v4845
    %v5026 = vunpack.c.h.b16 %v4845
    %v5027 = vpack.c.b16 %v4929, %v4927
    %v5028 = vpack.c.b16 %v4930, %v4928
    %v5029 = vpack.c.b16 %v4933, %v4931
    %v5030 = vpack.c.b16 %v4934, %v4932
    %v5031 = vpack.c.b16 %v4937, %v4935
    %v5032 = vpack.c.b16 %v4938, %v4936
    %v5033 = vpack.c.b16 %v4941, %v4939
    %v5034 = vpack.c.b16 %v4942, %v4940
    %v5035 = vpack.c.b16 %v4945, %v4943
    %v5036 = vpack.c.b16 %v4946, %v4944
    %v5037 = vpack.c.b16 %v4949, %v4947
    %v5038 = vpack.c.b16 %v4950, %v4948
    %v5039 = vpack.c.b16 %v4953, %v4951
    %v5040 = vpack.c.b16 %v4954, %v4952
    %v5041 = vpack.c.b16 %v4957, %v4955
    %v5042 = vpack.c.b16 %v4958, %v4956
    %v5043 = vpack.c.b16 %v4961, %v4959
    %v5044 = vpack.c.b16 %v4962, %v4960
    %v5045 = vpack.c.b16 %v4965, %v4963
    %v5046 = vpack.c.b16 %v4966, %v4964
    %v5047 = vpack.c.b16 %v4969, %v4967
    %v5048 = vpack.c.b16 %v4970, %v4968
    %v5049 = vpack.c.b16 %v4973, %v4971
    %v5050 = vpack.c.b16 %v4974, %v4972
    %v5051 = vpack.c.b16 %v4977, %v4975
    %v5052 = vpack.c.b16 %v4978, %v4976
    %v5053 = vpack.c.b16 %v4981, %v4979
    %v5054 = vpack.c.b16 %v4982, %v4980
    %v5055 = vpack.c.b16 %v4985, %v4983
    %v5056 = vpack.c.b16 %v4986, %v4984
    %v5057 = vpack.c.b16 %v4989, %v4987
    %v5058 = vpack.c.b16 %v4990, %v4988
    %v5059 = vpack.c.b16 %v4993, %v4991
    %v5060 = vpack.c.b16 %v4994, %v4992
    %v5061 = vpack.c.b16 %v4997, %v4995
    %v5062 = vpack.c.b16 %v4998, %v4996
    %v5063 = vpack.c.b16 %v5001, %v4999
    %v5064 = vpack.c.b16 %v5002, %v5000
    %v5065 = vpack.c.b16 %v5005, %v5003
    %v5066 = vpack.c.b16 %v5006, %v5004
    %v5067 = vpack.c.b16 %v5009, %v5007
    %v5068 = vpack.c.b16 %v5010, %v5008
    %v5069 = vpack.c.b16 %v5013, %v5011
    %v5070 = vpack.c.b16 %v5014, %v5012
    %v5071 = vpack.c.b16 %v5017, %v5015
    %v5072 = vpack.c.b16 %v5018, %v5016
    %v5073 = vpack.c.b16 %v5021, %v5019
    %v5074 = vpack.c.b16 %v5022, %v5020
    %v5075 = vpack.c.b16 %v5025, %v5023
    %v5076 = vpack.c.b16 %v5026, %v5024
    %vm5127 = vcmask 130048
    %v5129 = vsel %vm5127, %v4873, 0
    %5131 = vmatprep.subr.bf16.mxu0 %v5042
    %5132 = vmatpush1.bf16.msra.mxu0 %v5041
    %5133 = vmatprep.subr.bf16.mxu0 %v5040
    %5134 = vmatpush1.bf16.msra.mxu0 %v5039
    %5135 = vmatprep.subr.bf16.mxu0 %v5038
    %5136 = vmatpush1.bf16.msra.mxu0 %v5037
    %5137 = vmatprep.subr.bf16.mxu0 %v5036
    %5138 = vmatpush1.bf16.msra.mxu0 %v5035
    %5139 = vmatprep.subr.bf16.mxu0 %v5034
    %5140 = vmatpush1.bf16.msra.mxu0 %v5033
    %5141 = vmatprep.subr.bf16.mxu0 %v5032
    %5142 = vmatpush1.bf16.msra.mxu0 %v5031
    %5143 = vmatprep.subr.bf16.mxu0 %v5030
    %5144 = vmatpush1.bf16.msra.mxu0 %v5029
    %5145 = vmatprep.subr.bf16.mxu0 %v5028
    %5146 = vmatpush1.bf16.msra.mxu0 %v5027
    %5147 = vmatprep.subr.bf16.mxu0 %v5058
    %5148 = vmatpush2.bf16.msra.mxu0 %v5057
    %5149 = vmatprep.subr.bf16.mxu0 %v5056
    %5150 = vmatpush2.bf16.msra.mxu0 %v5055
    %5151 = vmatprep.subr.bf16.mxu0 %v5054
    %5152 = vmatpush2.bf16.msra.mxu0 %v5053
    %5153 = vmatprep.subr.bf16.mxu0 %v5052
    %5154 = vmatpush2.bf16.msra.mxu0 %v5051
    %5155 = vmatprep.subr.bf16.mxu0 %v5050
    %5156 = vmatpush2.bf16.msra.mxu0 %v5049
    %5157 = vmatprep.subr.bf16.mxu0 %v5048
    %5158 = vmatpush2.bf16.msra.mxu0 %v5047
    %5159 = vmatprep.subr.bf16.mxu0 %v5046
    %5160 = vmatpush2.bf16.msra.mxu0 %v5045
    %5161 = vmatprep.subr.bf16.mxu0 %v5044
    %5162 = vmatpush2.bf16.msra.mxu0 %v5043
    %5163 = vmatprep.mubr.bf16.mxu0 %v4871
    %5164 = vmatmul.mubr.bf16.gmra.mxu0 %v4870
    %v5165 = vpop.f32.mrf.mxu0
    %v5166 = vadd.f32 %v4851, %v5165
    %v5167 = vpop.f32.mrf.mxu0
    %v5168 = vadd.f32 %v4851, %v5167
    %v5169 = vpop.f32.mrf.mxu0
    %v5170 = vadd.f32 %v4856, %v5169
    %v5171 = vpop.f32.mrf.mxu0
    %v5172 = vadd.f32 %v4856, %v5171
    %5173 = vdwg.mxu0
    %5174 = vmatprep.subr.bf16.mxu0 %v5074
    %5175 = vmatpush1.bf16.msra.mxu0 %v5073
    %5176 = vmatprep.subr.bf16.mxu0 %v5072
    %5177 = vmatpush1.bf16.msra.mxu0 %v5071
    %5178 = vmatprep.subr.bf16.mxu0 %v5070
    %5179 = vmatpush1.bf16.msra.mxu0 %v5069
    %5180 = vmatprep.subr.bf16.mxu0 %v5068
    %5181 = vmatpush1.bf16.msra.mxu0 %v5067
    %5182 = vmatprep.subr.bf16.mxu0 %v5066
    %5183 = vmatpush1.bf16.msra.mxu0 %v5065
    %5184 = vmatprep.subr.bf16.mxu0 %v5064
    %5185 = vmatpush1.bf16.msra.mxu0 %v5063
    %5186 = vmatprep.subr.bf16.mxu0 %v5062
    %5187 = vmatpush1.bf16.msra.mxu0 %v5061
    %5188 = vmatprep.subr.bf16.mxu0 %v5060
    %5189 = vmatpush1.bf16.msra.mxu0 %v5059
    %5190 = vmatprep.subr.bf16.mxu0 0
    %5191 = vmatpush2.bf16.msra.mxu0 0
    %5192 = vmatprep.subr.bf16.mxu0 0
    %5193 = vmatpush2.bf16.msra.mxu0 0
    %5194 = vmatprep.subr.bf16.mxu0 0
    %5195 = vmatpush2.bf16.msra.mxu0 0
    %5196 = vmatprep.subr.bf16.mxu0 0
    %5197 = vmatpush2.bf16.msra.mxu0 0
    %5198 = vmatprep.subr.bf16.mxu0 0
    %5199 = vmatpush2.bf16.msra.mxu0 0
    %5200 = vmatprep.subr.bf16.mxu0 0
    %5201 = vmatpush2.bf16.msra.mxu0 0
    %5202 = vmatprep.subr.bf16.mxu0 0
    %5203 = vmatpush2.bf16.msra.mxu0 0
    %5204 = vmatprep.subr.bf16.mxu0 %v5076
    %5205 = vmatpush2.bf16.msra.mxu0 %v5075
    %5206 = vmatprep.mubr.bf16.mxu0 %v5129
    %5207 = vmatmul.mubr.bf16.gmra.mxu0 %v4872
    %v5208 = vpop.f32.mrf.mxu0
    %v5209 = vadd.f32 %v5166, %v5208
    %v5210 = vpop.f32.mrf.mxu0
    %v5211 = vadd.f32 %v5168, %v5210
    %v5212 = vpop.f32.mrf.mxu0
    %v5213 = vadd.f32 %v5170, %v5212
    %v5214 = vpop.f32.mrf.mxu0
    %v5215 = vadd.f32 %v5172, %v5214
    %5216 = vdwg.mxu0
    %v5217 = vadd.f32 %v5209, %v5211
    %5218 = vadd.xlane.f32.xlu0 %v5217
    %v5219 = vpop.xlane.xlu0 %5218
    %v5220 = vrot.slane %v5219, 4
    %v5221 = vadd.f32 %v5219, %v5220
    %v5222 = vrot.slane %v5221, 2
    %v5223 = vadd.f32 %v5221, %v5222
    %v5224 = vrot.slane %v5223, 1
    %v5225 = vadd.f32 %v5223, %v5224
    %s5226 = vtos %v5225
    %v5227 = vstv %s5226
    %v5228 = vmul.f32 %v5227, 0.0009765625
    %v5229 = vmul.f32 %v5209, %v5209
    %v5230 = vmul.f32 %v5211, %v5211
    %v5231 = vadd.f32 %v5229, %v5230
    %5232 = vadd.xlane.f32.xlu0 %v5231
    %v5233 = vpop.xlane.xlu0 %5232
    %v5234 = vrot.slane %v5233, 4
    %v5235 = vadd.f32 %v5233, %v5234
    %v5236 = vrot.slane %v5235, 2
    %v5237 = vadd.f32 %v5235, %v5236
    %v5238 = vrot.slane %v5237, 1
    %v5239 = vadd.f32 %v5237, %v5238
    %s5240 = vtos %v5239
    %v5241 = vstv %s5240
    %v5242 = vmul.f32 %v5241, 0.0009765625
    %v5243 = vmul.f32 %v5228, %v5228
    %v5244 = vsub.f32 %v5242, %v5243
    %v5245 = vsub.f32 %v5209, %v5228
    %v5246 = vsub.f32 %v5211, %v5228
    %v5247 = vadd.f32 %v5244, 1e-05
    %v5248 = vrsqrt.pop %v5247
    %v5249 = vmul.f32 %v5245, %v5248
    %v5250 = vmul.f32 %v5246, %v5248
    %v5251 = vmul.f32 %v5249, %v191
    %v5252 = vmul.f32 %v5250, %v192
    %v5253 = vadd.f32 %v5251, %v221
    %v5254 = vadd.f32 %v5252, %v222
    %v5255 = vadd.f32 %v3667, %v5253
    %v5256 = vadd.f32 %v3668, %v5254
    %v5257 = vxor.u32 %v5255, 2147483648
    %v5258 = vxor.u32 %v5256, 2147483648
    %v5259 = vmul.f32 %v5257, 1.442695
    %v5260 = vpow.pop %v5259
    %v5261 = vmul.f32 %v5258, 1.442695
    %v5262 = vpow.pop %v5261
    %v5263 = vadd.f32 %v5260, 1.0
    %v5264 = vadd.f32 %v5262, 1.0
    %v5265 = vrcp.pop %v5263
    %v5266 = vmul.f32 1.0, %v5265
    %v5267 = vrcp.pop %v5264
    %v5268 = vmul.f32 1.0, %v5267
    %v5269 = vtanh.pop %v5213
    %v5270 = vtanh.pop %v5215
    %v5271 = vmul.f32 %v5266, %v5269
    %v5272 = vmul.f32 %v5268, %v5270
    %5273 = vst [vmem:[#allocation12] sm:$0xff] %v5271
    %5274 = vst [vmem:[#allocation12 + $0x8] sm:$0xff] %v5272
    %s5275 = scalar_lea.vmem %s0, 64
    %v5276 = vld [vmem:[%s5275] sm:$0xff]
    %v5277 = vld [vmem:[%s5275 + $0x8] sm:$0xff]
    %v5278 = vld [vmem:[%s5275 + $0x10] sm:$0xff]
    %v5279 = vld [vmem:[%s5275 + $0x18] sm:$0xff]
    %v5280 = vld [vmem:[%s5275 + $0x20] sm:$0xff]
    %v5281 = vld [vmem:[%s5275 + $0x28] sm:$0xff]
    %v5282 = vld [vmem:[%s5275 + $0x30] sm:$0xff]
    %v5283 = vld [vmem:[%s5275 + $0x38] sm:$0xff]
    %5284 = vrot.lane.b32.xlu0 %v5276, 34
    %v5285 = vpop.permute.xlu0 %5284
    %5286 = vrot.lane.b32.xlu0 %v5278, 34
    %v5287 = vpop.permute.xlu0 %5286
    %5288 = vrot.lane.b32.xlu0 %v5280, 34
    %v5289 = vpop.permute.xlu0 %5288
    %5290 = vrot.lane.b32.xlu0 %v5282, 34
    %v5291 = vpop.permute.xlu0 %5290
    %5292 = vrot.lane.b32.xlu0 %v5277, 34
    %v5293 = vpop.permute.xlu0 %5292
    %5294 = vrot.lane.b32.xlu0 %v5279, 34
    %v5295 = vpop.permute.xlu0 %5294
    %5296 = vrot.lane.b32.xlu0 %v5281, 34
    %v5297 = vpop.permute.xlu0 %5296
    %5298 = vrot.lane.b32.xlu0 %v5283, 34
    %v5299 = vpop.permute.xlu0 %5298
    %v5300 = vsel %vm249, %v5285, %v5293
    %v5301 = vsel %vm249, %v5287, %v5295
    %v5302 = vsel %vm249, %v5289, %v5297
    %v5303 = vsel %vm249, %v5291, %v5299
    %v5304 = vsel %vm249, %v5293, %v5285
    %v5305 = vsel %vm249, %v5295, %v5287
    %v5306 = vsel %vm249, %v5297, %v5289
    %v5307 = vsel %vm249, %v5299, %v5291
    %v5308 = vld [vmem:[#allocation3] ss:$8 sm:$0x3]
    %v5310 = vlaneseq
    %v5311 = vshrl.u32 %v5310, 7
    %v5312 = vsub.s32 0, %v5311
    %v5313 = vrot.slane %v5308, %v5312
    %v5314 = vlaneseq
    %v5315 = vshrl.u32 %v5314, 7
    %v5316 = vsub.s32 1, %v5315
    %v5317 = vrot.slane %v5308, %v5316
    %v5320 = vmul.f32 %v5304, %v5313
    %v5321 = vmul.f32 %v5300, %v5317
    %v5322 = vmul.f32 %v5305, %v5313
    %v5323 = vmul.f32 %v5301, %v5317
    %v5324 = vmul.f32 %v5306, %v5313
    %v5325 = vmul.f32 %v5302, %v5317
    %v5326 = vmul.f32 %v5307, %v5313
    %v5327 = vmul.f32 %v5303, %v5317
    %v5328 = vpack.c.bf16 %v5322, %v5320
    %v5329 = vpack.c.bf16 %v5323, %v5321
    %v5330 = vpack.c.bf16 %v5326, %v5324
    %v5331 = vpack.c.bf16 %v5327, %v5325
    %v5336 = vunpack.c.l.b16 %v5328
    %v5337 = vunpack.c.l.b16 %v5329
    %v5338 = vunpack.c.h.b16 %v5328
    %v5339 = vunpack.c.h.b16 %v5329
    %v5340 = vunpack.c.l.b16 %v5330
    %v5341 = vunpack.c.l.b16 %v5331
    %v5342 = vunpack.c.h.b16 %v5330
    %v5343 = vunpack.c.h.b16 %v5331
    %v5344 = vpack.c.b16 %v5337, %v5336
    %v5345 = vpack.c.b16 %v5339, %v5338
    %v5346 = vpack.c.b16 %v5341, %v5340
    %v5347 = vpack.c.b16 %v5343, %v5342
    %5352 = vst [vmem:[#allocation2] sm:$0xff] %v5344
    %5353 = vst [vmem:[#allocation2 + $0x8] sm:$0xff] %v5345
    %5354 = vst [vmem:[#allocation2 + $0x10] sm:$0xff] %v5346
    %5355 = vst [vmem:[#allocation2 + $0x18] sm:$0xff] %v5347
    %5356 = vrot.lane.b32.xlu0 %v5276, 33
    %v5357 = vpop.permute.xlu0 %5356
    %5358 = vrot.lane.b32.xlu0 %v5278, 33
    %v5359 = vpop.permute.xlu0 %5358
    %5360 = vrot.lane.b32.xlu0 %v5280, 33
    %v5361 = vpop.permute.xlu0 %5360
    %5362 = vrot.lane.b32.xlu0 %v5282, 33
    %v5363 = vpop.permute.xlu0 %5362
    %5364 = vrot.lane.b32.xlu0 %v5277, 33
    %v5365 = vpop.permute.xlu0 %5364
    %5366 = vrot.lane.b32.xlu0 %v5279, 33
    %v5367 = vpop.permute.xlu0 %5366
    %5368 = vrot.lane.b32.xlu0 %v5281, 33
    %v5369 = vpop.permute.xlu0 %5368
    %5370 = vrot.lane.b32.xlu0 %v5283, 33
    %v5371 = vpop.permute.xlu0 %5370
    %v5372 = vsel %vm322, %v5357, %v5365
    %v5373 = vsel %vm322, %v5359, %v5367
    %v5374 = vsel %vm322, %v5361, %v5369
    %v5375 = vsel %vm322, %v5363, %v5371
    %v5376 = vsel %vm322, %v5365, %v5357
    %v5377 = vsel %vm322, %v5367, %v5359
    %v5378 = vsel %vm322, %v5369, %v5361
    %v5379 = vsel %vm322, %v5371, %v5363
    %v5380 = vld [vmem:[%s331] ss:$8 sm:$0x3]
    %v5382 = vlaneseq
    %v5383 = vshrl.u32 %v5382, 7
    %v5384 = vsub.s32 0, %v5383
    %v5385 = vrot.slane %v5380, %v5384
    %v5386 = vlaneseq
    %v5387 = vshrl.u32 %v5386, 7
    %v5388 = vsub.s32 1, %v5387
    %v5389 = vrot.slane %v5380, %v5388
    %v5392 = vmul.f32 %v5376, %v5385
    %v5393 = vmul.f32 %v5372, %v5389
    %v5394 = vmul.f32 %v5377, %v5385
    %v5395 = vmul.f32 %v5373, %v5389
    %v5396 = vmul.f32 %v5378, %v5385
    %v5397 = vmul.f32 %v5374, %v5389
    %v5398 = vmul.f32 %v5379, %v5385
    %v5399 = vmul.f32 %v5375, %v5389
    %v5400 = vpack.c.bf16 %v5394, %v5392
    %v5401 = vpack.c.bf16 %v5395, %v5393
    %v5402 = vpack.c.bf16 %v5398, %v5396
    %v5403 = vpack.c.bf16 %v5399, %v5397
    %v5408 = vunpack.c.l.b16 %v5400
    %v5409 = vunpack.c.l.b16 %v5401
    %v5410 = vunpack.c.h.b16 %v5400
    %v5411 = vunpack.c.h.b16 %v5401
    %v5412 = vunpack.c.l.b16 %v5402
    %v5413 = vunpack.c.l.b16 %v5403
    %v5414 = vunpack.c.h.b16 %v5402
    %v5415 = vunpack.c.h.b16 %v5403
    %v5416 = vpack.c.b16 %v5409, %v5408
    %v5417 = vpack.c.b16 %v5411, %v5410
    %v5418 = vpack.c.b16 %v5413, %v5412
    %v5419 = vpack.c.b16 %v5415, %v5414
    %5424 = vst [vmem:[#allocation2 + $0x20] sm:$0xff] %v5416
    %5425 = vst [vmem:[#allocation2 + $0x28] sm:$0xff] %v5417
    %5426 = vst [vmem:[#allocation2 + $0x30] sm:$0xff] %v5418
    %5427 = vst [vmem:[#allocation2 + $0x38] sm:$0xff] %v5419
    %5428 = vrot.lane.b32.xlu0 %v5276, 32
    %v5429 = vpop.permute.xlu0 %5428
    %5430 = vrot.lane.b32.xlu0 %v5278, 32
    %v5431 = vpop.permute.xlu0 %5430
    %5432 = vrot.lane.b32.xlu0 %v5280, 32
    %v5433 = vpop.permute.xlu0 %5432
    %5434 = vrot.lane.b32.xlu0 %v5282, 32
    %v5435 = vpop.permute.xlu0 %5434
    %5436 = vrot.lane.b32.xlu0 %v5277, 32
    %v5437 = vpop.permute.xlu0 %5436
    %5438 = vrot.lane.b32.xlu0 %v5279, 32
    %v5439 = vpop.permute.xlu0 %5438
    %5440 = vrot.lane.b32.xlu0 %v5281, 32
    %v5441 = vpop.permute.xlu0 %5440
    %5442 = vrot.lane.b32.xlu0 %v5283, 32
    %v5443 = vpop.permute.xlu0 %5442
    %v5444 = vsel %vm396, %v5429, %v5437
    %v5445 = vsel %vm396, %v5431, %v5439
    %v5446 = vsel %vm396, %v5433, %v5441
    %v5447 = vsel %vm396, %v5435, %v5443
    %v5448 = vsel %vm396, %v5437, %v5429
    %v5449 = vsel %vm396, %v5439, %v5431
    %v5450 = vsel %vm396, %v5441, %v5433
    %v5451 = vsel %vm396, %v5443, %v5435
    %v5452 = vld [vmem:[%s405] ss:$8 sm:$0x3]
    %v5454 = vlaneseq
    %v5455 = vshrl.u32 %v5454, 7
    %v5456 = vsub.s32 0, %v5455
    %v5457 = vrot.slane %v5452, %v5456
    %v5458 = vlaneseq
    %v5459 = vshrl.u32 %v5458, 7
    %v5460 = vsub.s32 1, %v5459
    %v5461 = vrot.slane %v5452, %v5460
    %v5464 = vmul.f32 %v5448, %v5457
    %v5465 = vmul.f32 %v5444, %v5461
    %v5466 = vmul.f32 %v5449, %v5457
    %v5467 = vmul.f32 %v5445, %v5461
    %v5468 = vmul.f32 %v5450, %v5457
    %v5469 = vmul.f32 %v5446, %v5461
    %v5470 = vmul.f32 %v5451, %v5457
    %v5471 = vmul.f32 %v5447, %v5461
    %v5472 = vpack.c.bf16 %v5466, %v5464
    %v5473 = vpack.c.bf16 %v5467, %v5465
    %v5474 = vpack.c.bf16 %v5470, %v5468
    %v5475 = vpack.c.bf16 %v5471, %v5469
    %v5480 = vunpack.c.l.b16 %v5472
    %v5481 = vunpack.c.l.b16 %v5473
    %v5482 = vunpack.c.h.b16 %v5472
    %v5483 = vunpack.c.h.b16 %v5473
    %v5484 = vunpack.c.l.b16 %v5474
    %v5485 = vunpack.c.l.b16 %v5475
    %v5486 = vunpack.c.h.b16 %v5474
    %v5487 = vunpack.c.h.b16 %v5475
    %v5488 = vpack.c.b16 %v5481, %v5480
    %v5489 = vpack.c.b16 %v5483, %v5482
    %v5490 = vpack.c.b16 %v5485, %v5484
    %v5491 = vpack.c.b16 %v5487, %v5486
    %5496 = vst [vmem:[#allocation2 + $0x40] sm:$0xff] %v5488
    %5497 = vst [vmem:[#allocation2 + $0x48] sm:$0xff] %v5489
    %5498 = vst [vmem:[#allocation2 + $0x50] sm:$0xff] %v5490
    %5499 = vst [vmem:[#allocation2 + $0x58] sm:$0xff] %v5491
    %5500 = vrot.lane.b32.xlu0 %v5276, 31
    %v5501 = vpop.permute.xlu0 %5500
    %5502 = vrot.lane.b32.xlu0 %v5278, 31
    %v5503 = vpop.permute.xlu0 %5502
    %5504 = vrot.lane.b32.xlu0 %v5280, 31
    %v5505 = vpop.permute.xlu0 %5504
    %5506 = vrot.lane.b32.xlu0 %v5282, 31
    %v5507 = vpop.permute.xlu0 %5506
    %5508 = vrot.lane.b32.xlu0 %v5277, 31
    %v5509 = vpop.permute.xlu0 %5508
    %5510 = vrot.lane.b32.xlu0 %v5279, 31
    %v5511 = vpop.permute.xlu0 %5510
    %5512 = vrot.lane.b32.xlu0 %v5281, 31
    %v5513 = vpop.permute.xlu0 %5512
    %5514 = vrot.lane.b32.xlu0 %v5283, 31
    %v5515 = vpop.permute.xlu0 %5514
    %v5516 = vsel %vm470, %v5501, %v5509
    %v5517 = vsel %vm470, %v5503, %v5511
    %v5518 = vsel %vm470, %v5505, %v5513
    %v5519 = vsel %vm470, %v5507, %v5515
    %v5520 = vsel %vm470, %v5509, %v5501
    %v5521 = vsel %vm470, %v5511, %v5503
    %v5522 = vsel %vm470, %v5513, %v5505
    %v5523 = vsel %vm470, %v5515, %v5507
    %v5524 = vld [vmem:[%s479] ss:$8 sm:$0x3]
    %v5526 = vlaneseq
    %v5527 = vshrl.u32 %v5526, 7
    %v5528 = vsub.s32 0, %v5527
    %v5529 = vrot.slane %v5524, %v5528
    %v5530 = vlaneseq
    %v5531 = vshrl.u32 %v5530, 7
    %v5532 = vsub.s32 1, %v5531
    %v5533 = vrot.slane %v5524, %v5532
    %v5536 = vmul.f32 %v5520, %v5529
    %v5537 = vmul.f32 %v5516, %v5533
    %v5538 = vmul.f32 %v5521, %v5529
    %v5539 = vmul.f32 %v5517, %v5533
    %v5540 = vmul.f32 %v5522, %v5529
    %v5541 = vmul.f32 %v5518, %v5533
    %v5542 = vmul.f32 %v5523, %v5529
    %v5543 = vmul.f32 %v5519, %v5533
    %v5544 = vpack.c.bf16 %v5538, %v5536
    %v5545 = vpack.c.bf16 %v5539, %v5537
    %v5546 = vpack.c.bf16 %v5542, %v5540
    %v5547 = vpack.c.bf16 %v5543, %v5541
    %v5552 = vunpack.c.l.b16 %v5544
    %v5553 = vunpack.c.l.b16 %v5545
    %v5554 = vunpack.c.h.b16 %v5544
    %v5555 = vunpack.c.h.b16 %v5545
    %v5556 = vunpack.c.l.b16 %v5546
    %v5557 = vunpack.c.l.b16 %v5547
    %v5558 = vunpack.c.h.b16 %v5546
    %v5559 = vunpack.c.h.b16 %v5547
    %v5560 = vpack.c.b16 %v5553, %v5552
    %v5561 = vpack.c.b16 %v5555, %v5554
    %v5562 = vpack.c.b16 %v5557, %v5556
    %v5563 = vpack.c.b16 %v5559, %v5558
    %5568 = vst [vmem:[#allocation2 + $0x60] sm:$0xff] %v5560
    %5569 = vst [vmem:[#allocation2 + $0x68] sm:$0xff] %v5561
    %5570 = vst [vmem:[#allocation2 + $0x70] sm:$0xff] %v5562
    %5571 = vst [vmem:[#allocation2 + $0x78] sm:$0xff] %v5563
    %5572 = vrot.lane.b32.xlu0 %v5276, 30
    %v5573 = vpop.permute.xlu0 %5572
    %5574 = vrot.lane.b32.xlu0 %v5278, 30
    %v5575 = vpop.permute.xlu0 %5574
    %5576 = vrot.lane.b32.xlu0 %v5280, 30
    %v5577 = vpop.permute.xlu0 %5576
    %5578 = vrot.lane.b32.xlu0 %v5282, 30
    %v5579 = vpop.permute.xlu0 %5578
    %5580 = vrot.lane.b32.xlu0 %v5277, 30
    %v5581 = vpop.permute.xlu0 %5580
    %5582 = vrot.lane.b32.xlu0 %v5279, 30
    %v5583 = vpop.permute.xlu0 %5582
    %5584 = vrot.lane.b32.xlu0 %v5281, 30
    %v5585 = vpop.permute.xlu0 %5584
    %5586 = vrot.lane.b32.xlu0 %v5283, 30
    %v5587 = vpop.permute.xlu0 %5586
    %v5588 = vsel %vm544, %v5573, %v5581
    %v5589 = vsel %vm544, %v5575, %v5583
    %v5590 = vsel %vm544, %v5577, %v5585
    %v5591 = vsel %vm544, %v5579, %v5587
    %v5592 = vsel %vm544, %v5581, %v5573
    %v5593 = vsel %vm544, %v5583, %v5575
    %v5594 = vsel %vm544, %v5585, %v5577
    %v5595 = vsel %vm544, %v5587, %v5579
    %v5596 = vld [vmem:[%s553] ss:$8 sm:$0x3]
    %v5598 = vlaneseq
    %v5599 = vshrl.u32 %v5598, 7
    %v5600 = vsub.s32 0, %v5599
    %v5601 = vrot.slane %v5596, %v5600
    %v5602 = vlaneseq
    %v5603 = vshrl.u32 %v5602, 7
    %v5604 = vsub.s32 1, %v5603
    %v5605 = vrot.slane %v5596, %v5604
    %v5608 = vmul.f32 %v5592, %v5601
    %v5609 = vmul.f32 %v5588, %v5605
    %v5610 = vmul.f32 %v5593, %v5601
    %v5611 = vmul.f32 %v5589, %v5605
    %v5612 = vmul.f32 %v5594, %v5601
    %v5613 = vmul.f32 %v5590, %v5605
    %v5614 = vmul.f32 %v5595, %v5601
    %v5615 = vmul.f32 %v5591, %v5605
    %v5616 = vpack.c.bf16 %v5610, %v5608
    %v5617 = vpack.c.bf16 %v5611, %v5609
    %v5618 = vpack.c.bf16 %v5614, %v5612
    %v5619 = vpack.c.bf16 %v5615, %v5613
    %v5624 = vunpack.c.l.b16 %v5616
    %v5625 = vunpack.c.l.b16 %v5617
    %v5626 = vunpack.c.h.b16 %v5616
    %v5627 = vunpack.c.h.b16 %v5617
    %v5628 = vunpack.c.l.b16 %v5618
    %v5629 = vunpack.c.l.b16 %v5619
    %v5630 = vunpack.c.h.b16 %v5618
    %v5631 = vunpack.c.h.b16 %v5619
    %v5632 = vpack.c.b16 %v5625, %v5624
    %v5633 = vpack.c.b16 %v5627, %v5626
    %v5634 = vpack.c.b16 %v5629, %v5628
    %v5635 = vpack.c.b16 %v5631, %v5630
    %5640 = vst [vmem:[#allocation2 + $0x80] sm:$0xff] %v5632
    %5641 = vst [vmem:[#allocation2 + $0x88] sm:$0xff] %v5633
    %5642 = vst [vmem:[#allocation2 + $0x90] sm:$0xff] %v5634
    %5643 = vst [vmem:[#allocation2 + $0x98] sm:$0xff] %v5635
    %5644 = vrot.lane.b32.xlu0 %v5276, 18
    %v5645 = vpop.permute.xlu0 %5644
    %5646 = vrot.lane.b32.xlu0 %v5278, 18
    %v5647 = vpop.permute.xlu0 %5646
    %5648 = vrot.lane.b32.xlu0 %v5280, 18
    %v5649 = vpop.permute.xlu0 %5648
    %5650 = vrot.lane.b32.xlu0 %v5282, 18
    %v5651 = vpop.permute.xlu0 %5650
    %5652 = vrot.lane.b32.xlu0 %v5277, 18
    %v5653 = vpop.permute.xlu0 %5652
    %5654 = vrot.lane.b32.xlu0 %v5279, 18
    %v5655 = vpop.permute.xlu0 %5654
    %5656 = vrot.lane.b32.xlu0 %v5281, 18
    %v5657 = vpop.permute.xlu0 %5656
    %5658 = vrot.lane.b32.xlu0 %v5283, 18
    %v5659 = vpop.permute.xlu0 %5658
    %v5660 = vsel %vm618, %v5645, %v5653
    %v5661 = vsel %vm618, %v5647, %v5655
    %v5662 = vsel %vm618, %v5649, %v5657
    %v5663 = vsel %vm618, %v5651, %v5659
    %v5664 = vsel %vm618, %v5653, %v5645
    %v5665 = vsel %vm618, %v5655, %v5647
    %v5666 = vsel %vm618, %v5657, %v5649
    %v5667 = vsel %vm618, %v5659, %v5651
    %v5668 = vld [vmem:[%s627] ss:$8 sm:$0x3]
    %v5670 = vlaneseq
    %v5671 = vshrl.u32 %v5670, 7
    %v5672 = vsub.s32 0, %v5671
    %v5673 = vrot.slane %v5668, %v5672
    %v5674 = vlaneseq
    %v5675 = vshrl.u32 %v5674, 7
    %v5676 = vsub.s32 1, %v5675
    %v5677 = vrot.slane %v5668, %v5676
    %v5680 = vmul.f32 %v5664, %v5673
    %v5681 = vmul.f32 %v5660, %v5677
    %v5682 = vmul.f32 %v5665, %v5673
    %v5683 = vmul.f32 %v5661, %v5677
    %v5684 = vmul.f32 %v5666, %v5673
    %v5685 = vmul.f32 %v5662, %v5677
    %v5686 = vmul.f32 %v5667, %v5673
    %v5687 = vmul.f32 %v5663, %v5677
    %v5688 = vpack.c.bf16 %v5682, %v5680
    %v5689 = vpack.c.bf16 %v5683, %v5681
    %v5690 = vpack.c.bf16 %v5686, %v5684
    %v5691 = vpack.c.bf16 %v5687, %v5685
    %v5696 = vunpack.c.l.b16 %v5688
    %v5697 = vunpack.c.l.b16 %v5689
    %v5698 = vunpack.c.h.b16 %v5688
    %v5699 = vunpack.c.h.b16 %v5689
    %v5700 = vunpack.c.l.b16 %v5690
    %v5701 = vunpack.c.l.b16 %v5691
    %v5702 = vunpack.c.h.b16 %v5690
    %v5703 = vunpack.c.h.b16 %v5691
    %v5704 = vpack.c.b16 %v5697, %v5696
    %v5705 = vpack.c.b16 %v5699, %v5698
    %v5706 = vpack.c.b16 %v5701, %v5700
    %v5707 = vpack.c.b16 %v5703, %v5702
    %5712 = vst [vmem:[#allocation2 + $0xa0] sm:$0xff] %v5704
    %5713 = vst [vmem:[#allocation2 + $0xa8] sm:$0xff] %v5705
    %5714 = vst [vmem:[#allocation2 + $0xb0] sm:$0xff] %v5706
    %5715 = vst [vmem:[#allocation2 + $0xb8] sm:$0xff] %v5707
    %5716 = vrot.lane.b32.xlu0 %v5276, 17
    %v5717 = vpop.permute.xlu0 %5716
    %5718 = vrot.lane.b32.xlu0 %v5278, 17
    %v5719 = vpop.permute.xlu0 %5718
    %5720 = vrot.lane.b32.xlu0 %v5280, 17
    %v5721 = vpop.permute.xlu0 %5720
    %5722 = vrot.lane.b32.xlu0 %v5282, 17
    %v5723 = vpop.permute.xlu0 %5722
    %5724 = vrot.lane.b32.xlu0 %v5277, 17
    %v5725 = vpop.permute.xlu0 %5724
    %5726 = vrot.lane.b32.xlu0 %v5279, 17
    %v5727 = vpop.permute.xlu0 %5726
    %5728 = vrot.lane.b32.xlu0 %v5281, 17
    %v5729 = vpop.permute.xlu0 %5728
    %5730 = vrot.lane.b32.xlu0 %v5283, 17
    %v5731 = vpop.permute.xlu0 %5730
    %v5732 = vsel %vm692, %v5717, %v5725
    %v5733 = vsel %vm692, %v5719, %v5727
    %v5734 = vsel %vm692, %v5721, %v5729
    %v5735 = vsel %vm692, %v5723, %v5731
    %v5736 = vsel %vm692, %v5725, %v5717
    %v5737 = vsel %vm692, %v5727, %v5719
    %v5738 = vsel %vm692, %v5729, %v5721
    %v5739 = vsel %vm692, %v5731, %v5723
    %v5740 = vld [vmem:[%s701] ss:$8 sm:$0x3]
    %v5742 = vlaneseq
    %v5743 = vshrl.u32 %v5742, 7
    %v5744 = vsub.s32 0, %v5743
    %v5745 = vrot.slane %v5740, %v5744
    %v5746 = vlaneseq
    %v5747 = vshrl.u32 %v5746, 7
    %v5748 = vsub.s32 1, %v5747
    %v5749 = vrot.slane %v5740, %v5748
    %v5752 = vmul.f32 %v5736, %v5745
    %v5753 = vmul.f32 %v5732, %v5749
    %v5754 = vmul.f32 %v5737, %v5745
    %v5755 = vmul.f32 %v5733, %v5749
    %v5756 = vmul.f32 %v5738, %v5745
    %v5757 = vmul.f32 %v5734, %v5749
    %v5758 = vmul.f32 %v5739, %v5745
    %v5759 = vmul.f32 %v5735, %v5749
    %v5760 = vpack.c.bf16 %v5754, %v5752
    %v5761 = vpack.c.bf16 %v5755, %v5753
    %v5762 = vpack.c.bf16 %v5758, %v5756
    %v5763 = vpack.c.bf16 %v5759, %v5757
    %v5768 = vunpack.c.l.b16 %v5760
    %v5769 = vunpack.c.l.b16 %v5761
    %v5770 = vunpack.c.h.b16 %v5760
    %v5771 = vunpack.c.h.b16 %v5761
    %v5772 = vunpack.c.l.b16 %v5762
    %v5773 = vunpack.c.l.b16 %v5763
    %v5774 = vunpack.c.h.b16 %v5762
    %v5775 = vunpack.c.h.b16 %v5763
    %v5776 = vpack.c.b16 %v5769, %v5768
    %v5777 = vpack.c.b16 %v5771, %v5770
    %v5778 = vpack.c.b16 %v5773, %v5772
    %v5779 = vpack.c.b16 %v5775, %v5774
    %5784 = vst [vmem:[#allocation2 + $0xc0] sm:$0xff] %v5776
    %5785 = vst [vmem:[#allocation2 + $0xc8] sm:$0xff] %v5777
    %5786 = vst [vmem:[#allocation2 + $0xd0] sm:$0xff] %v5778
    %5787 = vst [vmem:[#allocation2 + $0xd8] sm:$0xff] %v5779
    %5788 = vrot.lane.b32.xlu0 %v5276, 16
    %v5789 = vpop.permute.xlu0 %5788
    %5790 = vrot.lane.b32.xlu0 %v5278, 16
    %v5791 = vpop.permute.xlu0 %5790
    %5792 = vrot.lane.b32.xlu0 %v5280, 16
    %v5793 = vpop.permute.xlu0 %5792
    %5794 = vrot.lane.b32.xlu0 %v5282, 16
    %v5795 = vpop.permute.xlu0 %5794
    %5796 = vrot.lane.b32.xlu0 %v5277, 16
    %v5797 = vpop.permute.xlu0 %5796
    %5798 = vrot.lane.b32.xlu0 %v5279, 16
    %v5799 = vpop.permute.xlu0 %5798
    %5800 = vrot.lane.b32.xlu0 %v5281, 16
    %v5801 = vpop.permute.xlu0 %5800
    %5802 = vrot.lane.b32.xlu0 %v5283, 16
    %v5803 = vpop.permute.xlu0 %5802
    %v5804 = vsel %vm766, %v5789, %v5797
    %v5805 = vsel %vm766, %v5791, %v5799
    %v5806 = vsel %vm766, %v5793, %v5801
    %v5807 = vsel %vm766, %v5795, %v5803
    %v5808 = vsel %vm766, %v5797, %v5789
    %v5809 = vsel %vm766, %v5799, %v5791
    %v5810 = vsel %vm766, %v5801, %v5793
    %v5811 = vsel %vm766, %v5803, %v5795
    %v5812 = vld [vmem:[%s775] ss:$8 sm:$0x3]
    %v5814 = vlaneseq
    %v5815 = vshrl.u32 %v5814, 7
    %v5816 = vsub.s32 0, %v5815
    %v5817 = vrot.slane %v5812, %v5816
    %v5818 = vlaneseq
    %v5819 = vshrl.u32 %v5818, 7
    %v5820 = vsub.s32 1, %v5819
    %v5821 = vrot.slane %v5812, %v5820
    %v5824 = vmul.f32 %v5808, %v5817
    %v5825 = vmul.f32 %v5804, %v5821
    %v5826 = vmul.f32 %v5809, %v5817
    %v5827 = vmul.f32 %v5805, %v5821
    %v5828 = vmul.f32 %v5810, %v5817
    %v5829 = vmul.f32 %v5806, %v5821
    %v5830 = vmul.f32 %v5811, %v5817
    %v5831 = vmul.f32 %v5807, %v5821
    %v5832 = vpack.c.bf16 %v5826, %v5824
    %v5833 = vpack.c.bf16 %v5827, %v5825
    %v5834 = vpack.c.bf16 %v5830, %v5828
    %v5835 = vpack.c.bf16 %v5831, %v5829
    %v5840 = vunpack.c.l.b16 %v5832
    %v5841 = vunpack.c.l.b16 %v5833
    %v5842 = vunpack.c.h.b16 %v5832
    %v5843 = vunpack.c.h.b16 %v5833
    %v5844 = vunpack.c.l.b16 %v5834
    %v5845 = vunpack.c.l.b16 %v5835
    %v5846 = vunpack.c.h.b16 %v5834
    %v5847 = vunpack.c.h.b16 %v5835
    %v5848 = vpack.c.b16 %v5841, %v5840
    %v5849 = vpack.c.b16 %v5843, %v5842
    %v5850 = vpack.c.b16 %v5845, %v5844
    %v5851 = vpack.c.b16 %v5847, %v5846
    %5856 = vst [vmem:[#allocation2 + $0xe0] sm:$0xff] %v5848
    %5857 = vst [vmem:[#allocation2 + $0xe8] sm:$0xff] %v5849
    %5858 = vst [vmem:[#allocation2 + $0xf0] sm:$0xff] %v5850
    %5859 = vst [vmem:[#allocation2 + $0xf8] sm:$0xff] %v5851
    %5860 = vrot.lane.b32.xlu0 %v5276, 15
    %v5861 = vpop.permute.xlu0 %5860
    %5862 = vrot.lane.b32.xlu0 %v5278, 15
    %v5863 = vpop.permute.xlu0 %5862
    %5864 = vrot.lane.b32.xlu0 %v5280, 15
    %v5865 = vpop.permute.xlu0 %5864
    %5866 = vrot.lane.b32.xlu0 %v5282, 15
    %v5867 = vpop.permute.xlu0 %5866
    %5868 = vrot.lane.b32.xlu0 %v5277, 15
    %v5869 = vpop.permute.xlu0 %5868
    %5870 = vrot.lane.b32.xlu0 %v5279, 15
    %v5871 = vpop.permute.xlu0 %5870
    %5872 = vrot.lane.b32.xlu0 %v5281, 15
    %v5873 = vpop.permute.xlu0 %5872
    %5874 = vrot.lane.b32.xlu0 %v5283, 15
    %v5875 = vpop.permute.xlu0 %5874
    %v5876 = vsel %vm840, %v5861, %v5869
    %v5877 = vsel %vm840, %v5863, %v5871
    %v5878 = vsel %vm840, %v5865, %v5873
    %v5879 = vsel %vm840, %v5867, %v5875
    %v5880 = vsel %vm840, %v5869, %v5861
    %v5881 = vsel %vm840, %v5871, %v5863
    %v5882 = vsel %vm840, %v5873, %v5865
    %v5883 = vsel %vm840, %v5875, %v5867
    %v5884 = vld [vmem:[%s849] ss:$8 sm:$0x3]
    %v5886 = vlaneseq
    %v5887 = vshrl.u32 %v5886, 7
    %v5888 = vsub.s32 0, %v5887
    %v5889 = vrot.slane %v5884, %v5888
    %v5890 = vlaneseq
    %v5891 = vshrl.u32 %v5890, 7
    %v5892 = vsub.s32 1, %v5891
    %v5893 = vrot.slane %v5884, %v5892
    %v5896 = vmul.f32 %v5880, %v5889
    %v5897 = vmul.f32 %v5876, %v5893
    %v5898 = vmul.f32 %v5881, %v5889
    %v5899 = vmul.f32 %v5877, %v5893
    %v5900 = vmul.f32 %v5882, %v5889
    %v5901 = vmul.f32 %v5878, %v5893
    %v5902 = vmul.f32 %v5883, %v5889
    %v5903 = vmul.f32 %v5879, %v5893
    %v5904 = vpack.c.bf16 %v5898, %v5896
    %v5905 = vpack.c.bf16 %v5899, %v5897
    %v5906 = vpack.c.bf16 %v5902, %v5900
    %v5907 = vpack.c.bf16 %v5903, %v5901
    %v5912 = vunpack.c.l.b16 %v5904
    %v5913 = vunpack.c.l.b16 %v5905
    %v5914 = vunpack.c.h.b16 %v5904
    %v5915 = vunpack.c.h.b16 %v5905
    %v5916 = vunpack.c.l.b16 %v5906
    %v5917 = vunpack.c.l.b16 %v5907
    %v5918 = vunpack.c.h.b16 %v5906
    %v5919 = vunpack.c.h.b16 %v5907
    %v5920 = vpack.c.b16 %v5913, %v5912
    %v5921 = vpack.c.b16 %v5915, %v5914
    %v5922 = vpack.c.b16 %v5917, %v5916
    %v5923 = vpack.c.b16 %v5919, %v5918
    %5928 = vst [vmem:[#allocation2 + $0x100] sm:$0xff] %v5920
    %5929 = vst [vmem:[#allocation2 + $0x108] sm:$0xff] %v5921
    %5930 = vst [vmem:[#allocation2 + $0x110] sm:$0xff] %v5922
    %5931 = vst [vmem:[#allocation2 + $0x118] sm:$0xff] %v5923
    %5932 = vrot.lane.b32.xlu0 %v5276, 14
    %v5933 = vpop.permute.xlu0 %5932
    %5934 = vrot.lane.b32.xlu0 %v5278, 14
    %v5935 = vpop.permute.xlu0 %5934
    %5936 = vrot.lane.b32.xlu0 %v5280, 14
    %v5937 = vpop.permute.xlu0 %5936
    %5938 = vrot.lane.b32.xlu0 %v5282, 14
    %v5939 = vpop.permute.xlu0 %5938
    %5940 = vrot.lane.b32.xlu0 %v5277, 14
    %v5941 = vpop.permute.xlu0 %5940
    %5942 = vrot.lane.b32.xlu0 %v5279, 14
    %v5943 = vpop.permute.xlu0 %5942
    %5944 = vrot.lane.b32.xlu0 %v5281, 14
    %v5945 = vpop.permute.xlu0 %5944
    %5946 = vrot.lane.b32.xlu0 %v5283, 14
    %v5947 = vpop.permute.xlu0 %5946
    %v5948 = vsel %vm914, %v5933, %v5941
    %v5949 = vsel %vm914, %v5935, %v5943
    %v5950 = vsel %vm914, %v5937, %v5945
    %v5951 = vsel %vm914, %v5939, %v5947
    %v5952 = vsel %vm914, %v5941, %v5933
    %v5953 = vsel %vm914, %v5943, %v5935
    %v5954 = vsel %vm914, %v5945, %v5937
    %v5955 = vsel %vm914, %v5947, %v5939
    %v5956 = vld [vmem:[%s923] ss:$8 sm:$0x3]
    %v5958 = vlaneseq
    %v5959 = vshrl.u32 %v5958, 7
    %v5960 = vsub.s32 0, %v5959
    %v5961 = vrot.slane %v5956, %v5960
    %v5962 = vlaneseq
    %v5963 = vshrl.u32 %v5962, 7
    %v5964 = vsub.s32 1, %v5963
    %v5965 = vrot.slane %v5956, %v5964
    %v5968 = vmul.f32 %v5952, %v5961
    %v5969 = vmul.f32 %v5948, %v5965
    %v5970 = vmul.f32 %v5953, %v5961
    %v5971 = vmul.f32 %v5949, %v5965
    %v5972 = vmul.f32 %v5954, %v5961
    %v5973 = vmul.f32 %v5950, %v5965
    %v5974 = vmul.f32 %v5955, %v5961
    %v5975 = vmul.f32 %v5951, %v5965
    %v5976 = vpack.c.bf16 %v5970, %v5968
    %v5977 = vpack.c.bf16 %v5971, %v5969
    %v5978 = vpack.c.bf16 %v5974, %v5972
    %v5979 = vpack.c.bf16 %v5975, %v5973
    %v5984 = vunpack.c.l.b16 %v5976
    %v5985 = vunpack.c.l.b16 %v5977
    %v5986 = vunpack.c.h.b16 %v5976
    %v5987 = vunpack.c.h.b16 %v5977
    %v5988 = vunpack.c.l.b16 %v5978
    %v5989 = vunpack.c.l.b16 %v5979
    %v5990 = vunpack.c.h.b16 %v5978
    %v5991 = vunpack.c.h.b16 %v5979
    %v5992 = vpack.c.b16 %v5985, %v5984
    %v5993 = vpack.c.b16 %v5987, %v5986
    %v5994 = vpack.c.b16 %v5989, %v5988
    %v5995 = vpack.c.b16 %v5991, %v5990
    %6000 = vst [vmem:[#allocation2 + $0x120] sm:$0xff] %v5992
    %6001 = vst [vmem:[#allocation2 + $0x128] sm:$0xff] %v5993
    %6002 = vst [vmem:[#allocation2 + $0x130] sm:$0xff] %v5994
    %6003 = vst [vmem:[#allocation2 + $0x138] sm:$0xff] %v5995
    %6004 = vrot.lane.b32.xlu0 %v5276, 2
    %v6005 = vpop.permute.xlu0 %6004
    %6006 = vrot.lane.b32.xlu0 %v5278, 2
    %v6007 = vpop.permute.xlu0 %6006
    %6008 = vrot.lane.b32.xlu0 %v5280, 2
    %v6009 = vpop.permute.xlu0 %6008
    %6010 = vrot.lane.b32.xlu0 %v5282, 2
    %v6011 = vpop.permute.xlu0 %6010
    %6012 = vrot.lane.b32.xlu0 %v5277, 2
    %v6013 = vpop.permute.xlu0 %6012
    %6014 = vrot.lane.b32.xlu0 %v5279, 2
    %v6015 = vpop.permute.xlu0 %6014
    %6016 = vrot.lane.b32.xlu0 %v5281, 2
    %v6017 = vpop.permute.xlu0 %6016
    %6018 = vrot.lane.b32.xlu0 %v5283, 2
    %v6019 = vpop.permute.xlu0 %6018
    %v6020 = vsel %vm988, %v6005, %v6013
    %v6021 = vsel %vm988, %v6007, %v6015
    %v6022 = vsel %vm988, %v6009, %v6017
    %v6023 = vsel %vm988, %v6011, %v6019
    %v6024 = vsel %vm988, %v6013, %v6005
    %v6025 = vsel %vm988, %v6015, %v6007
    %v6026 = vsel %vm988, %v6017, %v6009
    %v6027 = vsel %vm988, %v6019, %v6011
    %v6028 = vld [vmem:[%s997] ss:$8 sm:$0x3]
    %v6030 = vlaneseq
    %v6031 = vshrl.u32 %v6030, 7
    %v6032 = vsub.s32 0, %v6031
    %v6033 = vrot.slane %v6028, %v6032
    %v6034 = vlaneseq
    %v6035 = vshrl.u32 %v6034, 7
    %v6036 = vsub.s32 1, %v6035
    %v6037 = vrot.slane %v6028, %v6036
    %v6040 = vmul.f32 %v6024, %v6033
    %v6041 = vmul.f32 %v6020, %v6037
    %v6042 = vmul.f32 %v6025, %v6033
    %v6043 = vmul.f32 %v6021, %v6037
    %v6044 = vmul.f32 %v6026, %v6033
    %v6045 = vmul.f32 %v6022, %v6037
    %v6046 = vmul.f32 %v6027, %v6033
    %v6047 = vmul.f32 %v6023, %v6037
    %v6048 = vpack.c.bf16 %v6042, %v6040
    %v6049 = vpack.c.bf16 %v6043, %v6041
    %v6050 = vpack.c.bf16 %v6046, %v6044
    %v6051 = vpack.c.bf16 %v6047, %v6045
    %v6056 = vunpack.c.l.b16 %v6048
    %v6057 = vunpack.c.l.b16 %v6049
    %v6058 = vunpack.c.h.b16 %v6048
    %v6059 = vunpack.c.h.b16 %v6049
    %v6060 = vunpack.c.l.b16 %v6050
    %v6061 = vunpack.c.l.b16 %v6051
    %v6062 = vunpack.c.h.b16 %v6050
    %v6063 = vunpack.c.h.b16 %v6051
    %v6064 = vpack.c.b16 %v6057, %v6056
    %v6065 = vpack.c.b16 %v6059, %v6058
    %v6066 = vpack.c.b16 %v6061, %v6060
    %v6067 = vpack.c.b16 %v6063, %v6062
    %6072 = vst [vmem:[#allocation2 + $0x140] sm:$0xff] %v6064
    %6073 = vst [vmem:[#allocation2 + $0x148] sm:$0xff] %v6065
    %6074 = vst [vmem:[#allocation2 + $0x150] sm:$0xff] %v6066
    %6075 = vst [vmem:[#allocation2 + $0x158] sm:$0xff] %v6067
    %6076 = vrot.lane.b32.xlu0 %v5276, 1
    %v6077 = vpop.permute.xlu0 %6076
    %6078 = vrot.lane.b32.xlu0 %v5278, 1
    %v6079 = vpop.permute.xlu0 %6078
    %6080 = vrot.lane.b32.xlu0 %v5280, 1
    %v6081 = vpop.permute.xlu0 %6080
    %6082 = vrot.lane.b32.xlu0 %v5282, 1
    %v6083 = vpop.permute.xlu0 %6082
    %6084 = vrot.lane.b32.xlu0 %v5277, 1
    %v6085 = vpop.permute.xlu0 %6084
    %6086 = vrot.lane.b32.xlu0 %v5279, 1
    %v6087 = vpop.permute.xlu0 %6086
    %6088 = vrot.lane.b32.xlu0 %v5281, 1
    %v6089 = vpop.permute.xlu0 %6088
    %6090 = vrot.lane.b32.xlu0 %v5283, 1
    %v6091 = vpop.permute.xlu0 %6090
    %v6092 = vsel %vm1062, %v6077, %v6085
    %v6093 = vsel %vm1062, %v6079, %v6087
    %v6094 = vsel %vm1062, %v6081, %v6089
    %v6095 = vsel %vm1062, %v6083, %v6091
    %v6096 = vsel %vm1062, %v6085, %v6077
    %v6097 = vsel %vm1062, %v6087, %v6079
    %v6098 = vsel %vm1062, %v6089, %v6081
    %v6099 = vsel %vm1062, %v6091, %v6083
    %v6100 = vld [vmem:[%s1071] ss:$8 sm:$0x3]
    %v6102 = vlaneseq
    %v6103 = vshrl.u32 %v6102, 7
    %v6104 = vsub.s32 0, %v6103
    %v6105 = vrot.slane %v6100, %v6104
    %v6106 = vlaneseq
    %v6107 = vshrl.u32 %v6106, 7
    %v6108 = vsub.s32 1, %v6107
    %v6109 = vrot.slane %v6100, %v6108
    %v6112 = vmul.f32 %v6096, %v6105
    %v6113 = vmul.f32 %v6092, %v6109
    %v6114 = vmul.f32 %v6097, %v6105
    %v6115 = vmul.f32 %v6093, %v6109
    %v6116 = vmul.f32 %v6098, %v6105
    %v6117 = vmul.f32 %v6094, %v6109
    %v6118 = vmul.f32 %v6099, %v6105
    %v6119 = vmul.f32 %v6095, %v6109
    %v6120 = vpack.c.bf16 %v6114, %v6112
    %v6121 = vpack.c.bf16 %v6115, %v6113
    %v6122 = vpack.c.bf16 %v6118, %v6116
    %v6123 = vpack.c.bf16 %v6119, %v6117
    %v6128 = vunpack.c.l.b16 %v6120
    %v6129 = vunpack.c.l.b16 %v6121
    %v6130 = vunpack.c.h.b16 %v6120
    %v6131 = vunpack.c.h.b16 %v6121
    %v6132 = vunpack.c.l.b16 %v6122
    %v6133 = vunpack.c.l.b16 %v6123
    %v6134 = vunpack.c.h.b16 %v6122
    %v6135 = vunpack.c.h.b16 %v6123
    %v6136 = vpack.c.b16 %v6129, %v6128
    %v6137 = vpack.c.b16 %v6131, %v6130
    %v6138 = vpack.c.b16 %v6133, %v6132
    %v6139 = vpack.c.b16 %v6135, %v6134
    %6144 = vst [vmem:[#allocation2 + $0x160] sm:$0xff] %v6136
    %6145 = vst [vmem:[#allocation2 + $0x168] sm:$0xff] %v6137
    %6146 = vst [vmem:[#allocation2 + $0x170] sm:$0xff] %v6138
    %6147 = vst [vmem:[#allocation2 + $0x178] sm:$0xff] %v6139
    %v6148 = vpack.c.bf16 %v5278, %v5276
    %v6149 = vpack.c.bf16 %v5279, %v5277
    %v6150 = vpack.c.bf16 %v5282, %v5280
    %v6151 = vpack.c.bf16 %v5283, %v5281
    %v6156 = vunpack.c.l.b16 %v6148
    %v6157 = vunpack.c.l.b16 %v6149
    %v6158 = vunpack.c.h.b16 %v6148
    %v6159 = vunpack.c.h.b16 %v6149
    %v6160 = vunpack.c.l.b16 %v6150
    %v6161 = vunpack.c.l.b16 %v6151
    %v6162 = vunpack.c.h.b16 %v6150
    %v6163 = vunpack.c.h.b16 %v6151
    %v6164 = vpack.c.b16 %v6157, %v6156
    %v6165 = vpack.c.b16 %v6159, %v6158
    %v6166 = vpack.c.b16 %v6161, %v6160
    %v6167 = vpack.c.b16 %v6163, %v6162
    %6172 = vst [vmem:[#allocation2 + $0x180] sm:$0xff] %v6164
    %6173 = vst [vmem:[#allocation2 + $0x188] sm:$0xff] %v6165
    %6174 = vst [vmem:[#allocation2 + $0x190] sm:$0xff] %v6166
    %6175 = vst [vmem:[#allocation2 + $0x198] sm:$0xff] %v6167
    %6176 = vrot.lane.b32.xlu0 %v5276, 127
    %v6177 = vpop.permute.xlu0 %6176
    %6178 = vrot.lane.b32.xlu0 %v5278, 127
    %v6179 = vpop.permute.xlu0 %6178
    %6180 = vrot.lane.b32.xlu0 %v5280, 127
    %v6181 = vpop.permute.xlu0 %6180
    %6182 = vrot.lane.b32.xlu0 %v5282, 127
    %v6183 = vpop.permute.xlu0 %6182
    %6184 = vrot.lane.b32.xlu0 %v5277, 127
    %v6185 = vpop.permute.xlu0 %6184
    %6186 = vrot.lane.b32.xlu0 %v5279, 127
    %v6187 = vpop.permute.xlu0 %6186
    %6188 = vrot.lane.b32.xlu0 %v5281, 127
    %v6189 = vpop.permute.xlu0 %6188
    %6190 = vrot.lane.b32.xlu0 %v5283, 127
    %v6191 = vpop.permute.xlu0 %6190
    %v6192 = vsel %vm1164, %v6177, %v6185
    %v6193 = vsel %vm1164, %v6179, %v6187
    %v6194 = vsel %vm1164, %v6181, %v6189
    %v6195 = vsel %vm1164, %v6183, %v6191
    %v6196 = vsel %vm1164, %v6185, %v6177
    %v6197 = vsel %vm1164, %v6187, %v6179
    %v6198 = vsel %vm1164, %v6189, %v6181
    %v6199 = vsel %vm1164, %v6191, %v6183
    %v6200 = vld [vmem:[%s1173] ss:$8 sm:$0x3]
    %v6202 = vlaneseq
    %v6203 = vshrl.u32 %v6202, 7
    %v6204 = vsub.s32 0, %v6203
    %v6205 = vrot.slane %v6200, %v6204
    %v6206 = vlaneseq
    %v6207 = vshrl.u32 %v6206, 7
    %v6208 = vsub.s32 1, %v6207
    %v6209 = vrot.slane %v6200, %v6208
    %v6212 = vmul.f32 %v6192, %v6205
    %v6213 = vmul.f32 %v6196, %v6209
    %v6214 = vmul.f32 %v6193, %v6205
    %v6215 = vmul.f32 %v6197, %v6209
    %v6216 = vmul.f32 %v6194, %v6205
    %v6217 = vmul.f32 %v6198, %v6209
    %v6218 = vmul.f32 %v6195, %v6205
    %v6219 = vmul.f32 %v6199, %v6209
    %v6220 = vpack.c.bf16 %v6214, %v6212
    %v6221 = vpack.c.bf16 %v6215, %v6213
    %v6222 = vpack.c.bf16 %v6218, %v6216
    %v6223 = vpack.c.bf16 %v6219, %v6217
    %v6228 = vunpack.c.l.b16 %v6220
    %v6229 = vunpack.c.l.b16 %v6221
    %v6230 = vunpack.c.h.b16 %v6220
    %v6231 = vunpack.c.h.b16 %v6221
    %v6232 = vunpack.c.l.b16 %v6222
    %v6233 = vunpack.c.l.b16 %v6223
    %v6234 = vunpack.c.h.b16 %v6222
    %v6235 = vunpack.c.h.b16 %v6223
    %v6236 = vpack.c.b16 %v6229, %v6228
    %v6237 = vpack.c.b16 %v6231, %v6230
    %v6238 = vpack.c.b16 %v6233, %v6232
    %v6239 = vpack.c.b16 %v6235, %v6234
    %6244 = vst [vmem:[#allocation2 + $0x1a0] sm:$0xff] %v6236
    %6245 = vst [vmem:[#allocation2 + $0x1a8] sm:$0xff] %v6237
    %6246 = vst [vmem:[#allocation2 + $0x1b0] sm:$0xff] %v6238
    %6247 = vst [vmem:[#allocation2 + $0x1b8] sm:$0xff] %v6239
    %6248 = vrot.lane.b32.xlu0 %v5276, 126
    %v6249 = vpop.permute.xlu0 %6248
    %6250 = vrot.lane.b32.xlu0 %v5278, 126
    %v6251 = vpop.permute.xlu0 %6250
    %6252 = vrot.lane.b32.xlu0 %v5280, 126
    %v6253 = vpop.permute.xlu0 %6252
    %6254 = vrot.lane.b32.xlu0 %v5282, 126
    %v6255 = vpop.permute.xlu0 %6254
    %6256 = vrot.lane.b32.xlu0 %v5277, 126
    %v6257 = vpop.permute.xlu0 %6256
    %6258 = vrot.lane.b32.xlu0 %v5279, 126
    %v6259 = vpop.permute.xlu0 %6258
    %6260 = vrot.lane.b32.xlu0 %v5281, 126
    %v6261 = vpop.permute.xlu0 %6260
    %6262 = vrot.lane.b32.xlu0 %v5283, 126
    %v6263 = vpop.permute.xlu0 %6262
    %v6264 = vsel %vm1238, %v6249, %v6257
    %v6265 = vsel %vm1238, %v6251, %v6259
    %v6266 = vsel %vm1238, %v6253, %v6261
    %v6267 = vsel %vm1238, %v6255, %v6263
    %v6268 = vsel %vm1238, %v6257, %v6249
    %v6269 = vsel %vm1238, %v6259, %v6251
    %v6270 = vsel %vm1238, %v6261, %v6253
    %v6271 = vsel %vm1238, %v6263, %v6255
    %v6272 = vld [vmem:[%s1247] ss:$8 sm:$0x3]
    %v6274 = vlaneseq
    %v6275 = vshrl.u32 %v6274, 7
    %v6276 = vsub.s32 0, %v6275
    %v6277 = vrot.slane %v6272, %v6276
    %v6278 = vlaneseq
    %v6279 = vshrl.u32 %v6278, 7
    %v6280 = vsub.s32 1, %v6279
    %v6281 = vrot.slane %v6272, %v6280
    %v6284 = vmul.f32 %v6264, %v6277
    %v6285 = vmul.f32 %v6268, %v6281
    %v6286 = vmul.f32 %v6265, %v6277
    %v6287 = vmul.f32 %v6269, %v6281
    %v6288 = vmul.f32 %v6266, %v6277
    %v6289 = vmul.f32 %v6270, %v6281
    %v6290 = vmul.f32 %v6267, %v6277
    %v6291 = vmul.f32 %v6271, %v6281
    %v6292 = vpack.c.bf16 %v6286, %v6284
    %v6293 = vpack.c.bf16 %v6287, %v6285
    %v6294 = vpack.c.bf16 %v6290, %v6288
    %v6295 = vpack.c.bf16 %v6291, %v6289
    %v6300 = vunpack.c.l.b16 %v6292
    %v6301 = vunpack.c.l.b16 %v6293
    %v6302 = vunpack.c.h.b16 %v6292
    %v6303 = vunpack.c.h.b16 %v6293
    %v6304 = vunpack.c.l.b16 %v6294
    %v6305 = vunpack.c.l.b16 %v6295
    %v6306 = vunpack.c.h.b16 %v6294
    %v6307 = vunpack.c.h.b16 %v6295
    %v6308 = vpack.c.b16 %v6301, %v6300
    %v6309 = vpack.c.b16 %v6303, %v6302
    %v6310 = vpack.c.b16 %v6305, %v6304
    %v6311 = vpack.c.b16 %v6307, %v6306
    %6316 = vst [vmem:[#allocation2 + $0x1c0] sm:$0xff] %v6308
    %6317 = vst [vmem:[#allocation2 + $0x1c8] sm:$0xff] %v6309
    %6318 = vst [vmem:[#allocation2 + $0x1d0] sm:$0xff] %v6310
    %6319 = vst [vmem:[#allocation2 + $0x1d8] sm:$0xff] %v6311
    %6320 = vrot.lane.b32.xlu0 %v5276, 114
    %v6321 = vpop.permute.xlu0 %6320
    %6322 = vrot.lane.b32.xlu0 %v5278, 114
    %v6323 = vpop.permute.xlu0 %6322
    %6324 = vrot.lane.b32.xlu0 %v5280, 114
    %v6325 = vpop.permute.xlu0 %6324
    %6326 = vrot.lane.b32.xlu0 %v5282, 114
    %v6327 = vpop.permute.xlu0 %6326
    %6328 = vrot.lane.b32.xlu0 %v5277, 114
    %v6329 = vpop.permute.xlu0 %6328
    %6330 = vrot.lane.b32.xlu0 %v5279, 114
    %v6331 = vpop.permute.xlu0 %6330
    %6332 = vrot.lane.b32.xlu0 %v5281, 114
    %v6333 = vpop.permute.xlu0 %6332
    %6334 = vrot.lane.b32.xlu0 %v5283, 114
    %v6335 = vpop.permute.xlu0 %6334
    %v6336 = vsel %vm1312, %v6321, %v6329
    %v6337 = vsel %vm1312, %v6323, %v6331
    %v6338 = vsel %vm1312, %v6325, %v6333
    %v6339 = vsel %vm1312, %v6327, %v6335
    %v6340 = vsel %vm1312, %v6329, %v6321
    %v6341 = vsel %vm1312, %v6331, %v6323
    %v6342 = vsel %vm1312, %v6333, %v6325
    %v6343 = vsel %vm1312, %v6335, %v6327
    %v6344 = vld [vmem:[%s1321] ss:$8 sm:$0x3]
    %v6346 = vlaneseq
    %v6347 = vshrl.u32 %v6346, 7
    %v6348 = vsub.s32 0, %v6347
    %v6349 = vrot.slane %v6344, %v6348
    %v6350 = vlaneseq
    %v6351 = vshrl.u32 %v6350, 7
    %v6352 = vsub.s32 1, %v6351
    %v6353 = vrot.slane %v6344, %v6352
    %v6356 = vmul.f32 %v6336, %v6349
    %v6357 = vmul.f32 %v6340, %v6353
    %v6358 = vmul.f32 %v6337, %v6349
    %v6359 = vmul.f32 %v6341, %v6353
    %v6360 = vmul.f32 %v6338, %v6349
    %v6361 = vmul.f32 %v6342, %v6353
    %v6362 = vmul.f32 %v6339, %v6349
    %v6363 = vmul.f32 %v6343, %v6353
    %v6364 = vpack.c.bf16 %v6358, %v6356
    %v6365 = vpack.c.bf16 %v6359, %v6357
    %v6366 = vpack.c.bf16 %v6362, %v6360
    %v6367 = vpack.c.bf16 %v6363, %v6361
    %v6372 = vunpack.c.l.b16 %v6364
    %v6373 = vunpack.c.l.b16 %v6365
    %v6374 = vunpack.c.h.b16 %v6364
    %v6375 = vunpack.c.h.b16 %v6365
    %v6376 = vunpack.c.l.b16 %v6366
    %v6377 = vunpack.c.l.b16 %v6367
    %v6378 = vunpack.c.h.b16 %v6366
    %v6379 = vunpack.c.h.b16 %v6367
    %v6380 = vpack.c.b16 %v6373, %v6372
    %v6381 = vpack.c.b16 %v6375, %v6374
    %v6382 = vpack.c.b16 %v6377, %v6376
    %v6383 = vpack.c.b16 %v6379, %v6378
    %6388 = vst [vmem:[#allocation2 + $0x1e0] sm:$0xff] %v6380
    %6389 = vst [vmem:[#allocation2 + $0x1e8] sm:$0xff] %v6381
    %6390 = vst [vmem:[#allocation2 + $0x1f0] sm:$0xff] %v6382
    %6391 = vst [vmem:[#allocation2 + $0x1f8] sm:$0xff] %v6383
    %6392 = vrot.lane.b32.xlu0 %v5276, 113
    %v6393 = vpop.permute.xlu0 %6392
    %6394 = vrot.lane.b32.xlu0 %v5278, 113
    %v6395 = vpop.permute.xlu0 %6394
    %6396 = vrot.lane.b32.xlu0 %v5280, 113
    %v6397 = vpop.permute.xlu0 %6396
    %6398 = vrot.lane.b32.xlu0 %v5282, 113
    %v6399 = vpop.permute.xlu0 %6398
    %6400 = vrot.lane.b32.xlu0 %v5277, 113
    %v6401 = vpop.permute.xlu0 %6400
    %6402 = vrot.lane.b32.xlu0 %v5279, 113
    %v6403 = vpop.permute.xlu0 %6402
    %6404 = vrot.lane.b32.xlu0 %v5281, 113
    %v6405 = vpop.permute.xlu0 %6404
    %6406 = vrot.lane.b32.xlu0 %v5283, 113
    %v6407 = vpop.permute.xlu0 %6406
    %v6408 = vsel %vm1386, %v6393, %v6401
    %v6409 = vsel %vm1386, %v6395, %v6403
    %v6410 = vsel %vm1386, %v6397, %v6405
    %v6411 = vsel %vm1386, %v6399, %v6407
    %v6412 = vsel %vm1386, %v6401, %v6393
    %v6413 = vsel %vm1386, %v6403, %v6395
    %v6414 = vsel %vm1386, %v6405, %v6397
    %v6415 = vsel %vm1386, %v6407, %v6399
    %v6416 = vld [vmem:[%s1395] ss:$8 sm:$0x3]
    %v6418 = vlaneseq
    %v6419 = vshrl.u32 %v6418, 7
    %v6420 = vsub.s32 0, %v6419
    %v6421 = vrot.slane %v6416, %v6420
    %v6422 = vlaneseq
    %v6423 = vshrl.u32 %v6422, 7
    %v6424 = vsub.s32 1, %v6423
    %v6425 = vrot.slane %v6416, %v6424
    %v6428 = vmul.f32 %v6408, %v6421
    %v6429 = vmul.f32 %v6412, %v6425
    %v6430 = vmul.f32 %v6409, %v6421
    %v6431 = vmul.f32 %v6413, %v6425
    %v6432 = vmul.f32 %v6410, %v6421
    %v6433 = vmul.f32 %v6414, %v6425
    %v6434 = vmul.f32 %v6411, %v6421
    %v6435 = vmul.f32 %v6415, %v6425
    %v6436 = vpack.c.bf16 %v6430, %v6428
    %v6437 = vpack.c.bf16 %v6431, %v6429
    %v6438 = vpack.c.bf16 %v6434, %v6432
    %v6439 = vpack.c.bf16 %v6435, %v6433
    %v6444 = vunpack.c.l.b16 %v6436
    %v6445 = vunpack.c.l.b16 %v6437
    %v6446 = vunpack.c.h.b16 %v6436
    %v6447 = vunpack.c.h.b16 %v6437
    %v6448 = vunpack.c.l.b16 %v6438
    %v6449 = vunpack.c.l.b16 %v6439
    %v6450 = vunpack.c.h.b16 %v6438
    %v6451 = vunpack.c.h.b16 %v6439
    %v6452 = vpack.c.b16 %v6445, %v6444
    %v6453 = vpack.c.b16 %v6447, %v6446
    %v6454 = vpack.c.b16 %v6449, %v6448
    %v6455 = vpack.c.b16 %v6451, %v6450
    %6460 = vst [vmem:[#allocation2 + $0x200] sm:$0xff] %v6452
    %6461 = vst [vmem:[#allocation2 + $0x208] sm:$0xff] %v6453
    %6462 = vst [vmem:[#allocation2 + $0x210] sm:$0xff] %v6454
    %6463 = vst [vmem:[#allocation2 + $0x218] sm:$0xff] %v6455
    %6464 = vrot.lane.b32.xlu0 %v5276, 112
    %v6465 = vpop.permute.xlu0 %6464
    %6466 = vrot.lane.b32.xlu0 %v5278, 112
    %v6467 = vpop.permute.xlu0 %6466
    %6468 = vrot.lane.b32.xlu0 %v5280, 112
    %v6469 = vpop.permute.xlu0 %6468
    %6470 = vrot.lane.b32.xlu0 %v5282, 112
    %v6471 = vpop.permute.xlu0 %6470
    %6472 = vrot.lane.b32.xlu0 %v5277, 112
    %v6473 = vpop.permute.xlu0 %6472
    %6474 = vrot.lane.b32.xlu0 %v5279, 112
    %v6475 = vpop.permute.xlu0 %6474
    %6476 = vrot.lane.b32.xlu0 %v5281, 112
    %v6477 = vpop.permute.xlu0 %6476
    %6478 = vrot.lane.b32.xlu0 %v5283, 112
    %v6479 = vpop.permute.xlu0 %6478
    %v6480 = vsel %vm1460, %v6465, %v6473
    %v6481 = vsel %vm1460, %v6467, %v6475
    %v6482 = vsel %vm1460, %v6469, %v6477
    %v6483 = vsel %vm1460, %v6471, %v6479
    %v6484 = vsel %vm1460, %v6473, %v6465
    %v6485 = vsel %vm1460, %v6475, %v6467
    %v6486 = vsel %vm1460, %v6477, %v6469
    %v6487 = vsel %vm1460, %v6479, %v6471
    %v6488 = vld [vmem:[%s1469] ss:$8 sm:$0x3]
    %v6490 = vlaneseq
    %v6491 = vshrl.u32 %v6490, 7
    %v6492 = vsub.s32 0, %v6491
    %v6493 = vrot.slane %v6488, %v6492
    %v6494 = vlaneseq
    %v6495 = vshrl.u32 %v6494, 7
    %v6496 = vsub.s32 1, %v6495
    %v6497 = vrot.slane %v6488, %v6496
    %v6500 = vmul.f32 %v6480, %v6493
    %v6501 = vmul.f32 %v6484, %v6497
    %v6502 = vmul.f32 %v6481, %v6493
    %v6503 = vmul.f32 %v6485, %v6497
    %v6504 = vmul.f32 %v6482, %v6493
    %v6505 = vmul.f32 %v6486, %v6497
    %v6506 = vmul.f32 %v6483, %v6493
    %v6507 = vmul.f32 %v6487, %v6497
    %v6508 = vpack.c.bf16 %v6502, %v6500
    %v6509 = vpack.c.bf16 %v6503, %v6501
    %v6510 = vpack.c.bf16 %v6506, %v6504
    %v6511 = vpack.c.bf16 %v6507, %v6505
    %v6516 = vunpack.c.l.b16 %v6508
    %v6517 = vunpack.c.l.b16 %v6509
    %v6518 = vunpack.c.h.b16 %v6508
    %v6519 = vunpack.c.h.b16 %v6509
    %v6520 = vunpack.c.l.b16 %v6510
    %v6521 = vunpack.c.l.b16 %v6511
    %v6522 = vunpack.c.h.b16 %v6510
    %v6523 = vunpack.c.h.b16 %v6511
    %v6524 = vpack.c.b16 %v6517, %v6516
    %v6525 = vpack.c.b16 %v6519, %v6518
    %v6526 = vpack.c.b16 %v6521, %v6520
    %v6527 = vpack.c.b16 %v6523, %v6522
    %6532 = vst [vmem:[#allocation2 + $0x220] sm:$0xff] %v6524
    %6533 = vst [vmem:[#allocation2 + $0x228] sm:$0xff] %v6525
    %6534 = vst [vmem:[#allocation2 + $0x230] sm:$0xff] %v6526
    %6535 = vst [vmem:[#allocation2 + $0x238] sm:$0xff] %v6527
    %6536 = vrot.lane.b32.xlu0 %v5276, 111
    %v6537 = vpop.permute.xlu0 %6536
    %6538 = vrot.lane.b32.xlu0 %v5278, 111
    %v6539 = vpop.permute.xlu0 %6538
    %6540 = vrot.lane.b32.xlu0 %v5280, 111
    %v6541 = vpop.permute.xlu0 %6540
    %6542 = vrot.lane.b32.xlu0 %v5282, 111
    %v6543 = vpop.permute.xlu0 %6542
    %6544 = vrot.lane.b32.xlu0 %v5277, 111
    %v6545 = vpop.permute.xlu0 %6544
    %6546 = vrot.lane.b32.xlu0 %v5279, 111
    %v6547 = vpop.permute.xlu0 %6546
    %6548 = vrot.lane.b32.xlu0 %v5281, 111
    %v6549 = vpop.permute.xlu0 %6548
    %6550 = vrot.lane.b32.xlu0 %v5283, 111
    %v6551 = vpop.permute.xlu0 %6550
    %v6552 = vsel %vm1534, %v6537, %v6545
    %v6553 = vsel %vm1534, %v6539, %v6547
    %v6554 = vsel %vm1534, %v6541, %v6549
    %v6555 = vsel %vm1534, %v6543, %v6551
    %v6556 = vsel %vm1534, %v6545, %v6537
    %v6557 = vsel %vm1534, %v6547, %v6539
    %v6558 = vsel %vm1534, %v6549, %v6541
    %v6559 = vsel %vm1534, %v6551, %v6543
    %v6560 = vld [vmem:[%s1543] ss:$8 sm:$0x3]
    %v6562 = vlaneseq
    %v6563 = vshrl.u32 %v6562, 7
    %v6564 = vsub.s32 0, %v6563
    %v6565 = vrot.slane %v6560, %v6564
    %v6566 = vlaneseq
    %v6567 = vshrl.u32 %v6566, 7
    %v6568 = vsub.s32 1, %v6567
    %v6569 = vrot.slane %v6560, %v6568
    %v6572 = vmul.f32 %v6552, %v6565
    %v6573 = vmul.f32 %v6556, %v6569
    %v6574 = vmul.f32 %v6553, %v6565
    %v6575 = vmul.f32 %v6557, %v6569
    %v6576 = vmul.f32 %v6554, %v6565
    %v6577 = vmul.f32 %v6558, %v6569
    %v6578 = vmul.f32 %v6555, %v6565
    %v6579 = vmul.f32 %v6559, %v6569
    %v6580 = vpack.c.bf16 %v6574, %v6572
    %v6581 = vpack.c.bf16 %v6575, %v6573
    %v6582 = vpack.c.bf16 %v6578, %v6576
    %v6583 = vpack.c.bf16 %v6579, %v6577
    %v6588 = vunpack.c.l.b16 %v6580
    %v6589 = vunpack.c.l.b16 %v6581
    %v6590 = vunpack.c.h.b16 %v6580
    %v6591 = vunpack.c.h.b16 %v6581
    %v6592 = vunpack.c.l.b16 %v6582
    %v6593 = vunpack.c.l.b16 %v6583
    %v6594 = vunpack.c.h.b16 %v6582
    %v6595 = vunpack.c.h.b16 %v6583
    %v6596 = vpack.c.b16 %v6589, %v6588
    %v6597 = vpack.c.b16 %v6591, %v6590
    %v6598 = vpack.c.b16 %v6593, %v6592
    %v6599 = vpack.c.b16 %v6595, %v6594
    %6604 = vst [vmem:[#allocation2 + $0x240] sm:$0xff] %v6596
    %6605 = vst [vmem:[#allocation2 + $0x248] sm:$0xff] %v6597
    %6606 = vst [vmem:[#allocation2 + $0x250] sm:$0xff] %v6598
    %6607 = vst [vmem:[#allocation2 + $0x258] sm:$0xff] %v6599
    %6608 = vrot.lane.b32.xlu0 %v5276, 110
    %v6609 = vpop.permute.xlu0 %6608
    %6610 = vrot.lane.b32.xlu0 %v5278, 110
    %v6611 = vpop.permute.xlu0 %6610
    %6612 = vrot.lane.b32.xlu0 %v5280, 110
    %v6613 = vpop.permute.xlu0 %6612
    %6614 = vrot.lane.b32.xlu0 %v5282, 110
    %v6615 = vpop.permute.xlu0 %6614
    %6616 = vrot.lane.b32.xlu0 %v5277, 110
    %v6617 = vpop.permute.xlu0 %6616
    %6618 = vrot.lane.b32.xlu0 %v5279, 110
    %v6619 = vpop.permute.xlu0 %6618
    %6620 = vrot.lane.b32.xlu0 %v5281, 110
    %v6621 = vpop.permute.xlu0 %6620
    %6622 = vrot.lane.b32.xlu0 %v5283, 110
    %v6623 = vpop.permute.xlu0 %6622
    %v6624 = vsel %vm1608, %v6609, %v6617
    %v6625 = vsel %vm1608, %v6611, %v6619
    %v6626 = vsel %vm1608, %v6613, %v6621
    %v6627 = vsel %vm1608, %v6615, %v6623
    %v6628 = vsel %vm1608, %v6617, %v6609
    %v6629 = vsel %vm1608, %v6619, %v6611
    %v6630 = vsel %vm1608, %v6621, %v6613
    %v6631 = vsel %vm1608, %v6623, %v6615
    %v6632 = vld [vmem:[%s1617] ss:$8 sm:$0x3]
    %v6634 = vlaneseq
    %v6635 = vshrl.u32 %v6634, 7
    %v6636 = vsub.s32 0, %v6635
    %v6637 = vrot.slane %v6632, %v6636
    %v6638 = vlaneseq
    %v6639 = vshrl.u32 %v6638, 7
    %v6640 = vsub.s32 1, %v6639
    %v6641 = vrot.slane %v6632, %v6640
    %v6644 = vmul.f32 %v6624, %v6637
    %v6645 = vmul.f32 %v6628, %v6641
    %v6646 = vmul.f32 %v6625, %v6637
    %v6647 = vmul.f32 %v6629, %v6641
    %v6648 = vmul.f32 %v6626, %v6637
    %v6649 = vmul.f32 %v6630, %v6641
    %v6650 = vmul.f32 %v6627, %v6637
    %v6651 = vmul.f32 %v6631, %v6641
    %v6652 = vpack.c.bf16 %v6646, %v6644
    %v6653 = vpack.c.bf16 %v6647, %v6645
    %v6654 = vpack.c.bf16 %v6650, %v6648
    %v6655 = vpack.c.bf16 %v6651, %v6649
    %v6660 = vunpack.c.l.b16 %v6652
    %v6661 = vunpack.c.l.b16 %v6653
    %v6662 = vunpack.c.h.b16 %v6652
    %v6663 = vunpack.c.h.b16 %v6653
    %v6664 = vunpack.c.l.b16 %v6654
    %v6665 = vunpack.c.l.b16 %v6655
    %v6666 = vunpack.c.h.b16 %v6654
    %v6667 = vunpack.c.h.b16 %v6655
    %v6668 = vpack.c.b16 %v6661, %v6660
    %v6669 = vpack.c.b16 %v6663, %v6662
    %v6670 = vpack.c.b16 %v6665, %v6664
    %v6671 = vpack.c.b16 %v6667, %v6666
    %6676 = vst [vmem:[#allocation2 + $0x260] sm:$0xff] %v6668
    %6677 = vst [vmem:[#allocation2 + $0x268] sm:$0xff] %v6669
    %6678 = vst [vmem:[#allocation2 + $0x270] sm:$0xff] %v6670
    %6679 = vst [vmem:[#allocation2 + $0x278] sm:$0xff] %v6671
    %6680 = vrot.lane.b32.xlu0 %v5276, 98
    %v6681 = vpop.permute.xlu0 %6680
    %6682 = vrot.lane.b32.xlu0 %v5278, 98
    %v6683 = vpop.permute.xlu0 %6682
    %6684 = vrot.lane.b32.xlu0 %v5280, 98
    %v6685 = vpop.permute.xlu0 %6684
    %6686 = vrot.lane.b32.xlu0 %v5282, 98
    %v6687 = vpop.permute.xlu0 %6686
    %6688 = vrot.lane.b32.xlu0 %v5277, 98
    %v6689 = vpop.permute.xlu0 %6688
    %6690 = vrot.lane.b32.xlu0 %v5279, 98
    %v6691 = vpop.permute.xlu0 %6690
    %6692 = vrot.lane.b32.xlu0 %v5281, 98
    %v6693 = vpop.permute.xlu0 %6692
    %6694 = vrot.lane.b32.xlu0 %v5283, 98
    %v6695 = vpop.permute.xlu0 %6694
    %v6696 = vsel %vm1682, %v6681, %v6689
    %v6697 = vsel %vm1682, %v6683, %v6691
    %v6698 = vsel %vm1682, %v6685, %v6693
    %v6699 = vsel %vm1682, %v6687, %v6695
    %v6700 = vsel %vm1682, %v6689, %v6681
    %v6701 = vsel %vm1682, %v6691, %v6683
    %v6702 = vsel %vm1682, %v6693, %v6685
    %v6703 = vsel %vm1682, %v6695, %v6687
    %v6704 = vld [vmem:[%s1691] ss:$8 sm:$0x3]
    %v6706 = vlaneseq
    %v6707 = vshrl.u32 %v6706, 7
    %v6708 = vsub.s32 0, %v6707
    %v6709 = vrot.slane %v6704, %v6708
    %v6710 = vlaneseq
    %v6711 = vshrl.u32 %v6710, 7
    %v6712 = vsub.s32 1, %v6711
    %v6713 = vrot.slane %v6704, %v6712
    %v6716 = vmul.f32 %v6696, %v6709
    %v6717 = vmul.f32 %v6700, %v6713
    %v6718 = vmul.f32 %v6697, %v6709
    %v6719 = vmul.f32 %v6701, %v6713
    %v6720 = vmul.f32 %v6698, %v6709
    %v6721 = vmul.f32 %v6702, %v6713
    %v6722 = vmul.f32 %v6699, %v6709
    %v6723 = vmul.f32 %v6703, %v6713
    %v6724 = vpack.c.bf16 %v6718, %v6716
    %v6725 = vpack.c.bf16 %v6719, %v6717
    %v6726 = vpack.c.bf16 %v6722, %v6720
    %v6727 = vpack.c.bf16 %v6723, %v6721
    %v6732 = vunpack.c.l.b16 %v6724
    %v6733 = vunpack.c.l.b16 %v6725
    %v6734 = vunpack.c.h.b16 %v6724
    %v6735 = vunpack.c.h.b16 %v6725
    %v6736 = vunpack.c.l.b16 %v6726
    %v6737 = vunpack.c.l.b16 %v6727
    %v6738 = vunpack.c.h.b16 %v6726
    %v6739 = vunpack.c.h.b16 %v6727
    %v6740 = vpack.c.b16 %v6733, %v6732
    %v6741 = vpack.c.b16 %v6735, %v6734
    %v6742 = vpack.c.b16 %v6737, %v6736
    %v6743 = vpack.c.b16 %v6739, %v6738
    %6748 = vst [vmem:[#allocation2 + $0x280] sm:$0xff] %v6740
    %6749 = vst [vmem:[#allocation2 + $0x288] sm:$0xff] %v6741
    %6750 = vst [vmem:[#allocation2 + $0x290] sm:$0xff] %v6742
    %6751 = vst [vmem:[#allocation2 + $0x298] sm:$0xff] %v6743
    %6752 = vrot.lane.b32.xlu0 %v5276, 97
    %v6753 = vpop.permute.xlu0 %6752
    %6754 = vrot.lane.b32.xlu0 %v5278, 97
    %v6755 = vpop.permute.xlu0 %6754
    %6756 = vrot.lane.b32.xlu0 %v5280, 97
    %v6757 = vpop.permute.xlu0 %6756
    %6758 = vrot.lane.b32.xlu0 %v5282, 97
    %v6759 = vpop.permute.xlu0 %6758
    %6760 = vrot.lane.b32.xlu0 %v5277, 97
    %v6761 = vpop.permute.xlu0 %6760
    %6762 = vrot.lane.b32.xlu0 %v5279, 97
    %v6763 = vpop.permute.xlu0 %6762
    %6764 = vrot.lane.b32.xlu0 %v5281, 97
    %v6765 = vpop.permute.xlu0 %6764
    %6766 = vrot.lane.b32.xlu0 %v5283, 97
    %v6767 = vpop.permute.xlu0 %6766
    %v6768 = vsel %vm1756, %v6753, %v6761
    %v6769 = vsel %vm1756, %v6755, %v6763
    %v6770 = vsel %vm1756, %v6757, %v6765
    %v6771 = vsel %vm1756, %v6759, %v6767
    %v6772 = vsel %vm1756, %v6761, %v6753
    %v6773 = vsel %vm1756, %v6763, %v6755
    %v6774 = vsel %vm1756, %v6765, %v6757
    %v6775 = vsel %vm1756, %v6767, %v6759
    %v6776 = vld [vmem:[%s1765] ss:$8 sm:$0x3]
    %v6778 = vlaneseq
    %v6779 = vshrl.u32 %v6778, 7
    %v6780 = vsub.s32 0, %v6779
    %v6781 = vrot.slane %v6776, %v6780
    %v6782 = vlaneseq
    %v6783 = vshrl.u32 %v6782, 7
    %v6784 = vsub.s32 1, %v6783
    %v6785 = vrot.slane %v6776, %v6784
    %v6788 = vmul.f32 %v6768, %v6781
    %v6789 = vmul.f32 %v6772, %v6785
    %v6790 = vmul.f32 %v6769, %v6781
    %v6791 = vmul.f32 %v6773, %v6785
    %v6792 = vmul.f32 %v6770, %v6781
    %v6793 = vmul.f32 %v6774, %v6785
    %v6794 = vmul.f32 %v6771, %v6781
    %v6795 = vmul.f32 %v6775, %v6785
    %v6796 = vpack.c.bf16 %v6790, %v6788
    %v6797 = vpack.c.bf16 %v6791, %v6789
    %v6798 = vpack.c.bf16 %v6794, %v6792
    %v6799 = vpack.c.bf16 %v6795, %v6793
    %v6804 = vunpack.c.l.b16 %v6796
    %v6805 = vunpack.c.l.b16 %v6797
    %v6806 = vunpack.c.h.b16 %v6796
    %v6807 = vunpack.c.h.b16 %v6797
    %v6808 = vunpack.c.l.b16 %v6798
    %v6809 = vunpack.c.l.b16 %v6799
    %v6810 = vunpack.c.h.b16 %v6798
    %v6811 = vunpack.c.h.b16 %v6799
    %v6812 = vpack.c.b16 %v6805, %v6804
    %v6813 = vpack.c.b16 %v6807, %v6806
    %v6814 = vpack.c.b16 %v6809, %v6808
    %v6815 = vpack.c.b16 %v6811, %v6810
    %6820 = vst [vmem:[#allocation2 + $0x2a0] sm:$0xff] %v6812
    %6821 = vst [vmem:[#allocation2 + $0x2a8] sm:$0xff] %v6813
    %6822 = vst [vmem:[#allocation2 + $0x2b0] sm:$0xff] %v6814
    %6823 = vst [vmem:[#allocation2 + $0x2b8] sm:$0xff] %v6815
    %6824 = vrot.lane.b32.xlu0 %v5276, 96
    %v6825 = vpop.permute.xlu0 %6824
    %6826 = vrot.lane.b32.xlu0 %v5278, 96
    %v6827 = vpop.permute.xlu0 %6826
    %6828 = vrot.lane.b32.xlu0 %v5280, 96
    %v6829 = vpop.permute.xlu0 %6828
    %6830 = vrot.lane.b32.xlu0 %v5282, 96
    %v6831 = vpop.permute.xlu0 %6830
    %6832 = vrot.lane.b32.xlu0 %v5277, 96
    %v6833 = vpop.permute.xlu0 %6832
    %6834 = vrot.lane.b32.xlu0 %v5279, 96
    %v6835 = vpop.permute.xlu0 %6834
    %6836 = vrot.lane.b32.xlu0 %v5281, 96
    %v6837 = vpop.permute.xlu0 %6836
    %6838 = vrot.lane.b32.xlu0 %v5283, 96
    %v6839 = vpop.permute.xlu0 %6838
    %v6840 = vsel %vm1830, %v6825, %v6833
    %v6841 = vsel %vm1830, %v6827, %v6835
    %v6842 = vsel %vm1830, %v6829, %v6837
    %v6843 = vsel %vm1830, %v6831, %v6839
    %v6844 = vsel %vm1830, %v6833, %v6825
    %v6845 = vsel %vm1830, %v6835, %v6827
    %v6846 = vsel %vm1830, %v6837, %v6829
    %v6847 = vsel %vm1830, %v6839, %v6831
    %v6848 = vld [vmem:[%s1839] ss:$8 sm:$0x3]
    %v6850 = vlaneseq
    %v6851 = vshrl.u32 %v6850, 7
    %v6852 = vsub.s32 0, %v6851
    %v6853 = vrot.slane %v6848, %v6852
    %v6854 = vlaneseq
    %v6855 = vshrl.u32 %v6854, 7
    %v6856 = vsub.s32 1, %v6855
    %v6857 = vrot.slane %v6848, %v6856
    %v6860 = vmul.f32 %v6840, %v6853
    %v6861 = vmul.f32 %v6844, %v6857
    %v6862 = vmul.f32 %v6841, %v6853
    %v6863 = vmul.f32 %v6845, %v6857
    %v6864 = vmul.f32 %v6842, %v6853
    %v6865 = vmul.f32 %v6846, %v6857
    %v6866 = vmul.f32 %v6843, %v6853
    %v6867 = vmul.f32 %v6847, %v6857
    %v6868 = vpack.c.bf16 %v6862, %v6860
    %v6869 = vpack.c.bf16 %v6863, %v6861
    %v6870 = vpack.c.bf16 %v6866, %v6864
    %v6871 = vpack.c.bf16 %v6867, %v6865
    %v6876 = vunpack.c.l.b16 %v6868
    %v6877 = vunpack.c.l.b16 %v6869
    %v6878 = vunpack.c.h.b16 %v6868
    %v6879 = vunpack.c.h.b16 %v6869
    %v6880 = vunpack.c.l.b16 %v6870
    %v6881 = vunpack.c.l.b16 %v6871
    %v6882 = vunpack.c.h.b16 %v6870
    %v6883 = vunpack.c.h.b16 %v6871
    %v6884 = vpack.c.b16 %v6877, %v6876
    %v6885 = vpack.c.b16 %v6879, %v6878
    %v6886 = vpack.c.b16 %v6881, %v6880
    %v6887 = vpack.c.b16 %v6883, %v6882
    %6892 = vst [vmem:[#allocation2 + $0x2c0] sm:$0xff] %v6884
    %6893 = vst [vmem:[#allocation2 + $0x2c8] sm:$0xff] %v6885
    %6894 = vst [vmem:[#allocation2 + $0x2d0] sm:$0xff] %v6886
    %6895 = vst [vmem:[#allocation2 + $0x2d8] sm:$0xff] %v6887
    %6896 = vrot.lane.b32.xlu0 %v5276, 95
    %v6897 = vpop.permute.xlu0 %6896
    %6898 = vrot.lane.b32.xlu0 %v5278, 95
    %v6899 = vpop.permute.xlu0 %6898
    %6900 = vrot.lane.b32.xlu0 %v5280, 95
    %v6901 = vpop.permute.xlu0 %6900
    %6902 = vrot.lane.b32.xlu0 %v5282, 95
    %v6903 = vpop.permute.xlu0 %6902
    %6904 = vrot.lane.b32.xlu0 %v5277, 95
    %v6905 = vpop.permute.xlu0 %6904
    %6906 = vrot.lane.b32.xlu0 %v5279, 95
    %v6907 = vpop.permute.xlu0 %6906
    %6908 = vrot.lane.b32.xlu0 %v5281, 95
    %v6909 = vpop.permute.xlu0 %6908
    %6910 = vrot.lane.b32.xlu0 %v5283, 95
    %v6911 = vpop.permute.xlu0 %6910
    %v6912 = vsel %vm1904, %v6897, %v6905
    %v6913 = vsel %vm1904, %v6899, %v6907
    %v6914 = vsel %vm1904, %v6901, %v6909
    %v6915 = vsel %vm1904, %v6903, %v6911
    %v6916 = vsel %vm1904, %v6905, %v6897
    %v6917 = vsel %vm1904, %v6907, %v6899
    %v6918 = vsel %vm1904, %v6909, %v6901
    %v6919 = vsel %vm1904, %v6911, %v6903
    %v6920 = vld [vmem:[%s1913] ss:$8 sm:$0x3]
    %v6922 = vlaneseq
    %v6923 = vshrl.u32 %v6922, 7
    %v6924 = vsub.s32 0, %v6923
    %v6925 = vrot.slane %v6920, %v6924
    %v6926 = vlaneseq
    %v6927 = vshrl.u32 %v6926, 7
    %v6928 = vsub.s32 1, %v6927
    %v6929 = vrot.slane %v6920, %v6928
    %v6932 = vmul.f32 %v6912, %v6925
    %v6933 = vmul.f32 %v6916, %v6929
    %v6934 = vmul.f32 %v6913, %v6925
    %v6935 = vmul.f32 %v6917, %v6929
    %v6936 = vmul.f32 %v6914, %v6925
    %v6937 = vmul.f32 %v6918, %v6929
    %v6938 = vmul.f32 %v6915, %v6925
    %v6939 = vmul.f32 %v6919, %v6929
    %v6940 = vpack.c.bf16 %v6934, %v6932
    %v6941 = vpack.c.bf16 %v6935, %v6933
    %v6942 = vpack.c.bf16 %v6938, %v6936
    %v6943 = vpack.c.bf16 %v6939, %v6937
    %v6948 = vunpack.c.l.b16 %v6940
    %v6949 = vunpack.c.l.b16 %v6941
    %v6950 = vunpack.c.h.b16 %v6940
    %v6951 = vunpack.c.h.b16 %v6941
    %v6952 = vunpack.c.l.b16 %v6942
    %v6953 = vunpack.c.l.b16 %v6943
    %v6954 = vunpack.c.h.b16 %v6942
    %v6955 = vunpack.c.h.b16 %v6943
    %v6956 = vpack.c.b16 %v6949, %v6948
    %v6957 = vpack.c.b16 %v6951, %v6950
    %v6958 = vpack.c.b16 %v6953, %v6952
    %v6959 = vpack.c.b16 %v6955, %v6954
    %6964 = vst [vmem:[#allocation2 + $0x2e0] sm:$0xff] %v6956
    %6965 = vst [vmem:[#allocation2 + $0x2e8] sm:$0xff] %v6957
    %6966 = vst [vmem:[#allocation2 + $0x2f0] sm:$0xff] %v6958
    %6967 = vst [vmem:[#allocation2 + $0x2f8] sm:$0xff] %v6959
    %6968 = vrot.lane.b32.xlu0 %v5276, 94
    %v6969 = vpop.permute.xlu0 %6968
    %6970 = vrot.lane.b32.xlu0 %v5278, 94
    %v6971 = vpop.permute.xlu0 %6970
    %6972 = vrot.lane.b32.xlu0 %v5280, 94
    %v6973 = vpop.permute.xlu0 %6972
    %6974 = vrot.lane.b32.xlu0 %v5282, 94
    %v6975 = vpop.permute.xlu0 %6974
    %6976 = vrot.lane.b32.xlu0 %v5277, 94
    %v6977 = vpop.permute.xlu0 %6976
    %6978 = vrot.lane.b32.xlu0 %v5279, 94
    %v6979 = vpop.permute.xlu0 %6978
    %6980 = vrot.lane.b32.xlu0 %v5281, 94
    %v6981 = vpop.permute.xlu0 %6980
    %6982 = vrot.lane.b32.xlu0 %v5283, 94
    %v6983 = vpop.permute.xlu0 %6982
    %v6984 = vsel %vm1978, %v6969, %v6977
    %v6985 = vsel %vm1978, %v6971, %v6979
    %v6986 = vsel %vm1978, %v6973, %v6981
    %v6987 = vsel %vm1978, %v6975, %v6983
    %v6988 = vsel %vm1978, %v6977, %v6969
    %v6989 = vsel %vm1978, %v6979, %v6971
    %v6990 = vsel %vm1978, %v6981, %v6973
    %v6991 = vsel %vm1978, %v6983, %v6975
    %v6992 = vld [vmem:[%s1987] ss:$8 sm:$0x3]
    %v6994 = vlaneseq
    %v6995 = vshrl.u32 %v6994, 7
    %v6996 = vsub.s32 0, %v6995
    %v6997 = vrot.slane %v6992, %v6996
    %v6998 = vlaneseq
    %v6999 = vshrl.u32 %v6998, 7
    %v7000 = vsub.s32 1, %v6999
    %v7001 = vrot.slane %v6992, %v7000
    %v7004 = vmul.f32 %v6984, %v6997
    %v7005 = vmul.f32 %v6988, %v7001
    %v7006 = vmul.f32 %v6985, %v6997
    %v7007 = vmul.f32 %v6989, %v7001
    %v7008 = vmul.f32 %v6986, %v6997
    %v7009 = vmul.f32 %v6990, %v7001
    %v7010 = vmul.f32 %v6987, %v6997
    %v7011 = vmul.f32 %v6991, %v7001
    %v7012 = vpack.c.bf16 %v7006, %v7004
    %v7013 = vpack.c.bf16 %v7007, %v7005
    %v7014 = vpack.c.bf16 %v7010, %v7008
    %v7015 = vpack.c.bf16 %v7011, %v7009
    %v7020 = vunpack.c.l.b16 %v7012
    %v7021 = vunpack.c.l.b16 %v7013
    %v7022 = vunpack.c.h.b16 %v7012
    %v7023 = vunpack.c.h.b16 %v7013
    %v7024 = vunpack.c.l.b16 %v7014
    %v7025 = vunpack.c.l.b16 %v7015
    %v7026 = vunpack.c.h.b16 %v7014
    %v7027 = vunpack.c.h.b16 %v7015
    %v7028 = vpack.c.b16 %v7021, %v7020
    %v7029 = vpack.c.b16 %v7023, %v7022
    %v7030 = vpack.c.b16 %v7025, %v7024
    %v7031 = vpack.c.b16 %v7027, %v7026
    %7036 = vst [vmem:[#allocation2 + $0x300] sm:$0xff] %v7028
    %7037 = vst [vmem:[#allocation2 + $0x308] sm:$0xff] %v7029
    %7038 = vst [vmem:[#allocation2 + $0x310] sm:$0xff] %v7030
    %7039 = vst [vmem:[#allocation2 + $0x318] sm:$0xff] %v7031
    %v7040 = vld [vmem:[#allocation2] sm:$0xff]
    %v7041 = vld [vmem:[#allocation2 + $0x8] sm:$0xff]
    %v7042 = vld [vmem:[#allocation2 + $0x10] sm:$0xff]
    %v7043 = vld [vmem:[#allocation2 + $0x18] sm:$0xff]
    %v7044 = vld [vmem:[#allocation2 + $0x20] sm:$0xff]
    %v7045 = vld [vmem:[#allocation2 + $0x28] sm:$0xff]
    %v7046 = vld [vmem:[#allocation2 + $0x30] sm:$0xff]
    %v7047 = vld [vmem:[#allocation2 + $0x38] sm:$0xff]
    %v7048 = vld [vmem:[#allocation2 + $0x40] sm:$0xff]
    %v7049 = vld [vmem:[#allocation2 + $0x48] sm:$0xff]
    %v7050 = vld [vmem:[#allocation2 + $0x50] sm:$0xff]
    %v7051 = vld [vmem:[#allocation2 + $0x58] sm:$0xff]
    %v7052 = vld [vmem:[#allocation2 + $0x60] sm:$0xff]
    %v7053 = vld [vmem:[#allocation2 + $0x68] sm:$0xff]
    %v7054 = vld [vmem:[#allocation2 + $0x70] sm:$0xff]
    %v7055 = vld [vmem:[#allocation2 + $0x78] sm:$0xff]
    %v7056 = vld [vmem:[#allocation2 + $0x80] sm:$0xff]
    %v7057 = vld [vmem:[#allocation2 + $0x88] sm:$0xff]
    %v7058 = vld [vmem:[#allocation2 + $0x90] sm:$0xff]
    %v7059 = vld [vmem:[#allocation2 + $0x98] sm:$0xff]
    %v7060 = vld [vmem:[#allocation2 + $0xa0] sm:$0xff]
    %v7061 = vld [vmem:[#allocation2 + $0xa8] sm:$0xff]
    %v7062 = vld [vmem:[#allocation2 + $0xb0] sm:$0xff]
    %v7063 = vld [vmem:[#allocation2 + $0xb8] sm:$0xff]
    %v7064 = vld [vmem:[#allocation2 + $0xc0] sm:$0xff]
    %v7065 = vld [vmem:[#allocation2 + $0xc8] sm:$0xff]
    %v7066 = vld [vmem:[#allocation2 + $0xd0] sm:$0xff]
    %v7067 = vld [vmem:[#allocation2 + $0xd8] sm:$0xff]
    %v7068 = vld [vmem:[#allocation2 + $0xe0] sm:$0xff]
    %v7069 = vld [vmem:[#allocation2 + $0xe8] sm:$0xff]
    %v7070 = vld [vmem:[#allocation2 + $0xf0] sm:$0xff]
    %v7071 = vld [vmem:[#allocation2 + $0xf8] sm:$0xff]
    %v7072 = vld [vmem:[#allocation2 + $0x100] sm:$0xff]
    %v7073 = vld [vmem:[#allocation2 + $0x108] sm:$0xff]
    %v7074 = vld [vmem:[#allocation2 + $0x110] sm:$0xff]
    %v7075 = vld [vmem:[#allocation2 + $0x118] sm:$0xff]
    %v7076 = vld [vmem:[#allocation2 + $0x120] sm:$0xff]
    %v7077 = vld [vmem:[#allocation2 + $0x128] sm:$0xff]
    %v7078 = vld [vmem:[#allocation2 + $0x130] sm:$0xff]
    %v7079 = vld [vmem:[#allocation2 + $0x138] sm:$0xff]
    %v7080 = vld [vmem:[#allocation2 + $0x140] sm:$0xff]
    %v7081 = vld [vmem:[#allocation2 + $0x148] sm:$0xff]
    %v7082 = vld [vmem:[#allocation2 + $0x150] sm:$0xff]
    %v7083 = vld [vmem:[#allocation2 + $0x158] sm:$0xff]
    %v7084 = vld [vmem:[#allocation2 + $0x160] sm:$0xff]
    %v7085 = vld [vmem:[#allocation2 + $0x168] sm:$0xff]
    %v7086 = vld [vmem:[#allocation2 + $0x170] sm:$0xff]
    %v7087 = vld [vmem:[#allocation2 + $0x178] sm:$0xff]
    %v7088 = vld [vmem:[#allocation2 + $0x180] sm:$0xff]
    %v7089 = vld [vmem:[#allocation2 + $0x188] sm:$0xff]
    %v7090 = vld [vmem:[#allocation2 + $0x190] sm:$0xff]
    %v7091 = vld [vmem:[#allocation2 + $0x198] sm:$0xff]
    %v7092 = vld [vmem:[#allocation2 + $0x1a0] sm:$0xff]
    %v7093 = vld [vmem:[#allocation2 + $0x1a8] sm:$0xff]
    %v7094 = vld [vmem:[#allocation2 + $0x1b0] sm:$0xff]
    %v7095 = vld [vmem:[#allocation2 + $0x1b8] sm:$0xff]
    %v7096 = vld [vmem:[#allocation2 + $0x1c0] sm:$0xff]
    %v7097 = vld [vmem:[#allocation2 + $0x1c8] sm:$0xff]
    %v7098 = vld [vmem:[#allocation2 + $0x1d0] sm:$0xff]
    %v7099 = vld [vmem:[#allocation2 + $0x1d8] sm:$0xff]
    %v7100 = vld [vmem:[#allocation2 + $0x1e0] sm:$0xff]
    %v7101 = vld [vmem:[#allocation2 + $0x1e8] sm:$0xff]
    %v7102 = vld [vmem:[#allocation2 + $0x1f0] sm:$0xff]
    %v7103 = vld [vmem:[#allocation2 + $0x1f8] sm:$0xff]
    %v7104 = vld [vmem:[#allocation2 + $0x200] sm:$0xff]
    %v7105 = vld [vmem:[#allocation2 + $0x208] sm:$0xff]
    %v7106 = vld [vmem:[#allocation2 + $0x210] sm:$0xff]
    %v7107 = vld [vmem:[#allocation2 + $0x218] sm:$0xff]
    %v7108 = vld [vmem:[#allocation2 + $0x220] sm:$0xff]
    %v7109 = vld [vmem:[#allocation2 + $0x228] sm:$0xff]
    %v7110 = vld [vmem:[#allocation2 + $0x230] sm:$0xff]
    %v7111 = vld [vmem:[#allocation2 + $0x238] sm:$0xff]
    %v7112 = vld [vmem:[#allocation2 + $0x240] sm:$0xff]
    %v7113 = vld [vmem:[#allocation2 + $0x248] sm:$0xff]
    %v7114 = vld [vmem:[#allocation2 + $0x250] sm:$0xff]
    %v7115 = vld [vmem:[#allocation2 + $0x258] sm:$0xff]
    %v7116 = vld [vmem:[#allocation2 + $0x260] sm:$0xff]
    %v7117 = vld [vmem:[#allocation2 + $0x268] sm:$0xff]
    %v7118 = vld [vmem:[#allocation2 + $0x270] sm:$0xff]
    %v7119 = vld [vmem:[#allocation2 + $0x278] sm:$0xff]
    %v7120 = vld [vmem:[#allocation2 + $0x280] sm:$0xff]
    %v7121 = vld [vmem:[#allocation2 + $0x288] sm:$0xff]
    %v7122 = vld [vmem:[#allocation2 + $0x290] sm:$0xff]
    %v7123 = vld [vmem:[#allocation2 + $0x298] sm:$0xff]
    %v7124 = vld [vmem:[#allocation2 + $0x2a0] sm:$0xff]
    %v7125 = vld [vmem:[#allocation2 + $0x2a8] sm:$0xff]
    %v7126 = vld [vmem:[#allocation2 + $0x2b0] sm:$0xff]
    %v7127 = vld [vmem:[#allocation2 + $0x2b8] sm:$0xff]
    %v7128 = vld [vmem:[#allocation2 + $0x2c0] sm:$0xff]
    %v7129 = vld [vmem:[#allocation2 + $0x2c8] sm:$0xff]
    %v7130 = vld [vmem:[#allocation2 + $0x2d0] sm:$0xff]
    %v7131 = vld [vmem:[#allocation2 + $0x2d8] sm:$0xff]
    %v7132 = vld [vmem:[#allocation2 + $0x2e0] sm:$0xff]
    %v7133 = vld [vmem:[#allocation2 + $0x2e8] sm:$0xff]
    %v7134 = vld [vmem:[#allocation2 + $0x2f0] sm:$0xff]
    %v7135 = vld [vmem:[#allocation2 + $0x2f8] sm:$0xff]
    %v7136 = vld [vmem:[#allocation2 + $0x300] sm:$0xff]
    %v7137 = vld [vmem:[#allocation2 + $0x308] sm:$0xff]
    %v7138 = vld [vmem:[#allocation2 + $0x310] sm:$0xff]
    %v7139 = vld [vmem:[#allocation2 + $0x318] sm:$0xff]
    %v7140 = vld [vmem:[%s3] sm:$0xff]
    %v7141 = vld [vmem:[%s3 + $0x8] sm:$0xff]
    %v7142 = vld [vmem:[%s3 + $0x10] sm:$0xff]
    %v7143 = vld [vmem:[%s3 + $0x18] sm:$0xff]
    %v7144 = vld [vmem:[%s3 + $0x20] sm:$0xff]
    %v7145 = vld [vmem:[%s3 + $0x28] sm:$0xff]
    %v7146 = vld [vmem:[%s3 + $0x30] sm:$0xff]
    %v7147 = vld [vmem:[%s3 + $0x38] sm:$0xff]
    %v7148 = vld [vmem:[%s3 + $0x40] sm:$0xff]
    %v7149 = vld [vmem:[%s3 + $0x48] sm:$0xff]
    %v7150 = vld [vmem:[%s3 + $0x50] sm:$0xff]
    %v7151 = vld [vmem:[%s3 + $0x58] sm:$0xff]
    %v7152 = vld [vmem:[%s3 + $0x60] sm:$0xff]
    %v7153 = vld [vmem:[%s3 + $0x68] sm:$0xff]
    %7155 = vset.pattern.permute.xlu0 0
    %7156 = vperm.xlu0 %7155, %v7140
    %v7157 = vpop.permute.xlu0 %7156
    %7160 = vset.pattern.permute.xlu0 0
    %7161 = vperm.xlu0 %7160, %v7141
    %v7162 = vpop.permute.xlu0 %7161
    %7165 = vset.pattern.permute.xlu0 0
    %7166 = vperm.xlu0 %7165, %v7142
    %v7167 = vpop.permute.xlu0 %7166
    %7170 = vset.pattern.permute.xlu0 0
    %7171 = vperm.xlu0 %7170, %v7143
    %v7172 = vpop.permute.xlu0 %7171
    %7175 = vset.pattern.permute.xlu0 0
    %7176 = vperm.xlu0 %7175, %v7144
    %v7177 = vpop.permute.xlu0 %7176
    %7180 = vset.pattern.permute.xlu0 0
    %7181 = vperm.xlu0 %7180, %v7145
    %v7182 = vpop.permute.xlu0 %7181
    %7185 = vset.pattern.permute.xlu0 0
    %7186 = vperm.xlu0 %7185, %v7146
    %v7187 = vpop.permute.xlu0 %7186
    %7190 = vset.pattern.permute.xlu0 0
    %7191 = vperm.xlu0 %7190, %v7147
    %v7192 = vpop.permute.xlu0 %7191
    %7195 = vset.pattern.permute.xlu0 0
    %7196 = vperm.xlu0 %7195, %v7148
    %v7197 = vpop.permute.xlu0 %7196
    %7200 = vset.pattern.permute.xlu0 0
    %7201 = vperm.xlu0 %7200, %v7149
    %v7202 = vpop.permute.xlu0 %7201
    %7205 = vset.pattern.permute.xlu0 0
    %7206 = vperm.xlu0 %7205, %v7150
    %v7207 = vpop.permute.xlu0 %7206
    %7210 = vset.pattern.permute.xlu0 0
    %7211 = vperm.xlu0 %7210, %v7151
    %v7212 = vpop.permute.xlu0 %7211
    %7215 = vset.pattern.permute.xlu0 0
    %7216 = vperm.xlu0 %7215, %v7152
    %v7217 = vpop.permute.xlu0 %7216
    %7220 = vset.pattern.permute.xlu0 0
    %7221 = vperm.xlu0 %7220, %v7153
    %v7222 = vpop.permute.xlu0 %7221
    %v7324 = vunpack.c.l.b16 %v7040
    %v7325 = vunpack.c.h.b16 %v7040
    %v7326 = vunpack.c.l.b16 %v7041
    %v7327 = vunpack.c.h.b16 %v7041
    %v7328 = vunpack.c.l.b16 %v7042
    %v7329 = vunpack.c.h.b16 %v7042
    %v7330 = vunpack.c.l.b16 %v7043
    %v7331 = vunpack.c.h.b16 %v7043
    %v7332 = vunpack.c.l.b16 %v7044
    %v7333 = vunpack.c.h.b16 %v7044
    %v7334 = vunpack.c.l.b16 %v7045
    %v7335 = vunpack.c.h.b16 %v7045
    %v7336 = vunpack.c.l.b16 %v7046
    %v7337 = vunpack.c.h.b16 %v7046
    %v7338 = vunpack.c.l.b16 %v7047
    %v7339 = vunpack.c.h.b16 %v7047
    %v7340 = vunpack.c.l.b16 %v7048
    %v7341 = vunpack.c.h.b16 %v7048
    %v7342 = vunpack.c.l.b16 %v7049
    %v7343 = vunpack.c.h.b16 %v7049
    %v7344 = vunpack.c.l.b16 %v7050
    %v7345 = vunpack.c.h.b16 %v7050
    %v7346 = vunpack.c.l.b16 %v7051
    %v7347 = vunpack.c.h.b16 %v7051
    %v7348 = vunpack.c.l.b16 %v7052
    %v7349 = vunpack.c.h.b16 %v7052
    %v7350 = vunpack.c.l.b16 %v7053
    %v7351 = vunpack.c.h.b16 %v7053
    %v7352 = vunpack.c.l.b16 %v7054
    %v7353 = vunpack.c.h.b16 %v7054
    %v7354 = vunpack.c.l.b16 %v7055
    %v7355 = vunpack.c.h.b16 %v7055
    %v7356 = vunpack.c.l.b16 %v7056
    %v7357 = vunpack.c.h.b16 %v7056
    %v7358 = vunpack.c.l.b16 %v7057
    %v7359 = vunpack.c.h.b16 %v7057
    %v7360 = vunpack.c.l.b16 %v7058
    %v7361 = vunpack.c.h.b16 %v7058
    %v7362 = vunpack.c.l.b16 %v7059
    %v7363 = vunpack.c.h.b16 %v7059
    %v7364 = vunpack.c.l.b16 %v7060
    %v7365 = vunpack.c.h.b16 %v7060
    %v7366 = vunpack.c.l.b16 %v7061
    %v7367 = vunpack.c.h.b16 %v7061
    %v7368 = vunpack.c.l.b16 %v7062
    %v7369 = vunpack.c.h.b16 %v7062
    %v7370 = vunpack.c.l.b16 %v7063
    %v7371 = vunpack.c.h.b16 %v7063
    %v7372 = vunpack.c.l.b16 %v7064
    %v7373 = vunpack.c.h.b16 %v7064
    %v7374 = vunpack.c.l.b16 %v7065
    %v7375 = vunpack.c.h.b16 %v7065
    %v7376 = vunpack.c.l.b16 %v7066
    %v7377 = vunpack.c.h.b16 %v7066
    %v7378 = vunpack.c.l.b16 %v7067
    %v7379 = vunpack.c.h.b16 %v7067
    %v7380 = vunpack.c.l.b16 %v7068
    %v7381 = vunpack.c.h.b16 %v7068
    %v7382 = vunpack.c.l.b16 %v7069
    %v7383 = vunpack.c.h.b16 %v7069
    %v7384 = vunpack.c.l.b16 %v7070
    %v7385 = vunpack.c.h.b16 %v7070
    %v7386 = vunpack.c.l.b16 %v7071
    %v7387 = vunpack.c.h.b16 %v7071
    %v7388 = vunpack.c.l.b16 %v7072
    %v7389 = vunpack.c.h.b16 %v7072
    %v7390 = vunpack.c.l.b16 %v7073
    %v7391 = vunpack.c.h.b16 %v7073
    %v7392 = vunpack.c.l.b16 %v7074
    %v7393 = vunpack.c.h.b16 %v7074
    %v7394 = vunpack.c.l.b16 %v7075
    %v7395 = vunpack.c.h.b16 %v7075
    %v7396 = vunpack.c.l.b16 %v7076
    %v7397 = vunpack.c.h.b16 %v7076
    %v7398 = vunpack.c.l.b16 %v7077
    %v7399 = vunpack.c.h.b16 %v7077
    %v7400 = vunpack.c.l.b16 %v7078
    %v7401 = vunpack.c.h.b16 %v7078
    %v7402 = vunpack.c.l.b16 %v7079
    %v7403 = vunpack.c.h.b16 %v7079
    %v7404 = vunpack.c.l.b16 %v7080
    %v7405 = vunpack.c.h.b16 %v7080
    %v7406 = vunpack.c.l.b16 %v7081
    %v7407 = vunpack.c.h.b16 %v7081
    %v7408 = vunpack.c.l.b16 %v7082
    %v7409 = vunpack.c.h.b16 %v7082
    %v7410 = vunpack.c.l.b16 %v7083
    %v7411 = vunpack.c.h.b16 %v7083
    %v7412 = vunpack.c.l.b16 %v7084
    %v7413 = vunpack.c.h.b16 %v7084
    %v7414 = vunpack.c.l.b16 %v7085
    %v7415 = vunpack.c.h.b16 %v7085
    %v7416 = vunpack.c.l.b16 %v7086
    %v7417 = vunpack.c.h.b16 %v7086
    %v7418 = vunpack.c.l.b16 %v7087
    %v7419 = vunpack.c.h.b16 %v7087
    %v7420 = vunpack.c.l.b16 %v7088
    %v7421 = vunpack.c.h.b16 %v7088
    %v7422 = vunpack.c.l.b16 %v7089
    %v7423 = vunpack.c.h.b16 %v7089
    %v7424 = vunpack.c.l.b16 %v7090
    %v7425 = vunpack.c.h.b16 %v7090
    %v7426 = vunpack.c.l.b16 %v7091
    %v7427 = vunpack.c.h.b16 %v7091
    %v7428 = vunpack.c.l.b16 %v7092
    %v7429 = vunpack.c.h.b16 %v7092
    %v7430 = vunpack.c.l.b16 %v7093
    %v7431 = vunpack.c.h.b16 %v7093
    %v7432 = vunpack.c.l.b16 %v7094
    %v7433 = vunpack.c.h.b16 %v7094
    %v7434 = vunpack.c.l.b16 %v7095
    %v7435 = vunpack.c.h.b16 %v7095
    %v7436 = vunpack.c.l.b16 %v7096
    %v7437 = vunpack.c.h.b16 %v7096
    %v7438 = vunpack.c.l.b16 %v7097
    %v7439 = vunpack.c.h.b16 %v7097
    %v7440 = vunpack.c.l.b16 %v7098
    %v7441 = vunpack.c.h.b16 %v7098
    %v7442 = vunpack.c.l.b16 %v7099
    %v7443 = vunpack.c.h.b16 %v7099
    %v7444 = vunpack.c.l.b16 %v7100
    %v7445 = vunpack.c.h.b16 %v7100
    %v7446 = vunpack.c.l.b16 %v7101
    %v7447 = vunpack.c.h.b16 %v7101
    %v7448 = vunpack.c.l.b16 %v7102
    %v7449 = vunpack.c.h.b16 %v7102
    %v7450 = vunpack.c.l.b16 %v7103
    %v7451 = vunpack.c.h.b16 %v7103
    %v7452 = vunpack.c.l.b16 %v7104
    %v7453 = vunpack.c.h.b16 %v7104
    %v7454 = vunpack.c.l.b16 %v7105
    %v7455 = vunpack.c.h.b16 %v7105
    %v7456 = vunpack.c.l.b16 %v7106
    %v7457 = vunpack.c.h.b16 %v7106
    %v7458 = vunpack.c.l.b16 %v7107
    %v7459 = vunpack.c.h.b16 %v7107
    %v7460 = vunpack.c.l.b16 %v7108
    %v7461 = vunpack.c.h.b16 %v7108
    %v7462 = vunpack.c.l.b16 %v7109
    %v7463 = vunpack.c.h.b16 %v7109
    %v7464 = vunpack.c.l.b16 %v7110
    %v7465 = vunpack.c.h.b16 %v7110
    %v7466 = vunpack.c.l.b16 %v7111
    %v7467 = vunpack.c.h.b16 %v7111
    %v7468 = vunpack.c.l.b16 %v7112
    %v7469 = vunpack.c.h.b16 %v7112
    %v7470 = vunpack.c.l.b16 %v7113
    %v7471 = vunpack.c.h.b16 %v7113
    %v7472 = vunpack.c.l.b16 %v7114
    %v7473 = vunpack.c.h.b16 %v7114
    %v7474 = vunpack.c.l.b16 %v7115
    %v7475 = vunpack.c.h.b16 %v7115
    %v7476 = vunpack.c.l.b16 %v7116
    %v7477 = vunpack.c.h.b16 %v7116
    %v7478 = vunpack.c.l.b16 %v7117
    %v7479 = vunpack.c.h.b16 %v7117
    %v7480 = vunpack.c.l.b16 %v7118
    %v7481 = vunpack.c.h.b16 %v7118
    %v7482 = vunpack.c.l.b16 %v7119
    %v7483 = vunpack.c.h.b16 %v7119
    %v7484 = vunpack.c.l.b16 %v7120
    %v7485 = vunpack.c.h.b16 %v7120
    %v7486 = vunpack.c.l.b16 %v7121
    %v7487 = vunpack.c.h.b16 %v7121
    %v7488 = vunpack.c.l.b16 %v7122
    %v7489 = vunpack.c.h.b16 %v7122
    %v7490 = vunpack.c.l.b16 %v7123
    %v7491 = vunpack.c.h.b16 %v7123
    %v7492 = vunpack.c.l.b16 %v7124
    %v7493 = vunpack.c.h.b16 %v7124
    %v7494 = vunpack.c.l.b16 %v7125
    %v7495 = vunpack.c.h.b16 %v7125
    %v7496 = vunpack.c.l.b16 %v7126
    %v7497 = vunpack.c.h.b16 %v7126
    %v7498 = vunpack.c.l.b16 %v7127
    %v7499 = vunpack.c.h.b16 %v7127
    %v7500 = vunpack.c.l.b16 %v7128
    %v7501 = vunpack.c.h.b16 %v7128
    %v7502 = vunpack.c.l.b16 %v7129
    %v7503 = vunpack.c.h.b16 %v7129
    %v7504 = vunpack.c.l.b16 %v7130
    %v7505 = vunpack.c.h.b16 %v7130
    %v7506 = vunpack.c.l.b16 %v7131
    %v7507 = vunpack.c.h.b16 %v7131
    %v7508 = vunpack.c.l.b16 %v7132
    %v7509 = vunpack.c.h.b16 %v7132
    %v7510 = vunpack.c.l.b16 %v7133
    %v7511 = vunpack.c.h.b16 %v7133
    %v7512 = vunpack.c.l.b16 %v7134
    %v7513 = vunpack.c.h.b16 %v7134
    %v7514 = vunpack.c.l.b16 %v7135
    %v7515 = vunpack.c.h.b16 %v7135
    %v7516 = vunpack.c.l.b16 %v7136
    %v7517 = vunpack.c.h.b16 %v7136
    %v7518 = vunpack.c.l.b16 %v7137
    %v7519 = vunpack.c.h.b16 %v7137
    %v7520 = vunpack.c.l.b16 %v7138
    %v7521 = vunpack.c.h.b16 %v7138
    %v7522 = vunpack.c.l.b16 %v7139
    %v7523 = vunpack.c.h.b16 %v7139
    %v7524 = vpack.c.b16 %v7326, %v7324
    %v7525 = vpack.c.b16 %v7327, %v7325
    %v7526 = vpack.c.b16 %v7330, %v7328
    %v7527 = vpack.c.b16 %v7331, %v7329
    %v7528 = vpack.c.b16 %v7334, %v7332
    %v7529 = vpack.c.b16 %v7335, %v7333
    %v7530 = vpack.c.b16 %v7338, %v7336
    %v7531 = vpack.c.b16 %v7339, %v7337
    %v7532 = vpack.c.b16 %v7342, %v7340
    %v7533 = vpack.c.b16 %v7343, %v7341
    %v7534 = vpack.c.b16 %v7346, %v7344
    %v7535 = vpack.c.b16 %v7347, %v7345
    %v7536 = vpack.c.b16 %v7350, %v7348
    %v7537 = vpack.c.b16 %v7351, %v7349
    %v7538 = vpack.c.b16 %v7354, %v7352
    %v7539 = vpack.c.b16 %v7355, %v7353
    %v7540 = vpack.c.b16 %v7358, %v7356
    %v7541 = vpack.c.b16 %v7359, %v7357
    %v7542 = vpack.c.b16 %v7362, %v7360
    %v7543 = vpack.c.b16 %v7363, %v7361
    %v7544 = vpack.c.b16 %v7366, %v7364
    %v7545 = vpack.c.b16 %v7367, %v7365
    %v7546 = vpack.c.b16 %v7370, %v7368
    %v7547 = vpack.c.b16 %v7371, %v7369
    %v7548 = vpack.c.b16 %v7374, %v7372
    %v7549 = vpack.c.b16 %v7375, %v7373
    %v7550 = vpack.c.b16 %v7378, %v7376
    %v7551 = vpack.c.b16 %v7379, %v7377
    %v7552 = vpack.c.b16 %v7382, %v7380
    %v7553 = vpack.c.b16 %v7383, %v7381
    %v7554 = vpack.c.b16 %v7386, %v7384
    %v7555 = vpack.c.b16 %v7387, %v7385
    %v7556 = vpack.c.b16 %v7390, %v7388
    %v7557 = vpack.c.b16 %v7391, %v7389
    %v7558 = vpack.c.b16 %v7394, %v7392
    %v7559 = vpack.c.b16 %v7395, %v7393
    %v7560 = vpack.c.b16 %v7398, %v7396
    %v7561 = vpack.c.b16 %v7399, %v7397
    %v7562 = vpack.c.b16 %v7402, %v7400
    %v7563 = vpack.c.b16 %v7403, %v7401
    %v7564 = vpack.c.b16 %v7406, %v7404
    %v7565 = vpack.c.b16 %v7407, %v7405
    %v7566 = vpack.c.b16 %v7410, %v7408
    %v7567 = vpack.c.b16 %v7411, %v7409
    %v7568 = vpack.c.b16 %v7414, %v7412
    %v7569 = vpack.c.b16 %v7415, %v7413
    %v7570 = vpack.c.b16 %v7418, %v7416
    %v7571 = vpack.c.b16 %v7419, %v7417
    %v7572 = vpack.c.b16 %v7422, %v7420
    %v7573 = vpack.c.b16 %v7423, %v7421
    %v7574 = vpack.c.b16 %v7426, %v7424
    %v7575 = vpack.c.b16 %v7427, %v7425
    %v7576 = vpack.c.b16 %v7430, %v7428
    %v7577 = vpack.c.b16 %v7431, %v7429
    %v7578 = vpack.c.b16 %v7434, %v7432
    %v7579 = vpack.c.b16 %v7435, %v7433
    %v7580 = vpack.c.b16 %v7438, %v7436
    %v7581 = vpack.c.b16 %v7439, %v7437
    %v7582 = vpack.c.b16 %v7442, %v7440
    %v7583 = vpack.c.b16 %v7443, %v7441
    %v7584 = vpack.c.b16 %v7446, %v7444
    %v7585 = vpack.c.b16 %v7447, %v7445
    %v7586 = vpack.c.b16 %v7450, %v7448
    %v7587 = vpack.c.b16 %v7451, %v7449
    %v7588 = vpack.c.b16 %v7454, %v7452
    %v7589 = vpack.c.b16 %v7455, %v7453
    %v7590 = vpack.c.b16 %v7458, %v7456
    %v7591 = vpack.c.b16 %v7459, %v7457
    %v7592 = vpack.c.b16 %v7462, %v7460
    %v7593 = vpack.c.b16 %v7463, %v7461
    %v7594 = vpack.c.b16 %v7466, %v7464
    %v7595 = vpack.c.b16 %v7467, %v7465
    %v7596 = vpack.c.b16 %v7470, %v7468
    %v7597 = vpack.c.b16 %v7471, %v7469
    %v7598 = vpack.c.b16 %v7474, %v7472
    %v7599 = vpack.c.b16 %v7475, %v7473
    %v7600 = vpack.c.b16 %v7478, %v7476
    %v7601 = vpack.c.b16 %v7479, %v7477
    %v7602 = vpack.c.b16 %v7482, %v7480
    %v7603 = vpack.c.b16 %v7483, %v7481
    %v7604 = vpack.c.b16 %v7486, %v7484
    %v7605 = vpack.c.b16 %v7487, %v7485
    %v7606 = vpack.c.b16 %v7490, %v7488
    %v7607 = vpack.c.b16 %v7491, %v7489
    %v7608 = vpack.c.b16 %v7494, %v7492
    %v7609 = vpack.c.b16 %v7495, %v7493
    %v7610 = vpack.c.b16 %v7498, %v7496
    %v7611 = vpack.c.b16 %v7499, %v7497
    %v7612 = vpack.c.b16 %v7502, %v7500
    %v7613 = vpack.c.b16 %v7503, %v7501
    %v7614 = vpack.c.b16 %v7506, %v7504
    %v7615 = vpack.c.b16 %v7507, %v7505
    %v7616 = vpack.c.b16 %v7510, %v7508
    %v7617 = vpack.c.b16 %v7511, %v7509
    %v7618 = vpack.c.b16 %v7514, %v7512
    %v7619 = vpack.c.b16 %v7515, %v7513
    %v7620 = vpack.c.b16 %v7518, %v7516
    %v7621 = vpack.c.b16 %v7519, %v7517
    %v7622 = vpack.c.b16 %v7522, %v7520
    %v7623 = vpack.c.b16 %v7523, %v7521
    %7724 = vmatprep.subr.bf16.mxu0 %v7539
    %7725 = vmatpush1.bf16.msra.mxu0 %v7538
    %7726 = vmatprep.subr.bf16.mxu0 %v7537
    %7727 = vmatpush1.bf16.msra.mxu0 %v7536
    %7728 = vmatprep.subr.bf16.mxu0 %v7535
    %7729 = vmatpush1.bf16.msra.mxu0 %v7534
    %7730 = vmatprep.subr.bf16.mxu0 %v7533
    %7731 = vmatpush1.bf16.msra.mxu0 %v7532
    %7732 = vmatprep.subr.bf16.mxu0 %v7531
    %7733 = vmatpush1.bf16.msra.mxu0 %v7530
    %7734 = vmatprep.subr.bf16.mxu0 %v7529
    %7735 = vmatpush1.bf16.msra.mxu0 %v7528
    %7736 = vmatprep.subr.bf16.mxu0 %v7527
    %7737 = vmatpush1.bf16.msra.mxu0 %v7526
    %7738 = vmatprep.subr.bf16.mxu0 %v7525
    %7739 = vmatpush1.bf16.msra.mxu0 %v7524
    %7740 = vmatprep.subr.bf16.mxu0 %v7555
    %7741 = vmatpush2.bf16.msra.mxu0 %v7554
    %7742 = vmatprep.subr.bf16.mxu0 %v7553
    %7743 = vmatpush2.bf16.msra.mxu0 %v7552
    %7744 = vmatprep.subr.bf16.mxu0 %v7551
    %7745 = vmatpush2.bf16.msra.mxu0 %v7550
    %7746 = vmatprep.subr.bf16.mxu0 %v7549
    %7747 = vmatpush2.bf16.msra.mxu0 %v7548
    %7748 = vmatprep.subr.bf16.mxu0 %v7547
    %7749 = vmatpush2.bf16.msra.mxu0 %v7546
    %7750 = vmatprep.subr.bf16.mxu0 %v7545
    %7751 = vmatpush2.bf16.msra.mxu0 %v7544
    %7752 = vmatprep.subr.bf16.mxu0 %v7543
    %7753 = vmatpush2.bf16.msra.mxu0 %v7542
    %7754 = vmatprep.subr.bf16.mxu0 %v7541
    %7755 = vmatpush2.bf16.msra.mxu0 %v7540
    %7756 = vmatprep.mubr.bf16.mxu0 %v2375
    %7757 = vmatmul.mubr.bf16.gmra.mxu0 %v2374
    %v7758 = vpop.f32.mrf.mxu0
    %v7759 = vadd.f32 %v7157, %v7758
    %v7760 = vpop.f32.mrf.mxu0
    %v7761 = vadd.f32 %v7157, %v7760
    %v7762 = vpop.f32.mrf.mxu0
    %v7763 = vadd.f32 %v7162, %v7762
    %v7764 = vpop.f32.mrf.mxu0
    %v7765 = vadd.f32 %v7162, %v7764
    %7766 = vmatprep.mubr.bf16.mxu0 %v2382
    %7767 = vmatmul.mubr.bf16.gmra.mxu0 %v2381
    %v7768 = vpop.f32.mrf.mxu0
    %v7769 = vadd.f32 %v7167, %v7768
    %v7770 = vpop.f32.mrf.mxu0
    %v7771 = vadd.f32 %v7167, %v7770
    %v7772 = vpop.f32.mrf.mxu0
    %v7773 = vadd.f32 %v7172, %v7772
    %v7774 = vpop.f32.mrf.mxu0
    %v7775 = vadd.f32 %v7172, %v7774
    %7776 = vmatprep.mubr.bf16.mxu0 %v2389
    %7777 = vmatmul.mubr.bf16.gmra.mxu0 %v2388
    %v7778 = vpop.f32.mrf.mxu0
    %v7779 = vadd.f32 %v7177, %v7778
    %v7780 = vpop.f32.mrf.mxu0
    %v7781 = vadd.f32 %v7177, %v7780
    %v7782 = vpop.f32.mrf.mxu0
    %v7783 = vadd.f32 %v7182, %v7782
    %v7784 = vpop.f32.mrf.mxu0
    %v7785 = vadd.f32 %v7182, %v7784
    %7786 = vmatprep.mubr.bf16.mxu0 %v2396
    %7787 = vmatmul.mubr.bf16.gmra.mxu0 %v2395
    %v7788 = vpop.f32.mrf.mxu0
    %v7789 = vadd.f32 %v7187, %v7788
    %v7790 = vpop.f32.mrf.mxu0
    %v7791 = vadd.f32 %v7187, %v7790
    %v7792 = vpop.f32.mrf.mxu0
    %v7793 = vadd.f32 %v7192, %v7792
    %v7794 = vpop.f32.mrf.mxu0
    %v7795 = vadd.f32 %v7192, %v7794
    %7796 = vmatprep.mubr.bf16.mxu0 %v2403
    %7797 = vmatmul.mubr.bf16.gmra.mxu0 %v2402
    %v7798 = vpop.f32.mrf.mxu0
    %v7799 = vadd.f32 %v7197, %v7798
    %v7800 = vpop.f32.mrf.mxu0
    %v7801 = vadd.f32 %v7197, %v7800
    %v7802 = vpop.f32.mrf.mxu0
    %v7803 = vadd.f32 %v7202, %v7802
    %v7804 = vpop.f32.mrf.mxu0
    %v7805 = vadd.f32 %v7202, %v7804
    %7806 = vmatprep.mubr.bf16.mxu0 %v2410
    %7807 = vmatmul.mubr.bf16.gmra.mxu0 %v2409
    %v7808 = vpop.f32.mrf.mxu0
    %v7809 = vadd.f32 %v7207, %v7808
    %v7810 = vpop.f32.mrf.mxu0
    %v7811 = vadd.f32 %v7207, %v7810
    %v7812 = vpop.f32.mrf.mxu0
    %v7813 = vadd.f32 %v7212, %v7812
    %v7814 = vpop.f32.mrf.mxu0
    %v7815 = vadd.f32 %v7212, %v7814
    %7816 = vmatprep.mubr.bf16.mxu0 %v2417
    %7817 = vmatmul.mubr.bf16.gmra.mxu0 %v2416
    %v7818 = vpop.f32.mrf.mxu0
    %v7819 = vadd.f32 %v7217, %v7818
    %v7820 = vpop.f32.mrf.mxu0
    %v7821 = vadd.f32 %v7217, %v7820
    %v7822 = vpop.f32.mrf.mxu0
    %v7823 = vadd.f32 %v7222, %v7822
    %v7824 = vpop.f32.mrf.mxu0
    %v7825 = vadd.f32 %v7222, %v7824
    %7826 = vdwg.mxu0
    %7827 = vmatprep.subr.bf16.mxu0 %v7571
    %7828 = vmatpush1.bf16.msra.mxu0 %v7570
    %7829 = vmatprep.subr.bf16.mxu0 %v7569
    %7830 = vmatpush1.bf16.msra.mxu0 %v7568
    %7831 = vmatprep.subr.bf16.mxu0 %v7567
    %7832 = vmatpush1.bf16.msra.mxu0 %v7566
    %7833 = vmatprep.subr.bf16.mxu0 %v7565
    %7834 = vmatpush1.bf16.msra.mxu0 %v7564
    %7835 = vmatprep.subr.bf16.mxu0 %v7563
    %7836 = vmatpush1.bf16.msra.mxu0 %v7562
    %7837 = vmatprep.subr.bf16.mxu0 %v7561
    %7838 = vmatpush1.bf16.msra.mxu0 %v7560
    %7839 = vmatprep.subr.bf16.mxu0 %v7559
    %7840 = vmatpush1.bf16.msra.mxu0 %v7558
    %7841 = vmatprep.subr.bf16.mxu0 %v7557
    %7842 = vmatpush1.bf16.msra.mxu0 %v7556
    %7843 = vmatprep.subr.bf16.mxu0 %v7587
    %7844 = vmatpush2.bf16.msra.mxu0 %v7586
    %7845 = vmatprep.subr.bf16.mxu0 %v7585
    %7846 = vmatpush2.bf16.msra.mxu0 %v7584
    %7847 = vmatprep.subr.bf16.mxu0 %v7583
    %7848 = vmatpush2.bf16.msra.mxu0 %v7582
    %7849 = vmatprep.subr.bf16.mxu0 %v7581
    %7850 = vmatpush2.bf16.msra.mxu0 %v7580
    %7851 = vmatprep.subr.bf16.mxu0 %v7579
    %7852 = vmatpush2.bf16.msra.mxu0 %v7578
    %7853 = vmatprep.subr.bf16.mxu0 %v7577
    %7854 = vmatpush2.bf16.msra.mxu0 %v7576
    %7855 = vmatprep.subr.bf16.mxu0 %v7575
    %7856 = vmatpush2.bf16.msra.mxu0 %v7574
    %7857 = vmatprep.subr.bf16.mxu0 %v7573
    %7858 = vmatpush2.bf16.msra.mxu0 %v7572
    %7859 = vmatprep.mubr.bf16.mxu0 %v2377
    %7860 = vmatmul.mubr.bf16.gmra.mxu0 %v2376
    %v7861 = vpop.f32.mrf.mxu0
    %v7862 = vadd.f32 %v7759, %v7861
    %v7863 = vpop.f32.mrf.mxu0
    %v7864 = vadd.f32 %v7761, %v7863
    %v7865 = vpop.f32.mrf.mxu0
    %v7866 = vadd.f32 %v7763, %v7865
    %v7867 = vpop.f32.mrf.mxu0
    %v7868 = vadd.f32 %v7765, %v7867
    %7869 = vmatprep.mubr.bf16.mxu0 %v2384
    %7870 = vmatmul.mubr.bf16.gmra.mxu0 %v2383
    %v7871 = vpop.f32.mrf.mxu0
    %v7872 = vadd.f32 %v7769, %v7871
    %v7873 = vpop.f32.mrf.mxu0
    %v7874 = vadd.f32 %v7771, %v7873
    %v7875 = vpop.f32.mrf.mxu0
    %v7876 = vadd.f32 %v7773, %v7875
    %v7877 = vpop.f32.mrf.mxu0
    %v7878 = vadd.f32 %v7775, %v7877
    %7879 = vmatprep.mubr.bf16.mxu0 %v2391
    %7880 = vmatmul.mubr.bf16.gmra.mxu0 %v2390
    %v7881 = vpop.f32.mrf.mxu0
    %v7882 = vadd.f32 %v7779, %v7881
    %v7883 = vpop.f32.mrf.mxu0
    %v7884 = vadd.f32 %v7781, %v7883
    %v7885 = vpop.f32.mrf.mxu0
    %v7886 = vadd.f32 %v7783, %v7885
    %v7887 = vpop.f32.mrf.mxu0
    %v7888 = vadd.f32 %v7785, %v7887
    %7889 = vmatprep.mubr.bf16.mxu0 %v2398
    %7890 = vmatmul.mubr.bf16.gmra.mxu0 %v2397
    %v7891 = vpop.f32.mrf.mxu0
    %v7892 = vadd.f32 %v7789, %v7891
    %v7893 = vpop.f32.mrf.mxu0
    %v7894 = vadd.f32 %v7791, %v7893
    %v7895 = vpop.f32.mrf.mxu0
    %v7896 = vadd.f32 %v7793, %v7895
    %v7897 = vpop.f32.mrf.mxu0
    %v7898 = vadd.f32 %v7795, %v7897
    %7899 = vmatprep.mubr.bf16.mxu0 %v2405
    %7900 = vmatmul.mubr.bf16.gmra.mxu0 %v2404
    %v7901 = vpop.f32.mrf.mxu0
    %v7902 = vadd.f32 %v7799, %v7901
    %v7903 = vpop.f32.mrf.mxu0
    %v7904 = vadd.f32 %v7801, %v7903
    %v7905 = vpop.f32.mrf.mxu0
    %v7906 = vadd.f32 %v7803, %v7905
    %v7907 = vpop.f32.mrf.mxu0
    %v7908 = vadd.f32 %v7805, %v7907
    %7909 = vmatprep.mubr.bf16.mxu0 %v2412
    %7910 = vmatmul.mubr.bf16.gmra.mxu0 %v2411
    %v7911 = vpop.f32.mrf.mxu0
    %v7912 = vadd.f32 %v7809, %v7911
    %v7913 = vpop.f32.mrf.mxu0
    %v7914 = vadd.f32 %v7811, %v7913
    %v7915 = vpop.f32.mrf.mxu0
    %v7916 = vadd.f32 %v7813, %v7915
    %v7917 = vpop.f32.mrf.mxu0
    %v7918 = vadd.f32 %v7815, %v7917
    %7919 = vmatprep.mubr.bf16.mxu0 %v2419
    %7920 = vmatmul.mubr.bf16.gmra.mxu0 %v2418
    %v7921 = vpop.f32.mrf.mxu0
    %v7922 = vadd.f32 %v7819, %v7921
    %v7923 = vpop.f32.mrf.mxu0
    %v7924 = vadd.f32 %v7821, %v7923
    %v7925 = vpop.f32.mrf.mxu0
    %v7926 = vadd.f32 %v7823, %v7925
    %v7927 = vpop.f32.mrf.mxu0
    %v7928 = vadd.f32 %v7825, %v7927
    %7929 = vdwg.mxu0
    %7930 = vmatprep.subr.bf16.mxu0 %v7603
    %7931 = vmatpush1.bf16.msra.mxu0 %v7602
    %7932 = vmatprep.subr.bf16.mxu0 %v7601
    %7933 = vmatpush1.bf16.msra.mxu0 %v7600
    %7934 = vmatprep.subr.bf16.mxu0 %v7599
    %7935 = vmatpush1.bf16.msra.mxu0 %v7598
    %7936 = vmatprep.subr.bf16.mxu0 %v7597
    %7937 = vmatpush1.bf16.msra.mxu0 %v7596
    %7938 = vmatprep.subr.bf16.mxu0 %v7595
    %7939 = vmatpush1.bf16.msra.mxu0 %v7594
    %7940 = vmatprep.subr.bf16.mxu0 %v7593
    %7941 = vmatpush1.bf16.msra.mxu0 %v7592
    %7942 = vmatprep.subr.bf16.mxu0 %v7591
    %7943 = vmatpush1.bf16.msra.mxu0 %v7590
    %7944 = vmatprep.subr.bf16.mxu0 %v7589
    %7945 = vmatpush1.bf16.msra.mxu0 %v7588
    %7946 = vmatprep.subr.bf16.mxu0 %v7619
    %7947 = vmatpush2.bf16.msra.mxu0 %v7618
    %7948 = vmatprep.subr.bf16.mxu0 %v7617
    %7949 = vmatpush2.bf16.msra.mxu0 %v7616
    %7950 = vmatprep.subr.bf16.mxu0 %v7615
    %7951 = vmatpush2.bf16.msra.mxu0 %v7614
    %7952 = vmatprep.subr.bf16.mxu0 %v7613
    %7953 = vmatpush2.bf16.msra.mxu0 %v7612
    %7954 = vmatprep.subr.bf16.mxu0 %v7611
    %7955 = vmatpush2.bf16.msra.mxu0 %v7610
    %7956 = vmatprep.subr.bf16.mxu0 %v7609
    %7957 = vmatpush2.bf16.msra.mxu0 %v7608
    %7958 = vmatprep.subr.bf16.mxu0 %v7607
    %7959 = vmatpush2.bf16.msra.mxu0 %v7606
    %7960 = vmatprep.subr.bf16.mxu0 %v7605
    %7961 = vmatpush2.bf16.msra.mxu0 %v7604
    %7962 = vmatprep.mubr.bf16.mxu0 %v2379
    %7963 = vmatmul.mubr.bf16.gmra.mxu0 %v2378
    %v7964 = vpop.f32.mrf.mxu0
    %v7965 = vadd.f32 %v7862, %v7964
    %v7966 = vpop.f32.mrf.mxu0
    %v7967 = vadd.f32 %v7864, %v7966
    %v7968 = vpop.f32.mrf.mxu0
    %v7969 = vadd.f32 %v7866, %v7968
    %v7970 = vpop.f32.mrf.mxu0
    %v7971 = vadd.f32 %v7868, %v7970
    %7972 = vmatprep.mubr.bf16.mxu0 %v2386
    %7973 = vmatmul.mubr.bf16.gmra.mxu0 %v2385
    %v7974 = vpop.f32.mrf.mxu0
    %v7975 = vadd.f32 %v7872, %v7974
    %v7976 = vpop.f32.mrf.mxu0
    %v7977 = vadd.f32 %v7874, %v7976
    %v7978 = vpop.f32.mrf.mxu0
    %v7979 = vadd.f32 %v7876, %v7978
    %v7980 = vpop.f32.mrf.mxu0
    %v7981 = vadd.f32 %v7878, %v7980
    %7982 = vmatprep.mubr.bf16.mxu0 %v2393
    %7983 = vmatmul.mubr.bf16.gmra.mxu0 %v2392
    %v7984 = vpop.f32.mrf.mxu0
    %v7985 = vadd.f32 %v7882, %v7984
    %v7986 = vpop.f32.mrf.mxu0
    %v7987 = vadd.f32 %v7884, %v7986
    %v7988 = vpop.f32.mrf.mxu0
    %v7989 = vadd.f32 %v7886, %v7988
    %v7990 = vpop.f32.mrf.mxu0
    %v7991 = vadd.f32 %v7888, %v7990
    %7992 = vmatprep.mubr.bf16.mxu0 %v2400
    %7993 = vmatmul.mubr.bf16.gmra.mxu0 %v2399
    %v7994 = vpop.f32.mrf.mxu0
    %v7995 = vadd.f32 %v7892, %v7994
    %v7996 = vpop.f32.mrf.mxu0
    %v7997 = vadd.f32 %v7894, %v7996
    %v7998 = vpop.f32.mrf.mxu0
    %v7999 = vadd.f32 %v7896, %v7998
    %v8000 = vpop.f32.mrf.mxu0
    %v8001 = vadd.f32 %v7898, %v8000
    %8002 = vmatprep.mubr.bf16.mxu0 %v2407
    %8003 = vmatmul.mubr.bf16.gmra.mxu0 %v2406
    %v8004 = vpop.f32.mrf.mxu0
    %v8005 = vadd.f32 %v7902, %v8004
    %v8006 = vpop.f32.mrf.mxu0
    %v8007 = vadd.f32 %v7904, %v8006
    %v8008 = vpop.f32.mrf.mxu0
    %v8009 = vadd.f32 %v7906, %v8008
    %v8010 = vpop.f32.mrf.mxu0
    %v8011 = vadd.f32 %v7908, %v8010
    %8012 = vmatprep.mubr.bf16.mxu0 %v2414
    %8013 = vmatmul.mubr.bf16.gmra.mxu0 %v2413
    %v8014 = vpop.f32.mrf.mxu0
    %v8015 = vadd.f32 %v7912, %v8014
    %v8016 = vpop.f32.mrf.mxu0
    %v8017 = vadd.f32 %v7914, %v8016
    %v8018 = vpop.f32.mrf.mxu0
    %v8019 = vadd.f32 %v7916, %v8018
    %v8020 = vpop.f32.mrf.mxu0
    %v8021 = vadd.f32 %v7918, %v8020
    %8022 = vmatprep.mubr.bf16.mxu0 %v2421
    %8023 = vmatmul.mubr.bf16.gmra.mxu0 %v2420
    %v8024 = vpop.f32.mrf.mxu0
    %v8025 = vadd.f32 %v7922, %v8024
    %v8026 = vpop.f32.mrf.mxu0
    %v8027 = vadd.f32 %v7924, %v8026
    %v8028 = vpop.f32.mrf.mxu0
    %v8029 = vadd.f32 %v7926, %v8028
    %v8030 = vpop.f32.mrf.mxu0
    %v8031 = vadd.f32 %v7928, %v8030
    %8032 = vdwg.mxu0
    %8033 = vmatprep.subr.bf16.mxu0 0
    %8034 = vmatpush1.bf16.msra.mxu0 0
    %8035 = vmatprep.subr.bf16.mxu0 0
    %8036 = vmatpush1.bf16.msra.mxu0 0
    %8037 = vmatprep.subr.bf16.mxu0 0
    %8038 = vmatpush1.bf16.msra.mxu0 0
    %8039 = vmatprep.subr.bf16.mxu0 0
    %8040 = vmatpush1.bf16.msra.mxu0 0
    %8041 = vmatprep.subr.bf16.mxu0 0
    %8042 = vmatpush1.bf16.msra.mxu0 0
    %8043 = vmatprep.subr.bf16.mxu0 0
    %8044 = vmatpush1.bf16.msra.mxu0 0
    %8045 = vmatprep.subr.bf16.mxu0 %v7623
    %8046 = vmatpush1.bf16.msra.mxu0 %v7622
    %8047 = vmatprep.subr.bf16.mxu0 %v7621
    %8048 = vmatpush1.bf16.msra.mxu0 %v7620
    %8049 = vmatprep.subr.bf16.mxu0 0
    %8050 = vmatpush2.bf16.msra.mxu0 0
    %8051 = vmatprep.subr.bf16.mxu0 0
    %8052 = vmatpush2.bf16.msra.mxu0 0
    %8053 = vmatprep.subr.bf16.mxu0 0
    %8054 = vmatpush2.bf16.msra.mxu0 0
    %8055 = vmatprep.subr.bf16.mxu0 0
    %8056 = vmatpush2.bf16.msra.mxu0 0
    %8057 = vmatprep.subr.bf16.mxu0 0
    %8058 = vmatpush2.bf16.msra.mxu0 0
    %8059 = vmatprep.subr.bf16.mxu0 0
    %8060 = vmatpush2.bf16.msra.mxu0 0
    %8061 = vmatprep.subr.bf16.mxu0 0
    %8062 = vmatpush2.bf16.msra.mxu0 0
    %8063 = vmatprep.subr.bf16.mxu0 0
    %8064 = vmatpush2.bf16.msra.mxu0 0
    %8065 = vmatprep.mubr.bf16.mxu0 0
    %8066 = vmatmul.mubr.bf16.gmra.mxu0 %v2967
    %v8067 = vpop.f32.mrf.mxu0
    %v8068 = vadd.f32 %v7965, %v8067
    %v8069 = vpop.f32.mrf.mxu0
    %v8070 = vadd.f32 %v7967, %v8069
    %v8071 = vpop.f32.mrf.mxu0
    %v8072 = vadd.f32 %v7969, %v8071
    %v8073 = vpop.f32.mrf.mxu0
    %v8074 = vadd.f32 %v7971, %v8073
    %8075 = vmatprep.mubr.bf16.mxu0 0
    %8076 = vmatmul.mubr.bf16.gmra.mxu0 %v2970
    %v8077 = vpop.f32.mrf.mxu0
    %v8078 = vadd.f32 %v7975, %v8077
    %v8079 = vpop.f32.mrf.mxu0
    %v8080 = vadd.f32 %v7977, %v8079
    %v8081 = vpop.f32.mrf.mxu0
    %v8082 = vadd.f32 %v7979, %v8081
    %v8083 = vpop.f32.mrf.mxu0
    %v8084 = vadd.f32 %v7981, %v8083
    %8085 = vmatprep.mubr.bf16.mxu0 0
    %8086 = vmatmul.mubr.bf16.gmra.mxu0 %v2973
    %v8087 = vpop.f32.mrf.mxu0
    %v8088 = vadd.f32 %v7985, %v8087
    %v8089 = vpop.f32.mrf.mxu0
    %v8090 = vadd.f32 %v7987, %v8089
    %v8091 = vpop.f32.mrf.mxu0
    %v8092 = vadd.f32 %v7989, %v8091
    %v8093 = vpop.f32.mrf.mxu0
    %v8094 = vadd.f32 %v7991, %v8093
    %8095 = vmatprep.mubr.bf16.mxu0 0
    %8096 = vmatmul.mubr.bf16.gmra.mxu0 %v2976
    %v8097 = vpop.f32.mrf.mxu0
    %v8098 = vadd.f32 %v7995, %v8097
    %v8099 = vpop.f32.mrf.mxu0
    %v8100 = vadd.f32 %v7997, %v8099
    %v8101 = vpop.f32.mrf.mxu0
    %v8102 = vadd.f32 %v7999, %v8101
    %v8103 = vpop.f32.mrf.mxu0
    %v8104 = vadd.f32 %v8001, %v8103
    %8105 = vmatprep.mubr.bf16.mxu0 0
    %8106 = vmatmul.mubr.bf16.gmra.mxu0 %v2979
    %v8107 = vpop.f32.mrf.mxu0
    %v8108 = vadd.f32 %v8005, %v8107
    %v8109 = vpop.f32.mrf.mxu0
    %v8110 = vadd.f32 %v8007, %v8109
    %v8111 = vpop.f32.mrf.mxu0
    %v8112 = vadd.f32 %v8009, %v8111
    %v8113 = vpop.f32.mrf.mxu0
    %v8114 = vadd.f32 %v8011, %v8113
    %8115 = vmatprep.mubr.bf16.mxu0 0
    %8116 = vmatmul.mubr.bf16.gmra.mxu0 %v2982
    %v8117 = vpop.f32.mrf.mxu0
    %v8118 = vadd.f32 %v8015, %v8117
    %v8119 = vpop.f32.mrf.mxu0
    %v8120 = vadd.f32 %v8017, %v8119
    %v8121 = vpop.f32.mrf.mxu0
    %v8122 = vadd.f32 %v8019, %v8121
    %v8123 = vpop.f32.mrf.mxu0
    %v8124 = vadd.f32 %v8021, %v8123
    %8125 = vmatprep.mubr.bf16.mxu0 0
    %8126 = vmatmul.mubr.bf16.gmra.mxu0 %v2985
    %v8127 = vpop.f32.mrf.mxu0
    %v8128 = vadd.f32 %v8025, %v8127
    %v8129 = vpop.f32.mrf.mxu0
    %v8130 = vadd.f32 %v8027, %v8129
    %v8131 = vpop.f32.mrf.mxu0
    %v8132 = vadd.f32 %v8029, %v8131
    %v8133 = vpop.f32.mrf.mxu0
    %v8134 = vadd.f32 %v8031, %v8133
    %8135 = vdwg.mxu0
    %v8136 = vadd.f32 %v8068, %v8070
    %v8137 = vadd.f32 %v8136, %v8072
    %v8138 = vadd.f32 %v8137, %v8074
    %v8139 = vadd.f32 %v8138, %v8078
    %v8140 = vadd.f32 %v8139, %v8080
    %v8141 = vadd.f32 %v8140, %v8082
    %v8142 = vadd.f32 %v8141, %v8084
    %v8143 = vadd.f32 %v8142, %v8088
    %v8144 = vadd.f32 %v8143, %v8090
    %v8145 = vadd.f32 %v8144, %v8092
    %v8146 = vadd.f32 %v8145, %v8094
    %v8147 = vadd.f32 %v8146, %v8098
    %v8148 = vadd.f32 %v8147, %v8100
    %8149 = vadd.xlane.f32.xlu0 %v8148
    %v8150 = vpop.xlane.xlu0 %8149
    %v8151 = vrot.slane %v8150, 4
    %v8152 = vadd.f32 %v8150, %v8151
    %v8153 = vrot.slane %v8152, 2
    %v8154 = vadd.f32 %v8152, %v8153
    %v8155 = vrot.slane %v8154, 1
    %v8156 = vadd.f32 %v8154, %v8155
    %s8157 = vtos %v8156
    %v8158 = vstv %s8157
    %v8159 = vmul.f32 %v8158, 0.00013950893
    %v8160 = vmul.f32 %v8068, %v8068
    %v8161 = vmul.f32 %v8070, %v8070
    %v8162 = vmul.f32 %v8072, %v8072
    %v8163 = vmul.f32 %v8074, %v8074
    %v8164 = vmul.f32 %v8078, %v8078
    %v8165 = vmul.f32 %v8080, %v8080
    %v8166 = vmul.f32 %v8082, %v8082
    %v8167 = vmul.f32 %v8084, %v8084
    %v8168 = vmul.f32 %v8088, %v8088
    %v8169 = vmul.f32 %v8090, %v8090
    %v8170 = vmul.f32 %v8092, %v8092
    %v8171 = vmul.f32 %v8094, %v8094
    %v8172 = vmul.f32 %v8098, %v8098
    %v8173 = vmul.f32 %v8100, %v8100
    %v8174 = vadd.f32 %v8160, %v8161
    %v8175 = vadd.f32 %v8174, %v8162
    %v8176 = vadd.f32 %v8175, %v8163
    %v8177 = vadd.f32 %v8176, %v8164
    %v8178 = vadd.f32 %v8177, %v8165
    %v8179 = vadd.f32 %v8178, %v8166
    %v8180 = vadd.f32 %v8179, %v8167
    %v8181 = vadd.f32 %v8180, %v8168
    %v8182 = vadd.f32 %v8181, %v8169
    %v8183 = vadd.f32 %v8182, %v8170
    %v8184 = vadd.f32 %v8183, %v8171
    %v8185 = vadd.f32 %v8184, %v8172
    %v8186 = vadd.f32 %v8185, %v8173
    %8187 = vadd.xlane.f32.xlu0 %v8186
    %v8188 = vpop.xlane.xlu0 %8187
    %v8189 = vrot.slane %v8188, 4
    %v8190 = vadd.f32 %v8188, %v8189
    %v8191 = vrot.slane %v8190, 2
    %v8192 = vadd.f32 %v8190, %v8191
    %v8193 = vrot.slane %v8192, 1
    %v8194 = vadd.f32 %v8192, %v8193
    %s8195 = vtos %v8194
    %v8196 = vstv %s8195
    %v8197 = vmul.f32 %v8196, 0.00013950893
    %v8198 = vmul.f32 %v8159, %v8159
    %v8199 = vsub.f32 %v8197, %v8198
    %v8200 = vsub.f32 %v8068, %v8159
    %v8201 = vsub.f32 %v8070, %v8159
    %v8202 = vsub.f32 %v8072, %v8159
    %v8203 = vsub.f32 %v8074, %v8159
    %v8204 = vsub.f32 %v8078, %v8159
    %v8205 = vsub.f32 %v8080, %v8159
    %v8206 = vsub.f32 %v8082, %v8159
    %v8207 = vsub.f32 %v8084, %v8159
    %v8208 = vsub.f32 %v8088, %v8159
    %v8209 = vsub.f32 %v8090, %v8159
    %v8210 = vsub.f32 %v8092, %v8159
    %v8211 = vsub.f32 %v8094, %v8159
    %v8212 = vsub.f32 %v8098, %v8159
    %v8213 = vsub.f32 %v8100, %v8159
    %v8214 = vadd.f32 %v8199, 1e-05
    %v8215 = vrsqrt.pop %v8214
    %v8216 = vmul.f32 %v8200, %v8215
    %v8217 = vmul.f32 %v8201, %v8215
    %v8218 = vmul.f32 %v8202, %v8215
    %v8219 = vmul.f32 %v8203, %v8215
    %v8220 = vmul.f32 %v8204, %v8215
    %v8221 = vmul.f32 %v8205, %v8215
    %v8222 = vmul.f32 %v8206, %v8215
    %v8223 = vmul.f32 %v8207, %v8215
    %v8224 = vmul.f32 %v8208, %v8215
    %v8225 = vmul.f32 %v8209, %v8215
    %v8226 = vmul.f32 %v8210, %v8215
    %v8227 = vmul.f32 %v8211, %v8215
    %v8228 = vmul.f32 %v8212, %v8215
    %v8229 = vmul.f32 %v8213, %v8215
    %v8230 = vmul.f32 %v8216, %v163
    %v8231 = vmul.f32 %v8217, %v164
    %v8232 = vmul.f32 %v8218, %v165
    %v8233 = vmul.f32 %v8219, %v166
    %v8234 = vmul.f32 %v8220, %v167
    %v8235 = vmul.f32 %v8221, %v168
    %v8236 = vmul.f32 %v8222, %v169
    %v8237 = vmul.f32 %v8223, %v170
    %v8238 = vmul.f32 %v8224, %v171
    %v8239 = vmul.f32 %v8225, %v172
    %v8240 = vmul.f32 %v8226, %v173
    %v8241 = vmul.f32 %v8227, %v174
    %v8242 = vmul.f32 %v8228, %v175
    %v8243 = vmul.f32 %v8229, %v176
    %v8244 = vadd.f32 %v8230, %v193
    %v8245 = vadd.f32 %v8231, %v194
    %v8246 = vadd.f32 %v8232, %v195
    %v8247 = vadd.f32 %v8233, %v196
    %v8248 = vadd.f32 %v8234, %v197
    %v8249 = vadd.f32 %v8235, %v198
    %v8250 = vadd.f32 %v8236, %v199
    %v8251 = vadd.f32 %v8237, %v200
    %v8252 = vadd.f32 %v8238, %v201
    %v8253 = vadd.f32 %v8239, %v202
    %v8254 = vadd.f32 %v8240, %v203
    %v8255 = vadd.f32 %v8241, %v204
    %v8256 = vadd.f32 %v8242, %v205
    %v8257 = vadd.f32 %v8243, %v206
    %v8258 = vadd.f32 %v8102, %v8104
    %v8259 = vadd.f32 %v8258, %v8108
    %v8260 = vadd.f32 %v8259, %v8110
    %v8261 = vadd.f32 %v8260, %v8112
    %v8262 = vadd.f32 %v8261, %v8114
    %v8263 = vadd.f32 %v8262, %v8118
    %v8264 = vadd.f32 %v8263, %v8120
    %8265 = vadd.xlane.f32.xlu0 %v8264
    %v8266 = vpop.xlane.xlu0 %8265
    %v8267 = vrot.slane %v8266, 4
    %v8268 = vadd.f32 %v8266, %v8267
    %v8269 = vrot.slane %v8268, 2
    %v8270 = vadd.f32 %v8268, %v8269
    %v8271 = vrot.slane %v8270, 1
    %v8272 = vadd.f32 %v8270, %v8271
    %s8273 = vtos %v8272
    %v8274 = vstv %s8273
    %v8275 = vmul.f32 %v8274, 0.00024414063
    %v8276 = vmul.f32 %v8102, %v8102
    %v8277 = vmul.f32 %v8104, %v8104
    %v8278 = vmul.f32 %v8108, %v8108
    %v8279 = vmul.f32 %v8110, %v8110
    %v8280 = vmul.f32 %v8112, %v8112
    %v8281 = vmul.f32 %v8114, %v8114
    %v8282 = vmul.f32 %v8118, %v8118
    %v8283 = vmul.f32 %v8120, %v8120
    %v8284 = vadd.f32 %v8276, %v8277
    %v8285 = vadd.f32 %v8284, %v8278
    %v8286 = vadd.f32 %v8285, %v8279
    %v8287 = vadd.f32 %v8286, %v8280
    %v8288 = vadd.f32 %v8287, %v8281
    %v8289 = vadd.f32 %v8288, %v8282
    %v8290 = vadd.f32 %v8289, %v8283
    %8291 = vadd.xlane.f32.xlu0 %v8290
    %v8292 = vpop.xlane.xlu0 %8291
    %v8293 = vrot.slane %v8292, 4
    %v8294 = vadd.f32 %v8292, %v8293
    %v8295 = vrot.slane %v8294, 2
    %v8296 = vadd.f32 %v8294, %v8295
    %v8297 = vrot.slane %v8296, 1
    %v8298 = vadd.f32 %v8296, %v8297
    %s8299 = vtos %v8298
    %v8300 = vstv %s8299
    %v8301 = vmul.f32 %v8300, 0.00024414063
    %v8302 = vmul.f32 %v8275, %v8275
    %v8303 = vsub.f32 %v8301, %v8302
    %v8304 = vsub.f32 %v8102, %v8275
    %v8305 = vsub.f32 %v8104, %v8275
    %v8306 = vsub.f32 %v8108, %v8275
    %v8307 = vsub.f32 %v8110, %v8275
    %v8308 = vsub.f32 %v8112, %v8275
    %v8309 = vsub.f32 %v8114, %v8275
    %v8310 = vsub.f32 %v8118, %v8275
    %v8311 = vsub.f32 %v8120, %v8275
    %v8312 = vadd.f32 %v8303, 1e-05
    %v8313 = vrsqrt.pop %v8312
    %v8314 = vmul.f32 %v8304, %v8313
    %v8315 = vmul.f32 %v8305, %v8313
    %v8316 = vmul.f32 %v8306, %v8313
    %v8317 = vmul.f32 %v8307, %v8313
    %v8318 = vmul.f32 %v8308, %v8313
    %v8319 = vmul.f32 %v8309, %v8313
    %v8320 = vmul.f32 %v8310, %v8313
    %v8321 = vmul.f32 %v8311, %v8313
    %v8322 = vmul.f32 %v8314, %v177
    %v8323 = vmul.f32 %v8315, %v178
    %v8324 = vmul.f32 %v8316, %v179
    %v8325 = vmul.f32 %v8317, %v180
    %v8326 = vmul.f32 %v8318, %v181
    %v8327 = vmul.f32 %v8319, %v182
    %v8328 = vmul.f32 %v8320, %v183
    %v8329 = vmul.f32 %v8321, %v184
    %v8330 = vadd.f32 %v8322, %v207
    %v8331 = vadd.f32 %v8323, %v208
    %v8332 = vadd.f32 %v8324, %v209
    %v8333 = vadd.f32 %v8325, %v210
    %v8334 = vadd.f32 %v8326, %v211
    %v8335 = vadd.f32 %v8327, %v212
    %v8336 = vadd.f32 %v8328, %v213
    %v8337 = vadd.f32 %v8329, %v214
    %v8338 = vadd.f32 %v8122, %v8124
    %v8339 = vadd.f32 %v8338, %v8128
    %v8340 = vadd.f32 %v8339, %v8130
    %v8341 = vadd.f32 %v8340, %v8132
    %v8342 = vadd.f32 %v8341, %v8134
    %8343 = vadd.xlane.f32.xlu0 %v8342
    %v8344 = vpop.xlane.xlu0 %8343
    %v8345 = vrot.slane %v8344, 4
    %v8346 = vadd.f32 %v8344, %v8345
    %v8347 = vrot.slane %v8346, 2
    %v8348 = vadd.f32 %v8346, %v8347
    %v8349 = vrot.slane %v8348, 1
    %v8350 = vadd.f32 %v8348, %v8349
    %s8351 = vtos %v8350
    %v8352 = vstv %s8351
    %v8353 = vmul.f32 %v8352, 0.00032552084
    %v8354 = vmul.f32 %v8122, %v8122
    %v8355 = vmul.f32 %v8124, %v8124
    %v8356 = vmul.f32 %v8128, %v8128
    %v8357 = vmul.f32 %v8130, %v8130
    %v8358 = vmul.f32 %v8132, %v8132
    %v8359 = vmul.f32 %v8134, %v8134
    %v8360 = vadd.f32 %v8354, %v8355
    %v8361 = vadd.f32 %v8360, %v8356
    %v8362 = vadd.f32 %v8361, %v8357
    %v8363 = vadd.f32 %v8362, %v8358
    %v8364 = vadd.f32 %v8363, %v8359
    %8365 = vadd.xlane.f32.xlu0 %v8364
    %v8366 = vpop.xlane.xlu0 %8365
    %v8367 = vrot.slane %v8366, 4
    %v8368 = vadd.f32 %v8366, %v8367
    %v8369 = vrot.slane %v8368, 2
    %v8370 = vadd.f32 %v8368, %v8369
    %v8371 = vrot.slane %v8370, 1
    %v8372 = vadd.f32 %v8370, %v8371
    %s8373 = vtos %v8372
    %v8374 = vstv %s8373
    %v8375 = vmul.f32 %v8374, 0.00032552084
    %v8376 = vmul.f32 %v8353, %v8353
    %v8377 = vsub.f32 %v8375, %v8376
    %v8378 = vsub.f32 %v8122, %v8353
    %v8379 = vsub.f32 %v8124, %v8353
    %v8380 = vsub.f32 %v8128, %v8353
    %v8381 = vsub.f32 %v8130, %v8353
    %v8382 = vsub.f32 %v8132, %v8353
    %v8383 = vsub.f32 %v8134, %v8353
    %v8384 = vadd.f32 %v8377, 1e-05
    %v8385 = vrsqrt.pop %v8384
    %v8386 = vmul.f32 %v8378, %v8385
    %v8387 = vmul.f32 %v8379, %v8385
    %v8388 = vmul.f32 %v8380, %v8385
    %v8389 = vmul.f32 %v8381, %v8385
    %v8390 = vmul.f32 %v8382, %v8385
    %v8391 = vmul.f32 %v8383, %v8385
    %v8392 = vmul.f32 %v8386, %v185
    %v8393 = vmul.f32 %v8387, %v186
    %v8394 = vmul.f32 %v8388, %v187
    %v8395 = vmul.f32 %v8389, %v188
    %v8396 = vmul.f32 %v8390, %v189
    %v8397 = vmul.f32 %v8391, %v190
    %v8398 = vadd.f32 %v8392, %v215
    %v8399 = vadd.f32 %v8393, %v216
    %v8400 = vadd.f32 %v8394, %v217
    %v8401 = vadd.f32 %v8395, %v218
    %v8402 = vadd.f32 %v8396, %v219
    %v8403 = vadd.f32 %v8397, %v220
    %v8404 = vadd.f32 %v8256, %v8336
    %v8405 = vadd.f32 %v8257, %v8337
    %v8406 = vadd.f32 %v8244, %v8330
    %v8407 = vadd.f32 %v8245, %v8331
    %v8408 = vxor.u32 %v8406, 2147483648
    %v8409 = vxor.u32 %v8407, 2147483648
    %v8410 = vmul.f32 %v8408, 1.442695
    %v8411 = vpow.pop %v8410
    %v8412 = vmul.f32 %v8409, 1.442695
    %v8413 = vpow.pop %v8412
    %v8414 = vadd.f32 %v8411, 1.0
    %v8415 = vadd.f32 %v8413, 1.0
    %v8416 = vrcp.pop %v8414
    %v8417 = vmul.f32 1.0, %v8416
    %v8418 = vrcp.pop %v8415
    %v8419 = vmul.f32 1.0, %v8418
    %v8420 = vadd.f32 %v8246, %v8332
    %v8421 = vadd.f32 %v8247, %v8333
    %v8422 = vadd.f32 %v8420, 1.0
    %v8423 = vadd.f32 %v8421, 1.0
    %v8424 = vxor.u32 %v8422, 2147483648
    %v8425 = vxor.u32 %v8423, 2147483648
    %v8426 = vmul.f32 %v8424, 1.442695
    %v8427 = vpow.pop %v8426
    %v8428 = vmul.f32 %v8425, 1.442695
    %v8429 = vpow.pop %v8428
    %v8430 = vadd.f32 %v8427, 1.0
    %v8431 = vadd.f32 %v8429, 1.0
    %v8432 = vrcp.pop %v8430
    %v8433 = vmul.f32 1.0, %v8432
    %v8434 = vrcp.pop %v8431
    %v8435 = vmul.f32 1.0, %v8434
    %v8436 = vadd.f32 %v8248, %v8334
    %v8437 = vadd.f32 %v8249, %v8335
    %v8438 = vtanh.pop %v8436
    %v8439 = vtanh.pop %v8437
    %v8444 = vrot.slane %v5280, 4
    %v8445 = vrot.slane %v5282, 4
    %v8446 = vsel %vm3707, %v8444, %v8445
    %v8447 = vrot.slane %v5281, 4
    %v8448 = vrot.slane %v5283, 4
    %v8449 = vsel %vm3707, %v8447, %v8448
    %v8452 = vmul.f32 %v8433, %v8446
    %v8453 = vmul.f32 %v8435, %v8449
    %v8454 = vmul.f32 %v8417, %v8438
    %v8455 = vmul.f32 %v8419, %v8439
    %v8456 = vadd.f32 %v8452, %v8454
    %v8457 = vadd.f32 %v8453, %v8455
    %s8458 = scalar_lea.vmem [#allocation13], 16
    %8459 = vst [vmem:[%s8458] sm:$0xff] %v8456
    %8460 = vst [vmem:[%s8458 + $0x8] sm:$0xff] %v8457
    %v8461 = vadd.f32 %v8250, %v8398
    %v8462 = vadd.f32 %v8251, %v8399
    %v8463 = vxor.u32 %v8461, 2147483648
    %v8464 = vxor.u32 %v8462, 2147483648
    %v8465 = vmul.f32 %v8463, 1.442695
    %v8466 = vpow.pop %v8465
    %v8467 = vmul.f32 %v8464, 1.442695
    %v8468 = vpow.pop %v8467
    %v8469 = vadd.f32 %v8466, 1.0
    %v8470 = vadd.f32 %v8468, 1.0
    %v8471 = vrcp.pop %v8469
    %v8472 = vmul.f32 1.0, %v8471
    %v8473 = vrcp.pop %v8470
    %v8474 = vmul.f32 1.0, %v8473
    %v8475 = vadd.f32 %v8252, %v8400
    %v8476 = vadd.f32 %v8253, %v8401
    %v8477 = vadd.f32 %v8475, 1.0
    %v8478 = vadd.f32 %v8476, 1.0
    %v8479 = vxor.u32 %v8477, 2147483648
    %v8480 = vxor.u32 %v8478, 2147483648
    %v8481 = vmul.f32 %v8479, 1.442695
    %v8482 = vpow.pop %v8481
    %v8483 = vmul.f32 %v8480, 1.442695
    %v8484 = vpow.pop %v8483
    %v8485 = vadd.f32 %v8482, 1.0
    %v8486 = vadd.f32 %v8484, 1.0
    %v8487 = vrcp.pop %v8485
    %v8488 = vmul.f32 1.0, %v8487
    %v8489 = vrcp.pop %v8486
    %v8490 = vmul.f32 1.0, %v8489
    %v8491 = vadd.f32 %v8254, %v8402
    %v8492 = vadd.f32 %v8255, %v8403
    %v8493 = vtanh.pop %v8491
    %v8494 = vtanh.pop %v8492
    %v8497 = vrot.slane %v5278, 4
    %v8498 = vsel %vm3707, %v8497, %v8444
    %v8499 = vrot.slane %v5279, 4
    %v8500 = vsel %vm3707, %v8499, %v8447
    %v8503 = vmul.f32 %v8488, %v8498
    %v8504 = vmul.f32 %v8490, %v8500
    %v8505 = vmul.f32 %v8472, %v8493
    %v8506 = vmul.f32 %v8474, %v8494
    %v8507 = vadd.f32 %v8503, %v8505
    %v8508 = vadd.f32 %v8504, %v8506
    %s8509 = scalar_lea.vmem [#allocation15], 16
    %8510 = vst [vmem:[%s8509] sm:$0xff] %v8507
    %8511 = vst [vmem:[%s8509 + $0x8] sm:$0xff] %v8508
    %8512 = vrot.lane.b32.xlu0 %v8456, 34
    %v8513 = vpop.permute.xlu0 %8512
    %8514 = vrot.lane.b32.xlu0 %v8507, 34
    %v8515 = vpop.permute.xlu0 %8514
    %8516 = vrot.lane.b32.xlu0 %v8457, 34
    %v8517 = vpop.permute.xlu0 %8516
    %8518 = vrot.lane.b32.xlu0 %v8508, 34
    %v8519 = vpop.permute.xlu0 %8518
    %v8520 = vsel %vm249, %v8513, %v8517
    %v8521 = vsel %vm249, %v8515, %v8519
    %v8522 = vsel %vm249, %v8517, %v8513
    %v8523 = vsel %vm249, %v8519, %v8515
    %v8524 = vld [vmem:[#allocation3] ss:$8 sm:$0x3]
    %v8526 = vlaneseq
    %v8527 = vshrl.u32 %v8526, 7
    %v8528 = vsub.s32 0, %v8527
    %v8529 = vrot.slane %v8524, %v8528
    %v8530 = vlaneseq
    %v8531 = vshrl.u32 %v8530, 7
    %v8532 = vsub.s32 1, %v8531
    %v8533 = vrot.slane %v8524, %v8532
    %v8536 = vmul.f32 %v8522, %v8529
    %v8537 = vmul.f32 %v8520, %v8533
    %v8538 = vmul.f32 %v8523, %v8529
    %v8539 = vmul.f32 %v8521, %v8533
    %v8540 = vpack.c.bf16 %v8538, %v8536
    %v8541 = vpack.c.bf16 %v8539, %v8537
    %v8544 = vunpack.c.l.b16 %v8540
    %v8545 = vunpack.c.l.b16 %v8541
    %v8546 = vunpack.c.h.b16 %v8540
    %v8547 = vunpack.c.h.b16 %v8541
    %v8548 = vpack.c.b16 %v8545, %v8544
    %v8549 = vpack.c.b16 %v8547, %v8546
    %8552 = vst [vmem:[#allocation2] sm:$0xff] %v8548
    %8553 = vst [vmem:[#allocation2 + $0x8] sm:$0xff] %v8549
    %8554 = vrot.lane.b32.xlu0 %v8456, 33
    %v8555 = vpop.permute.xlu0 %8554
    %8556 = vrot.lane.b32.xlu0 %v8507, 33
    %v8557 = vpop.permute.xlu0 %8556
    %8558 = vrot.lane.b32.xlu0 %v8457, 33
    %v8559 = vpop.permute.xlu0 %8558
    %8560 = vrot.lane.b32.xlu0 %v8508, 33
    %v8561 = vpop.permute.xlu0 %8560
    %v8562 = vsel %vm322, %v8555, %v8559
    %v8563 = vsel %vm322, %v8557, %v8561
    %v8564 = vsel %vm322, %v8559, %v8555
    %v8565 = vsel %vm322, %v8561, %v8557
    %v8566 = vld [vmem:[%s331] ss:$8 sm:$0x3]
    %v8568 = vlaneseq
    %v8569 = vshrl.u32 %v8568, 7
    %v8570 = vsub.s32 0, %v8569
    %v8571 = vrot.slane %v8566, %v8570
    %v8572 = vlaneseq
    %v8573 = vshrl.u32 %v8572, 7
    %v8574 = vsub.s32 1, %v8573
    %v8575 = vrot.slane %v8566, %v8574
    %v8578 = vmul.f32 %v8564, %v8571
    %v8579 = vmul.f32 %v8562, %v8575
    %v8580 = vmul.f32 %v8565, %v8571
    %v8581 = vmul.f32 %v8563, %v8575
    %v8582 = vpack.c.bf16 %v8580, %v8578
    %v8583 = vpack.c.bf16 %v8581, %v8579
    %v8586 = vunpack.c.l.b16 %v8582
    %v8587 = vunpack.c.l.b16 %v8583
    %v8588 = vunpack.c.h.b16 %v8582
    %v8589 = vunpack.c.h.b16 %v8583
    %v8590 = vpack.c.b16 %v8587, %v8586
    %v8591 = vpack.c.b16 %v8589, %v8588
    %8594 = vst [vmem:[#allocation2 + $0x10] sm:$0xff] %v8590
    %8595 = vst [vmem:[#allocation2 + $0x18] sm:$0xff] %v8591
    %8596 = vrot.lane.b32.xlu0 %v8456, 32
    %v8597 = vpop.permute.xlu0 %8596
    %8598 = vrot.lane.b32.xlu0 %v8507, 32
    %v8599 = vpop.permute.xlu0 %8598
    %8600 = vrot.lane.b32.xlu0 %v8457, 32
    %v8601 = vpop.permute.xlu0 %8600
    %8602 = vrot.lane.b32.xlu0 %v8508, 32
    %v8603 = vpop.permute.xlu0 %8602
    %v8604 = vsel %vm396, %v8597, %v8601
    %v8605 = vsel %vm396, %v8599, %v8603
    %v8606 = vsel %vm396, %v8601, %v8597
    %v8607 = vsel %vm396, %v8603, %v8599
    %v8608 = vld [vmem:[%s405] ss:$8 sm:$0x3]
    %v8610 = vlaneseq
    %v8611 = vshrl.u32 %v8610, 7
    %v8612 = vsub.s32 0, %v8611
    %v8613 = vrot.slane %v8608, %v8612
    %v8614 = vlaneseq
    %v8615 = vshrl.u32 %v8614, 7
    %v8616 = vsub.s32 1, %v8615
    %v8617 = vrot.slane %v8608, %v8616
    %v8620 = vmul.f32 %v8606, %v8613
    %v8621 = vmul.f32 %v8604, %v8617
    %v8622 = vmul.f32 %v8607, %v8613
    %v8623 = vmul.f32 %v8605, %v8617
    %v8624 = vpack.c.bf16 %v8622, %v8620
    %v8625 = vpack.c.bf16 %v8623, %v8621
    %v8628 = vunpack.c.l.b16 %v8624
    %v8629 = vunpack.c.l.b16 %v8625
    %v8630 = vunpack.c.h.b16 %v8624
    %v8631 = vunpack.c.h.b16 %v8625
    %v8632 = vpack.c.b16 %v8629, %v8628
    %v8633 = vpack.c.b16 %v8631, %v8630
    %8636 = vst [vmem:[#allocation2 + $0x20] sm:$0xff] %v8632
    %8637 = vst [vmem:[#allocation2 + $0x28] sm:$0xff] %v8633
    %8638 = vrot.lane.b32.xlu0 %v8456, 31
    %v8639 = vpop.permute.xlu0 %8638
    %8640 = vrot.lane.b32.xlu0 %v8507, 31
    %v8641 = vpop.permute.xlu0 %8640
    %8642 = vrot.lane.b32.xlu0 %v8457, 31
    %v8643 = vpop.permute.xlu0 %8642
    %8644 = vrot.lane.b32.xlu0 %v8508, 31
    %v8645 = vpop.permute.xlu0 %8644
    %v8646 = vsel %vm470, %v8639, %v8643
    %v8647 = vsel %vm470, %v8641, %v8645
    %v8648 = vsel %vm470, %v8643, %v8639
    %v8649 = vsel %vm470, %v8645, %v8641
    %v8650 = vld [vmem:[%s479] ss:$8 sm:$0x3]
    %v8652 = vlaneseq
    %v8653 = vshrl.u32 %v8652, 7
    %v8654 = vsub.s32 0, %v8653
    %v8655 = vrot.slane %v8650, %v8654
    %v8656 = vlaneseq
    %v8657 = vshrl.u32 %v8656, 7
    %v8658 = vsub.s32 1, %v8657
    %v8659 = vrot.slane %v8650, %v8658
    %v8662 = vmul.f32 %v8648, %v8655
    %v8663 = vmul.f32 %v8646, %v8659
    %v8664 = vmul.f32 %v8649, %v8655
    %v8665 = vmul.f32 %v8647, %v8659
    %v8666 = vpack.c.bf16 %v8664, %v8662
    %v8667 = vpack.c.bf16 %v8665, %v8663
    %v8670 = vunpack.c.l.b16 %v8666
    %v8671 = vunpack.c.l.b16 %v8667
    %v8672 = vunpack.c.h.b16 %v8666
    %v8673 = vunpack.c.h.b16 %v8667
    %v8674 = vpack.c.b16 %v8671, %v8670
    %v8675 = vpack.c.b16 %v8673, %v8672
    %8678 = vst [vmem:[#allocation2 + $0x30] sm:$0xff] %v8674
    %8679 = vst [vmem:[#allocation2 + $0x38] sm:$0xff] %v8675
    %8680 = vrot.lane.b32.xlu0 %v8456, 30
    %v8681 = vpop.permute.xlu0 %8680
    %8682 = vrot.lane.b32.xlu0 %v8507, 30
    %v8683 = vpop.permute.xlu0 %8682
    %8684 = vrot.lane.b32.xlu0 %v8457, 30
    %v8685 = vpop.permute.xlu0 %8684
    %8686 = vrot.lane.b32.xlu0 %v8508, 30
    %v8687 = vpop.permute.xlu0 %8686
    %v8688 = vsel %vm544, %v8681, %v8685
    %v8689 = vsel %vm544, %v8683, %v8687
    %v8690 = vsel %vm544, %v8685, %v8681
    %v8691 = vsel %vm544, %v8687, %v8683
    %v8692 = vld [vmem:[%s553] ss:$8 sm:$0x3]
    %v8694 = vlaneseq
    %v8695 = vshrl.u32 %v8694, 7
    %v8696 = vsub.s32 0, %v8695
    %v8697 = vrot.slane %v8692, %v8696
    %v8698 = vlaneseq
    %v8699 = vshrl.u32 %v8698, 7
    %v8700 = vsub.s32 1, %v8699
    %v8701 = vrot.slane %v8692, %v8700
    %v8704 = vmul.f32 %v8690, %v8697
    %v8705 = vmul.f32 %v8688, %v8701
    %v8706 = vmul.f32 %v8691, %v8697
    %v8707 = vmul.f32 %v8689, %v8701
    %v8708 = vpack.c.bf16 %v8706, %v8704
    %v8709 = vpack.c.bf16 %v8707, %v8705
    %v8712 = vunpack.c.l.b16 %v8708
    %v8713 = vunpack.c.l.b16 %v8709
    %v8714 = vunpack.c.h.b16 %v8708
    %v8715 = vunpack.c.h.b16 %v8709
    %v8716 = vpack.c.b16 %v8713, %v8712
    %v8717 = vpack.c.b16 %v8715, %v8714
    %8720 = vst [vmem:[#allocation2 + $0x40] sm:$0xff] %v8716
    %8721 = vst [vmem:[#allocation2 + $0x48] sm:$0xff] %v8717
    %8722 = vrot.lane.b32.xlu0 %v8456, 18
    %v8723 = vpop.permute.xlu0 %8722
    %8724 = vrot.lane.b32.xlu0 %v8507, 18
    %v8725 = vpop.permute.xlu0 %8724
    %8726 = vrot.lane.b32.xlu0 %v8457, 18
    %v8727 = vpop.permute.xlu0 %8726
    %8728 = vrot.lane.b32.xlu0 %v8508, 18
    %v8729 = vpop.permute.xlu0 %8728
    %v8730 = vsel %vm618, %v8723, %v8727
    %v8731 = vsel %vm618, %v8725, %v8729
    %v8732 = vsel %vm618, %v8727, %v8723
    %v8733 = vsel %vm618, %v8729, %v8725
    %v8734 = vld [vmem:[%s627] ss:$8 sm:$0x3]
    %v8736 = vlaneseq
    %v8737 = vshrl.u32 %v8736, 7
    %v8738 = vsub.s32 0, %v8737
    %v8739 = vrot.slane %v8734, %v8738
    %v8740 = vlaneseq
    %v8741 = vshrl.u32 %v8740, 7
    %v8742 = vsub.s32 1, %v8741
    %v8743 = vrot.slane %v8734, %v8742
    %v8746 = vmul.f32 %v8732, %v8739
    %v8747 = vmul.f32 %v8730, %v8743
    %v8748 = vmul.f32 %v8733, %v8739
    %v8749 = vmul.f32 %v8731, %v8743
    %v8750 = vpack.c.bf16 %v8748, %v8746
    %v8751 = vpack.c.bf16 %v8749, %v8747
    %v8754 = vunpack.c.l.b16 %v8750
    %v8755 = vunpack.c.l.b16 %v8751
    %v8756 = vunpack.c.h.b16 %v8750
    %v8757 = vunpack.c.h.b16 %v8751
    %v8758 = vpack.c.b16 %v8755, %v8754
    %v8759 = vpack.c.b16 %v8757, %v8756
    %8762 = vst [vmem:[#allocation2 + $0x50] sm:$0xff] %v8758
    %8763 = vst [vmem:[#allocation2 + $0x58] sm:$0xff] %v8759
    %8764 = vrot.lane.b32.xlu0 %v8456, 17
    %v8765 = vpop.permute.xlu0 %8764
    %8766 = vrot.lane.b32.xlu0 %v8507, 17
    %v8767 = vpop.permute.xlu0 %8766
    %8768 = vrot.lane.b32.xlu0 %v8457, 17
    %v8769 = vpop.permute.xlu0 %8768
    %8770 = vrot.lane.b32.xlu0 %v8508, 17
    %v8771 = vpop.permute.xlu0 %8770
    %v8772 = vsel %vm692, %v8765, %v8769
    %v8773 = vsel %vm692, %v8767, %v8771
    %v8774 = vsel %vm692, %v8769, %v8765
    %v8775 = vsel %vm692, %v8771, %v8767
    %v8776 = vld [vmem:[%s701] ss:$8 sm:$0x3]
    %v8778 = vlaneseq
    %v8779 = vshrl.u32 %v8778, 7
    %v8780 = vsub.s32 0, %v8779
    %v8781 = vrot.slane %v8776, %v8780
    %v8782 = vlaneseq
    %v8783 = vshrl.u32 %v8782, 7
    %v8784 = vsub.s32 1, %v8783
    %v8785 = vrot.slane %v8776, %v8784
    %v8788 = vmul.f32 %v8774, %v8781
    %v8789 = vmul.f32 %v8772, %v8785
    %v8790 = vmul.f32 %v8775, %v8781
    %v8791 = vmul.f32 %v8773, %v8785
    %v8792 = vpack.c.bf16 %v8790, %v8788
    %v8793 = vpack.c.bf16 %v8791, %v8789
    %v8796 = vunpack.c.l.b16 %v8792
    %v8797 = vunpack.c.l.b16 %v8793
    %v8798 = vunpack.c.h.b16 %v8792
    %v8799 = vunpack.c.h.b16 %v8793
    %v8800 = vpack.c.b16 %v8797, %v8796
    %v8801 = vpack.c.b16 %v8799, %v8798
    %8804 = vst [vmem:[#allocation2 + $0x60] sm:$0xff] %v8800
    %8805 = vst [vmem:[#allocation2 + $0x68] sm:$0xff] %v8801
    %8806 = vrot.lane.b32.xlu0 %v8456, 16
    %v8807 = vpop.permute.xlu0 %8806
    %8808 = vrot.lane.b32.xlu0 %v8507, 16
    %v8809 = vpop.permute.xlu0 %8808
    %8810 = vrot.lane.b32.xlu0 %v8457, 16
    %v8811 = vpop.permute.xlu0 %8810
    %8812 = vrot.lane.b32.xlu0 %v8508, 16
    %v8813 = vpop.permute.xlu0 %8812
    %v8814 = vsel %vm766, %v8807, %v8811
    %v8815 = vsel %vm766, %v8809, %v8813
    %v8816 = vsel %vm766, %v8811, %v8807
    %v8817 = vsel %vm766, %v8813, %v8809
    %v8818 = vld [vmem:[%s775] ss:$8 sm:$0x3]
    %v8820 = vlaneseq
    %v8821 = vshrl.u32 %v8820, 7
    %v8822 = vsub.s32 0, %v8821
    %v8823 = vrot.slane %v8818, %v8822
    %v8824 = vlaneseq
    %v8825 = vshrl.u32 %v8824, 7
    %v8826 = vsub.s32 1, %v8825
    %v8827 = vrot.slane %v8818, %v8826
    %v8830 = vmul.f32 %v8816, %v8823
    %v8831 = vmul.f32 %v8814, %v8827
    %v8832 = vmul.f32 %v8817, %v8823
    %v8833 = vmul.f32 %v8815, %v8827
    %v8834 = vpack.c.bf16 %v8832, %v8830
    %v8835 = vpack.c.bf16 %v8833, %v8831
    %v8838 = vunpack.c.l.b16 %v8834
    %v8839 = vunpack.c.l.b16 %v8835
    %v8840 = vunpack.c.h.b16 %v8834
    %v8841 = vunpack.c.h.b16 %v8835
    %v8842 = vpack.c.b16 %v8839, %v8838
    %v8843 = vpack.c.b16 %v8841, %v8840
    %8846 = vst [vmem:[#allocation2 + $0x70] sm:$0xff] %v8842
    %8847 = vst [vmem:[#allocation2 + $0x78] sm:$0xff] %v8843
    %8848 = vrot.lane.b32.xlu0 %v8456, 15
    %v8849 = vpop.permute.xlu0 %8848
    %8850 = vrot.lane.b32.xlu0 %v8507, 15
    %v8851 = vpop.permute.xlu0 %8850
    %8852 = vrot.lane.b32.xlu0 %v8457, 15
    %v8853 = vpop.permute.xlu0 %8852
    %8854 = vrot.lane.b32.xlu0 %v8508, 15
    %v8855 = vpop.permute.xlu0 %8854
    %v8856 = vsel %vm840, %v8849, %v8853
    %v8857 = vsel %vm840, %v8851, %v8855
    %v8858 = vsel %vm840, %v8853, %v8849
    %v8859 = vsel %vm840, %v8855, %v8851
    %v8860 = vld [vmem:[%s849] ss:$8 sm:$0x3]
    %v8862 = vlaneseq
    %v8863 = vshrl.u32 %v8862, 7
    %v8864 = vsub.s32 0, %v8863
    %v8865 = vrot.slane %v8860, %v8864
    %v8866 = vlaneseq
    %v8867 = vshrl.u32 %v8866, 7
    %v8868 = vsub.s32 1, %v8867
    %v8869 = vrot.slane %v8860, %v8868
    %v8872 = vmul.f32 %v8858, %v8865
    %v8873 = vmul.f32 %v8856, %v8869
    %v8874 = vmul.f32 %v8859, %v8865
    %v8875 = vmul.f32 %v8857, %v8869
    %v8876 = vpack.c.bf16 %v8874, %v8872
    %v8877 = vpack.c.bf16 %v8875, %v8873
    %v8880 = vunpack.c.l.b16 %v8876
    %v8881 = vunpack.c.l.b16 %v8877
    %v8882 = vunpack.c.h.b16 %v8876
    %v8883 = vunpack.c.h.b16 %v8877
    %v8884 = vpack.c.b16 %v8881, %v8880
    %v8885 = vpack.c.b16 %v8883, %v8882
    %8888 = vst [vmem:[#allocation2 + $0x80] sm:$0xff] %v8884
    %8889 = vst [vmem:[#allocation2 + $0x88] sm:$0xff] %v8885
    %8890 = vrot.lane.b32.xlu0 %v8456, 14
    %v8891 = vpop.permute.xlu0 %8890
    %8892 = vrot.lane.b32.xlu0 %v8507, 14
    %v8893 = vpop.permute.xlu0 %8892
    %8894 = vrot.lane.b32.xlu0 %v8457, 14
    %v8895 = vpop.permute.xlu0 %8894
    %8896 = vrot.lane.b32.xlu0 %v8508, 14
    %v8897 = vpop.permute.xlu0 %8896
    %v8898 = vsel %vm914, %v8891, %v8895
    %v8899 = vsel %vm914, %v8893, %v8897
    %v8900 = vsel %vm914, %v8895, %v8891
    %v8901 = vsel %vm914, %v8897, %v8893
    %v8902 = vld [vmem:[%s923] ss:$8 sm:$0x3]
    %v8904 = vlaneseq
    %v8905 = vshrl.u32 %v8904, 7
    %v8906 = vsub.s32 0, %v8905
    %v8907 = vrot.slane %v8902, %v8906
    %v8908 = vlaneseq
    %v8909 = vshrl.u32 %v8908, 7
    %v8910 = vsub.s32 1, %v8909
    %v8911 = vrot.slane %v8902, %v8910
    %v8914 = vmul.f32 %v8900, %v8907
    %v8915 = vmul.f32 %v8898, %v8911
    %v8916 = vmul.f32 %v8901, %v8907
    %v8917 = vmul.f32 %v8899, %v8911
    %v8918 = vpack.c.bf16 %v8916, %v8914
    %v8919 = vpack.c.bf16 %v8917, %v8915
    %v8922 = vunpack.c.l.b16 %v8918
    %v8923 = vunpack.c.l.b16 %v8919
    %v8924 = vunpack.c.h.b16 %v8918
    %v8925 = vunpack.c.h.b16 %v8919
    %v8926 = vpack.c.b16 %v8923, %v8922
    %v8927 = vpack.c.b16 %v8925, %v8924
    %8930 = vst [vmem:[#allocation2 + $0x90] sm:$0xff] %v8926
    %8931 = vst [vmem:[#allocation2 + $0x98] sm:$0xff] %v8927
    %8932 = vrot.lane.b32.xlu0 %v8456, 2
    %v8933 = vpop.permute.xlu0 %8932
    %8934 = vrot.lane.b32.xlu0 %v8507, 2
    %v8935 = vpop.permute.xlu0 %8934
    %8936 = vrot.lane.b32.xlu0 %v8457, 2
    %v8937 = vpop.permute.xlu0 %8936
    %8938 = vrot.lane.b32.xlu0 %v8508, 2
    %v8939 = vpop.permute.xlu0 %8938
    %v8940 = vsel %vm988, %v8933, %v8937
    %v8941 = vsel %vm988, %v8935, %v8939
    %v8942 = vsel %vm988, %v8937, %v8933
    %v8943 = vsel %vm988, %v8939, %v8935
    %v8944 = vld [vmem:[%s997] ss:$8 sm:$0x3]
    %v8946 = vlaneseq
    %v8947 = vshrl.u32 %v8946, 7
    %v8948 = vsub.s32 0, %v8947
    %v8949 = vrot.slane %v8944, %v8948
    %v8950 = vlaneseq
    %v8951 = vshrl.u32 %v8950, 7
    %v8952 = vsub.s32 1, %v8951
    %v8953 = vrot.slane %v8944, %v8952
    %v8956 = vmul.f32 %v8942, %v8949
    %v8957 = vmul.f32 %v8940, %v8953
    %v8958 = vmul.f32 %v8943, %v8949
    %v8959 = vmul.f32 %v8941, %v8953
    %v8960 = vpack.c.bf16 %v8958, %v8956
    %v8961 = vpack.c.bf16 %v8959, %v8957
    %v8964 = vunpack.c.l.b16 %v8960
    %v8965 = vunpack.c.l.b16 %v8961
    %v8966 = vunpack.c.h.b16 %v8960
    %v8967 = vunpack.c.h.b16 %v8961
    %v8968 = vpack.c.b16 %v8965, %v8964
    %v8969 = vpack.c.b16 %v8967, %v8966
    %8972 = vst [vmem:[#allocation2 + $0xa0] sm:$0xff] %v8968
    %8973 = vst [vmem:[#allocation2 + $0xa8] sm:$0xff] %v8969
    %8974 = vrot.lane.b32.xlu0 %v8456, 1
    %v8975 = vpop.permute.xlu0 %8974
    %8976 = vrot.lane.b32.xlu0 %v8507, 1
    %v8977 = vpop.permute.xlu0 %8976
    %8978 = vrot.lane.b32.xlu0 %v8457, 1
    %v8979 = vpop.permute.xlu0 %8978
    %8980 = vrot.lane.b32.xlu0 %v8508, 1
    %v8981 = vpop.permute.xlu0 %8980
    %v8982 = vsel %vm1062, %v8975, %v8979
    %v8983 = vsel %vm1062, %v8977, %v8981
    %v8984 = vsel %vm1062, %v8979, %v8975
    %v8985 = vsel %vm1062, %v8981, %v8977
    %v8986 = vld [vmem:[%s1071] ss:$8 sm:$0x3]
    %v8988 = vlaneseq
    %v8989 = vshrl.u32 %v8988, 7
    %v8990 = vsub.s32 0, %v8989
    %v8991 = vrot.slane %v8986, %v8990
    %v8992 = vlaneseq
    %v8993 = vshrl.u32 %v8992, 7
    %v8994 = vsub.s32 1, %v8993
    %v8995 = vrot.slane %v8986, %v8994
    %v8998 = vmul.f32 %v8984, %v8991
    %v8999 = vmul.f32 %v8982, %v8995
    %v9000 = vmul.f32 %v8985, %v8991
    %v9001 = vmul.f32 %v8983, %v8995
    %v9002 = vpack.c.bf16 %v9000, %v8998
    %v9003 = vpack.c.bf16 %v9001, %v8999
    %v9006 = vunpack.c.l.b16 %v9002
    %v9007 = vunpack.c.l.b16 %v9003
    %v9008 = vunpack.c.h.b16 %v9002
    %v9009 = vunpack.c.h.b16 %v9003
    %v9010 = vpack.c.b16 %v9007, %v9006
    %v9011 = vpack.c.b16 %v9009, %v9008
    %9014 = vst [vmem:[#allocation2 + $0xb0] sm:$0xff] %v9010
    %9015 = vst [vmem:[#allocation2 + $0xb8] sm:$0xff] %v9011
    %v9016 = vpack.c.bf16 %v8507, %v8456
    %v9017 = vpack.c.bf16 %v8508, %v8457
    %v9020 = vunpack.c.l.b16 %v9016
    %v9021 = vunpack.c.l.b16 %v9017
    %v9022 = vunpack.c.h.b16 %v9016
    %v9023 = vunpack.c.h.b16 %v9017
    %v9024 = vpack.c.b16 %v9021, %v9020
    %v9025 = vpack.c.b16 %v9023, %v9022
    %9028 = vst [vmem:[#allocation2 + $0xc0] sm:$0xff] %v9024
    %9029 = vst [vmem:[#allocation2 + $0xc8] sm:$0xff] %v9025
    %9030 = vrot.lane.b32.xlu0 %v8456, 127
    %v9031 = vpop.permute.xlu0 %9030
    %9032 = vrot.lane.b32.xlu0 %v8507, 127
    %v9033 = vpop.permute.xlu0 %9032
    %9034 = vrot.lane.b32.xlu0 %v8457, 127
    %v9035 = vpop.permute.xlu0 %9034
    %9036 = vrot.lane.b32.xlu0 %v8508, 127
    %v9037 = vpop.permute.xlu0 %9036
    %v9038 = vsel %vm1164, %v9031, %v9035
    %v9039 = vsel %vm1164, %v9033, %v9037
    %v9040 = vsel %vm1164, %v9035, %v9031
    %v9041 = vsel %vm1164, %v9037, %v9033
    %v9042 = vld [vmem:[%s1173] ss:$8 sm:$0x3]
    %v9044 = vlaneseq
    %v9045 = vshrl.u32 %v9044, 7
    %v9046 = vsub.s32 0, %v9045
    %v9047 = vrot.slane %v9042, %v9046
    %v9048 = vlaneseq
    %v9049 = vshrl.u32 %v9048, 7
    %v9050 = vsub.s32 1, %v9049
    %v9051 = vrot.slane %v9042, %v9050
    %v9054 = vmul.f32 %v9038, %v9047
    %v9055 = vmul.f32 %v9040, %v9051
    %v9056 = vmul.f32 %v9039, %v9047
    %v9057 = vmul.f32 %v9041, %v9051
    %v9058 = vpack.c.bf16 %v9056, %v9054
    %v9059 = vpack.c.bf16 %v9057, %v9055
    %v9062 = vunpack.c.l.b16 %v9058
    %v9063 = vunpack.c.l.b16 %v9059
    %v9064 = vunpack.c.h.b16 %v9058
    %v9065 = vunpack.c.h.b16 %v9059
    %v9066 = vpack.c.b16 %v9063, %v9062
    %v9067 = vpack.c.b16 %v9065, %v9064
    %9070 = vst [vmem:[#allocation2 + $0xd0] sm:$0xff] %v9066
    %9071 = vst [vmem:[#allocation2 + $0xd8] sm:$0xff] %v9067
    %9072 = vrot.lane.b32.xlu0 %v8456, 126
    %v9073 = vpop.permute.xlu0 %9072
    %9074 = vrot.lane.b32.xlu0 %v8507, 126
    %v9075 = vpop.permute.xlu0 %9074
    %9076 = vrot.lane.b32.xlu0 %v8457, 126
    %v9077 = vpop.permute.xlu0 %9076
    %9078 = vrot.lane.b32.xlu0 %v8508, 126
    %v9079 = vpop.permute.xlu0 %9078
    %v9080 = vsel %vm1238, %v9073, %v9077
    %v9081 = vsel %vm1238, %v9075, %v9079
    %v9082 = vsel %vm1238, %v9077, %v9073
    %v9083 = vsel %vm1238, %v9079, %v9075
    %v9084 = vld [vmem:[%s1247] ss:$8 sm:$0x3]
    %v9086 = vlaneseq
    %v9087 = vshrl.u32 %v9086, 7
    %v9088 = vsub.s32 0, %v9087
    %v9089 = vrot.slane %v9084, %v9088
    %v9090 = vlaneseq
    %v9091 = vshrl.u32 %v9090, 7
    %v9092 = vsub.s32 1, %v9091
    %v9093 = vrot.slane %v9084, %v9092
    %v9096 = vmul.f32 %v9080, %v9089
    %v9097 = vmul.f32 %v9082, %v9093
    %v9098 = vmul.f32 %v9081, %v9089
    %v9099 = vmul.f32 %v9083, %v9093
    %v9100 = vpack.c.bf16 %v9098, %v9096
    %v9101 = vpack.c.bf16 %v9099, %v9097
    %v9104 = vunpack.c.l.b16 %v9100
    %v9105 = vunpack.c.l.b16 %v9101
    %v9106 = vunpack.c.h.b16 %v9100
    %v9107 = vunpack.c.h.b16 %v9101
    %v9108 = vpack.c.b16 %v9105, %v9104
    %v9109 = vpack.c.b16 %v9107, %v9106
    %9112 = vst [vmem:[#allocation2 + $0xe0] sm:$0xff] %v9108
    %9113 = vst [vmem:[#allocation2 + $0xe8] sm:$0xff] %v9109
    %9114 = vrot.lane.b32.xlu0 %v8456, 114
    %v9115 = vpop.permute.xlu0 %9114
    %9116 = vrot.lane.b32.xlu0 %v8507, 114
    %v9117 = vpop.permute.xlu0 %9116
    %9118 = vrot.lane.b32.xlu0 %v8457, 114
    %v9119 = vpop.permute.xlu0 %9118
    %9120 = vrot.lane.b32.xlu0 %v8508, 114
    %v9121 = vpop.permute.xlu0 %9120
    %v9122 = vsel %vm1312, %v9115, %v9119
    %v9123 = vsel %vm1312, %v9117, %v9121
    %v9124 = vsel %vm1312, %v9119, %v9115
    %v9125 = vsel %vm1312, %v9121, %v9117
    %v9126 = vld [vmem:[%s1321] ss:$8 sm:$0x3]
    %v9128 = vlaneseq
    %v9129 = vshrl.u32 %v9128, 7
    %v9130 = vsub.s32 0, %v9129
    %v9131 = vrot.slane %v9126, %v9130
    %v9132 = vlaneseq
    %v9133 = vshrl.u32 %v9132, 7
    %v9134 = vsub.s32 1, %v9133
    %v9135 = vrot.slane %v9126, %v9134
    %v9138 = vmul.f32 %v9122, %v9131
    %v9139 = vmul.f32 %v9124, %v9135
    %v9140 = vmul.f32 %v9123, %v9131
    %v9141 = vmul.f32 %v9125, %v9135
    %v9142 = vpack.c.bf16 %v9140, %v9138
    %v9143 = vpack.c.bf16 %v9141, %v9139
    %v9146 = vunpack.c.l.b16 %v9142
    %v9147 = vunpack.c.l.b16 %v9143
    %v9148 = vunpack.c.h.b16 %v9142
    %v9149 = vunpack.c.h.b16 %v9143
    %v9150 = vpack.c.b16 %v9147, %v9146
    %v9151 = vpack.c.b16 %v9149, %v9148
    %9154 = vst [vmem:[#allocation2 + $0xf0] sm:$0xff] %v9150
    %9155 = vst [vmem:[#allocation2 + $0xf8] sm:$0xff] %v9151
    %9156 = vrot.lane.b32.xlu0 %v8456, 113
    %v9157 = vpop.permute.xlu0 %9156
    %9158 = vrot.lane.b32.xlu0 %v8507, 113
    %v9159 = vpop.permute.xlu0 %9158
    %9160 = vrot.lane.b32.xlu0 %v8457, 113
    %v9161 = vpop.permute.xlu0 %9160
    %9162 = vrot.lane.b32.xlu0 %v8508, 113
    %v9163 = vpop.permute.xlu0 %9162
    %v9164 = vsel %vm1386, %v9157, %v9161
    %v9165 = vsel %vm1386, %v9159, %v9163
    %v9166 = vsel %vm1386, %v9161, %v9157
    %v9167 = vsel %vm1386, %v9163, %v9159
    %v9168 = vld [vmem:[%s1395] ss:$8 sm:$0x3]
    %v9170 = vlaneseq
    %v9171 = vshrl.u32 %v9170, 7
    %v9172 = vsub.s32 0, %v9171
    %v9173 = vrot.slane %v9168, %v9172
    %v9174 = vlaneseq
    %v9175 = vshrl.u32 %v9174, 7
    %v9176 = vsub.s32 1, %v9175
    %v9177 = vrot.slane %v9168, %v9176
    %v9180 = vmul.f32 %v9164, %v9173
    %v9181 = vmul.f32 %v9166, %v9177
    %v9182 = vmul.f32 %v9165, %v9173
    %v9183 = vmul.f32 %v9167, %v9177
    %v9184 = vpack.c.bf16 %v9182, %v9180
    %v9185 = vpack.c.bf16 %v9183, %v9181
    %v9188 = vunpack.c.l.b16 %v9184
    %v9189 = vunpack.c.l.b16 %v9185
    %v9190 = vunpack.c.h.b16 %v9184
    %v9191 = vunpack.c.h.b16 %v9185
    %v9192 = vpack.c.b16 %v9189, %v9188
    %v9193 = vpack.c.b16 %v9191, %v9190
    %9196 = vst [vmem:[#allocation2 + $0x100] sm:$0xff] %v9192
    %9197 = vst [vmem:[#allocation2 + $0x108] sm:$0xff] %v9193
    %9198 = vrot.lane.b32.xlu0 %v8456, 112
    %v9199 = vpop.permute.xlu0 %9198
    %9200 = vrot.lane.b32.xlu0 %v8507, 112
    %v9201 = vpop.permute.xlu0 %9200
    %9202 = vrot.lane.b32.xlu0 %v8457, 112
    %v9203 = vpop.permute.xlu0 %9202
    %9204 = vrot.lane.b32.xlu0 %v8508, 112
    %v9205 = vpop.permute.xlu0 %9204
    %v9206 = vsel %vm1460, %v9199, %v9203
    %v9207 = vsel %vm1460, %v9201, %v9205
    %v9208 = vsel %vm1460, %v9203, %v9199
    %v9209 = vsel %vm1460, %v9205, %v9201
    %v9210 = vld [vmem:[%s1469] ss:$8 sm:$0x3]
    %v9212 = vlaneseq
    %v9213 = vshrl.u32 %v9212, 7
    %v9214 = vsub.s32 0, %v9213
    %v9215 = vrot.slane %v9210, %v9214
    %v9216 = vlaneseq
    %v9217 = vshrl.u32 %v9216, 7
    %v9218 = vsub.s32 1, %v9217
    %v9219 = vrot.slane %v9210, %v9218
    %v9222 = vmul.f32 %v9206, %v9215
    %v9223 = vmul.f32 %v9208, %v9219
    %v9224 = vmul.f32 %v9207, %v9215
    %v9225 = vmul.f32 %v9209, %v9219
    %v9226 = vpack.c.bf16 %v9224, %v9222
    %v9227 = vpack.c.bf16 %v9225, %v9223
    %v9230 = vunpack.c.l.b16 %v9226
    %v9231 = vunpack.c.l.b16 %v9227
    %v9232 = vunpack.c.h.b16 %v9226
    %v9233 = vunpack.c.h.b16 %v9227
    %v9234 = vpack.c.b16 %v9231, %v9230
    %v9235 = vpack.c.b16 %v9233, %v9232
    %9238 = vst [vmem:[#allocation2 + $0x110] sm:$0xff] %v9234
    %9239 = vst [vmem:[#allocation2 + $0x118] sm:$0xff] %v9235
    %9240 = vrot.lane.b32.xlu0 %v8456, 111
    %v9241 = vpop.permute.xlu0 %9240
    %9242 = vrot.lane.b32.xlu0 %v8507, 111
    %v9243 = vpop.permute.xlu0 %9242
    %9244 = vrot.lane.b32.xlu0 %v8457, 111
    %v9245 = vpop.permute.xlu0 %9244
    %9246 = vrot.lane.b32.xlu0 %v8508, 111
    %v9247 = vpop.permute.xlu0 %9246
    %v9248 = vsel %vm1534, %v9241, %v9245
    %v9249 = vsel %vm1534, %v9243, %v9247
    %v9250 = vsel %vm1534, %v9245, %v9241
    %v9251 = vsel %vm1534, %v9247, %v9243
    %v9252 = vld [vmem:[%s1543] ss:$8 sm:$0x3]
    %v9254 = vlaneseq
    %v9255 = vshrl.u32 %v9254, 7
    %v9256 = vsub.s32 0, %v9255
    %v9257 = vrot.slane %v9252, %v9256
    %v9258 = vlaneseq
    %v9259 = vshrl.u32 %v9258, 7
    %v9260 = vsub.s32 1, %v9259
    %v9261 = vrot.slane %v9252, %v9260
    %v9264 = vmul.f32 %v9248, %v9257
    %v9265 = vmul.f32 %v9250, %v9261
    %v9266 = vmul.f32 %v9249, %v9257
    %v9267 = vmul.f32 %v9251, %v9261
    %v9268 = vpack.c.bf16 %v9266, %v9264
    %v9269 = vpack.c.bf16 %v9267, %v9265
    %v9272 = vunpack.c.l.b16 %v9268
    %v9273 = vunpack.c.l.b16 %v9269
    %v9274 = vunpack.c.h.b16 %v9268
    %v9275 = vunpack.c.h.b16 %v9269
    %v9276 = vpack.c.b16 %v9273, %v9272
    %v9277 = vpack.c.b16 %v9275, %v9274
    %9280 = vst [vmem:[#allocation2 + $0x120] sm:$0xff] %v9276
    %9281 = vst [vmem:[#allocation2 + $0x128] sm:$0xff] %v9277
    %9282 = vrot.lane.b32.xlu0 %v8456, 110
    %v9283 = vpop.permute.xlu0 %9282
    %9284 = vrot.lane.b32.xlu0 %v8507, 110
    %v9285 = vpop.permute.xlu0 %9284
    %9286 = vrot.lane.b32.xlu0 %v8457, 110
    %v9287 = vpop.permute.xlu0 %9286
    %9288 = vrot.lane.b32.xlu0 %v8508, 110
    %v9289 = vpop.permute.xlu0 %9288
    %v9290 = vsel %vm1608, %v9283, %v9287
    %v9291 = vsel %vm1608, %v9285, %v9289
    %v9292 = vsel %vm1608, %v9287, %v9283
    %v9293 = vsel %vm1608, %v9289, %v9285
    %v9294 = vld [vmem:[%s1617] ss:$8 sm:$0x3]
    %v9296 = vlaneseq
    %v9297 = vshrl.u32 %v9296, 7
    %v9298 = vsub.s32 0, %v9297
    %v9299 = vrot.slane %v9294, %v9298
    %v9300 = vlaneseq
    %v9301 = vshrl.u32 %v9300, 7
    %v9302 = vsub.s32 1, %v9301
    %v9303 = vrot.slane %v9294, %v9302
    %v9306 = vmul.f32 %v9290, %v9299
    %v9307 = vmul.f32 %v9292, %v9303
    %v9308 = vmul.f32 %v9291, %v9299
    %v9309 = vmul.f32 %v9293, %v9303
    %v9310 = vpack.c.bf16 %v9308, %v9306
    %v9311 = vpack.c.bf16 %v9309, %v9307
    %v9314 = vunpack.c.l.b16 %v9310
    %v9315 = vunpack.c.l.b16 %v9311
    %v9316 = vunpack.c.h.b16 %v9310
    %v9317 = vunpack.c.h.b16 %v9311
    %v9318 = vpack.c.b16 %v9315, %v9314
    %v9319 = vpack.c.b16 %v9317, %v9316
    %9322 = vst [vmem:[#allocation2 + $0x130] sm:$0xff] %v9318
    %9323 = vst [vmem:[#allocation2 + $0x138] sm:$0xff] %v9319
    %9324 = vrot.lane.b32.xlu0 %v8456, 98
    %v9325 = vpop.permute.xlu0 %9324
    %9326 = vrot.lane.b32.xlu0 %v8507, 98
    %v9327 = vpop.permute.xlu0 %9326
    %9328 = vrot.lane.b32.xlu0 %v8457, 98
    %v9329 = vpop.permute.xlu0 %9328
    %9330 = vrot.lane.b32.xlu0 %v8508, 98
    %v9331 = vpop.permute.xlu0 %9330
    %v9332 = vsel %vm1682, %v9325, %v9329
    %v9333 = vsel %vm1682, %v9327, %v9331
    %v9334 = vsel %vm1682, %v9329, %v9325
    %v9335 = vsel %vm1682, %v9331, %v9327
    %v9336 = vld [vmem:[%s1691] ss:$8 sm:$0x3]
    %v9338 = vlaneseq
    %v9339 = vshrl.u32 %v9338, 7
    %v9340 = vsub.s32 0, %v9339
    %v9341 = vrot.slane %v9336, %v9340
    %v9342 = vlaneseq
    %v9343 = vshrl.u32 %v9342, 7
    %v9344 = vsub.s32 1, %v9343
    %v9345 = vrot.slane %v9336, %v9344
    %v9348 = vmul.f32 %v9332, %v9341
    %v9349 = vmul.f32 %v9334, %v9345
    %v9350 = vmul.f32 %v9333, %v9341
    %v9351 = vmul.f32 %v9335, %v9345
    %v9352 = vpack.c.bf16 %v9350, %v9348
    %v9353 = vpack.c.bf16 %v9351, %v9349
    %v9356 = vunpack.c.l.b16 %v9352
    %v9357 = vunpack.c.l.b16 %v9353
    %v9358 = vunpack.c.h.b16 %v9352
    %v9359 = vunpack.c.h.b16 %v9353
    %v9360 = vpack.c.b16 %v9357, %v9356
    %v9361 = vpack.c.b16 %v9359, %v9358
    %9364 = vst [vmem:[#allocation2 + $0x140] sm:$0xff] %v9360
    %9365 = vst [vmem:[#allocation2 + $0x148] sm:$0xff] %v9361
    %9366 = vrot.lane.b32.xlu0 %v8456, 97
    %v9367 = vpop.permute.xlu0 %9366
    %9368 = vrot.lane.b32.xlu0 %v8507, 97
    %v9369 = vpop.permute.xlu0 %9368
    %9370 = vrot.lane.b32.xlu0 %v8457, 97
    %v9371 = vpop.permute.xlu0 %9370
    %9372 = vrot.lane.b32.xlu0 %v8508, 97
    %v9373 = vpop.permute.xlu0 %9372
    %v9374 = vsel %vm1756, %v9367, %v9371
    %v9375 = vsel %vm1756, %v9369, %v9373
    %v9376 = vsel %vm1756, %v9371, %v9367
    %v9377 = vsel %vm1756, %v9373, %v9369
    %v9378 = vld [vmem:[%s1765] ss:$8 sm:$0x3]
    %v9380 = vlaneseq
    %v9381 = vshrl.u32 %v9380, 7
    %v9382 = vsub.s32 0, %v9381
    %v9383 = vrot.slane %v9378, %v9382
    %v9384 = vlaneseq
    %v9385 = vshrl.u32 %v9384, 7
    %v9386 = vsub.s32 1, %v9385
    %v9387 = vrot.slane %v9378, %v9386
    %v9390 = vmul.f32 %v9374, %v9383
    %v9391 = vmul.f32 %v9376, %v9387
    %v9392 = vmul.f32 %v9375, %v9383
    %v9393 = vmul.f32 %v9377, %v9387
    %v9394 = vpack.c.bf16 %v9392, %v9390
    %v9395 = vpack.c.bf16 %v9393, %v9391
    %v9398 = vunpack.c.l.b16 %v9394
    %v9399 = vunpack.c.l.b16 %v9395
    %v9400 = vunpack.c.h.b16 %v9394
    %v9401 = vunpack.c.h.b16 %v9395
    %v9402 = vpack.c.b16 %v9399, %v9398
    %v9403 = vpack.c.b16 %v9401, %v9400
    %9406 = vst [vmem:[#allocation2 + $0x150] sm:$0xff] %v9402
    %9407 = vst [vmem:[#allocation2 + $0x158] sm:$0xff] %v9403
    %9408 = vrot.lane.b32.xlu0 %v8456, 96
    %v9409 = vpop.permute.xlu0 %9408
    %9410 = vrot.lane.b32.xlu0 %v8507, 96
    %v9411 = vpop.permute.xlu0 %9410
    %9412 = vrot.lane.b32.xlu0 %v8457, 96
    %v9413 = vpop.permute.xlu0 %9412
    %9414 = vrot.lane.b32.xlu0 %v8508, 96
    %v9415 = vpop.permute.xlu0 %9414
    %v9416 = vsel %vm1830, %v9409, %v9413
    %v9417 = vsel %vm1830, %v9411, %v9415
    %v9418 = vsel %vm1830, %v9413, %v9409
    %v9419 = vsel %vm1830, %v9415, %v9411
    %v9420 = vld [vmem:[%s1839] ss:$8 sm:$0x3]
    %v9422 = vlaneseq
    %v9423 = vshrl.u32 %v9422, 7
    %v9424 = vsub.s32 0, %v9423
    %v9425 = vrot.slane %v9420, %v9424
    %v9426 = vlaneseq
    %v9427 = vshrl.u32 %v9426, 7
    %v9428 = vsub.s32 1, %v9427
    %v9429 = vrot.slane %v9420, %v9428
    %v9432 = vmul.f32 %v9416, %v9425
    %v9433 = vmul.f32 %v9418, %v9429
    %v9434 = vmul.f32 %v9417, %v9425
    %v9435 = vmul.f32 %v9419, %v9429
    %v9436 = vpack.c.bf16 %v9434, %v9432
    %v9437 = vpack.c.bf16 %v9435, %v9433
    %v9440 = vunpack.c.l.b16 %v9436
    %v9441 = vunpack.c.l.b16 %v9437
    %v9442 = vunpack.c.h.b16 %v9436
    %v9443 = vunpack.c.h.b16 %v9437
    %v9444 = vpack.c.b16 %v9441, %v9440
    %v9445 = vpack.c.b16 %v9443, %v9442
    %9448 = vst [vmem:[#allocation2 + $0x160] sm:$0xff] %v9444
    %9449 = vst [vmem:[#allocation2 + $0x168] sm:$0xff] %v9445
    %9450 = vrot.lane.b32.xlu0 %v8456, 95
    %v9451 = vpop.permute.xlu0 %9450
    %9452 = vrot.lane.b32.xlu0 %v8507, 95
    %v9453 = vpop.permute.xlu0 %9452
    %9454 = vrot.lane.b32.xlu0 %v8457, 95
    %v9455 = vpop.permute.xlu0 %9454
    %9456 = vrot.lane.b32.xlu0 %v8508, 95
    %v9457 = vpop.permute.xlu0 %9456
    %v9458 = vsel %vm1904, %v9451, %v9455
    %v9459 = vsel %vm1904, %v9453, %v9457
    %v9460 = vsel %vm1904, %v9455, %v9451
    %v9461 = vsel %vm1904, %v9457, %v9453
    %v9462 = vld [vmem:[%s1913] ss:$8 sm:$0x3]
    %v9464 = vlaneseq
    %v9465 = vshrl.u32 %v9464, 7
    %v9466 = vsub.s32 0, %v9465
    %v9467 = vrot.slane %v9462, %v9466
    %v9468 = vlaneseq
    %v9469 = vshrl.u32 %v9468, 7
    %v9470 = vsub.s32 1, %v9469
    %v9471 = vrot.slane %v9462, %v9470
    %v9474 = vmul.f32 %v9458, %v9467
    %v9475 = vmul.f32 %v9460, %v9471
    %v9476 = vmul.f32 %v9459, %v9467
    %v9477 = vmul.f32 %v9461, %v9471
    %v9478 = vpack.c.bf16 %v9476, %v9474
    %v9479 = vpack.c.bf16 %v9477, %v9475
    %v9482 = vunpack.c.l.b16 %v9478
    %v9483 = vunpack.c.l.b16 %v9479
    %v9484 = vunpack.c.h.b16 %v9478
    %v9485 = vunpack.c.h.b16 %v9479
    %v9486 = vpack.c.b16 %v9483, %v9482
    %v9487 = vpack.c.b16 %v9485, %v9484
    %9490 = vst [vmem:[#allocation2 + $0x170] sm:$0xff] %v9486
    %9491 = vst [vmem:[#allocation2 + $0x178] sm:$0xff] %v9487
    %9492 = vrot.lane.b32.xlu0 %v8456, 94
    %v9493 = vpop.permute.xlu0 %9492
    %9494 = vrot.lane.b32.xlu0 %v8507, 94
    %v9495 = vpop.permute.xlu0 %9494
    %9496 = vrot.lane.b32.xlu0 %v8457, 94
    %v9497 = vpop.permute.xlu0 %9496
    %9498 = vrot.lane.b32.xlu0 %v8508, 94
    %v9499 = vpop.permute.xlu0 %9498
    %v9500 = vsel %vm1978, %v9493, %v9497
    %v9501 = vsel %vm1978, %v9495, %v9499
    %v9502 = vsel %vm1978, %v9497, %v9493
    %v9503 = vsel %vm1978, %v9499, %v9495
    %v9504 = vld [vmem:[%s1987] ss:$8 sm:$0x3]
    %v9506 = vlaneseq
    %v9507 = vshrl.u32 %v9506, 7
    %v9508 = vsub.s32 0, %v9507
    %v9509 = vrot.slane %v9504, %v9508
    %v9510 = vlaneseq
    %v9511 = vshrl.u32 %v9510, 7
    %v9512 = vsub.s32 1, %v9511
    %v9513 = vrot.slane %v9504, %v9512
    %v9516 = vmul.f32 %v9500, %v9509
    %v9517 = vmul.f32 %v9502, %v9513
    %v9518 = vmul.f32 %v9501, %v9509
    %v9519 = vmul.f32 %v9503, %v9513
    %v9520 = vpack.c.bf16 %v9518, %v9516
    %v9521 = vpack.c.bf16 %v9519, %v9517
    %v9524 = vunpack.c.l.b16 %v9520
    %v9525 = vunpack.c.l.b16 %v9521
    %v9526 = vunpack.c.h.b16 %v9520
    %v9527 = vunpack.c.h.b16 %v9521
    %v9528 = vpack.c.b16 %v9525, %v9524
    %v9529 = vpack.c.b16 %v9527, %v9526
    %9532 = vst [vmem:[#allocation2 + $0x180] sm:$0xff] %v9528
    %9533 = vst [vmem:[#allocation2 + $0x188] sm:$0xff] %v9529
    %v9534 = vld [vmem:[#allocation2] sm:$0xff]
    %v9535 = vld [vmem:[#allocation2 + $0x8] sm:$0xff]
    %v9536 = vld [vmem:[#allocation2 + $0x10] sm:$0xff]
    %v9537 = vld [vmem:[#allocation2 + $0x18] sm:$0xff]
    %v9538 = vld [vmem:[#allocation2 + $0x20] sm:$0xff]
    %v9539 = vld [vmem:[#allocation2 + $0x28] sm:$0xff]
    %v9540 = vld [vmem:[#allocation2 + $0x30] sm:$0xff]
    %v9541 = vld [vmem:[#allocation2 + $0x38] sm:$0xff]
    %v9542 = vld [vmem:[#allocation2 + $0x40] sm:$0xff]
    %v9543 = vld [vmem:[#allocation2 + $0x48] sm:$0xff]
    %v9544 = vld [vmem:[#allocation2 + $0x50] sm:$0xff]
    %v9545 = vld [vmem:[#allocation2 + $0x58] sm:$0xff]
    %v9546 = vld [vmem:[#allocation2 + $0x60] sm:$0xff]
    %v9547 = vld [vmem:[#allocation2 + $0x68] sm:$0xff]
    %v9548 = vld [vmem:[#allocation2 + $0x70] sm:$0xff]
    %v9549 = vld [vmem:[#allocation2 + $0x78] sm:$0xff]
    %v9550 = vld [vmem:[#allocation2 + $0x80] sm:$0xff]
    %v9551 = vld [vmem:[#allocation2 + $0x88] sm:$0xff]
    %v9552 = vld [vmem:[#allocation2 + $0x90] sm:$0xff]
    %v9553 = vld [vmem:[#allocation2 + $0x98] sm:$0xff]
    %v9554 = vld [vmem:[#allocation2 + $0xa0] sm:$0xff]
    %v9555 = vld [vmem:[#allocation2 + $0xa8] sm:$0xff]
    %v9556 = vld [vmem:[#allocation2 + $0xb0] sm:$0xff]
    %v9557 = vld [vmem:[#allocation2 + $0xb8] sm:$0xff]
    %v9558 = vld [vmem:[#allocation2 + $0xc0] sm:$0xff]
    %v9559 = vld [vmem:[#allocation2 + $0xc8] sm:$0xff]
    %v9560 = vld [vmem:[#allocation2 + $0xd0] sm:$0xff]
    %v9561 = vld [vmem:[#allocation2 + $0xd8] sm:$0xff]
    %v9562 = vld [vmem:[#allocation2 + $0xe0] sm:$0xff]
    %v9563 = vld [vmem:[#allocation2 + $0xe8] sm:$0xff]
    %v9564 = vld [vmem:[#allocation2 + $0xf0] sm:$0xff]
    %v9565 = vld [vmem:[#allocation2 + $0xf8] sm:$0xff]
    %v9566 = vld [vmem:[#allocation2 + $0x100] sm:$0xff]
    %v9567 = vld [vmem:[#allocation2 + $0x108] sm:$0xff]
    %v9568 = vld [vmem:[#allocation2 + $0x110] sm:$0xff]
    %v9569 = vld [vmem:[#allocation2 + $0x118] sm:$0xff]
    %v9570 = vld [vmem:[#allocation2 + $0x120] sm:$0xff]
    %v9571 = vld [vmem:[#allocation2 + $0x128] sm:$0xff]
    %v9572 = vld [vmem:[#allocation2 + $0x130] sm:$0xff]
    %v9573 = vld [vmem:[#allocation2 + $0x138] sm:$0xff]
    %v9574 = vld [vmem:[#allocation2 + $0x140] sm:$0xff]
    %v9575 = vld [vmem:[#allocation2 + $0x148] sm:$0xff]
    %v9576 = vld [vmem:[#allocation2 + $0x150] sm:$0xff]
    %v9577 = vld [vmem:[#allocation2 + $0x158] sm:$0xff]
    %v9578 = vld [vmem:[#allocation2 + $0x160] sm:$0xff]
    %v9579 = vld [vmem:[#allocation2 + $0x168] sm:$0xff]
    %v9580 = vld [vmem:[#allocation2 + $0x170] sm:$0xff]
    %v9581 = vld [vmem:[#allocation2 + $0x178] sm:$0xff]
    %v9582 = vld [vmem:[#allocation2 + $0x180] sm:$0xff]
    %v9583 = vld [vmem:[#allocation2 + $0x188] sm:$0xff]
    %v9584 = vld [vmem:[%s5] sm:$0xff]
    %v9585 = vld [vmem:[%s5 + $0x8] sm:$0xff]
    %9587 = vset.pattern.permute.xlu0 0
    %9588 = vperm.xlu0 %9587, %v9584
    %v9589 = vpop.permute.xlu0 %9588
    %9592 = vset.pattern.permute.xlu0 0
    %9593 = vperm.xlu0 %9592, %v9585
    %v9594 = vpop.permute.xlu0 %9593
    %v9646 = vunpack.c.l.b16 %v9534
    %v9647 = vunpack.c.h.b16 %v9534
    %v9648 = vunpack.c.l.b16 %v9535
    %v9649 = vunpack.c.h.b16 %v9535
    %v9650 = vunpack.c.l.b16 %v9536
    %v9651 = vunpack.c.h.b16 %v9536
    %v9652 = vunpack.c.l.b16 %v9537
    %v9653 = vunpack.c.h.b16 %v9537
    %v9654 = vunpack.c.l.b16 %v9538
    %v9655 = vunpack.c.h.b16 %v9538
    %v9656 = vunpack.c.l.b16 %v9539
    %v9657 = vunpack.c.h.b16 %v9539
    %v9658 = vunpack.c.l.b16 %v9540
    %v9659 = vunpack.c.h.b16 %v9540
    %v9660 = vunpack.c.l.b16 %v9541
    %v9661 = vunpack.c.h.b16 %v9541
    %v9662 = vunpack.c.l.b16 %v9542
    %v9663 = vunpack.c.h.b16 %v9542
    %v9664 = vunpack.c.l.b16 %v9543
    %v9665 = vunpack.c.h.b16 %v9543
    %v9666 = vunpack.c.l.b16 %v9544
    %v9667 = vunpack.c.h.b16 %v9544
    %v9668 = vunpack.c.l.b16 %v9545
    %v9669 = vunpack.c.h.b16 %v9545
    %v9670 = vunpack.c.l.b16 %v9546
    %v9671 = vunpack.c.h.b16 %v9546
    %v9672 = vunpack.c.l.b16 %v9547
    %v9673 = vunpack.c.h.b16 %v9547
    %v9674 = vunpack.c.l.b16 %v9548
    %v9675 = vunpack.c.h.b16 %v9548
    %v9676 = vunpack.c.l.b16 %v9549
    %v9677 = vunpack.c.h.b16 %v9549
    %v9678 = vunpack.c.l.b16 %v9550
    %v9679 = vunpack.c.h.b16 %v9550
    %v9680 = vunpack.c.l.b16 %v9551
    %v9681 = vunpack.c.h.b16 %v9551
    %v9682 = vunpack.c.l.b16 %v9552
    %v9683 = vunpack.c.h.b16 %v9552
    %v9684 = vunpack.c.l.b16 %v9553
    %v9685 = vunpack.c.h.b16 %v9553
    %v9686 = vunpack.c.l.b16 %v9554
    %v9687 = vunpack.c.h.b16 %v9554
    %v9688 = vunpack.c.l.b16 %v9555
    %v9689 = vunpack.c.h.b16 %v9555
    %v9690 = vunpack.c.l.b16 %v9556
    %v9691 = vunpack.c.h.b16 %v9556
    %v9692 = vunpack.c.l.b16 %v9557
    %v9693 = vunpack.c.h.b16 %v9557
    %v9694 = vunpack.c.l.b16 %v9558
    %v9695 = vunpack.c.h.b16 %v9558
    %v9696 = vunpack.c.l.b16 %v9559
    %v9697 = vunpack.c.h.b16 %v9559
    %v9698 = vunpack.c.l.b16 %v9560
    %v9699 = vunpack.c.h.b16 %v9560
    %v9700 = vunpack.c.l.b16 %v9561
    %v9701 = vunpack.c.h.b16 %v9561
    %v9702 = vunpack.c.l.b16 %v9562
    %v9703 = vunpack.c.h.b16 %v9562
    %v9704 = vunpack.c.l.b16 %v9563
    %v9705 = vunpack.c.h.b16 %v9563
    %v9706 = vunpack.c.l.b16 %v9564
    %v9707 = vunpack.c.h.b16 %v9564
    %v9708 = vunpack.c.l.b16 %v9565
    %v9709 = vunpack.c.h.b16 %v9565
    %v9710 = vunpack.c.l.b16 %v9566
    %v9711 = vunpack.c.h.b16 %v9566
    %v9712 = vunpack.c.l.b16 %v9567
    %v9713 = vunpack.c.h.b16 %v9567
    %v9714 = vunpack.c.l.b16 %v9568
    %v9715 = vunpack.c.h.b16 %v9568
    %v9716 = vunpack.c.l.b16 %v9569
    %v9717 = vunpack.c.h.b16 %v9569
    %v9718 = vunpack.c.l.b16 %v9570
    %v9719 = vunpack.c.h.b16 %v9570
    %v9720 = vunpack.c.l.b16 %v9571
    %v9721 = vunpack.c.h.b16 %v9571
    %v9722 = vunpack.c.l.b16 %v9572
    %v9723 = vunpack.c.h.b16 %v9572
    %v9724 = vunpack.c.l.b16 %v9573
    %v9725 = vunpack.c.h.b16 %v9573
    %v9726 = vunpack.c.l.b16 %v9574
    %v9727 = vunpack.c.h.b16 %v9574
    %v9728 = vunpack.c.l.b16 %v9575
    %v9729 = vunpack.c.h.b16 %v9575
    %v9730 = vunpack.c.l.b16 %v9576
    %v9731 = vunpack.c.h.b16 %v9576
    %v9732 = vunpack.c.l.b16 %v9577
    %v9733 = vunpack.c.h.b16 %v9577
    %v9734 = vunpack.c.l.b16 %v9578
    %v9735 = vunpack.c.h.b16 %v9578
    %v9736 = vunpack.c.l.b16 %v9579
    %v9737 = vunpack.c.h.b16 %v9579
    %v9738 = vunpack.c.l.b16 %v9580
    %v9739 = vunpack.c.h.b16 %v9580
    %v9740 = vunpack.c.l.b16 %v9581
    %v9741 = vunpack.c.h.b16 %v9581
    %v9742 = vunpack.c.l.b16 %v9582
    %v9743 = vunpack.c.h.b16 %v9582
    %v9744 = vunpack.c.l.b16 %v9583
    %v9745 = vunpack.c.h.b16 %v9583
    %v9746 = vpack.c.b16 %v9648, %v9646
    %v9747 = vpack.c.b16 %v9649, %v9647
    %v9748 = vpack.c.b16 %v9652, %v9650
    %v9749 = vpack.c.b16 %v9653, %v9651
    %v9750 = vpack.c.b16 %v9656, %v9654
    %v9751 = vpack.c.b16 %v9657, %v9655
    %v9752 = vpack.c.b16 %v9660, %v9658
    %v9753 = vpack.c.b16 %v9661, %v9659
    %v9754 = vpack.c.b16 %v9664, %v9662
    %v9755 = vpack.c.b16 %v9665, %v9663
    %v9756 = vpack.c.b16 %v9668, %v9666
    %v9757 = vpack.c.b16 %v9669, %v9667
    %v9758 = vpack.c.b16 %v9672, %v9670
    %v9759 = vpack.c.b16 %v9673, %v9671
    %v9760 = vpack.c.b16 %v9676, %v9674
    %v9761 = vpack.c.b16 %v9677, %v9675
    %v9762 = vpack.c.b16 %v9680, %v9678
    %v9763 = vpack.c.b16 %v9681, %v9679
    %v9764 = vpack.c.b16 %v9684, %v9682
    %v9765 = vpack.c.b16 %v9685, %v9683
    %v9766 = vpack.c.b16 %v9688, %v9686
    %v9767 = vpack.c.b16 %v9689, %v9687
    %v9768 = vpack.c.b16 %v9692, %v9690
    %v9769 = vpack.c.b16 %v9693, %v9691
    %v9770 = vpack.c.b16 %v9696, %v9694
    %v9771 = vpack.c.b16 %v9697, %v9695
    %v9772 = vpack.c.b16 %v9700, %v9698
    %v9773 = vpack.c.b16 %v9701, %v9699
    %v9774 = vpack.c.b16 %v9704, %v9702
    %v9775 = vpack.c.b16 %v9705, %v9703
    %v9776 = vpack.c.b16 %v9708, %v9706
    %v9777 = vpack.c.b16 %v9709, %v9707
    %v9778 = vpack.c.b16 %v9712, %v9710
    %v9779 = vpack.c.b16 %v9713, %v9711
    %v9780 = vpack.c.b16 %v9716, %v9714
    %v9781 = vpack.c.b16 %v9717, %v9715
    %v9782 = vpack.c.b16 %v9720, %v9718
    %v9783 = vpack.c.b16 %v9721, %v9719
    %v9784 = vpack.c.b16 %v9724, %v9722
    %v9785 = vpack.c.b16 %v9725, %v9723
    %v9786 = vpack.c.b16 %v9728, %v9726
    %v9787 = vpack.c.b16 %v9729, %v9727
    %v9788 = vpack.c.b16 %v9732, %v9730
    %v9789 = vpack.c.b16 %v9733, %v9731
    %v9790 = vpack.c.b16 %v9736, %v9734
    %v9791 = vpack.c.b16 %v9737, %v9735
    %v9792 = vpack.c.b16 %v9740, %v9738
    %v9793 = vpack.c.b16 %v9741, %v9739
    %v9794 = vpack.c.b16 %v9744, %v9742
    %v9795 = vpack.c.b16 %v9745, %v9743
    %9846 = vmatprep.subr.bf16.mxu0 %v9761
    %9847 = vmatpush1.bf16.msra.mxu0 %v9760
    %9848 = vmatprep.subr.bf16.mxu0 %v9759
    %9849 = vmatpush1.bf16.msra.mxu0 %v9758
    %9850 = vmatprep.subr.bf16.mxu0 %v9757
    %9851 = vmatpush1.bf16.msra.mxu0 %v9756
    %9852 = vmatprep.subr.bf16.mxu0 %v9755
    %9853 = vmatpush1.bf16.msra.mxu0 %v9754
    %9854 = vmatprep.subr.bf16.mxu0 %v9753
    %9855 = vmatpush1.bf16.msra.mxu0 %v9752
    %9856 = vmatprep.subr.bf16.mxu0 %v9751
    %9857 = vmatpush1.bf16.msra.mxu0 %v9750
    %9858 = vmatprep.subr.bf16.mxu0 %v9749
    %9859 = vmatpush1.bf16.msra.mxu0 %v9748
    %9860 = vmatprep.subr.bf16.mxu0 %v9747
    %9861 = vmatpush1.bf16.msra.mxu0 %v9746
    %9862 = vmatprep.subr.bf16.mxu0 %v9777
    %9863 = vmatpush2.bf16.msra.mxu0 %v9776
    %9864 = vmatprep.subr.bf16.mxu0 %v9775
    %9865 = vmatpush2.bf16.msra.mxu0 %v9774
    %9866 = vmatprep.subr.bf16.mxu0 %v9773
    %9867 = vmatpush2.bf16.msra.mxu0 %v9772
    %9868 = vmatprep.subr.bf16.mxu0 %v9771
    %9869 = vmatpush2.bf16.msra.mxu0 %v9770
    %9870 = vmatprep.subr.bf16.mxu0 %v9769
    %9871 = vmatpush2.bf16.msra.mxu0 %v9768
    %9872 = vmatprep.subr.bf16.mxu0 %v9767
    %9873 = vmatpush2.bf16.msra.mxu0 %v9766
    %9874 = vmatprep.subr.bf16.mxu0 %v9765
    %9875 = vmatpush2.bf16.msra.mxu0 %v9764
    %9876 = vmatprep.subr.bf16.mxu0 %v9763
    %9877 = vmatpush2.bf16.msra.mxu0 %v9762
    %9878 = vmatprep.mubr.bf16.mxu0 %v4871
    %9879 = vmatmul.mubr.bf16.gmra.mxu0 %v4870
    %v9880 = vpop.f32.mrf.mxu0
    %v9881 = vadd.f32 %v9589, %v9880
    %v9882 = vpop.f32.mrf.mxu0
    %v9883 = vadd.f32 %v9589, %v9882
    %v9884 = vpop.f32.mrf.mxu0
    %v9885 = vadd.f32 %v9594, %v9884
    %v9886 = vpop.f32.mrf.mxu0
    %v9887 = vadd.f32 %v9594, %v9886
    %9888 = vdwg.mxu0
    %9889 = vmatprep.subr.bf16.mxu0 %v9793
    %9890 = vmatpush1.bf16.msra.mxu0 %v9792
    %9891 = vmatprep.subr.bf16.mxu0 %v9791
    %9892 = vmatpush1.bf16.msra.mxu0 %v9790
    %9893 = vmatprep.subr.bf16.mxu0 %v9789
    %9894 = vmatpush1.bf16.msra.mxu0 %v9788
    %9895 = vmatprep.subr.bf16.mxu0 %v9787
    %9896 = vmatpush1.bf16.msra.mxu0 %v9786
    %9897 = vmatprep.subr.bf16.mxu0 %v9785
    %9898 = vmatpush1.bf16.msra.mxu0 %v9784
    %9899 = vmatprep.subr.bf16.mxu0 %v9783
    %9900 = vmatpush1.bf16.msra.mxu0 %v9782
    %9901 = vmatprep.subr.bf16.mxu0 %v9781
    %9902 = vmatpush1.bf16.msra.mxu0 %v9780
    %9903 = vmatprep.subr.bf16.mxu0 %v9779
    %9904 = vmatpush1.bf16.msra.mxu0 %v9778
    %9905 = vmatprep.subr.bf16.mxu0 0
    %9906 = vmatpush2.bf16.msra.mxu0 0
    %9907 = vmatprep.subr.bf16.mxu0 0
    %9908 = vmatpush2.bf16.msra.mxu0 0
    %9909 = vmatprep.subr.bf16.mxu0 0
    %9910 = vmatpush2.bf16.msra.mxu0 0
    %9911 = vmatprep.subr.bf16.mxu0 0
    %9912 = vmatpush2.bf16.msra.mxu0 0
    %9913 = vmatprep.subr.bf16.mxu0 0
    %9914 = vmatpush2.bf16.msra.mxu0 0
    %9915 = vmatprep.subr.bf16.mxu0 0
    %9916 = vmatpush2.bf16.msra.mxu0 0
    %9917 = vmatprep.subr.bf16.mxu0 0
    %9918 = vmatpush2.bf16.msra.mxu0 0
    %9919 = vmatprep.subr.bf16.mxu0 %v9795
    %9920 = vmatpush2.bf16.msra.mxu0 %v9794
    %9921 = vmatprep.mubr.bf16.mxu0 %v5129
    %9922 = vmatmul.mubr.bf16.gmra.mxu0 %v4872
    %v9923 = vpop.f32.mrf.mxu0
    %v9924 = vadd.f32 %v9881, %v9923
    %v9925 = vpop.f32.mrf.mxu0
    %v9926 = vadd.f32 %v9883, %v9925
    %v9927 = vpop.f32.mrf.mxu0
    %v9928 = vadd.f32 %v9885, %v9927
    %v9929 = vpop.f32.mrf.mxu0
    %v9930 = vadd.f32 %v9887, %v9929
    %9931 = vdwg.mxu0
    %v9932 = vadd.f32 %v9924, %v9926
    %9933 = vadd.xlane.f32.xlu0 %v9932
    %v9934 = vpop.xlane.xlu0 %9933
    %v9935 = vrot.slane %v9934, 4
    %v9936 = vadd.f32 %v9934, %v9935
    %v9937 = vrot.slane %v9936, 2
    %v9938 = vadd.f32 %v9936, %v9937
    %v9939 = vrot.slane %v9938, 1
    %v9940 = vadd.f32 %v9938, %v9939
    %s9941 = vtos %v9940
    %v9942 = vstv %s9941
    %v9943 = vmul.f32 %v9942, 0.0009765625
    %v9944 = vmul.f32 %v9924, %v9924
    %v9945 = vmul.f32 %v9926, %v9926
    %v9946 = vadd.f32 %v9944, %v9945
    %9947 = vadd.xlane.f32.xlu0 %v9946
    %v9948 = vpop.xlane.xlu0 %9947
    %v9949 = vrot.slane %v9948, 4
    %v9950 = vadd.f32 %v9948, %v9949
    %v9951 = vrot.slane %v9950, 2
    %v9952 = vadd.f32 %v9950, %v9951
    %v9953 = vrot.slane %v9952, 1
    %v9954 = vadd.f32 %v9952, %v9953
    %s9955 = vtos %v9954
    %v9956 = vstv %s9955
    %v9957 = vmul.f32 %v9956, 0.0009765625
    %v9958 = vmul.f32 %v9943, %v9943
    %v9959 = vsub.f32 %v9957, %v9958
    %v9960 = vsub.f32 %v9924, %v9943
    %v9961 = vsub.f32 %v9926, %v9943
    %v9962 = vadd.f32 %v9959, 1e-05
    %v9963 = vrsqrt.pop %v9962
    %v9964 = vmul.f32 %v9960, %v9963
    %v9965 = vmul.f32 %v9961, %v9963
    %v9966 = vmul.f32 %v9964, %v191
    %v9967 = vmul.f32 %v9965, %v192
    %v9968 = vadd.f32 %v9966, %v221
    %v9969 = vadd.f32 %v9967, %v222
    %v9970 = vadd.f32 %v8404, %v9968
    %v9971 = vadd.f32 %v8405, %v9969
    %v9972 = vxor.u32 %v9970, 2147483648
    %v9973 = vxor.u32 %v9971, 2147483648
    %v9974 = vmul.f32 %v9972, 1.442695
    %v9975 = vpow.pop %v9974
    %v9976 = vmul.f32 %v9973, 1.442695
    %v9977 = vpow.pop %v9976
    %v9978 = vadd.f32 %v9975, 1.0
    %v9979 = vadd.f32 %v9977, 1.0
    %v9980 = vrcp.pop %v9978
    %v9981 = vmul.f32 1.0, %v9980
    %v9982 = vrcp.pop %v9979
    %v9983 = vmul.f32 1.0, %v9982
    %v9984 = vtanh.pop %v9928
    %v9985 = vtanh.pop %v9930
    %v9986 = vmul.f32 %v9981, %v9984
    %v9987 = vmul.f32 %v9983, %v9985
    %s9988 = scalar_lea.vmem [#allocation12], 16
    %9989 = vst [vmem:[%s9988] sm:$0xff] %v9986
    %9990 = vst [vmem:[%s9988 + $0x8] sm:$0xff] %v9987
    // Predicated region
    $region54: #{tpu_custom_call.1} parent=1 // pred_check
      _
    $region55: #{tpu_custom_call.1} parent=1 // pred_check_branch
      %9992 = sbr.rel (0) target = $region57
    $region56: #{tpu_custom_call.1} parent=1 // pred_region
      %s9994 = ssub.s32 512, 512
      %9995 = vsyncadd [#allocation5], %s9994
      %s9996 = sshll.u32 [#allocation12], 4
      %s9997 = int_to_ptr.vmem [resolvable:$true] %s9996
      %10002 = dma.vmem_to_hbm [thread:$0]  %s9997, 512, %s8, [#allocation5], 256, 256, 16
    $region57: #{tpu_custom_call.1} parent=1 // pred_fallthru
      _
    // Predicated region
    $region58: #{tpu_custom_call.1} parent=1 // pred_check
      _
    $region59: #{tpu_custom_call.1} parent=1 // pred_check_branch
      %10004 = sbr.rel (0) target = $region61
    $region60: #{tpu_custom_call.1} parent=1 // pred_region
      %s10006 = ssub.s32 512, 512
      %10007 = vsyncadd [#allocation14], %s10006
      %s10008 = sshll.u32 [#allocation13], 4
      %s10009 = int_to_ptr.vmem [resolvable:$true] %s10008
      %10014 = dma.vmem_to_hbm [thread:$0]  %s10009, 512, %s9, [#allocation14], 256, 256, 16
    $region61: #{tpu_custom_call.1} parent=1 // pred_fallthru
      _
    // Predicated region
    $region62: #{tpu_custom_call.1} parent=1 // pred_check
      _
    $region63: #{tpu_custom_call.1} parent=1 // pred_check_branch
      %10016 = sbr.rel (0) target = $region65
    $region64: #{tpu_custom_call.1} parent=1 // pred_region
      %s10018 = ssub.s32 512, 512
      %10019 = vsyncadd [#allocation14], %s10018
      %s10020 = sshll.u32 [#allocation15], 4
      %s10021 = int_to_ptr.vmem [resolvable:$true] %s10020
      %10026 = dma.vmem_to_hbm [thread:$0]  %s10021, 512, %s10, [#allocation14], 256, 256, 16
    $region65: #{tpu_custom_call.1} parent=1 // pred_fallthru
      _
    // Predicated region
    $region66: #{tpu_custom_call.1} parent=1 // pred_check
      _
    $region67: #{tpu_custom_call.1} parent=1 // pred_check_branch
      %10028 = sbr.rel (0) target = $region69
    $region68: #{tpu_custom_call.1} parent=1 // pred_region
      %10029 = dma.done [#allocation5], 512
    $region69: #{tpu_custom_call.1} parent=1 // pred_fallthru
      _
    // Predicated region
    $region70: #{tpu_custom_call.1} parent=1 // pred_check
      _
    $region71: #{tpu_custom_call.1} parent=1 // pred_check_branch
      %10031 = sbr.rel (0) target = $region73
    $region72: #{tpu_custom_call.1} parent=1 // pred_region
      %10032 = dma.done [#allocation14], 512
    $region73: #{tpu_custom_call.1} parent=1 // pred_fallthru
      _
    // Predicated region
    $region74: #{tpu_custom_call.1} parent=1 // pred_check
      _
    $region75: #{tpu_custom_call.1} parent=1 // pred_check_branch
      %10034 = sbr.rel (0) target = $region77
    $region76: #{tpu_custom_call.1} parent=1 // pred_region
      %10035 = dma.done [#allocation14], 512
    $region77: #{tpu_custom_call.1} parent=1 // pred_fallthru
      _
    %10036 = vsyncpa [#allocation4], 1
    %10037 = vsyncpa [#allocation7], 1
    %10038 = vsyncpa [#allocation10], 1
    %10039 = vsyncpa [#allocation5], 1
    %10040 = vsyncpa [#allocation14], 1

</llo_original>
